<compile_context>
chip_gen: v7x
topology: tpu7x:2x2x1
jax: 0.10.0
libtpu: 0.0.40
codegen_flags: <defaults>
</compile_context>

<pallas_src>
import jax
import jax.numpy as jnp
from jax import lax
from jax.experimental import pallas as pl
from jax.experimental.pallas import tpu as pltpu

LRN_SIZE = 40
LRN_ALPHA = 1e-4
LRN_BETA = 0.75
LRN_K = 1.0

H_IN = 16            # input spatial (square)
C_OUT = 64           # channels of both convs
HC1 = H_IN - 2       # 14 : conv1 output spatial
HP1 = HC1 // 2       # 7  : after first max-pool
HC2 = HP1 - 2        # 5  : conv2 output spatial
HP2 = HC2 // 2       # 2  : after second max-pool (floor mode)
NPOS1 = HP1 * HP1    # 49 : pool-1 output positions per image (kernel rows / image)
FLAT = C_OUT * HP2 * HP2   # 256


def convblock_kernel(x_ref, w1_ref, b1_ref, w2_ref, b2_ref, lrn_ref, out_ref):
    # x_ref  : (B*49, 64) bf16  conv1 im2col patches; lanes = 4 x [16 taps], one
    #                           16-lane group per pixel of the 2x2 pool window
    # w1_ref : (64, 256)  bf16  block_diag(w1, w1, w1, w1), w1 = (16, 64)
    # b1_ref : (1, 256)   f32   conv1 bias tiled 4x
    # w2_ref : (576, 64)  bf16  conv2 weights, row index = (dy*3+dx)*64 + cin
    # b2_ref : (1, 64)    f32
    # lrn_ref: (256, 256) bf16  block-diag LRN window mask, values = alpha/size
    # out_ref: (B, 256)   f32   (h, w, c)-flattened pooled conv2 output
    B = out_ref.shape[0]
    R = B * NPOS1
    C = C_OUT

    # ---- conv1: all 4 pixels of every 2x2 pool window in one lane-dense matmul ----
    acc1 = jnp.dot(x_ref[...], w1_ref[...], preferred_element_type=jnp.float32)
    acc1 = acc1 + b1_ref[...]                                    # (R, 256) f32

    # ---- LocalResponseNorm(40) + ReLU (elementwise math kept in f32 for v5e) ------
    sq = acc1 * acc1
    win = jnp.dot(sq.astype(jnp.bfloat16), lrn_ref[...],         # alpha/size folded
                  preferred_element_type=jnp.float32)            # into the mask
    inv_denom = jnp.exp(-LRN_BETA * jnp.log(LRN_K + win))        # EUP, no divide
    a = jnp.maximum(acc1 * inv_denom, 0.0)                       # (R, 256) f32

    # ---- max_pool2d(2): H and W reductions are lane-block maxes (no reshapes) -----
    a_pool = jnp.maximum(jnp.maximum(a[:, 0 * C:1 * C], a[:, 1 * C:2 * C]),
                         jnp.maximum(a[:, 2 * C:3 * C], a[:, 3 * C:4 * C]))
    # a_pool: (R, 64) f32, row = (b, hp*7 + wp) over the pooled 7x7 grid

    # ---- conv2: 9 accumulated (R,64)@(64,64) matmuls on row-shifted f32 views -----
    a_ext = jnp.concatenate(
        [a_pool, jnp.zeros((2 * HP1 + 2, C), jnp.float32)], axis=0)   # (R+16, 64)
    acc2 = jnp.zeros((R, C), jnp.float32)
    for dy in range(3):
        for dx in range(3):
            t = dy * 3 + dx
            off = dy * HP1 + dx
            lhs = a_ext[off:off + R, :]                          # f32 row shift
            acc2 = acc2 + jnp.dot(lhs.astype(jnp.bfloat16),      # bf16 cast per tap
                                  w2_ref[t * C:(t + 1) * C, :],
                                  preferred_element_type=jnp.float32)
    acc2 = acc2 + b2_ref[...]
    # acc2 row (b, i*7 + j) holds conv2 output pixel (i, j) for i,j <= 4; rows with
    # i > 4 or j > 4 are wrap-around garbage and are never read below.

    # ---- max_pool2d(2) floor mode via row-shifted maxes --------------------------
    pad8 = jnp.zeros((8, C), jnp.float32)
    e = jnp.concatenate([acc2, pad8], axis=0)
    m01 = jnp.maximum(e[0:R, :], e[1:R + 1, :])                  # max over (j, j+1)
    e2 = jnp.concatenate([m01, pad8], axis=0)
    q = jnp.maximum(e2[0:R, :], e2[HP1:R + HP1, :])              # + rows (i, i+1)
    # q row (b, 14*u + 2*v) = pooled output pixel (u, v).  Final gather only touches
    # 4 rows / image of the smallest tensor in the kernel.
    q3 = q.reshape(B, NPOS1, C)
    out = jnp.concatenate([q3[:, 0, :], q3[:, 2, :],
                           q3[:, 2 * HP1, :], q3[:, 2 * HP1 + 2, :]], axis=-1)
    out_ref[...] = out.astype(out_ref.dtype)                     # (B, 256) lane-dense


def convblock_forward(x_nchw, W1, b1, W2, b2, *, b_blk=32):
    """x_nchw: (N,1,16,16); W1: (64,1,3,3); W2: (64,64,3,3). Returns (N, 256)."""
    N = x_nchw.shape[0]
    assert x_nchw.shape[1:] == (1, H_IN, H_IN)
    assert b_blk % 8 == 0, "b_blk must be a multiple of 8 (sublane tiling)"

    # grid even and >= 2 so both v7x TensorCores always get work (review item #6)
    grid_n = max(2, -(-N // b_blk))
    grid_n += grid_n % 2
    npad = grid_n * b_blk

    # ---- conv1 im2col, 2x2-pool-window lane packed (hoisted to XLA) ---------------
    x2 = x_nchw[:, 0]                                                    # (N,16,16)
    taps = jnp.stack([x2[:, ky:ky + HC1, kx:kx + HC1]
                      for ky in range(3) for kx in range(3)], axis=-1)   # (N,14,14,9)
    taps = jnp.pad(taps, ((0, 0), (0, 0), (0, 0), (0, 16 - 9)))          # (N,14,14,16)
    taps = taps.reshape(N, HP1, 2, HP1, 2, 16).transpose(0, 1, 3, 2, 4, 5)
    taps = taps.reshape(N, HP1, HP1, 64)                                 # lane=q*16+tap
    taps = jnp.pad(taps, ((0, npad - N), (0, 0), (0, 0), (0, 0)))
    patches = taps.reshape(npad * NPOS1, 64).astype(jnp.bfloat16)

    # ---- weights -------------------------------------------------------------------
    w1_k = jnp.zeros((16, C_OUT), jnp.float32).at[:9].set(
        W1[:, 0].reshape(C_OUT, 9).T)
    w1_blk = jnp.kron(jnp.eye(4, dtype=jnp.float32), w1_k).astype(jnp.bfloat16)
    b1_k = jnp.tile(b1.reshape(1, C_OUT), (1, 4)).astype(jnp.float32)    # (1,256)
    w2_k = jnp.transpose(W2, (2, 3, 1, 0)).reshape(9 * C_OUT, C_OUT).astype(jnp.bfloat16)
    b2_k = b2.reshape(1, C_OUT).astype(jnp.float32)

    # LRN(size=40) channel-window mask with alpha/size folded in (review item #8),
    # block-diagonal over the 4 packed pixels: M[cp, c] = alpha/n iff c-20<=cp<=c+19.
    idx = jnp.arange(C_OUT)
    in_win = ((idx[None, :] - LRN_SIZE // 2 <= idx[:, None]) &
              (idx[:, None] <= idx[None, :] + (LRN_SIZE - 1) // 2))
    lrn_mat = jnp.where(in_win, LRN_ALPHA / LRN_SIZE, 0.0).astype(jnp.float32)
    lrn_blk = jnp.kron(jnp.eye(4, dtype=jnp.float32), lrn_mat).astype(jnp.bfloat16)

    # Explicit scoped-VMEM limit from the padded footprint (review items #5/#7):
    # never below the 32 MiB default, capped so it also fits v7x's 64 MiB physical.
    vmem_bytes = int(min(48 * 2 ** 20,
                         max(32 * 2 ** 20, 4 * 2 ** 20 + b_blk * 600 * 1024)))

    out = pl.pallas_call(
        convblock_kernel,
        out_shape=jax.ShapeDtypeStruct((npad, FLAT), jnp.float32),
        grid_spec=pltpu.PrefetchScalarGridSpec(
            num_scalar_prefetch=0,
            grid=(grid_n,),
            in_specs=[
                pl.BlockSpec((b_blk * NPOS1, 64), lambda i: (i, 0)),
                pl.BlockSpec((64, 4 * C_OUT), lambda i: (0, 0)),
                pl.BlockSpec((1, 4 * C_OUT), lambda i: (0, 0)),
                pl.BlockSpec((9 * C_OUT, C_OUT), lambda i: (0, 0)),
                pl.BlockSpec((1, C_OUT), lambda i: (0, 0)),
                pl.BlockSpec((4 * C_OUT, 4 * C_OUT), lambda i: (0, 0)),
            ],
            out_specs=pl.BlockSpec((b_blk, FLAT), lambda i: (i, 0)),
        ),
        compiler_params=pltpu.CompilerParams(
            dimension_semantics=("parallel",),
            vmem_limit_bytes=vmem_bytes),
    )(patches, w1_blk, b1_k, w2_k, b2_k, lrn_blk)

    # Kernel output is (h,w,c)-flattened; torch.nn.Flatten on NCHW is (c,h,w) order.
    # This permute touches only N*256 floats (negligible XLA op).
    out = out[:N].reshape(N, HP2, HP2, C_OUT)
    return jnp.transpose(out, (0, 3, 1, 2)).reshape(N, FLAT)


def convblock_reference(x_nchw, W1, b1, W2, b2):
    """Pure-JAX/XLA reference mirroring the PyTorch forward (NCHW)."""
    dn = ('NCHW', 'OIHW', 'NCHW')
    y = lax.conv_general_dilated(x_nchw, W1, (1, 1), 'VALID',
                                 dimension_numbers=dn) + b1[None, :, None, None]
    C = y.shape[1]
    sq = y * y
    padded = jnp.pad(sq, ((0, 0), (LRN_SIZE // 2, (LRN_SIZE - 1) // 2),
                          (0, 0), (0, 0)))
    win = jnp.stack([jnp.sum(padded[:, c:c + LRN_SIZE], axis=1)
                     for c in range(C)], axis=1)
    y = y / (LRN_K + (LRN_ALPHA / LRN_SIZE) * win) ** LRN_BETA
    y = jnp.maximum(y, 0.0)

    def maxpool2(t):
        return lax.reduce_window(t, -jnp.inf, lax.max,
                                 (1, 1, 2, 2), (1, 1, 2, 2), 'VALID')

    y = maxpool2(y)
    y = lax.conv_general_dilated(y, W2, (1, 1), 'VALID',
                                 dimension_numbers=dn) + b2[None, :, None, None]
    y = maxpool2(y)
    return y.reshape(y.shape[0], -1)


if __name__ == "__main__":
    key = jax.random.PRNGKey(0)
    k_x, k_w1, k_b1, k_w2, k_b2 = jax.random.split(key, 5)

    N = 16
    x = jax.random.normal(k_x, (N, 1, 16, 16), jnp.float32)

    # deterministic PyTorch-default-style init (uniform +/- 1/sqrt(fan_in))
    fan_in1, fan_in2 = 1 * 3 * 3, 64 * 3 * 3
    bnd1, bnd2 = 1.0 / fan_in1 ** 0.5, 1.0 / fan_in2 ** 0.5
    W1 = jax.random.uniform(k_w1, (64, 1, 3, 3), jnp.float32, -bnd1, bnd1)
    b1 = jax.random.uniform(k_b1, (64,), jnp.float32, -bnd1, bnd1)
    W2 = jax.random.uniform(k_w2, (64, 64, 3, 3), jnp.float32, -bnd2, bnd2)
    b2 = jax.random.uniform(k_b2, (64,), jnp.float32, -bnd2, bnd2)

    # b_blk=8 -> grid=(2,) (even, both v7x TCs busy) at this small demo batch;
    # use b_blk=32 (v7x) / 64+ (v6e, 128 MiB VMEM) for real batch sizes.
    fwd = jax.jit(lambda *a: convblock_forward(*a, b_blk=8))
    out = jax.block_until_ready(fwd(x, W1, b1, W2, b2))

    ref = convblock_reference(x, W1, b1, W2, b2)
    assert out.shape == (N, 256), out.shape
    # bf16 MXU operands -> slightly looser tolerance than pure f32
    assert jnp.allclose(out, ref, atol=2e-2, rtol=2e-2), \
        float(jnp.max(jnp.abs(out - ref)))
    print("KERNEL_OK")
</pallas_src>

<mosaic_0001>
module attributes {stable_mosaic.version = 11 : i64} {
  func.func @convblock_kernel(%arg0: i32, %arg1: memref<392x64xbf16, #tpu.memory_space<vmem>>, %arg2: memref<64x256xbf16, #tpu.memory_space<vmem>>, %arg3: memref<1x256xf32, #tpu.memory_space<vmem>>, %arg4: memref<576x64xbf16, #tpu.memory_space<vmem>>, %arg5: memref<1x64xf32, #tpu.memory_space<vmem>>, %arg6: memref<256x256xbf16, #tpu.memory_space<vmem>>, %arg7: memref<8x256xf32, #tpu.memory_space<vmem>>) attributes {dimension_semantics = [#tpu.dimension_semantics<parallel>], iteration_bounds = array<i64: 2>, scalar_prefetch = 0 : i64, scratch_operands = 0 : i64, tpu.core_type = #tpu.core_type<tc>, window_params = [{transform_indices = @transform_0, window_bounds = array<i64: 392, 64>}, {pipeline_mode = #tpu.pipeline_mode<synchronous>, transform_indices = @transform_1, window_bounds = array<i64: 64, 256>}, {pipeline_mode = #tpu.pipeline_mode<synchronous>, transform_indices = @transform_2, window_bounds = array<i64: 1, 256>}, {pipeline_mode = #tpu.pipeline_mode<synchronous>, transform_indices = @transform_3, window_bounds = array<i64: 576, 64>}, {pipeline_mode = #tpu.pipeline_mode<synchronous>, transform_indices = @transform_4, window_bounds = array<i64: 1, 64>}, {pipeline_mode = #tpu.pipeline_mode<synchronous>, transform_indices = @transform_5, window_bounds = array<i64: 256, 256>}, {transform_indices = @transform_6, window_bounds = array<i64: 8, 256>}]} {
    %c0 = arith.constant 0 : index
    %c0_0 = arith.constant 0 : index
    %0 = vector.load %arg1[%c0, %c0_0] : memref<392x64xbf16, #tpu.memory_space<vmem>>, vector<392x64xbf16>
    %c0_1 = arith.constant 0 : index
    %c0_2 = arith.constant 0 : index
    %1 = vector.load %arg2[%c0_1, %c0_2] : memref<64x256xbf16, #tpu.memory_space<vmem>>, vector<64x256xbf16>
    %cst = arith.constant dense<0.000000e+00> : vector<392x256xf32>
    %2 = tpu.matmul %0, %1, %cst {dimension_numbers = #tpu.dot_dimension_numbers<[1], [0], [0], [1], [0, 0, 1, 1], [], []>} : vector<392x64xbf16>, vector<64x256xbf16>, vector<392x256xf32> -> vector<392x256xf32>
    %c0_3 = arith.constant 0 : index
    %c0_4 = arith.constant 0 : index
    %3 = vector.load %arg3[%c0_3, %c0_4] : memref<1x256xf32, #tpu.memory_space<vmem>>, vector<1x256xf32>
    %4 = vector.broadcast %3 : vector<1x256xf32> to vector<392x256xf32>
    %5 = arith.addf %2, %4 : vector<392x256xf32>
    %6 = arith.mulf %5, %5 : vector<392x256xf32>
    %7 = arith.truncf %6 : vector<392x256xf32> to vector<392x256xbf16>
    %c0_5 = arith.constant 0 : index
    %c0_6 = arith.constant 0 : index
    %8 = vector.load %arg6[%c0_5, %c0_6] : memref<256x256xbf16, #tpu.memory_space<vmem>>, vector<256x256xbf16>
    %cst_7 = arith.constant dense<0.000000e+00> : vector<392x256xf32>
    %9 = tpu.matmul %7, %8, %cst_7 {dimension_numbers = #tpu.dot_dimension_numbers<[1], [0], [0], [1], [0, 0, 1, 1], [], []>} : vector<392x256xbf16>, vector<256x256xbf16>, vector<392x256xf32> -> vector<392x256xf32>
    %cst_8 = arith.constant 1.000000e+00 : f32
    %10 = vector.broadcast %cst_8 : f32 to vector<392x256xf32>
    %11 = arith.addf %10, %9 : vector<392x256xf32>
    %12 = math.log %11 : vector<392x256xf32>
    %cst_9 = arith.constant -7.500000e-01 : f32
    %13 = vector.broadcast %cst_9 : f32 to vector<392x256xf32>
    %14 = arith.mulf %13, %12 : vector<392x256xf32>
    %15 = math.exp %14 : vector<392x256xf32>
    %16 = arith.mulf %5, %15 : vector<392x256xf32>
    %cst_10 = arith.constant 0.000000e+00 : f32
    %17 = vector.broadcast %cst_10 : f32 to vector<392x256xf32>
    %18 = arith.maximumf %16, %17 : vector<392x256xf32>
    %19 = vector.extract_strided_slice %18 {offsets = [0, 0], sizes = [392, 64], strides = [1, 1]} : vector<392x256xf32> to vector<392x64xf32>
    %20 = vector.extract_strided_slice %18 {offsets = [0, 64], sizes = [392, 64], strides = [1, 1]} : vector<392x256xf32> to vector<392x64xf32>
    %21 = arith.maximumf %19, %20 : vector<392x64xf32>
    %22 = vector.extract_strided_slice %18 {offsets = [0, 128], sizes = [392, 64], strides = [1, 1]} : vector<392x256xf32> to vector<392x64xf32>
    %23 = vector.extract_strided_slice %18 {offsets = [0, 192], sizes = [392, 64], strides = [1, 1]} : vector<392x256xf32> to vector<392x64xf32>
    %24 = arith.maximumf %22, %23 : vector<392x64xf32>
    %25 = arith.maximumf %21, %24 : vector<392x64xf32>
    %cst_11 = arith.constant 0.000000e+00 : f32
    %26 = vector.broadcast %cst_11 : f32 to vector<16x64xf32>
    %27 = tpu.concatenate %25, %26 in 0 : vector<392x64xf32>, vector<16x64xf32> -> vector<408x64xf32>
    %cst_12 = arith.constant 0.000000e+00 : f32
    %28 = vector.broadcast %cst_12 : f32 to vector<392x64xf32>
    %29 = vector.extract_strided_slice %27 {offsets = [0, 0], sizes = [392, 64], strides = [1, 1]} : vector<408x64xf32> to vector<392x64xf32>
    %30 = arith.truncf %29 : vector<392x64xf32> to vector<392x64xbf16>
    %c0_13 = arith.constant 0 : index
    %c0_14 = arith.constant 0 : index
    %31 = vector.load %arg4[%c0_13, %c0_14] : memref<576x64xbf16, #tpu.memory_space<vmem>>, vector<64x64xbf16>
    %cst_15 = arith.constant dense<0.000000e+00> : vector<392x64xf32>
    %32 = tpu.matmul %30, %31, %cst_15 {dimension_numbers = #tpu.dot_dimension_numbers<[1], [0], [0], [1], [0, 0, 1, 1], [], []>} : vector<392x64xbf16>, vector<64x64xbf16>, vector<392x64xf32> -> vector<392x64xf32>
    %33 = arith.addf %28, %32 : vector<392x64xf32>
    %34 = vector.extract_strided_slice %27 {offsets = [1, 0], sizes = [392, 64], strides = [1, 1]} : vector<408x64xf32> to vector<392x64xf32>
    %35 = arith.truncf %34 : vector<392x64xf32> to vector<392x64xbf16>
    %c64 = arith.constant 64 : index
    %c0_16 = arith.constant 0 : index
    %36 = vector.load %arg4[%c64, %c0_16] : memref<576x64xbf16, #tpu.memory_space<vmem>>, vector<64x64xbf16>
    %cst_17 = arith.constant dense<0.000000e+00> : vector<392x64xf32>
    %37 = tpu.matmul %35, %36, %cst_17 {dimension_numbers = #tpu.dot_dimension_numbers<[1], [0], [0], [1], [0, 0, 1, 1], [], []>} : vector<392x64xbf16>, vector<64x64xbf16>, vector<392x64xf32> -> vector<392x64xf32>
    %38 = arith.addf %33, %37 : vector<392x64xf32>
    %39 = vector.extract_strided_slice %27 {offsets = [2, 0], sizes = [392, 64], strides = [1, 1]} : vector<408x64xf32> to vector<392x64xf32>
    %40 = arith.truncf %39 : vector<392x64xf32> to vector<392x64xbf16>
    %c128 = arith.constant 128 : index
    %c0_18 = arith.constant 0 : index
    %41 = vector.load %arg4[%c128, %c0_18] : memref<576x64xbf16, #tpu.memory_space<vmem>>, vector<64x64xbf16>
    %cst_19 = arith.constant dense<0.000000e+00> : vector<392x64xf32>
    %42 = tpu.matmul %40, %41, %cst_19 {dimension_numbers = #tpu.dot_dimension_numbers<[1], [0], [0], [1], [0, 0, 1, 1], [], []>} : vector<392x64xbf16>, vector<64x64xbf16>, vector<392x64xf32> -> vector<392x64xf32>
    %43 = arith.addf %38, %42 : vector<392x64xf32>
    %44 = vector.extract_strided_slice %27 {offsets = [7, 0], sizes = [392, 64], strides = [1, 1]} : vector<408x64xf32> to vector<392x64xf32>
    %45 = arith.truncf %44 : vector<392x64xf32> to vector<392x64xbf16>
    %c192 = arith.constant 192 : index
    %c0_20 = arith.constant 0 : index
    %46 = vector.load %arg4[%c192, %c0_20] : memref<576x64xbf16, #tpu.memory_space<vmem>>, vector<64x64xbf16>
    %cst_21 = arith.constant dense<0.000000e+00> : vector<392x64xf32>
    %47 = tpu.matmul %45, %46, %cst_21 {dimension_numbers = #tpu.dot_dimension_numbers<[1], [0], [0], [1], [0, 0, 1, 1], [], []>} : vector<392x64xbf16>, vector<64x64xbf16>, vector<392x64xf32> -> vector<392x64xf32>
    %48 = arith.addf %43, %47 : vector<392x64xf32>
    %49 = vector.extract_strided_slice %27 {offsets = [8, 0], sizes = [392, 64], strides = [1, 1]} : vector<408x64xf32> to vector<392x64xf32>
    %50 = arith.truncf %49 : vector<392x64xf32> to vector<392x64xbf16>
    %c256 = arith.constant 256 : index
    %c0_22 = arith.constant 0 : index
    %51 = vector.load %arg4[%c256, %c0_22] : memref<576x64xbf16, #tpu.memory_space<vmem>>, vector<64x64xbf16>
    %cst_23 = arith.constant dense<0.000000e+00> : vector<392x64xf32>
    %52 = tpu.matmul %50, %51, %cst_23 {dimension_numbers = #tpu.dot_dimension_numbers<[1], [0], [0], [1], [0, 0, 1, 1], [], []>} : vector<392x64xbf16>, vector<64x64xbf16>, vector<392x64xf32> -> vector<392x64xf32>
    %53 = arith.addf %48, %52 : vector<392x64xf32>
    %54 = vector.extract_strided_slice %27 {offsets = [9, 0], sizes = [392, 64], strides = [1, 1]} : vector<408x64xf32> to vector<392x64xf32>
    %55 = arith.truncf %54 : vector<392x64xf32> to vector<392x64xbf16>
    %c320 = arith.constant 320 : index
    %c0_24 = arith.constant 0 : index
    %56 = vector.load %arg4[%c320, %c0_24] : memref<576x64xbf16, #tpu.memory_space<vmem>>, vector<64x64xbf16>
    %cst_25 = arith.constant dense<0.000000e+00> : vector<392x64xf32>
    %57 = tpu.matmul %55, %56, %cst_25 {dimension_numbers = #tpu.dot_dimension_numbers<[1], [0], [0], [1], [0, 0, 1, 1], [], []>} : vector<392x64xbf16>, vector<64x64xbf16>, vector<392x64xf32> -> vector<392x64xf32>
    %58 = arith.addf %53, %57 : vector<392x64xf32>
    %59 = vector.extract_strided_slice %27 {offsets = [14, 0], sizes = [392, 64], strides = [1, 1]} : vector<408x64xf32> to vector<392x64xf32>
    %60 = arith.truncf %59 : vector<392x64xf32> to vector<392x64xbf16>
    %c384 = arith.constant 384 : index
    %c0_26 = arith.constant 0 : index
    %61 = vector.load %arg4[%c384, %c0_26] : memref<576x64xbf16, #tpu.memory_space<vmem>>, vector<64x64xbf16>
    %cst_27 = arith.constant dense<0.000000e+00> : vector<392x64xf32>
    %62 = tpu.matmul %60, %61, %cst_27 {dimension_numbers = #tpu.dot_dimension_numbers<[1], [0], [0], [1], [0, 0, 1, 1], [], []>} : vector<392x64xbf16>, vector<64x64xbf16>, vector<392x64xf32> -> vector<392x64xf32>
    %63 = arith.addf %58, %62 : vector<392x64xf32>
    %64 = vector.extract_strided_slice %27 {offsets = [15, 0], sizes = [392, 64], strides = [1, 1]} : vector<408x64xf32> to vector<392x64xf32>
    %65 = arith.truncf %64 : vector<392x64xf32> to vector<392x64xbf16>
    %c448 = arith.constant 448 : index
    %c0_28 = arith.constant 0 : index
    %66 = vector.load %arg4[%c448, %c0_28] : memref<576x64xbf16, #tpu.memory_space<vmem>>, vector<64x64xbf16>
    %cst_29 = arith.constant dense<0.000000e+00> : vector<392x64xf32>
    %67 = tpu.matmul %65, %66, %cst_29 {dimension_numbers = #tpu.dot_dimension_numbers<[1], [0], [0], [1], [0, 0, 1, 1], [], []>} : vector<392x64xbf16>, vector<64x64xbf16>, vector<392x64xf32> -> vector<392x64xf32>
    %68 = arith.addf %63, %67 : vector<392x64xf32>
    %69 = vector.extract_strided_slice %27 {offsets = [16, 0], sizes = [392, 64], strides = [1, 1]} : vector<408x64xf32> to vector<392x64xf32>
    %70 = arith.truncf %69 : vector<392x64xf32> to vector<392x64xbf16>
    %c512 = arith.constant 512 : index
    %c0_30 = arith.constant 0 : index
    %71 = vector.load %arg4[%c512, %c0_30] : memref<576x64xbf16, #tpu.memory_space<vmem>>, vector<64x64xbf16>
    %cst_31 = arith.constant dense<0.000000e+00> : vector<392x64xf32>
    %72 = tpu.matmul %70, %71, %cst_31 {dimension_numbers = #tpu.dot_dimension_numbers<[1], [0], [0], [1], [0, 0, 1, 1], [], []>} : vector<392x64xbf16>, vector<64x64xbf16>, vector<392x64xf32> -> vector<392x64xf32>
    %73 = arith.addf %68, %72 : vector<392x64xf32>
    %c0_32 = arith.constant 0 : index
    %c0_33 = arith.constant 0 : index
    %74 = vector.load %arg5[%c0_32, %c0_33] : memref<1x64xf32, #tpu.memory_space<vmem>>, vector<1x64xf32>
    %75 = vector.broadcast %74 : vector<1x64xf32> to vector<392x64xf32>
    %76 = arith.addf %73, %75 : vector<392x64xf32>
    %cst_34 = arith.constant 0.000000e+00 : f32
    %77 = vector.broadcast %cst_34 : f32 to vector<8x64xf32>
    %78 = tpu.concatenate %76, %77 in 0 : vector<392x64xf32>, vector<8x64xf32> -> vector<400x64xf32>
    %79 = vector.extract_strided_slice %78 {offsets = [0, 0], sizes = [392, 64], strides = [1, 1]} : vector<400x64xf32> to vector<392x64xf32>
    %80 = vector.extract_strided_slice %78 {offsets = [1, 0], sizes = [392, 64], strides = [1, 1]} : vector<400x64xf32> to vector<392x64xf32>
    %81 = arith.maximumf %79, %80 : vector<392x64xf32>
    %82 = tpu.concatenate %81, %77 in 0 : vector<392x64xf32>, vector<8x64xf32> -> vector<400x64xf32>
    %83 = vector.extract_strided_slice %82 {offsets = [0, 0], sizes = [392, 64], strides = [1, 1]} : vector<400x64xf32> to vector<392x64xf32>
    %84 = vector.extract_strided_slice %82 {offsets = [7, 0], sizes = [392, 64], strides = [1, 1]} : vector<400x64xf32> to vector<392x64xf32>
    %85 = arith.maximumf %83, %84 : vector<392x64xf32>
    %86 = vector.shape_cast %85 : vector<392x64xf32> to vector<8x49x64xf32>
    %87 = vector.extract_strided_slice %86 {offsets = [0, 0, 0], sizes = [8, 1, 64], strides = [1, 1, 1]} : vector<8x49x64xf32> to vector<8x1x64xf32>
    %88 = vector.shape_cast %87 : vector<8x1x64xf32> to vector<8x64xf32>
    %89 = vector.extract_strided_slice %86 {offsets = [0, 2, 0], sizes = [8, 1, 64], strides = [1, 1, 1]} : vector<8x49x64xf32> to vector<8x1x64xf32>
    %90 = vector.shape_cast %89 : vector<8x1x64xf32> to vector<8x64xf32>
    %91 = vector.extract_strided_slice %86 {offsets = [0, 14, 0], sizes = [8, 1, 64], strides = [1, 1, 1]} : vector<8x49x64xf32> to vector<8x1x64xf32>
    %92 = vector.shape_cast %91 : vector<8x1x64xf32> to vector<8x64xf32>
    %93 = vector.extract_strided_slice %86 {offsets = [0, 16, 0], sizes = [8, 1, 64], strides = [1, 1, 1]} : vector<8x49x64xf32> to vector<8x1x64xf32>
    %94 = vector.shape_cast %93 : vector<8x1x64xf32> to vector<8x64xf32>
    %95 = tpu.concatenate %88, %90, %92, %94 in 1 : vector<8x64xf32>, vector<8x64xf32>, vector<8x64xf32>, vector<8x64xf32> -> vector<8x256xf32>
    %c0_35 = arith.constant 0 : index
    %c0_36 = arith.constant 0 : index
    %96 = vector.load %arg7[%c0_35, %c0_36] : memref<8x256xf32, #tpu.memory_space<vmem>>, vector<8x256xf32>
    tpu.vector_store %arg7[%c0_35, %c0_36], %95 {strides = array<i32>} : memref<8x256xf32, #tpu.memory_space<vmem>>, vector<8x256xf32>,
    return
  }
  func.func @transform_0(%arg0: i32) -> (i32, i32) {
    %c0_i32 = arith.constant 0 : i32
    %c0_i32_0 = arith.constant 0 : i32
    return %arg0, %c0_i32 : i32, i32
  }
  func.func @transform_1(%arg0: i32) -> (i32, i32) {
    %c0_i32 = arith.constant 0 : i32
    %c0_i32_0 = arith.constant 0 : i32
    %c0_i32_1 = arith.constant 0 : i32
    return %c0_i32, %c0_i32_0 : i32, i32
  }
  func.func @transform_2(%arg0: i32) -> (i32, i32) {
    %c0_i32 = arith.constant 0 : i32
    %c0_i32_0 = arith.constant 0 : i32
    %c0_i32_1 = arith.constant 0 : i32
    return %c0_i32, %c0_i32_0 : i32, i32
  }
  func.func @transform_3(%arg0: i32) -> (i32, i32) {
    %c0_i32 = arith.constant 0 : i32
    %c0_i32_0 = arith.constant 0 : i32
    %c0_i32_1 = arith.constant 0 : i32
    return %c0_i32, %c0_i32_0 : i32, i32
  }
  func.func @transform_4(%arg0: i32) -> (i32, i32) {
    %c0_i32 = arith.constant 0 : i32
    %c0_i32_0 = arith.constant 0 : i32
    %c0_i32_1 = arith.constant 0 : i32
    return %c0_i32, %c0_i32_0 : i32, i32
  }
  func.func @transform_5(%arg0: i32) -> (i32, i32) {
    %c0_i32 = arith.constant 0 : i32
    %c0_i32_0 = arith.constant 0 : i32
    %c0_i32_1 = arith.constant 0 : i32
    return %c0_i32, %c0_i32_0 : i32, i32
  }
  func.func @transform_6(%arg0: i32) -> (i32, i32) {
    %c0_i32 = arith.constant 0 : i32
    %c0_i32_0 = arith.constant 0 : i32
    return %arg0, %c0_i32 : i32, i32
  }
}

</mosaic_0001>

<llo_original>
// kernel: squeeze.3
$region0: #{squeeze.3}
  %s0 = inlined_call_operand.vmem [shape: f32[64,3,3], index: 0, kind: input, shape index: {}]
  %s1 = inlined_call_operand.vmem [shape: f32[64,9], index: 1, kind: output, shape index: {}]
  $region1: #{squeeze.3} parent=0
    #allocation0 [shape = 'u8[12288]{0}', space=vmem, size = 0x3000, scoped, tag = 'scoped mem for input reshape']
    %s3 = sshllo.u32 0, 4
    %s4 = smul.addr 4, 2
    %s5 = scalar_lea.vmem %s0, %s4
    %v6 = vld [vmem:[%s5] sm:%s3]
    %s7 = scalar_lea.vmem [#allocation0], 16
    %8 = vst [vmem:[%s7] sm:%s3] %v6
    %s9 = scalar_lea.vmem %s0, 4
    %v10 = vld [vmem:[%s9] sm:%s3]
    %s11 = scalar_lea.vmem [#allocation0], 8
    %12 = vst [vmem:[%s11] sm:%s3] %v10
    %v13 = vld [vmem:[%s0] sm:%s3]
    %14 = vst [vmem:[#allocation0] sm:%s3] %v13
    %v15 = vld [vmem:[#allocation0] sm:$0x7]
    %vm16 = vcmask 523264
    %17 = vst.msk [vmem:[%s1] sm:$0x7] %vm16, %v15
    %s18 = scalar_lea.vmem [#allocation0], 8
    %v19 = vld [vmem:[%s18] sm:$0x7]
    %vm20 = vcmask 523264
    %s21 = scalar_lea.vmem %s1, 3
    %22 = vst.msk [vmem:[%s21] sm:$0x7] %vm20, %v19
    %s23 = scalar_lea.vmem [#allocation0], 16
    %v24 = vld [vmem:[%s23] sm:$0x7]
    %vm25 = vcmask 523264
    %s26 = scalar_lea.vmem %s1, 6
    %27 = vst.msk [vmem:[%s26] sm:$0x7] %vm25, %v24

// kernel: _lambda_.1
$region0: #{_lambda_.1}
  #allocation0 [shape = 'u32[]', space=smem, size = 0x4, offset = 0x4, fixed_abs, tag = 'smem constant byte address 0x4 - core index']
  #allocation1 [shape = 'u32[144,128]{1,0:T(1,128)}', space=vmem, size = 0x12000, scoped, tag = 'internal scratch']
  %s0 = inlined_call_operand.vmem [shape: bf16[784,64], index: 0, kind: input, shape index: {}]
  %s1 = inlined_call_operand.vmem [shape: bf16[64,256], index: 1, kind: input, shape index: {}]
  %s2 = inlined_call_operand.vmem [shape: f32[1,256], index: 2, kind: input, shape index: {}]
  %s3 = inlined_call_operand.vmem [shape: bf16[576,64], index: 3, kind: input, shape index: {}]
  %s4 = inlined_call_operand.vmem [shape: f32[1,64], index: 4, kind: input, shape index: {}]
  %s5 = inlined_call_operand.vmem [shape: bf16[256,256], index: 5, kind: input, shape index: {}]
  %s6 = inlined_call_operand.vmem [shape: f32[16,256], index: 6, kind: output, shape index: {}]
  %s7 = sld [smem:[#allocation0]]
  $region57: #{_lambda_.1} parent=0
    _
  %s9 = ssub.s32 1, %s7
  %s10 = scalar_select 0, %s9, %s7
  loop: start=0, step=1, limit=4
  $region2: #{_lambda_.1} parent=0 // loop_pre_header
    _
  $region3: #{_lambda_.1} parent=0 // loop_header
    %s12 = sphi 0, %s16
    %p13 = scmp.ge.s32.totalorder %s12, 4
    %s22 = sphi 0, %s24
    %s25 = sphi 0, %s22
    %s26 = sphi 0, %s25
    %s42 = sphi 0, %s26
    %s46 = sphi 0, %s46
    %s48 = sphi 0, %s46
    %s49 = sphi 0, %s48
    %s63 = sphi 0, %s49
    %s67 = sphi 0, %s67
    %s69 = sphi 0, %s67
    %s70 = sphi 0, %s69
    %s84 = sphi 0, %s70
    %s88 = sphi 0, %s88
    %s90 = sphi 0, %s88
    %s91 = sphi 0, %s90
    %s105 = sphi 0, %s91
    %s109 = sphi 0, %s109
    %s111 = sphi 0, %s109
    %s112 = sphi 0, %s111
    %s126 = sphi 0, %s112
    %s130 = sphi 0, %s130
    %s132 = sphi 0, %s130
    %s133 = sphi 0, %s132
    %s147 = sphi 0, %s133
    %s153 = sphi 0, %s155
    %s156 = sphi 0, %s153
    %s157 = sphi 0, %s156
    %s173 = sphi 0, %s157
  $region4: #{_lambda_.1} parent=0 // loop_header_branch
    %15 = sbr.rel (%p13) target = $region8
  $region5: #{_lambda_.1} parent=0 // loop_body
    %s17 = ssub.s32 %s12, 1
    %s18 = ssub.s32 %s12, 2
    %s19 = sadd.s32 %s12, 1
    %s20 = ssub.s32 %s12, %s19
    %p21 = scmp.eq.s32.totalorder %s20, 0
    %s23 = sadd.s32 %s22, 1
    %s24 = scalar_select %p21, %s22, %s23
    %p27 = pneg %p21
    %p28 = scmp.eq.s32.totalorder %s12, 1
    %p29 = por %p27, %p28
    %p30 = scmp.ne.s32.totalorder %s22, %s25
    %p31 = scmp.eq.s32.totalorder %s12, 0
    %p32 = por %p30, %p31
    %p33 = scmp.ne.s32.totalorder %s22, %s25
    %p34 = scmp.eq.s32.totalorder %s17, 1
    %p35 = por %p33, %p34
    %p36 = scmp.ne.s32.totalorder %s25, %s26
    %p37 = scmp.eq.s32.totalorder %s17, 0
    %p38 = por %p36, %p37
    %p39 = scmp.ne.s32.totalorder %s25, %s26
    %p40 = scmp.eq.s32.totalorder %s18, 1
    %p41 = por %p39, %p40
    %p43 = scmp.ne.s32.totalorder %s26, %s42
    %p44 = scmp.eq.s32.totalorder %s18, 0
    %p45 = por %p43, %p44
    %s47 = sadd.s32 %s46, 1
    %p50 = scmp.eq.s32.totalorder %s12, 1
    %p51 = scmp.ne.s32.totalorder %s46, %s48
    %p52 = scmp.eq.s32.totalorder %s12, 0
    %p53 = por %p51, %p52
    %p54 = scmp.ne.s32.totalorder %s46, %s48
    %p55 = scmp.eq.s32.totalorder %s17, 1
    %p56 = por %p54, %p55
    %p57 = scmp.ne.s32.totalorder %s48, %s49
    %p58 = scmp.eq.s32.totalorder %s17, 0
    %p59 = por %p57, %p58
    %p60 = scmp.ne.s32.totalorder %s48, %s49
    %p61 = scmp.eq.s32.totalorder %s18, 1
    %p62 = por %p60, %p61
    %p64 = scmp.ne.s32.totalorder %s49, %s63
    %p65 = scmp.eq.s32.totalorder %s18, 0
    %p66 = por %p64, %p65
    %s68 = sadd.s32 %s67, 1
    %p71 = scmp.eq.s32.totalorder %s12, 1
    %p72 = scmp.ne.s32.totalorder %s67, %s69
    %p73 = scmp.eq.s32.totalorder %s12, 0
    %p74 = por %p72, %p73
    %p75 = scmp.ne.s32.totalorder %s67, %s69
    %p76 = scmp.eq.s32.totalorder %s17, 1
    %p77 = por %p75, %p76
    %p78 = scmp.ne.s32.totalorder %s69, %s70
    %p79 = scmp.eq.s32.totalorder %s17, 0
    %p80 = por %p78, %p79
    %p81 = scmp.ne.s32.totalorder %s69, %s70
    %p82 = scmp.eq.s32.totalorder %s18, 1
    %p83 = por %p81, %p82
    %p85 = scmp.ne.s32.totalorder %s70, %s84
    %p86 = scmp.eq.s32.totalorder %s18, 0
    %p87 = por %p85, %p86
    %s89 = sadd.s32 %s88, 1
    %p92 = scmp.eq.s32.totalorder %s12, 1
    %p93 = scmp.ne.s32.totalorder %s88, %s90
    %p94 = scmp.eq.s32.totalorder %s12, 0
    %p95 = por %p93, %p94
    %p96 = scmp.ne.s32.totalorder %s88, %s90
    %p97 = scmp.eq.s32.totalorder %s17, 1
    %p98 = por %p96, %p97
    %p99 = scmp.ne.s32.totalorder %s90, %s91
    %p100 = scmp.eq.s32.totalorder %s17, 0
    %p101 = por %p99, %p100
    %p102 = scmp.ne.s32.totalorder %s90, %s91
    %p103 = scmp.eq.s32.totalorder %s18, 1
    %p104 = por %p102, %p103
    %p106 = scmp.ne.s32.totalorder %s91, %s105
    %p107 = scmp.eq.s32.totalorder %s18, 0
    %p108 = por %p106, %p107
    %s110 = sadd.s32 %s109, 1
    %p113 = scmp.eq.s32.totalorder %s12, 1
    %p114 = scmp.ne.s32.totalorder %s109, %s111
    %p115 = scmp.eq.s32.totalorder %s12, 0
    %p116 = por %p114, %p115
    %p117 = scmp.ne.s32.totalorder %s109, %s111
    %p118 = scmp.eq.s32.totalorder %s17, 1
    %p119 = por %p117, %p118
    %p120 = scmp.ne.s32.totalorder %s111, %s112
    %p121 = scmp.eq.s32.totalorder %s17, 0
    %p122 = por %p120, %p121
    %p123 = scmp.ne.s32.totalorder %s111, %s112
    %p124 = scmp.eq.s32.totalorder %s18, 1
    %p125 = por %p123, %p124
    %p127 = scmp.ne.s32.totalorder %s112, %s126
    %p128 = scmp.eq.s32.totalorder %s18, 0
    %p129 = por %p127, %p128
    %s131 = sadd.s32 %s130, 1
    %p134 = scmp.eq.s32.totalorder %s12, 1
    %p135 = scmp.ne.s32.totalorder %s130, %s132
    %p136 = scmp.eq.s32.totalorder %s12, 0
    %p137 = por %p135, %p136
    %p138 = scmp.ne.s32.totalorder %s130, %s132
    %p139 = scmp.eq.s32.totalorder %s17, 1
    %p140 = por %p138, %p139
    %p141 = scmp.ne.s32.totalorder %s132, %s133
    %p142 = scmp.eq.s32.totalorder %s17, 0
    %p143 = por %p141, %p142
    %p144 = scmp.ne.s32.totalorder %s132, %s133
    %p145 = scmp.eq.s32.totalorder %s18, 1
    %p146 = por %p144, %p145
    %p148 = scmp.ne.s32.totalorder %s133, %s147
    %p149 = scmp.eq.s32.totalorder %s18, 0
    %p150 = por %p148, %p149
    %s151 = ssub.s32 %s12, %s19
    %p152 = scmp.eq.s32.totalorder %s151, 0
    %s154 = sadd.s32 %s153, 1
    %s155 = scalar_select %p152, %s153, %s154
    %p158 = pneg %p152
    %p159 = scmp.eq.s32.totalorder %s12, 1
    %p160 = por %p158, %p159
    %p161 = scmp.ne.s32.totalorder %s153, %s156
    %p162 = scmp.eq.s32.totalorder %s12, 0
    %p163 = por %p161, %p162
    %p164 = scmp.ne.s32.totalorder %s153, %s156
    %p165 = scmp.eq.s32.totalorder %s17, 1
    %p166 = por %p164, %p165
    %p167 = scmp.ne.s32.totalorder %s156, %s157
    %p168 = scmp.eq.s32.totalorder %s17, 0
    %p169 = por %p167, %p168
    %p170 = scmp.ne.s32.totalorder %s156, %s157
    %p171 = scmp.eq.s32.totalorder %s18, 1
    %p172 = por %p170, %p171
    %p174 = scmp.ne.s32.totalorder %s157, %s173
    %p175 = scmp.eq.s32.totalorder %s18, 0
    %p176 = por %p174, %p175
    %p177 = scmp.le.s32.totalorder 1, %s12
    %p178 = scmp.lt.s32.totalorder %s12, 3
    %p179 = pnand %p177, %p178
    %p180 = pneg %p179
    // Predicated region
    $region9: #{_lambda_.1} parent=5 // pred_check
      _
    $region10: #{_lambda_.1} parent=5 // pred_check_branch
      %182 = sbr.rel (%p179) target = $region12
    $region11: #{_lambda_.1} parent=5 // pred_region
      %s183 = ssub.s32 %s12, 1
      // Predicated region
      $region13: #{_lambda_.1} parent=11 // pred_check
        %p184 = pneg %p59
      $region14: #{_lambda_.1} parent=11 // pred_check_branch
        %186 = sbr.rel (%p184) target = $region16
      $region15: #{_lambda_.1} parent=11 // pred_region
        _
      $region16: #{_lambda_.1} parent=11 // pred_fallthru
        _
      // Predicated region
      $region17: #{_lambda_.1} parent=11 // pred_check
        %p187 = pneg %p80
      $region18: #{_lambda_.1} parent=11 // pred_check_branch
        %189 = sbr.rel (%p187) target = $region20
      $region19: #{_lambda_.1} parent=11 // pred_region
        _
      $region20: #{_lambda_.1} parent=11 // pred_fallthru
        _
      // Predicated region
      $region21: #{_lambda_.1} parent=11 // pred_check
        %p190 = pneg %p101
      $region22: #{_lambda_.1} parent=11 // pred_check_branch
        %192 = sbr.rel (%p190) target = $region24
      $region23: #{_lambda_.1} parent=11 // pred_region
        _
      $region24: #{_lambda_.1} parent=11 // pred_fallthru
        _
      // Predicated region
      $region25: #{_lambda_.1} parent=11 // pred_check
        %p193 = pneg %p122
      $region26: #{_lambda_.1} parent=11 // pred_check_branch
        %195 = sbr.rel (%p193) target = $region28
      $region27: #{_lambda_.1} parent=11 // pred_region
        _
      $region28: #{_lambda_.1} parent=11 // pred_fallthru
        _
      // Predicated region
      $region29: #{_lambda_.1} parent=11 // pred_check
        %p196 = pneg %p143
      $region30: #{_lambda_.1} parent=11 // pred_check_branch
        %198 = sbr.rel (%p196) target = $region32
      $region31: #{_lambda_.1} parent=11 // pred_region
        _
      $region32: #{_lambda_.1} parent=11 // pred_fallthru
        _
    $region12: #{_lambda_.1} parent=5 // pred_fallthru
      _
    %p199 = scmp.lt.s32.totalorder %s12, 2
    // Predicated region
    $region33: #{_lambda_.1} parent=5 // pred_check
      %p200 = pneg %p199
    $region34: #{_lambda_.1} parent=5 // pred_check_branch
      %202 = sbr.rel (%p200) target = $region36
    $region35: #{_lambda_.1} parent=5 // pred_region
      // Predicated region
      $region37: #{_lambda_.1} parent=35 // pred_check
        %p203 = pneg %p32
      $region38: #{_lambda_.1} parent=35 // pred_check_branch
        %205 = sbr.rel (%p203) target = $region40
      $region39: #{_lambda_.1} parent=35 // pred_region
        %s206 = smul.u32 49, %s12
        %p207 = scmp.lt.s32.totalorder %s206, 97
        %s208 = scalar_select %p207, %s206, 97
        %s209 = smul.addr %s208, 4
        %s210 = scalar_lea.vmem %s0, %s209
        %s211 = smul.u32 49, %s12
      $region40: #{_lambda_.1} parent=35 // pred_fallthru
        _
    $region36: #{_lambda_.1} parent=5 // pred_fallthru
      _
    %p212 = scmp.le.s32.totalorder 1, %s12
    %p213 = scmp.lt.s32.totalorder %s12, 3
    %p214 = pnand %p212, %p213
    %p215 = pneg %p214
    // Predicated region
    $region41: #{_lambda_.1} parent=5 // pred_check
      _
    $region42: #{_lambda_.1} parent=5 // pred_check_branch
      %217 = sbr.rel (%p214) target = $region44
    $region43: #{_lambda_.1} parent=5 // pred_region
      %s218 = ssub.s32 %s12, 1
      %s219 = smul.u32 49, %s17
      %p220 = scmp.lt.s32.totalorder %s219, 97
      %s221 = scalar_select %p220, %s219, 97
      %s222 = smul.addr %s221, 4
      %s223 = scalar_lea.vmem %s0, %s222
      %p224 = pneg %p38
      %p225 = pneg %p35
      %p226 = pneg %p59
      %p227 = pneg %p56
      %p228 = pneg %p80
      %p229 = pneg %p77
      %p230 = pneg %p101
      %p231 = pneg %p98
      %p232 = pneg %p122
      %p233 = pneg %p119
      %p234 = pneg %p143
      %p235 = pneg %p140
      %p236 = pneg %p169
      %p237 = pneg %p166
      %p238 = scmp.lt.s32.totalorder %s17, 1
      %s239 = scalar_select %p238, %s17, 1
      %s240 = smul.addr %s239, 2
      %s241 = smul.addr %s240, 8
      %s242 = scalar_lea.vmem %s6, %s241
      %s243 = smul.u32 49, %s17
      %p244 = scmp.lt.s32.totalorder %s243, 97
      %s245 = scalar_select %p244, %s243, 97
      %s246 = smul.addr %s245, 4
      %s247 = scalar_lea.vmem %s0, %s246
      %s248 = smul.u32 49, %s17
      %p249 = scmp.lt.s32.totalorder %s17, 1
      %s250 = scalar_select %p249, %s17, 1
      %s251 = smul.addr %s250, 2
      %s252 = smul.addr %s251, 8
      %s253 = scalar_lea.vmem %s6, %s252
      %v255 = vld [vmem:[%s247] sm:$0xf]
      %v256 = vld [vmem:[%s247 + $0x4] sm:$0xf]
      %v257 = vld [vmem:[%s247 + $0x8] sm:$0xf]
      %v258 = vld [vmem:[%s247 + $0xc] sm:$0xf]
      %v259 = vld [vmem:[%s247 + $0x10] sm:$0xf]
      %v260 = vld [vmem:[%s247 + $0x14] sm:$0xf]
      %v261 = vld [vmem:[%s247 + $0x18] sm:$0xf]
      %v262 = vld [vmem:[%s247 + $0x1c] sm:$0xf]
      %v263 = vld [vmem:[%s247 + $0x20] sm:$0xf]
      %v264 = vld [vmem:[%s247 + $0x24] sm:$0xf]
      %v265 = vld [vmem:[%s247 + $0x28] sm:$0xf]
      %v266 = vld [vmem:[%s247 + $0x2c] sm:$0xf]
      %v267 = vld [vmem:[%s247 + $0x30] sm:$0xf]
      %v268 = vld [vmem:[%s247 + $0x34] sm:$0xf]
      %v269 = vld [vmem:[%s247 + $0x38] sm:$0xf]
      %v270 = vld [vmem:[%s247 + $0x3c] sm:$0xf]
      %v271 = vld [vmem:[%s247 + $0x40] sm:$0xf]
      %v272 = vld [vmem:[%s247 + $0x44] sm:$0xf]
      %v273 = vld [vmem:[%s247 + $0x48] sm:$0xf]
      %v274 = vld [vmem:[%s247 + $0x4c] sm:$0xf]
      %v275 = vld [vmem:[%s247 + $0x50] sm:$0xf]
      %v276 = vld [vmem:[%s247 + $0x54] sm:$0xf]
      %v277 = vld [vmem:[%s247 + $0x58] sm:$0xf]
      %v278 = vld [vmem:[%s247 + $0x5c] sm:$0xf]
      %v279 = vld [vmem:[%s247 + $0x60] sm:$0xf]
      %v280 = vld [vmem:[%s247 + $0x64] sm:$0xf]
      %v281 = vld [vmem:[%s247 + $0x68] sm:$0xf]
      %v282 = vld [vmem:[%s247 + $0x6c] sm:$0xf]
      %v283 = vld [vmem:[%s247 + $0x70] sm:$0xf]
      %v284 = vld [vmem:[%s247 + $0x74] sm:$0xf]
      %v285 = vld [vmem:[%s247 + $0x78] sm:$0xf]
      %v286 = vld [vmem:[%s247 + $0x7c] sm:$0xf]
      %v287 = vld [vmem:[%s247 + $0x80] sm:$0xf]
      %v288 = vld [vmem:[%s247 + $0x84] sm:$0xf]
      %v289 = vld [vmem:[%s247 + $0x88] sm:$0xf]
      %v290 = vld [vmem:[%s247 + $0x8c] sm:$0xf]
      %v291 = vld [vmem:[%s247 + $0x90] sm:$0xf]
      %v292 = vld [vmem:[%s247 + $0x94] sm:$0xf]
      %v293 = vld [vmem:[%s247 + $0x98] sm:$0xf]
      %v294 = vld [vmem:[%s247 + $0x9c] sm:$0xf]
      %v295 = vld [vmem:[%s247 + $0xa0] sm:$0xf]
      %v296 = vld [vmem:[%s247 + $0xa4] sm:$0xf]
      %v297 = vld [vmem:[%s247 + $0xa8] sm:$0xf]
      %v298 = vld [vmem:[%s247 + $0xac] sm:$0xf]
      %v299 = vld [vmem:[%s247 + $0xb0] sm:$0xf]
      %v300 = vld [vmem:[%s247 + $0xb4] sm:$0xf]
      %v301 = vld [vmem:[%s247 + $0xb8] sm:$0xf]
      %v302 = vld [vmem:[%s247 + $0xbc] sm:$0xf]
      %v303 = vld [vmem:[%s247 + $0xc0] sm:$0xf]
      %v304 = vld [vmem:[%s1] sm:$0xff]
      %v305 = vld [vmem:[%s1 + $0x8] sm:$0xff]
      %v306 = vld [vmem:[%s1 + $0x10] sm:$0xff]
      %v307 = vld [vmem:[%s1 + $0x18] sm:$0xff]
      %v308 = vld [vmem:[%s1 + $0x20] sm:$0xff]
      %v309 = vld [vmem:[%s1 + $0x28] sm:$0xff]
      %v310 = vld [vmem:[%s1 + $0x30] sm:$0xff]
      %v311 = vld [vmem:[%s1 + $0x38] sm:$0xff]
      %v312 = vld [vmem:[%s2] sm:$0x3]
      %v314 = vlaneseq
      %v315 = vshrl.u32 %v314, 7
      %v316 = vsub.s32 0, %v315
      %v317 = vrot.slane %v312, %v316
      %v318 = vlaneseq
      %v319 = vshrl.u32 %v318, 7
      %v320 = vsub.s32 1, %v319
      %v321 = vrot.slane %v312, %v320
      %v373 = vunpack.c.l.b16 %v255
      %v374 = vunpack.c.l.b16 %v256
      %v375 = vunpack.c.l.b16 %v257
      %v376 = vunpack.c.l.b16 %v258
      %v377 = vunpack.c.l.b16 %v259
      %v378 = vunpack.c.l.b16 %v260
      %v379 = vunpack.c.l.b16 %v261
      %v380 = vunpack.c.l.b16 %v262
      %v381 = vunpack.c.l.b16 %v263
      %v382 = vunpack.c.l.b16 %v264
      %v383 = vunpack.c.l.b16 %v265
      %v384 = vunpack.c.l.b16 %v266
      %v385 = vunpack.c.l.b16 %v267
      %v386 = vunpack.c.l.b16 %v268
      %v387 = vunpack.c.l.b16 %v269
      %v388 = vunpack.c.l.b16 %v270
      %v389 = vunpack.c.l.b16 %v271
      %v390 = vunpack.c.l.b16 %v272
      %v391 = vunpack.c.l.b16 %v273
      %v392 = vunpack.c.l.b16 %v274
      %v393 = vunpack.c.l.b16 %v275
      %v394 = vunpack.c.l.b16 %v276
      %v395 = vunpack.c.l.b16 %v277
      %v396 = vunpack.c.l.b16 %v278
      %v397 = vunpack.c.l.b16 %v279
      %v398 = vunpack.c.l.b16 %v280
      %v399 = vunpack.c.l.b16 %v281
      %v400 = vunpack.c.l.b16 %v282
      %v401 = vunpack.c.l.b16 %v283
      %v402 = vunpack.c.l.b16 %v284
      %v403 = vunpack.c.l.b16 %v285
      %v404 = vunpack.c.l.b16 %v286
      %v405 = vunpack.c.l.b16 %v287
      %v406 = vunpack.c.l.b16 %v288
      %v407 = vunpack.c.l.b16 %v289
      %v408 = vunpack.c.l.b16 %v290
      %v409 = vunpack.c.l.b16 %v291
      %v410 = vunpack.c.l.b16 %v292
      %v411 = vunpack.c.l.b16 %v293
      %v412 = vunpack.c.l.b16 %v294
      %v413 = vunpack.c.l.b16 %v295
      %v414 = vunpack.c.l.b16 %v296
      %v415 = vunpack.c.l.b16 %v297
      %v416 = vunpack.c.l.b16 %v298
      %v417 = vunpack.c.l.b16 %v299
      %v418 = vunpack.c.l.b16 %v300
      %v419 = vunpack.c.l.b16 %v301
      %v420 = vunpack.c.l.b16 %v302
      %v421 = vunpack.c.l.b16 %v303
      %v422 = vpack.c.b16 %v374, %v373
      %v423 = vpack.c.b16 %v376, %v375
      %v424 = vpack.c.b16 %v378, %v377
      %v425 = vpack.c.b16 %v380, %v379
      %v426 = vpack.c.b16 %v382, %v381
      %v427 = vpack.c.b16 %v384, %v383
      %v428 = vpack.c.b16 %v386, %v385
      %v429 = vpack.c.b16 %v388, %v387
      %v430 = vpack.c.b16 %v390, %v389
      %v431 = vpack.c.b16 %v392, %v391
      %v432 = vpack.c.b16 %v394, %v393
      %v433 = vpack.c.b16 %v396, %v395
      %v434 = vpack.c.b16 %v398, %v397
      %v435 = vpack.c.b16 %v400, %v399
      %v436 = vpack.c.b16 %v402, %v401
      %v437 = vpack.c.b16 %v404, %v403
      %v438 = vpack.c.b16 %v406, %v405
      %v439 = vpack.c.b16 %v408, %v407
      %v440 = vpack.c.b16 %v410, %v409
      %v441 = vpack.c.b16 %v412, %v411
      %v442 = vpack.c.b16 %v414, %v413
      %v443 = vpack.c.b16 %v416, %v415
      %v444 = vpack.c.b16 %v418, %v417
      %v445 = vpack.c.b16 %v420, %v419
      %v446 = vpack.c.b16 %v421, %v421
      %v455 = vunpack.c.l.b16 %v304
      %v456 = vunpack.c.h.b16 %v304
      %v457 = vunpack.c.l.b16 %v305
      %v458 = vunpack.c.h.b16 %v305
      %v459 = vunpack.c.l.b16 %v306
      %v460 = vunpack.c.h.b16 %v306
      %v461 = vunpack.c.l.b16 %v307
      %v462 = vunpack.c.h.b16 %v307
      %v463 = vunpack.c.l.b16 %v308
      %v464 = vunpack.c.h.b16 %v308
      %v465 = vunpack.c.l.b16 %v309
      %v466 = vunpack.c.h.b16 %v309
      %v467 = vunpack.c.l.b16 %v310
      %v468 = vunpack.c.h.b16 %v310
      %v469 = vunpack.c.l.b16 %v311
      %v470 = vunpack.c.h.b16 %v311
      %v471 = vpack.c.b16 %v457, %v455
      %v472 = vpack.c.b16 %v458, %v456
      %v473 = vpack.c.b16 %v461, %v459
      %v474 = vpack.c.b16 %v462, %v460
      %v475 = vpack.c.b16 %v465, %v463
      %v476 = vpack.c.b16 %v466, %v464
      %v477 = vpack.c.b16 %v469, %v467
      %v478 = vpack.c.b16 %v470, %v468
      %vm487 = vcmask 523264
      %v489 = vsel %vm487, %v422, 0
      %v492 = vsel %vm487, %v423, 0
      %v495 = vsel %vm487, %v424, 0
      %v498 = vsel %vm487, %v425, 0
      %v501 = vsel %vm487, %v426, 0
      %v504 = vsel %vm487, %v427, 0
      %v507 = vsel %vm487, %v428, 0
      %v510 = vsel %vm487, %v429, 0
      %v513 = vsel %vm487, %v430, 0
      %v516 = vsel %vm487, %v431, 0
      %v519 = vsel %vm487, %v432, 0
      %v522 = vsel %vm487, %v433, 0
      %v525 = vsel %vm487, %v434, 0
      %v528 = vsel %vm487, %v435, 0
      %v531 = vsel %vm487, %v436, 0
      %v534 = vsel %vm487, %v437, 0
      %v537 = vsel %vm487, %v438, 0
      %v540 = vsel %vm487, %v439, 0
      %v543 = vsel %vm487, %v440, 0
      %v546 = vsel %vm487, %v441, 0
      %v549 = vsel %vm487, %v442, 0
      %v552 = vsel %vm487, %v443, 0
      %v555 = vsel %vm487, %v444, 0
      %v558 = vsel %vm487, %v445, 0
      %v561 = vsel %vm487, %v446, 0
      %563 = vmatprep.subr.bf16.mxu0 %v472
      %564 = vmatpush1.bf16.msra.mxu0 %v471
      %565 = vmatprep.subr.bf16.mxu0 %v474
      %566 = vmatpush1.bf16.msra.mxu0 %v473
      %567 = vmatprep.subr.bf16.mxu0 %v476
      %568 = vmatpush1.bf16.msra.mxu0 %v475
      %569 = vmatprep.subr.bf16.mxu0 %v478
      %570 = vmatpush1.bf16.msra.mxu0 %v477
      %571 = vmatprep.subr.bf16.mxu0 0
      %572 = vmatpush1.bf16.msra.mxu0 0
      %573 = vmatprep.subr.bf16.mxu0 0
      %574 = vmatpush1.bf16.msra.mxu0 0
      %575 = vmatprep.subr.bf16.mxu0 0
      %576 = vmatpush1.bf16.msra.mxu0 0
      %577 = vmatprep.subr.bf16.mxu0 0
      %578 = vmatpush1.bf16.msra.mxu0 0
      %579 = vmatprep.subr.bf16.mxu0 0
      %580 = vmatpush1.bf16.msra.mxu0 0
      %581 = vmatprep.subr.bf16.mxu0 0
      %582 = vmatpush1.bf16.msra.mxu0 0
      %583 = vmatprep.subr.bf16.mxu0 0
      %584 = vmatpush1.bf16.msra.mxu0 0
      %585 = vmatprep.subr.bf16.mxu0 0
      %586 = vmatpush1.bf16.msra.mxu0 0
      %587 = vmatprep.subr.bf16.mxu0 0
      %588 = vmatpush1.bf16.msra.mxu0 0
      %589 = vmatprep.subr.bf16.mxu0 0
      %590 = vmatpush1.bf16.msra.mxu0 0
      %591 = vmatprep.subr.bf16.mxu0 0
      %592 = vmatpush1.bf16.msra.mxu0 0
      %593 = vmatprep.subr.bf16.mxu0 0
      %594 = vmatpush1.bf16.msra.mxu0 0
      %595 = vmatprep.mubr.bf16.mxu0 0
      %596 = vmatmul.mubr.bf16.gmra.mrb[0].mxu0 %v489
      %v597 = vpop.f32.mrb[0].mxu0
      %v598 = vadd.f32 %v317, %v597
      %v599 = vpop.f32.mrb[0].mxu0
      %v600 = vadd.f32 %v321, %v599
      %v601 = vpop.f32.mrb[0].mxu0
      %v602 = vadd.f32 %v317, %v601
      %v603 = vpop.f32.mrb[0].mxu0
      %v604 = vadd.f32 %v321, %v603
      %605 = vmatprep.mubr.bf16.mxu0 0
      %606 = vmatmul.mubr.bf16.gmra.mrb[0].mxu0 %v492
      %v607 = vpop.f32.mrb[0].mxu0
      %v608 = vadd.f32 %v317, %v607
      %v609 = vpop.f32.mrb[0].mxu0
      %v610 = vadd.f32 %v321, %v609
      %v611 = vpop.f32.mrb[0].mxu0
      %v612 = vadd.f32 %v317, %v611
      %v613 = vpop.f32.mrb[0].mxu0
      %v614 = vadd.f32 %v321, %v613
      %615 = vmatprep.mubr.bf16.mxu0 0
      %616 = vmatmul.mubr.bf16.gmra.mrb[0].mxu0 %v495
      %v617 = vpop.f32.mrb[0].mxu0
      %v618 = vadd.f32 %v317, %v617
      %v619 = vpop.f32.mrb[0].mxu0
      %v620 = vadd.f32 %v321, %v619
      %v621 = vpop.f32.mrb[0].mxu0
      %v622 = vadd.f32 %v317, %v621
      %v623 = vpop.f32.mrb[0].mxu0
      %v624 = vadd.f32 %v321, %v623
      %625 = vmatprep.mubr.bf16.mxu0 0
      %626 = vmatmul.mubr.bf16.gmra.mrb[0].mxu0 %v498
      %v627 = vpop.f32.mrb[0].mxu0
      %v628 = vadd.f32 %v317, %v627
      %v629 = vpop.f32.mrb[0].mxu0
      %v630 = vadd.f32 %v321, %v629
      %v631 = vpop.f32.mrb[0].mxu0
      %v632 = vadd.f32 %v317, %v631
      %v633 = vpop.f32.mrb[0].mxu0
      %v634 = vadd.f32 %v321, %v633
      %635 = vmatprep.mubr.bf16.mxu0 0
      %636 = vmatmul.mubr.bf16.gmra.mrb[0].mxu0 %v501
      %v637 = vpop.f32.mrb[0].mxu0
      %v638 = vadd.f32 %v317, %v637
      %v639 = vpop.f32.mrb[0].mxu0
      %v640 = vadd.f32 %v321, %v639
      %v641 = vpop.f32.mrb[0].mxu0
      %v642 = vadd.f32 %v317, %v641
      %v643 = vpop.f32.mrb[0].mxu0
      %v644 = vadd.f32 %v321, %v643
      %645 = vmatprep.mubr.bf16.mxu0 0
      %646 = vmatmul.mubr.bf16.gmra.mrb[0].mxu0 %v504
      %v647 = vpop.f32.mrb[0].mxu0
      %v648 = vadd.f32 %v317, %v647
      %v649 = vpop.f32.mrb[0].mxu0
      %v650 = vadd.f32 %v321, %v649
      %v651 = vpop.f32.mrb[0].mxu0
      %v652 = vadd.f32 %v317, %v651
      %v653 = vpop.f32.mrb[0].mxu0
      %v654 = vadd.f32 %v321, %v653
      %655 = vmatprep.mubr.bf16.mxu0 0
      %656 = vmatmul.mubr.bf16.gmra.mrb[0].mxu0 %v507
      %v657 = vpop.f32.mrb[0].mxu0
      %v658 = vadd.f32 %v317, %v657
      %v659 = vpop.f32.mrb[0].mxu0
      %v660 = vadd.f32 %v321, %v659
      %v661 = vpop.f32.mrb[0].mxu0
      %v662 = vadd.f32 %v317, %v661
      %v663 = vpop.f32.mrb[0].mxu0
      %v664 = vadd.f32 %v321, %v663
      %665 = vmatprep.mubr.bf16.mxu0 0
      %666 = vmatmul.mubr.bf16.gmra.mrb[0].mxu0 %v510
      %v667 = vpop.f32.mrb[0].mxu0
      %v668 = vadd.f32 %v317, %v667
      %v669 = vpop.f32.mrb[0].mxu0
      %v670 = vadd.f32 %v321, %v669
      %v671 = vpop.f32.mrb[0].mxu0
      %v672 = vadd.f32 %v317, %v671
      %v673 = vpop.f32.mrb[0].mxu0
      %v674 = vadd.f32 %v321, %v673
      %675 = vmatprep.mubr.bf16.mxu0 0
      %676 = vmatmul.mubr.bf16.gmra.mrb[0].mxu0 %v513
      %v677 = vpop.f32.mrb[0].mxu0
      %v678 = vadd.f32 %v317, %v677
      %v679 = vpop.f32.mrb[0].mxu0
      %v680 = vadd.f32 %v321, %v679
      %v681 = vpop.f32.mrb[0].mxu0
      %v682 = vadd.f32 %v317, %v681
      %v683 = vpop.f32.mrb[0].mxu0
      %v684 = vadd.f32 %v321, %v683
      %685 = vmatprep.mubr.bf16.mxu0 0
      %686 = vmatmul.mubr.bf16.gmra.mrb[0].mxu0 %v516
      %v687 = vpop.f32.mrb[0].mxu0
      %v688 = vadd.f32 %v317, %v687
      %v689 = vpop.f32.mrb[0].mxu0
      %v690 = vadd.f32 %v321, %v689
      %v691 = vpop.f32.mrb[0].mxu0
      %v692 = vadd.f32 %v317, %v691
      %v693 = vpop.f32.mrb[0].mxu0
      %v694 = vadd.f32 %v321, %v693
      %695 = vmatprep.mubr.bf16.mxu0 0
      %696 = vmatmul.mubr.bf16.gmra.mrb[0].mxu0 %v519
      %v697 = vpop.f32.mrb[0].mxu0
      %v698 = vadd.f32 %v317, %v697
      %v699 = vpop.f32.mrb[0].mxu0
      %v700 = vadd.f32 %v321, %v699
      %v701 = vpop.f32.mrb[0].mxu0
      %v702 = vadd.f32 %v317, %v701
      %v703 = vpop.f32.mrb[0].mxu0
      %v704 = vadd.f32 %v321, %v703
      %705 = vmatprep.mubr.bf16.mxu0 0
      %706 = vmatmul.mubr.bf16.gmra.mrb[0].mxu0 %v522
      %v707 = vpop.f32.mrb[0].mxu0
      %v708 = vadd.f32 %v317, %v707
      %v709 = vpop.f32.mrb[0].mxu0
      %v710 = vadd.f32 %v321, %v709
      %v711 = vpop.f32.mrb[0].mxu0
      %v712 = vadd.f32 %v317, %v711
      %v713 = vpop.f32.mrb[0].mxu0
      %v714 = vadd.f32 %v321, %v713
      %715 = vmatprep.mubr.bf16.mxu0 0
      %716 = vmatmul.mubr.bf16.gmra.mrb[0].mxu0 %v525
      %v717 = vpop.f32.mrb[0].mxu0
      %v718 = vadd.f32 %v317, %v717
      %v719 = vpop.f32.mrb[0].mxu0
      %v720 = vadd.f32 %v321, %v719
      %v721 = vpop.f32.mrb[0].mxu0
      %v722 = vadd.f32 %v317, %v721
      %v723 = vpop.f32.mrb[0].mxu0
      %v724 = vadd.f32 %v321, %v723
      %725 = vmatprep.mubr.bf16.mxu0 0
      %726 = vmatmul.mubr.bf16.gmra.mrb[0].mxu0 %v528
      %v727 = vpop.f32.mrb[0].mxu0
      %v728 = vadd.f32 %v317, %v727
      %v729 = vpop.f32.mrb[0].mxu0
      %v730 = vadd.f32 %v321, %v729
      %v731 = vpop.f32.mrb[0].mxu0
      %v732 = vadd.f32 %v317, %v731
      %v733 = vpop.f32.mrb[0].mxu0
      %v734 = vadd.f32 %v321, %v733
      %735 = vmatprep.mubr.bf16.mxu0 0
      %736 = vmatmul.mubr.bf16.gmra.mrb[0].mxu0 %v531
      %v737 = vpop.f32.mrb[0].mxu0
      %v738 = vadd.f32 %v317, %v737
      %v739 = vpop.f32.mrb[0].mxu0
      %v740 = vadd.f32 %v321, %v739
      %v741 = vpop.f32.mrb[0].mxu0
      %v742 = vadd.f32 %v317, %v741
      %v743 = vpop.f32.mrb[0].mxu0
      %v744 = vadd.f32 %v321, %v743
      %745 = vmatprep.mubr.bf16.mxu0 0
      %746 = vmatmul.mubr.bf16.gmra.mrb[0].mxu0 %v534
      %v747 = vpop.f32.mrb[0].mxu0
      %v748 = vadd.f32 %v317, %v747
      %v749 = vpop.f32.mrb[0].mxu0
      %v750 = vadd.f32 %v321, %v749
      %v751 = vpop.f32.mrb[0].mxu0
      %v752 = vadd.f32 %v317, %v751
      %v753 = vpop.f32.mrb[0].mxu0
      %v754 = vadd.f32 %v321, %v753
      %755 = vmatprep.mubr.bf16.mxu0 0
      %756 = vmatmul.mubr.bf16.gmra.mrb[0].mxu0 %v537
      %v757 = vpop.f32.mrb[0].mxu0
      %v758 = vadd.f32 %v317, %v757
      %v759 = vpop.f32.mrb[0].mxu0
      %v760 = vadd.f32 %v321, %v759
      %v761 = vpop.f32.mrb[0].mxu0
      %v762 = vadd.f32 %v317, %v761
      %v763 = vpop.f32.mrb[0].mxu0
      %v764 = vadd.f32 %v321, %v763
      %765 = vmatprep.mubr.bf16.mxu0 0
      %766 = vmatmul.mubr.bf16.gmra.mrb[0].mxu0 %v540
      %v767 = vpop.f32.mrb[0].mxu0
      %v768 = vadd.f32 %v317, %v767
      %v769 = vpop.f32.mrb[0].mxu0
      %v770 = vadd.f32 %v321, %v769
      %v771 = vpop.f32.mrb[0].mxu0
      %v772 = vadd.f32 %v317, %v771
      %v773 = vpop.f32.mrb[0].mxu0
      %v774 = vadd.f32 %v321, %v773
      %775 = vmatprep.mubr.bf16.mxu0 0
      %776 = vmatmul.mubr.bf16.gmra.mrb[0].mxu0 %v543
      %v777 = vpop.f32.mrb[0].mxu0
      %v778 = vadd.f32 %v317, %v777
      %v779 = vpop.f32.mrb[0].mxu0
      %v780 = vadd.f32 %v321, %v779
      %v781 = vpop.f32.mrb[0].mxu0
      %v782 = vadd.f32 %v317, %v781
      %v783 = vpop.f32.mrb[0].mxu0
      %v784 = vadd.f32 %v321, %v783
      %785 = vmatprep.mubr.bf16.mxu0 0
      %786 = vmatmul.mubr.bf16.gmra.mrb[0].mxu0 %v546
      %v787 = vpop.f32.mrb[0].mxu0
      %v788 = vadd.f32 %v317, %v787
      %v789 = vpop.f32.mrb[0].mxu0
      %v790 = vadd.f32 %v321, %v789
      %v791 = vpop.f32.mrb[0].mxu0
      %v792 = vadd.f32 %v317, %v791
      %v793 = vpop.f32.mrb[0].mxu0
      %v794 = vadd.f32 %v321, %v793
      %795 = vmatprep.mubr.bf16.mxu0 0
      %796 = vmatmul.mubr.bf16.gmra.mrb[0].mxu0 %v549
      %v797 = vpop.f32.mrb[0].mxu0
      %v798 = vadd.f32 %v317, %v797
      %v799 = vpop.f32.mrb[0].mxu0
      %v800 = vadd.f32 %v321, %v799
      %v801 = vpop.f32.mrb[0].mxu0
      %v802 = vadd.f32 %v317, %v801
      %v803 = vpop.f32.mrb[0].mxu0
      %v804 = vadd.f32 %v321, %v803
      %805 = vmatprep.mubr.bf16.mxu0 0
      %806 = vmatmul.mubr.bf16.gmra.mrb[0].mxu0 %v552
      %v807 = vpop.f32.mrb[0].mxu0
      %v808 = vadd.f32 %v317, %v807
      %v809 = vpop.f32.mrb[0].mxu0
      %v810 = vadd.f32 %v321, %v809
      %v811 = vpop.f32.mrb[0].mxu0
      %v812 = vadd.f32 %v317, %v811
      %v813 = vpop.f32.mrb[0].mxu0
      %v814 = vadd.f32 %v321, %v813
      %815 = vmatprep.mubr.bf16.mxu0 0
      %816 = vmatmul.mubr.bf16.gmra.mrb[0].mxu0 %v555
      %v817 = vpop.f32.mrb[0].mxu0
      %v818 = vadd.f32 %v317, %v817
      %v819 = vpop.f32.mrb[0].mxu0
      %v820 = vadd.f32 %v321, %v819
      %v821 = vpop.f32.mrb[0].mxu0
      %v822 = vadd.f32 %v317, %v821
      %v823 = vpop.f32.mrb[0].mxu0
      %v824 = vadd.f32 %v321, %v823
      %825 = vmatprep.mubr.bf16.mxu0 0
      %826 = vmatmul.mubr.bf16.gmra.mrb[0].mxu0 %v558
      %v827 = vpop.f32.mrb[0].mxu0
      %v828 = vadd.f32 %v317, %v827
      %v829 = vpop.f32.mrb[0].mxu0
      %v830 = vadd.f32 %v321, %v829
      %v831 = vpop.f32.mrb[0].mxu0
      %v832 = vadd.f32 %v317, %v831
      %v833 = vpop.f32.mrb[0].mxu0
      %v834 = vadd.f32 %v321, %v833
      %835 = vmatprep.mubr.bf16.mxu0 0
      %836 = vmatmul.mubr.bf16.gmra.mrb[0].mxu0 %v561
      %v837 = vpop.f32.mrb[0].mxu0
      %v838 = vadd.f32 %v317, %v837
      %v839 = vpop.f32.mrb[0].mxu0
      %v840 = vadd.f32 %v321, %v839
      %v841 = vpop.f32.mrb[0].mxu0
      %v842 = vpop.f32.mrb[0].mxu0
      %843 = vdwg.mxu0
      %v844 = vmul.f32 %v598, %v598
      %v845 = vmul.f32 %v600, %v600
      %v846 = vmul.f32 %v602, %v602
      %v847 = vmul.f32 %v604, %v604
      %v848 = vmul.f32 %v608, %v608
      %v849 = vmul.f32 %v610, %v610
      %v850 = vmul.f32 %v612, %v612
      %v851 = vmul.f32 %v614, %v614
      %v852 = vmul.f32 %v618, %v618
      %v853 = vmul.f32 %v620, %v620
      %v854 = vmul.f32 %v622, %v622
      %v855 = vmul.f32 %v624, %v624
      %v856 = vmul.f32 %v628, %v628
      %v857 = vmul.f32 %v630, %v630
      %v858 = vmul.f32 %v632, %v632
      %v859 = vmul.f32 %v634, %v634
      %v860 = vmul.f32 %v638, %v638
      %v861 = vmul.f32 %v640, %v640
      %v862 = vmul.f32 %v642, %v642
      %v863 = vmul.f32 %v644, %v644
      %v864 = vmul.f32 %v648, %v648
      %v865 = vmul.f32 %v650, %v650
      %v866 = vmul.f32 %v652, %v652
      %v867 = vmul.f32 %v654, %v654
      %v868 = vmul.f32 %v658, %v658
      %v869 = vmul.f32 %v660, %v660
      %v870 = vmul.f32 %v662, %v662
      %v871 = vmul.f32 %v664, %v664
      %v872 = vmul.f32 %v668, %v668
      %v873 = vmul.f32 %v670, %v670
      %v874 = vmul.f32 %v672, %v672
      %v875 = vmul.f32 %v674, %v674
      %v876 = vmul.f32 %v678, %v678
      %v877 = vmul.f32 %v680, %v680
      %v878 = vmul.f32 %v682, %v682
      %v879 = vmul.f32 %v684, %v684
      %v880 = vmul.f32 %v688, %v688
      %v881 = vmul.f32 %v690, %v690
      %v882 = vmul.f32 %v692, %v692
      %v883 = vmul.f32 %v694, %v694
      %v884 = vmul.f32 %v698, %v698
      %v885 = vmul.f32 %v700, %v700
      %v886 = vmul.f32 %v702, %v702
      %v887 = vmul.f32 %v704, %v704
      %v888 = vmul.f32 %v708, %v708
      %v889 = vmul.f32 %v710, %v710
      %v890 = vmul.f32 %v712, %v712
      %v891 = vmul.f32 %v714, %v714
      %v892 = vmul.f32 %v718, %v718
      %v893 = vmul.f32 %v720, %v720
      %v894 = vmul.f32 %v722, %v722
      %v895 = vmul.f32 %v724, %v724
      %v896 = vmul.f32 %v728, %v728
      %v897 = vmul.f32 %v730, %v730
      %v898 = vmul.f32 %v732, %v732
      %v899 = vmul.f32 %v734, %v734
      %v900 = vmul.f32 %v738, %v738
      %v901 = vmul.f32 %v740, %v740
      %v902 = vmul.f32 %v742, %v742
      %v903 = vmul.f32 %v744, %v744
      %v904 = vmul.f32 %v748, %v748
      %v905 = vmul.f32 %v750, %v750
      %v906 = vmul.f32 %v752, %v752
      %v907 = vmul.f32 %v754, %v754
      %v908 = vmul.f32 %v758, %v758
      %v909 = vmul.f32 %v760, %v760
      %v910 = vmul.f32 %v762, %v762
      %v911 = vmul.f32 %v764, %v764
      %v912 = vmul.f32 %v768, %v768
      %v913 = vmul.f32 %v770, %v770
      %v914 = vmul.f32 %v772, %v772
      %v915 = vmul.f32 %v774, %v774
      %v916 = vmul.f32 %v778, %v778
      %v917 = vmul.f32 %v780, %v780
      %v918 = vmul.f32 %v782, %v782
      %v919 = vmul.f32 %v784, %v784
      %v920 = vmul.f32 %v788, %v788
      %v921 = vmul.f32 %v790, %v790
      %v922 = vmul.f32 %v792, %v792
      %v923 = vmul.f32 %v794, %v794
      %v924 = vmul.f32 %v798, %v798
      %v925 = vmul.f32 %v800, %v800
      %v926 = vmul.f32 %v802, %v802
      %v927 = vmul.f32 %v804, %v804
      %v928 = vmul.f32 %v808, %v808
      %v929 = vmul.f32 %v810, %v810
      %v930 = vmul.f32 %v812, %v812
      %v931 = vmul.f32 %v814, %v814
      %v932 = vmul.f32 %v818, %v818
      %v933 = vmul.f32 %v820, %v820
      %v934 = vmul.f32 %v822, %v822
      %v935 = vmul.f32 %v824, %v824
      %v936 = vmul.f32 %v828, %v828
      %v937 = vmul.f32 %v830, %v830
      %v938 = vmul.f32 %v832, %v832
      %v939 = vmul.f32 %v834, %v834
      %v940 = vmul.f32 %v838, %v838
      %v941 = vmul.f32 %v840, %v840
      %v942 = vpack.c.bf16 %v846, %v844
      %v943 = vpack.c.bf16 %v847, %v845
      %v944 = vpack.c.bf16 %v850, %v848
      %v945 = vpack.c.bf16 %v851, %v849
      %v946 = vpack.c.bf16 %v854, %v852
      %v947 = vpack.c.bf16 %v855, %v853
      %v948 = vpack.c.bf16 %v858, %v856
      %v949 = vpack.c.bf16 %v859, %v857
      %v950 = vpack.c.bf16 %v862, %v860
      %v951 = vpack.c.bf16 %v863, %v861
      %v952 = vpack.c.bf16 %v866, %v864
      %v953 = vpack.c.bf16 %v867, %v865
      %v954 = vpack.c.bf16 %v870, %v868
      %v955 = vpack.c.bf16 %v871, %v869
      %v956 = vpack.c.bf16 %v874, %v872
      %v957 = vpack.c.bf16 %v875, %v873
      %v958 = vpack.c.bf16 %v878, %v876
      %v959 = vpack.c.bf16 %v879, %v877
      %v960 = vpack.c.bf16 %v882, %v880
      %v961 = vpack.c.bf16 %v883, %v881
      %v962 = vpack.c.bf16 %v886, %v884
      %v963 = vpack.c.bf16 %v887, %v885
      %v964 = vpack.c.bf16 %v890, %v888
      %v965 = vpack.c.bf16 %v891, %v889
      %v966 = vpack.c.bf16 %v894, %v892
      %v967 = vpack.c.bf16 %v895, %v893
      %v968 = vpack.c.bf16 %v898, %v896
      %v969 = vpack.c.bf16 %v899, %v897
      %v970 = vpack.c.bf16 %v902, %v900
      %v971 = vpack.c.bf16 %v903, %v901
      %v972 = vpack.c.bf16 %v906, %v904
      %v973 = vpack.c.bf16 %v907, %v905
      %v974 = vpack.c.bf16 %v910, %v908
      %v975 = vpack.c.bf16 %v911, %v909
      %v976 = vpack.c.bf16 %v914, %v912
      %v977 = vpack.c.bf16 %v915, %v913
      %v978 = vpack.c.bf16 %v918, %v916
      %v979 = vpack.c.bf16 %v919, %v917
      %v980 = vpack.c.bf16 %v922, %v920
      %v981 = vpack.c.bf16 %v923, %v921
      %v982 = vpack.c.bf16 %v926, %v924
      %v983 = vpack.c.bf16 %v927, %v925
      %v984 = vpack.c.bf16 %v930, %v928
      %v985 = vpack.c.bf16 %v931, %v929
      %v986 = vpack.c.bf16 %v934, %v932
      %v987 = vpack.c.bf16 %v935, %v933
      %v988 = vpack.c.bf16 %v938, %v936
      %v989 = vpack.c.bf16 %v939, %v937
      %v990 = vpack.c.bf16 %v940, %v940
      %v991 = vpack.c.bf16 %v941, %v941
      %v992 = vld [vmem:[%s5] sm:$0xff]
      %v993 = vld [vmem:[%s5 + $0x8] sm:$0xff]
      %v994 = vld [vmem:[%s5 + $0x10] sm:$0xff]
      %v995 = vld [vmem:[%s5 + $0x18] sm:$0xff]
      %v996 = vld [vmem:[%s5 + $0x20] sm:$0xff]
      %v997 = vld [vmem:[%s5 + $0x28] sm:$0xff]
      %v998 = vld [vmem:[%s5 + $0x30] sm:$0xff]
      %v999 = vld [vmem:[%s5 + $0x38] sm:$0xff]
      %v1000 = vld [vmem:[%s5 + $0x40] sm:$0xff]
      %v1001 = vld [vmem:[%s5 + $0x48] sm:$0xff]
      %v1002 = vld [vmem:[%s5 + $0x50] sm:$0xff]
      %v1003 = vld [vmem:[%s5 + $0x58] sm:$0xff]
      %v1004 = vld [vmem:[%s5 + $0x60] sm:$0xff]
      %v1005 = vld [vmem:[%s5 + $0x68] sm:$0xff]
      %v1006 = vld [vmem:[%s5 + $0x70] sm:$0xff]
      %v1007 = vld [vmem:[%s5 + $0x78] sm:$0xff]
      %v1008 = vld [vmem:[%s5 + $0x80] sm:$0xff]
      %v1009 = vld [vmem:[%s5 + $0x88] sm:$0xff]
      %v1010 = vld [vmem:[%s5 + $0x90] sm:$0xff]
      %v1011 = vld [vmem:[%s5 + $0x98] sm:$0xff]
      %v1012 = vld [vmem:[%s5 + $0xa0] sm:$0xff]
      %v1013 = vld [vmem:[%s5 + $0xa8] sm:$0xff]
      %v1014 = vld [vmem:[%s5 + $0xb0] sm:$0xff]
      %v1015 = vld [vmem:[%s5 + $0xb8] sm:$0xff]
      %v1016 = vld [vmem:[%s5 + $0xc0] sm:$0xff]
      %v1017 = vld [vmem:[%s5 + $0xc8] sm:$0xff]
      %v1018 = vld [vmem:[%s5 + $0xd0] sm:$0xff]
      %v1019 = vld [vmem:[%s5 + $0xd8] sm:$0xff]
      %v1020 = vld [vmem:[%s5 + $0xe0] sm:$0xff]
      %v1021 = vld [vmem:[%s5 + $0xe8] sm:$0xff]
      %v1022 = vld [vmem:[%s5 + $0xf0] sm:$0xff]
      %v1023 = vld [vmem:[%s5 + $0xf8] sm:$0xff]
      %v1056 = vunpack.c.l.b16 %v992
      %v1057 = vunpack.c.h.b16 %v992
      %v1058 = vunpack.c.l.b16 %v993
      %v1059 = vunpack.c.h.b16 %v993
      %v1060 = vunpack.c.l.b16 %v994
      %v1061 = vunpack.c.h.b16 %v994
      %v1062 = vunpack.c.l.b16 %v995
      %v1063 = vunpack.c.h.b16 %v995
      %v1064 = vunpack.c.l.b16 %v996
      %v1065 = vunpack.c.h.b16 %v996
      %v1066 = vunpack.c.l.b16 %v997
      %v1067 = vunpack.c.h.b16 %v997
      %v1068 = vunpack.c.l.b16 %v998
      %v1069 = vunpack.c.h.b16 %v998
      %v1070 = vunpack.c.l.b16 %v999
      %v1071 = vunpack.c.h.b16 %v999
      %v1072 = vunpack.c.l.b16 %v1000
      %v1073 = vunpack.c.h.b16 %v1000
      %v1074 = vunpack.c.l.b16 %v1001
      %v1075 = vunpack.c.h.b16 %v1001
      %v1076 = vunpack.c.l.b16 %v1002
      %v1077 = vunpack.c.h.b16 %v1002
      %v1078 = vunpack.c.l.b16 %v1003
      %v1079 = vunpack.c.h.b16 %v1003
      %v1080 = vunpack.c.l.b16 %v1004
      %v1081 = vunpack.c.h.b16 %v1004
      %v1082 = vunpack.c.l.b16 %v1005
      %v1083 = vunpack.c.h.b16 %v1005
      %v1084 = vunpack.c.l.b16 %v1006
      %v1085 = vunpack.c.h.b16 %v1006
      %v1086 = vunpack.c.l.b16 %v1007
      %v1087 = vunpack.c.h.b16 %v1007
      %v1088 = vunpack.c.l.b16 %v1008
      %v1089 = vunpack.c.h.b16 %v1008
      %v1090 = vunpack.c.l.b16 %v1009
      %v1091 = vunpack.c.h.b16 %v1009
      %v1092 = vunpack.c.l.b16 %v1010
      %v1093 = vunpack.c.h.b16 %v1010
      %v1094 = vunpack.c.l.b16 %v1011
      %v1095 = vunpack.c.h.b16 %v1011
      %v1096 = vunpack.c.l.b16 %v1012
      %v1097 = vunpack.c.h.b16 %v1012
      %v1098 = vunpack.c.l.b16 %v1013
      %v1099 = vunpack.c.h.b16 %v1013
      %v1100 = vunpack.c.l.b16 %v1014
      %v1101 = vunpack.c.h.b16 %v1014
      %v1102 = vunpack.c.l.b16 %v1015
      %v1103 = vunpack.c.h.b16 %v1015
      %v1104 = vunpack.c.l.b16 %v1016
      %v1105 = vunpack.c.h.b16 %v1016
      %v1106 = vunpack.c.l.b16 %v1017
      %v1107 = vunpack.c.h.b16 %v1017
      %v1108 = vunpack.c.l.b16 %v1018
      %v1109 = vunpack.c.h.b16 %v1018
      %v1110 = vunpack.c.l.b16 %v1019
      %v1111 = vunpack.c.h.b16 %v1019
      %v1112 = vunpack.c.l.b16 %v1020
      %v1113 = vunpack.c.h.b16 %v1020
      %v1114 = vunpack.c.l.b16 %v1021
      %v1115 = vunpack.c.h.b16 %v1021
      %v1116 = vunpack.c.l.b16 %v1022
      %v1117 = vunpack.c.h.b16 %v1022
      %v1118 = vunpack.c.l.b16 %v1023
      %v1119 = vunpack.c.h.b16 %v1023
      %v1120 = vpack.c.b16 %v1058, %v1056
      %v1121 = vpack.c.b16 %v1059, %v1057
      %v1122 = vpack.c.b16 %v1062, %v1060
      %v1123 = vpack.c.b16 %v1063, %v1061
      %v1124 = vpack.c.b16 %v1066, %v1064
      %v1125 = vpack.c.b16 %v1067, %v1065
      %v1126 = vpack.c.b16 %v1070, %v1068
      %v1127 = vpack.c.b16 %v1071, %v1069
      %v1128 = vpack.c.b16 %v1074, %v1072
      %v1129 = vpack.c.b16 %v1075, %v1073
      %v1130 = vpack.c.b16 %v1078, %v1076
      %v1131 = vpack.c.b16 %v1079, %v1077
      %v1132 = vpack.c.b16 %v1082, %v1080
      %v1133 = vpack.c.b16 %v1083, %v1081
      %v1134 = vpack.c.b16 %v1086, %v1084
      %v1135 = vpack.c.b16 %v1087, %v1085
      %v1136 = vpack.c.b16 %v1090, %v1088
      %v1137 = vpack.c.b16 %v1091, %v1089
      %v1138 = vpack.c.b16 %v1094, %v1092
      %v1139 = vpack.c.b16 %v1095, %v1093
      %v1140 = vpack.c.b16 %v1098, %v1096
      %v1141 = vpack.c.b16 %v1099, %v1097
      %v1142 = vpack.c.b16 %v1102, %v1100
      %v1143 = vpack.c.b16 %v1103, %v1101
      %v1144 = vpack.c.b16 %v1106, %v1104
      %v1145 = vpack.c.b16 %v1107, %v1105
      %v1146 = vpack.c.b16 %v1110, %v1108
      %v1147 = vpack.c.b16 %v1111, %v1109
      %v1148 = vpack.c.b16 %v1114, %v1112
      %v1149 = vpack.c.b16 %v1115, %v1113
      %v1150 = vpack.c.b16 %v1118, %v1116
      %v1151 = vpack.c.b16 %v1119, %v1117
      %1184 = vmatprep.subr.bf16.mxu0 %v1121
      %1185 = vmatpush1.bf16.msra.mxu0 %v1120
      %1186 = vmatprep.subr.bf16.mxu0 %v1123
      %1187 = vmatpush1.bf16.msra.mxu0 %v1122
      %1188 = vmatprep.subr.bf16.mxu0 %v1125
      %1189 = vmatpush1.bf16.msra.mxu0 %v1124
      %1190 = vmatprep.subr.bf16.mxu0 %v1127
      %1191 = vmatpush1.bf16.msra.mxu0 %v1126
      %1192 = vmatprep.subr.bf16.mxu0 %v1129
      %1193 = vmatpush1.bf16.msra.mxu0 %v1128
      %1194 = vmatprep.subr.bf16.mxu0 %v1131
      %1195 = vmatpush1.bf16.msra.mxu0 %v1130
      %1196 = vmatprep.subr.bf16.mxu0 %v1133
      %1197 = vmatpush1.bf16.msra.mxu0 %v1132
      %1198 = vmatprep.subr.bf16.mxu0 %v1135
      %1199 = vmatpush1.bf16.msra.mxu0 %v1134
      %1200 = vmatprep.subr.bf16.mxu0 %v1137
      %1201 = vmatpush1.bf16.msra.mxu0 %v1136
      %1202 = vmatprep.subr.bf16.mxu0 %v1139
      %1203 = vmatpush1.bf16.msra.mxu0 %v1138
      %1204 = vmatprep.subr.bf16.mxu0 %v1141
      %1205 = vmatpush1.bf16.msra.mxu0 %v1140
      %1206 = vmatprep.subr.bf16.mxu0 %v1143
      %1207 = vmatpush1.bf16.msra.mxu0 %v1142
      %1208 = vmatprep.subr.bf16.mxu0 %v1145
      %1209 = vmatpush1.bf16.msra.mxu0 %v1144
      %1210 = vmatprep.subr.bf16.mxu0 %v1147
      %1211 = vmatpush1.bf16.msra.mxu0 %v1146
      %1212 = vmatprep.subr.bf16.mxu0 %v1149
      %1213 = vmatpush1.bf16.msra.mxu0 %v1148
      %1214 = vmatprep.subr.bf16.mxu0 %v1151
      %1215 = vmatpush1.bf16.msra.mxu0 %v1150
      %1216 = vmatprep.mubr.bf16.mxu0 %v943
      %1217 = vmatmul.mubr.bf16.gmra.mrb[0].mxu0 %v942
      %v1218 = vpop.f32.mrb[0].mxu0
      %v1219 = vadd.f32 1.0, %v1218
      %v1220 = vpop.f32.mrb[0].mxu0
      %v1221 = vadd.f32 1.0, %v1220
      %v1222 = vpop.f32.mrb[0].mxu0
      %v1223 = vadd.f32 1.0, %v1222
      %v1224 = vpop.f32.mrb[0].mxu0
      %v1225 = vadd.f32 1.0, %v1224
      %1226 = vmatprep.mubr.bf16.mxu0 %v945
      %1227 = vmatmul.mubr.bf16.gmra.mrb[0].mxu0 %v944
      %v1228 = vpop.f32.mrb[0].mxu0
      %v1229 = vadd.f32 1.0, %v1228
      %v1230 = vpop.f32.mrb[0].mxu0
      %v1231 = vadd.f32 1.0, %v1230
      %v1232 = vpop.f32.mrb[0].mxu0
      %v1233 = vadd.f32 1.0, %v1232
      %v1234 = vpop.f32.mrb[0].mxu0
      %v1235 = vadd.f32 1.0, %v1234
      %1236 = vmatprep.mubr.bf16.mxu0 %v947
      %1237 = vmatmul.mubr.bf16.gmra.mrb[0].mxu0 %v946
      %v1238 = vpop.f32.mrb[0].mxu0
      %v1239 = vadd.f32 1.0, %v1238
      %v1240 = vpop.f32.mrb[0].mxu0
      %v1241 = vadd.f32 1.0, %v1240
      %v1242 = vpop.f32.mrb[0].mxu0
      %v1243 = vadd.f32 1.0, %v1242
      %v1244 = vpop.f32.mrb[0].mxu0
      %v1245 = vadd.f32 1.0, %v1244
      %1246 = vmatprep.mubr.bf16.mxu0 %v949
      %1247 = vmatmul.mubr.bf16.gmra.mrb[0].mxu0 %v948
      %v1248 = vpop.f32.mrb[0].mxu0
      %v1249 = vadd.f32 1.0, %v1248
      %v1250 = vpop.f32.mrb[0].mxu0
      %v1251 = vadd.f32 1.0, %v1250
      %v1252 = vpop.f32.mrb[0].mxu0
      %v1253 = vadd.f32 1.0, %v1252
      %v1254 = vpop.f32.mrb[0].mxu0
      %v1255 = vadd.f32 1.0, %v1254
      %1256 = vmatprep.mubr.bf16.mxu0 %v951
      %1257 = vmatmul.mubr.bf16.gmra.mrb[0].mxu0 %v950
      %v1258 = vpop.f32.mrb[0].mxu0
      %v1259 = vadd.f32 1.0, %v1258
      %v1260 = vpop.f32.mrb[0].mxu0
      %v1261 = vadd.f32 1.0, %v1260
      %v1262 = vpop.f32.mrb[0].mxu0
      %v1263 = vadd.f32 1.0, %v1262
      %v1264 = vpop.f32.mrb[0].mxu0
      %v1265 = vadd.f32 1.0, %v1264
      %1266 = vmatprep.mubr.bf16.mxu0 %v953
      %1267 = vmatmul.mubr.bf16.gmra.mrb[0].mxu0 %v952
      %v1268 = vpop.f32.mrb[0].mxu0
      %v1269 = vadd.f32 1.0, %v1268
      %v1270 = vpop.f32.mrb[0].mxu0
      %v1271 = vadd.f32 1.0, %v1270
      %v1272 = vpop.f32.mrb[0].mxu0
      %v1273 = vadd.f32 1.0, %v1272
      %v1274 = vpop.f32.mrb[0].mxu0
      %v1275 = vadd.f32 1.0, %v1274
      %1276 = vmatprep.mubr.bf16.mxu0 %v955
      %1277 = vmatmul.mubr.bf16.gmra.mrb[0].mxu0 %v954
      %v1278 = vpop.f32.mrb[0].mxu0
      %v1279 = vadd.f32 1.0, %v1278
      %v1280 = vpop.f32.mrb[0].mxu0
      %v1281 = vadd.f32 1.0, %v1280
      %v1282 = vpop.f32.mrb[0].mxu0
      %v1283 = vadd.f32 1.0, %v1282
      %v1284 = vpop.f32.mrb[0].mxu0
      %v1285 = vadd.f32 1.0, %v1284
      %1286 = vmatprep.mubr.bf16.mxu0 %v957
      %1287 = vmatmul.mubr.bf16.gmra.mrb[0].mxu0 %v956
      %v1288 = vpop.f32.mrb[0].mxu0
      %v1289 = vadd.f32 1.0, %v1288
      %v1290 = vpop.f32.mrb[0].mxu0
      %v1291 = vadd.f32 1.0, %v1290
      %v1292 = vpop.f32.mrb[0].mxu0
      %v1293 = vadd.f32 1.0, %v1292
      %v1294 = vpop.f32.mrb[0].mxu0
      %v1295 = vadd.f32 1.0, %v1294
      %1296 = vmatprep.mubr.bf16.mxu0 %v959
      %1297 = vmatmul.mubr.bf16.gmra.mrb[0].mxu0 %v958
      %v1298 = vpop.f32.mrb[0].mxu0
      %v1299 = vadd.f32 1.0, %v1298
      %v1300 = vpop.f32.mrb[0].mxu0
      %v1301 = vadd.f32 1.0, %v1300
      %v1302 = vpop.f32.mrb[0].mxu0
      %v1303 = vadd.f32 1.0, %v1302
      %v1304 = vpop.f32.mrb[0].mxu0
      %v1305 = vadd.f32 1.0, %v1304
      %1306 = vmatprep.mubr.bf16.mxu0 %v961
      %1307 = vmatmul.mubr.bf16.gmra.mrb[0].mxu0 %v960
      %v1308 = vpop.f32.mrb[0].mxu0
      %v1309 = vadd.f32 1.0, %v1308
      %v1310 = vpop.f32.mrb[0].mxu0
      %v1311 = vadd.f32 1.0, %v1310
      %v1312 = vpop.f32.mrb[0].mxu0
      %v1313 = vadd.f32 1.0, %v1312
      %v1314 = vpop.f32.mrb[0].mxu0
      %v1315 = vadd.f32 1.0, %v1314
      %1316 = vmatprep.mubr.bf16.mxu0 %v963
      %1317 = vmatmul.mubr.bf16.gmra.mrb[0].mxu0 %v962
      %v1318 = vpop.f32.mrb[0].mxu0
      %v1319 = vadd.f32 1.0, %v1318
      %v1320 = vpop.f32.mrb[0].mxu0
      %v1321 = vadd.f32 1.0, %v1320
      %v1322 = vpop.f32.mrb[0].mxu0
      %v1323 = vadd.f32 1.0, %v1322
      %v1324 = vpop.f32.mrb[0].mxu0
      %v1325 = vadd.f32 1.0, %v1324
      %1326 = vmatprep.mubr.bf16.mxu0 %v965
      %1327 = vmatmul.mubr.bf16.gmra.mrb[0].mxu0 %v964
      %v1328 = vpop.f32.mrb[0].mxu0
      %v1329 = vadd.f32 1.0, %v1328
      %v1330 = vpop.f32.mrb[0].mxu0
      %v1331 = vadd.f32 1.0, %v1330
      %v1332 = vpop.f32.mrb[0].mxu0
      %v1333 = vadd.f32 1.0, %v1332
      %v1334 = vpop.f32.mrb[0].mxu0
      %v1335 = vadd.f32 1.0, %v1334
      %1336 = vmatprep.mubr.bf16.mxu0 %v967
      %1337 = vmatmul.mubr.bf16.gmra.mrb[0].mxu0 %v966
      %v1338 = vpop.f32.mrb[0].mxu0
      %v1339 = vadd.f32 1.0, %v1338
      %v1340 = vpop.f32.mrb[0].mxu0
      %v1341 = vadd.f32 1.0, %v1340
      %v1342 = vpop.f32.mrb[0].mxu0
      %v1343 = vadd.f32 1.0, %v1342
      %v1344 = vpop.f32.mrb[0].mxu0
      %v1345 = vadd.f32 1.0, %v1344
      %1346 = vmatprep.mubr.bf16.mxu0 %v969
      %1347 = vmatmul.mubr.bf16.gmra.mrb[0].mxu0 %v968
      %v1348 = vpop.f32.mrb[0].mxu0
      %v1349 = vadd.f32 1.0, %v1348
      %v1350 = vpop.f32.mrb[0].mxu0
      %v1351 = vadd.f32 1.0, %v1350
      %v1352 = vpop.f32.mrb[0].mxu0
      %v1353 = vadd.f32 1.0, %v1352
      %v1354 = vpop.f32.mrb[0].mxu0
      %v1355 = vadd.f32 1.0, %v1354
      %1356 = vmatprep.mubr.bf16.mxu0 %v971
      %1357 = vmatmul.mubr.bf16.gmra.mrb[0].mxu0 %v970
      %v1358 = vpop.f32.mrb[0].mxu0
      %v1359 = vadd.f32 1.0, %v1358
      %v1360 = vpop.f32.mrb[0].mxu0
      %v1361 = vadd.f32 1.0, %v1360
      %v1362 = vpop.f32.mrb[0].mxu0
      %v1363 = vadd.f32 1.0, %v1362
      %v1364 = vpop.f32.mrb[0].mxu0
      %v1365 = vadd.f32 1.0, %v1364
      %1366 = vmatprep.mubr.bf16.mxu0 %v973
      %1367 = vmatmul.mubr.bf16.gmra.mrb[0].mxu0 %v972
      %v1368 = vpop.f32.mrb[0].mxu0
      %v1369 = vadd.f32 1.0, %v1368
      %v1370 = vpop.f32.mrb[0].mxu0
      %v1371 = vadd.f32 1.0, %v1370
      %v1372 = vpop.f32.mrb[0].mxu0
      %v1373 = vadd.f32 1.0, %v1372
      %v1374 = vpop.f32.mrb[0].mxu0
      %v1375 = vadd.f32 1.0, %v1374
      %1376 = vmatprep.mubr.bf16.mxu0 %v975
      %1377 = vmatmul.mubr.bf16.gmra.mrb[0].mxu0 %v974
      %v1378 = vpop.f32.mrb[0].mxu0
      %v1379 = vadd.f32 1.0, %v1378
      %v1380 = vpop.f32.mrb[0].mxu0
      %v1381 = vadd.f32 1.0, %v1380
      %v1382 = vpop.f32.mrb[0].mxu0
      %v1383 = vadd.f32 1.0, %v1382
      %v1384 = vpop.f32.mrb[0].mxu0
      %v1385 = vadd.f32 1.0, %v1384
      %1386 = vmatprep.mubr.bf16.mxu0 %v977
      %1387 = vmatmul.mubr.bf16.gmra.mrb[0].mxu0 %v976
      %v1388 = vpop.f32.mrb[0].mxu0
      %v1389 = vadd.f32 1.0, %v1388
      %v1390 = vpop.f32.mrb[0].mxu0
      %v1391 = vadd.f32 1.0, %v1390
      %v1392 = vpop.f32.mrb[0].mxu0
      %v1393 = vadd.f32 1.0, %v1392
      %v1394 = vpop.f32.mrb[0].mxu0
      %v1395 = vadd.f32 1.0, %v1394
      %1396 = vmatprep.mubr.bf16.mxu0 %v979
      %1397 = vmatmul.mubr.bf16.gmra.mrb[0].mxu0 %v978
      %v1398 = vpop.f32.mrb[0].mxu0
      %v1399 = vadd.f32 1.0, %v1398
      %v1400 = vpop.f32.mrb[0].mxu0
      %v1401 = vadd.f32 1.0, %v1400
      %v1402 = vpop.f32.mrb[0].mxu0
      %v1403 = vadd.f32 1.0, %v1402
      %v1404 = vpop.f32.mrb[0].mxu0
      %v1405 = vadd.f32 1.0, %v1404
      %1406 = vmatprep.mubr.bf16.mxu0 %v981
      %1407 = vmatmul.mubr.bf16.gmra.mrb[0].mxu0 %v980
      %v1408 = vpop.f32.mrb[0].mxu0
      %v1409 = vadd.f32 1.0, %v1408
      %v1410 = vpop.f32.mrb[0].mxu0
      %v1411 = vadd.f32 1.0, %v1410
      %v1412 = vpop.f32.mrb[0].mxu0
      %v1413 = vadd.f32 1.0, %v1412
      %v1414 = vpop.f32.mrb[0].mxu0
      %v1415 = vadd.f32 1.0, %v1414
      %1416 = vmatprep.mubr.bf16.mxu0 %v983
      %1417 = vmatmul.mubr.bf16.gmra.mrb[0].mxu0 %v982
      %v1418 = vpop.f32.mrb[0].mxu0
      %v1419 = vadd.f32 1.0, %v1418
      %v1420 = vpop.f32.mrb[0].mxu0
      %v1421 = vadd.f32 1.0, %v1420
      %v1422 = vpop.f32.mrb[0].mxu0
      %v1423 = vadd.f32 1.0, %v1422
      %v1424 = vpop.f32.mrb[0].mxu0
      %v1425 = vadd.f32 1.0, %v1424
      %1426 = vmatprep.mubr.bf16.mxu0 %v985
      %1427 = vmatmul.mubr.bf16.gmra.mrb[0].mxu0 %v984
      %v1428 = vpop.f32.mrb[0].mxu0
      %v1429 = vadd.f32 1.0, %v1428
      %v1430 = vpop.f32.mrb[0].mxu0
      %v1431 = vadd.f32 1.0, %v1430
      %v1432 = vpop.f32.mrb[0].mxu0
      %v1433 = vadd.f32 1.0, %v1432
      %v1434 = vpop.f32.mrb[0].mxu0
      %v1435 = vadd.f32 1.0, %v1434
      %1436 = vmatprep.mubr.bf16.mxu0 %v987
      %1437 = vmatmul.mubr.bf16.gmra.mrb[0].mxu0 %v986
      %v1438 = vpop.f32.mrb[0].mxu0
      %v1439 = vadd.f32 1.0, %v1438
      %v1440 = vpop.f32.mrb[0].mxu0
      %v1441 = vadd.f32 1.0, %v1440
      %v1442 = vpop.f32.mrb[0].mxu0
      %v1443 = vadd.f32 1.0, %v1442
      %v1444 = vpop.f32.mrb[0].mxu0
      %v1445 = vadd.f32 1.0, %v1444
      %1446 = vmatprep.mubr.bf16.mxu0 %v989
      %1447 = vmatmul.mubr.bf16.gmra.mrb[0].mxu0 %v988
      %v1448 = vpop.f32.mrb[0].mxu0
      %v1449 = vadd.f32 1.0, %v1448
      %v1450 = vpop.f32.mrb[0].mxu0
      %v1451 = vadd.f32 1.0, %v1450
      %v1452 = vpop.f32.mrb[0].mxu0
      %v1453 = vadd.f32 1.0, %v1452
      %v1454 = vpop.f32.mrb[0].mxu0
      %v1455 = vadd.f32 1.0, %v1454
      %1456 = vmatprep.mubr.bf16.mxu0 %v991
      %1457 = vmatmul.mubr.bf16.gmra.mrb[0].mxu0 %v990
      %v1458 = vpop.f32.mrb[0].mxu0
      %v1459 = vadd.f32 1.0, %v1458
      %v1460 = vpop.f32.mrb[0].mxu0
      %v1461 = vadd.f32 1.0, %v1460
      %v1462 = vpop.f32.mrb[0].mxu0
      %v1463 = vpop.f32.mrb[0].mxu0
      %1464 = vdwg.mxu0
      %v1465 = vlog2.pop %v1219
      %v1466 = vmul.f32 %v1465, 0.6931472
      %v1467 = vlog2.pop %v1221
      %v1468 = vmul.f32 %v1467, 0.6931472
      %v1469 = vlog2.pop %v1223
      %v1470 = vmul.f32 %v1469, 0.6931472
      %v1471 = vlog2.pop %v1225
      %v1472 = vmul.f32 %v1471, 0.6931472
      %v1473 = vlog2.pop %v1229
      %v1474 = vmul.f32 %v1473, 0.6931472
      %v1475 = vlog2.pop %v1231
      %v1476 = vmul.f32 %v1475, 0.6931472
      %v1477 = vlog2.pop %v1233
      %v1478 = vmul.f32 %v1477, 0.6931472
      %v1479 = vlog2.pop %v1235
      %v1480 = vmul.f32 %v1479, 0.6931472
      %v1481 = vlog2.pop %v1239
      %v1482 = vmul.f32 %v1481, 0.6931472
      %v1483 = vlog2.pop %v1241
      %v1484 = vmul.f32 %v1483, 0.6931472
      %v1485 = vlog2.pop %v1243
      %v1486 = vmul.f32 %v1485, 0.6931472
      %v1487 = vlog2.pop %v1245
      %v1488 = vmul.f32 %v1487, 0.6931472
      %v1489 = vlog2.pop %v1249
      %v1490 = vmul.f32 %v1489, 0.6931472
      %v1491 = vlog2.pop %v1251
      %v1492 = vmul.f32 %v1491, 0.6931472
      %v1493 = vlog2.pop %v1253
      %v1494 = vmul.f32 %v1493, 0.6931472
      %v1495 = vlog2.pop %v1255
      %v1496 = vmul.f32 %v1495, 0.6931472
      %v1497 = vlog2.pop %v1259
      %v1498 = vmul.f32 %v1497, 0.6931472
      %v1499 = vlog2.pop %v1261
      %v1500 = vmul.f32 %v1499, 0.6931472
      %v1501 = vlog2.pop %v1263
      %v1502 = vmul.f32 %v1501, 0.6931472
      %v1503 = vlog2.pop %v1265
      %v1504 = vmul.f32 %v1503, 0.6931472
      %v1505 = vlog2.pop %v1269
      %v1506 = vmul.f32 %v1505, 0.6931472
      %v1507 = vlog2.pop %v1271
      %v1508 = vmul.f32 %v1507, 0.6931472
      %v1509 = vlog2.pop %v1273
      %v1510 = vmul.f32 %v1509, 0.6931472
      %v1511 = vlog2.pop %v1275
      %v1512 = vmul.f32 %v1511, 0.6931472
      %v1513 = vlog2.pop %v1279
      %v1514 = vmul.f32 %v1513, 0.6931472
      %v1515 = vlog2.pop %v1281
      %v1516 = vmul.f32 %v1515, 0.6931472
      %v1517 = vlog2.pop %v1283
      %v1518 = vmul.f32 %v1517, 0.6931472
      %v1519 = vlog2.pop %v1285
      %v1520 = vmul.f32 %v1519, 0.6931472
      %v1521 = vlog2.pop %v1289
      %v1522 = vmul.f32 %v1521, 0.6931472
      %v1523 = vlog2.pop %v1291
      %v1524 = vmul.f32 %v1523, 0.6931472
      %v1525 = vlog2.pop %v1293
      %v1526 = vmul.f32 %v1525, 0.6931472
      %v1527 = vlog2.pop %v1295
      %v1528 = vmul.f32 %v1527, 0.6931472
      %v1529 = vlog2.pop %v1299
      %v1530 = vmul.f32 %v1529, 0.6931472
      %v1531 = vlog2.pop %v1301
      %v1532 = vmul.f32 %v1531, 0.6931472
      %v1533 = vlog2.pop %v1303
      %v1534 = vmul.f32 %v1533, 0.6931472
      %v1535 = vlog2.pop %v1305
      %v1536 = vmul.f32 %v1535, 0.6931472
      %v1537 = vlog2.pop %v1309
      %v1538 = vmul.f32 %v1537, 0.6931472
      %v1539 = vlog2.pop %v1311
      %v1540 = vmul.f32 %v1539, 0.6931472
      %v1541 = vlog2.pop %v1313
      %v1542 = vmul.f32 %v1541, 0.6931472
      %v1543 = vlog2.pop %v1315
      %v1544 = vmul.f32 %v1543, 0.6931472
      %v1545 = vlog2.pop %v1319
      %v1546 = vmul.f32 %v1545, 0.6931472
      %v1547 = vlog2.pop %v1321
      %v1548 = vmul.f32 %v1547, 0.6931472
      %v1549 = vlog2.pop %v1323
      %v1550 = vmul.f32 %v1549, 0.6931472
      %v1551 = vlog2.pop %v1325
      %v1552 = vmul.f32 %v1551, 0.6931472
      %v1553 = vlog2.pop %v1329
      %v1554 = vmul.f32 %v1553, 0.6931472
      %v1555 = vlog2.pop %v1331
      %v1556 = vmul.f32 %v1555, 0.6931472
      %v1557 = vlog2.pop %v1333
      %v1558 = vmul.f32 %v1557, 0.6931472
      %v1559 = vlog2.pop %v1335
      %v1560 = vmul.f32 %v1559, 0.6931472
      %v1561 = vlog2.pop %v1339
      %v1562 = vmul.f32 %v1561, 0.6931472
      %v1563 = vlog2.pop %v1341
      %v1564 = vmul.f32 %v1563, 0.6931472
      %v1565 = vlog2.pop %v1343
      %v1566 = vmul.f32 %v1565, 0.6931472
      %v1567 = vlog2.pop %v1345
      %v1568 = vmul.f32 %v1567, 0.6931472
      %v1569 = vlog2.pop %v1349
      %v1570 = vmul.f32 %v1569, 0.6931472
      %v1571 = vlog2.pop %v1351
      %v1572 = vmul.f32 %v1571, 0.6931472
      %v1573 = vlog2.pop %v1353
      %v1574 = vmul.f32 %v1573, 0.6931472
      %v1575 = vlog2.pop %v1355
      %v1576 = vmul.f32 %v1575, 0.6931472
      %v1577 = vlog2.pop %v1359
      %v1578 = vmul.f32 %v1577, 0.6931472
      %v1579 = vlog2.pop %v1361
      %v1580 = vmul.f32 %v1579, 0.6931472
      %v1581 = vlog2.pop %v1363
      %v1582 = vmul.f32 %v1581, 0.6931472
      %v1583 = vlog2.pop %v1365
      %v1584 = vmul.f32 %v1583, 0.6931472
      %v1585 = vlog2.pop %v1369
      %v1586 = vmul.f32 %v1585, 0.6931472
      %v1587 = vlog2.pop %v1371
      %v1588 = vmul.f32 %v1587, 0.6931472
      %v1589 = vlog2.pop %v1373
      %v1590 = vmul.f32 %v1589, 0.6931472
      %v1591 = vlog2.pop %v1375
      %v1592 = vmul.f32 %v1591, 0.6931472
      %v1593 = vlog2.pop %v1379
      %v1594 = vmul.f32 %v1593, 0.6931472
      %v1595 = vlog2.pop %v1381
      %v1596 = vmul.f32 %v1595, 0.6931472
      %v1597 = vlog2.pop %v1383
      %v1598 = vmul.f32 %v1597, 0.6931472
      %v1599 = vlog2.pop %v1385
      %v1600 = vmul.f32 %v1599, 0.6931472
      %v1601 = vlog2.pop %v1389
      %v1602 = vmul.f32 %v1601, 0.6931472
      %v1603 = vlog2.pop %v1391
      %v1604 = vmul.f32 %v1603, 0.6931472
      %v1605 = vlog2.pop %v1393
      %v1606 = vmul.f32 %v1605, 0.6931472
      %v1607 = vlog2.pop %v1395
      %v1608 = vmul.f32 %v1607, 0.6931472
      %v1609 = vlog2.pop %v1399
      %v1610 = vmul.f32 %v1609, 0.6931472
      %v1611 = vlog2.pop %v1401
      %v1612 = vmul.f32 %v1611, 0.6931472
      %v1613 = vlog2.pop %v1403
      %v1614 = vmul.f32 %v1613, 0.6931472
      %v1615 = vlog2.pop %v1405
      %v1616 = vmul.f32 %v1615, 0.6931472
      %v1617 = vlog2.pop %v1409
      %v1618 = vmul.f32 %v1617, 0.6931472
      %v1619 = vlog2.pop %v1411
      %v1620 = vmul.f32 %v1619, 0.6931472
      %v1621 = vlog2.pop %v1413
      %v1622 = vmul.f32 %v1621, 0.6931472
      %v1623 = vlog2.pop %v1415
      %v1624 = vmul.f32 %v1623, 0.6931472
      %v1625 = vlog2.pop %v1419
      %v1626 = vmul.f32 %v1625, 0.6931472
      %v1627 = vlog2.pop %v1421
      %v1628 = vmul.f32 %v1627, 0.6931472
      %v1629 = vlog2.pop %v1423
      %v1630 = vmul.f32 %v1629, 0.6931472
      %v1631 = vlog2.pop %v1425
      %v1632 = vmul.f32 %v1631, 0.6931472
      %v1633 = vlog2.pop %v1429
      %v1634 = vmul.f32 %v1633, 0.6931472
      %v1635 = vlog2.pop %v1431
      %v1636 = vmul.f32 %v1635, 0.6931472
      %v1637 = vlog2.pop %v1433
      %v1638 = vmul.f32 %v1637, 0.6931472
      %v1639 = vlog2.pop %v1435
      %v1640 = vmul.f32 %v1639, 0.6931472
      %v1641 = vlog2.pop %v1439
      %v1642 = vmul.f32 %v1641, 0.6931472
      %v1643 = vlog2.pop %v1441
      %v1644 = vmul.f32 %v1643, 0.6931472
      %v1645 = vlog2.pop %v1443
      %v1646 = vmul.f32 %v1645, 0.6931472
      %v1647 = vlog2.pop %v1445
      %v1648 = vmul.f32 %v1647, 0.6931472
      %v1649 = vlog2.pop %v1449
      %v1650 = vmul.f32 %v1649, 0.6931472
      %v1651 = vlog2.pop %v1451
      %v1652 = vmul.f32 %v1651, 0.6931472
      %v1653 = vlog2.pop %v1453
      %v1654 = vmul.f32 %v1653, 0.6931472
      %v1655 = vlog2.pop %v1455
      %v1656 = vmul.f32 %v1655, 0.6931472
      %v1657 = vlog2.pop %v1459
      %v1658 = vmul.f32 %v1657, 0.6931472
      %v1659 = vlog2.pop %v1461
      %v1660 = vmul.f32 %v1659, 0.6931472
      %v1661 = vmul.f32 %v1466, -0.75
      %v1662 = vmul.f32 %v1468, -0.75
      %v1663 = vmul.f32 %v1470, -0.75
      %v1664 = vmul.f32 %v1472, -0.75
      %v1665 = vmul.f32 %v1474, -0.75
      %v1666 = vmul.f32 %v1476, -0.75
      %v1667 = vmul.f32 %v1478, -0.75
      %v1668 = vmul.f32 %v1480, -0.75
      %v1669 = vmul.f32 %v1482, -0.75
      %v1670 = vmul.f32 %v1484, -0.75
      %v1671 = vmul.f32 %v1486, -0.75
      %v1672 = vmul.f32 %v1488, -0.75
      %v1673 = vmul.f32 %v1490, -0.75
      %v1674 = vmul.f32 %v1492, -0.75
      %v1675 = vmul.f32 %v1494, -0.75
      %v1676 = vmul.f32 %v1496, -0.75
      %v1677 = vmul.f32 %v1498, -0.75
      %v1678 = vmul.f32 %v1500, -0.75
      %v1679 = vmul.f32 %v1502, -0.75
      %v1680 = vmul.f32 %v1504, -0.75
      %v1681 = vmul.f32 %v1506, -0.75
      %v1682 = vmul.f32 %v1508, -0.75
      %v1683 = vmul.f32 %v1510, -0.75
      %v1684 = vmul.f32 %v1512, -0.75
      %v1685 = vmul.f32 %v1514, -0.75
      %v1686 = vmul.f32 %v1516, -0.75
      %v1687 = vmul.f32 %v1518, -0.75
      %v1688 = vmul.f32 %v1520, -0.75
      %v1689 = vmul.f32 %v1522, -0.75
      %v1690 = vmul.f32 %v1524, -0.75
      %v1691 = vmul.f32 %v1526, -0.75
      %v1692 = vmul.f32 %v1528, -0.75
      %v1693 = vmul.f32 %v1530, -0.75
      %v1694 = vmul.f32 %v1532, -0.75
      %v1695 = vmul.f32 %v1534, -0.75
      %v1696 = vmul.f32 %v1536, -0.75
      %v1697 = vmul.f32 %v1538, -0.75
      %v1698 = vmul.f32 %v1540, -0.75
      %v1699 = vmul.f32 %v1542, -0.75
      %v1700 = vmul.f32 %v1544, -0.75
      %v1701 = vmul.f32 %v1546, -0.75
      %v1702 = vmul.f32 %v1548, -0.75
      %v1703 = vmul.f32 %v1550, -0.75
      %v1704 = vmul.f32 %v1552, -0.75
      %v1705 = vmul.f32 %v1554, -0.75
      %v1706 = vmul.f32 %v1556, -0.75
      %v1707 = vmul.f32 %v1558, -0.75
      %v1708 = vmul.f32 %v1560, -0.75
      %v1709 = vmul.f32 %v1562, -0.75
      %v1710 = vmul.f32 %v1564, -0.75
      %v1711 = vmul.f32 %v1566, -0.75
      %v1712 = vmul.f32 %v1568, -0.75
      %v1713 = vmul.f32 %v1570, -0.75
      %v1714 = vmul.f32 %v1572, -0.75
      %v1715 = vmul.f32 %v1574, -0.75
      %v1716 = vmul.f32 %v1576, -0.75
      %v1717 = vmul.f32 %v1578, -0.75
      %v1718 = vmul.f32 %v1580, -0.75
      %v1719 = vmul.f32 %v1582, -0.75
      %v1720 = vmul.f32 %v1584, -0.75
      %v1721 = vmul.f32 %v1586, -0.75
      %v1722 = vmul.f32 %v1588, -0.75
      %v1723 = vmul.f32 %v1590, -0.75
      %v1724 = vmul.f32 %v1592, -0.75
      %v1725 = vmul.f32 %v1594, -0.75
      %v1726 = vmul.f32 %v1596, -0.75
      %v1727 = vmul.f32 %v1598, -0.75
      %v1728 = vmul.f32 %v1600, -0.75
      %v1729 = vmul.f32 %v1602, -0.75
      %v1730 = vmul.f32 %v1604, -0.75
      %v1731 = vmul.f32 %v1606, -0.75
      %v1732 = vmul.f32 %v1608, -0.75
      %v1733 = vmul.f32 %v1610, -0.75
      %v1734 = vmul.f32 %v1612, -0.75
      %v1735 = vmul.f32 %v1614, -0.75
      %v1736 = vmul.f32 %v1616, -0.75
      %v1737 = vmul.f32 %v1618, -0.75
      %v1738 = vmul.f32 %v1620, -0.75
      %v1739 = vmul.f32 %v1622, -0.75
      %v1740 = vmul.f32 %v1624, -0.75
      %v1741 = vmul.f32 %v1626, -0.75
      %v1742 = vmul.f32 %v1628, -0.75
      %v1743 = vmul.f32 %v1630, -0.75
      %v1744 = vmul.f32 %v1632, -0.75
      %v1745 = vmul.f32 %v1634, -0.75
      %v1746 = vmul.f32 %v1636, -0.75
      %v1747 = vmul.f32 %v1638, -0.75
      %v1748 = vmul.f32 %v1640, -0.75
      %v1749 = vmul.f32 %v1642, -0.75
      %v1750 = vmul.f32 %v1644, -0.75
      %v1751 = vmul.f32 %v1646, -0.75
      %v1752 = vmul.f32 %v1648, -0.75
      %v1753 = vmul.f32 %v1650, -0.75
      %v1754 = vmul.f32 %v1652, -0.75
      %v1755 = vmul.f32 %v1654, -0.75
      %v1756 = vmul.f32 %v1656, -0.75
      %v1757 = vmul.f32 %v1658, -0.75
      %v1758 = vmul.f32 %v1660, -0.75
      %v1759 = vmul.f32 %v1661, 1.442695
      %v1760 = vpow.pop %v1759
      %v1761 = vmul.f32 %v1662, 1.442695
      %v1762 = vpow.pop %v1761
      %v1763 = vmul.f32 %v1663, 1.442695
      %v1764 = vpow.pop %v1763
      %v1765 = vmul.f32 %v1664, 1.442695
      %v1766 = vpow.pop %v1765
      %v1767 = vmul.f32 %v1665, 1.442695
      %v1768 = vpow.pop %v1767
      %v1769 = vmul.f32 %v1666, 1.442695
      %v1770 = vpow.pop %v1769
      %v1771 = vmul.f32 %v1667, 1.442695
      %v1772 = vpow.pop %v1771
      %v1773 = vmul.f32 %v1668, 1.442695
      %v1774 = vpow.pop %v1773
      %v1775 = vmul.f32 %v1669, 1.442695
      %v1776 = vpow.pop %v1775
      %v1777 = vmul.f32 %v1670, 1.442695
      %v1778 = vpow.pop %v1777
      %v1779 = vmul.f32 %v1671, 1.442695
      %v1780 = vpow.pop %v1779
      %v1781 = vmul.f32 %v1672, 1.442695
      %v1782 = vpow.pop %v1781
      %v1783 = vmul.f32 %v1673, 1.442695
      %v1784 = vpow.pop %v1783
      %v1785 = vmul.f32 %v1674, 1.442695
      %v1786 = vpow.pop %v1785
      %v1787 = vmul.f32 %v1675, 1.442695
      %v1788 = vpow.pop %v1787
      %v1789 = vmul.f32 %v1676, 1.442695
      %v1790 = vpow.pop %v1789
      %v1791 = vmul.f32 %v1677, 1.442695
      %v1792 = vpow.pop %v1791
      %v1793 = vmul.f32 %v1678, 1.442695
      %v1794 = vpow.pop %v1793
      %v1795 = vmul.f32 %v1679, 1.442695
      %v1796 = vpow.pop %v1795
      %v1797 = vmul.f32 %v1680, 1.442695
      %v1798 = vpow.pop %v1797
      %v1799 = vmul.f32 %v1681, 1.442695
      %v1800 = vpow.pop %v1799
      %v1801 = vmul.f32 %v1682, 1.442695
      %v1802 = vpow.pop %v1801
      %v1803 = vmul.f32 %v1683, 1.442695
      %v1804 = vpow.pop %v1803
      %v1805 = vmul.f32 %v1684, 1.442695
      %v1806 = vpow.pop %v1805
      %v1807 = vmul.f32 %v1685, 1.442695
      %v1808 = vpow.pop %v1807
      %v1809 = vmul.f32 %v1686, 1.442695
      %v1810 = vpow.pop %v1809
      %v1811 = vmul.f32 %v1687, 1.442695
      %v1812 = vpow.pop %v1811
      %v1813 = vmul.f32 %v1688, 1.442695
      %v1814 = vpow.pop %v1813
      %v1815 = vmul.f32 %v1689, 1.442695
      %v1816 = vpow.pop %v1815
      %v1817 = vmul.f32 %v1690, 1.442695
      %v1818 = vpow.pop %v1817
      %v1819 = vmul.f32 %v1691, 1.442695
      %v1820 = vpow.pop %v1819
      %v1821 = vmul.f32 %v1692, 1.442695
      %v1822 = vpow.pop %v1821
      %v1823 = vmul.f32 %v1693, 1.442695
      %v1824 = vpow.pop %v1823
      %v1825 = vmul.f32 %v1694, 1.442695
      %v1826 = vpow.pop %v1825
      %v1827 = vmul.f32 %v1695, 1.442695
      %v1828 = vpow.pop %v1827
      %v1829 = vmul.f32 %v1696, 1.442695
      %v1830 = vpow.pop %v1829
      %v1831 = vmul.f32 %v1697, 1.442695
      %v1832 = vpow.pop %v1831
      %v1833 = vmul.f32 %v1698, 1.442695
      %v1834 = vpow.pop %v1833
      %v1835 = vmul.f32 %v1699, 1.442695
      %v1836 = vpow.pop %v1835
      %v1837 = vmul.f32 %v1700, 1.442695
      %v1838 = vpow.pop %v1837
      %v1839 = vmul.f32 %v1701, 1.442695
      %v1840 = vpow.pop %v1839
      %v1841 = vmul.f32 %v1702, 1.442695
      %v1842 = vpow.pop %v1841
      %v1843 = vmul.f32 %v1703, 1.442695
      %v1844 = vpow.pop %v1843
      %v1845 = vmul.f32 %v1704, 1.442695
      %v1846 = vpow.pop %v1845
      %v1847 = vmul.f32 %v1705, 1.442695
      %v1848 = vpow.pop %v1847
      %v1849 = vmul.f32 %v1706, 1.442695
      %v1850 = vpow.pop %v1849
      %v1851 = vmul.f32 %v1707, 1.442695
      %v1852 = vpow.pop %v1851
      %v1853 = vmul.f32 %v1708, 1.442695
      %v1854 = vpow.pop %v1853
      %v1855 = vmul.f32 %v1709, 1.442695
      %v1856 = vpow.pop %v1855
      %v1857 = vmul.f32 %v1710, 1.442695
      %v1858 = vpow.pop %v1857
      %v1859 = vmul.f32 %v1711, 1.442695
      %v1860 = vpow.pop %v1859
      %v1861 = vmul.f32 %v1712, 1.442695
      %v1862 = vpow.pop %v1861
      %v1863 = vmul.f32 %v1713, 1.442695
      %v1864 = vpow.pop %v1863
      %v1865 = vmul.f32 %v1714, 1.442695
      %v1866 = vpow.pop %v1865
      %v1867 = vmul.f32 %v1715, 1.442695
      %v1868 = vpow.pop %v1867
      %v1869 = vmul.f32 %v1716, 1.442695
      %v1870 = vpow.pop %v1869
      %v1871 = vmul.f32 %v1717, 1.442695
      %v1872 = vpow.pop %v1871
      %v1873 = vmul.f32 %v1718, 1.442695
      %v1874 = vpow.pop %v1873
      %v1875 = vmul.f32 %v1719, 1.442695
      %v1876 = vpow.pop %v1875
      %v1877 = vmul.f32 %v1720, 1.442695
      %v1878 = vpow.pop %v1877
      %v1879 = vmul.f32 %v1721, 1.442695
      %v1880 = vpow.pop %v1879
      %v1881 = vmul.f32 %v1722, 1.442695
      %v1882 = vpow.pop %v1881
      %v1883 = vmul.f32 %v1723, 1.442695
      %v1884 = vpow.pop %v1883
      %v1885 = vmul.f32 %v1724, 1.442695
      %v1886 = vpow.pop %v1885
      %v1887 = vmul.f32 %v1725, 1.442695
      %v1888 = vpow.pop %v1887
      %v1889 = vmul.f32 %v1726, 1.442695
      %v1890 = vpow.pop %v1889
      %v1891 = vmul.f32 %v1727, 1.442695
      %v1892 = vpow.pop %v1891
      %v1893 = vmul.f32 %v1728, 1.442695
      %v1894 = vpow.pop %v1893
      %v1895 = vmul.f32 %v1729, 1.442695
      %v1896 = vpow.pop %v1895
      %v1897 = vmul.f32 %v1730, 1.442695
      %v1898 = vpow.pop %v1897
      %v1899 = vmul.f32 %v1731, 1.442695
      %v1900 = vpow.pop %v1899
      %v1901 = vmul.f32 %v1732, 1.442695
      %v1902 = vpow.pop %v1901
      %v1903 = vmul.f32 %v1733, 1.442695
      %v1904 = vpow.pop %v1903
      %v1905 = vmul.f32 %v1734, 1.442695
      %v1906 = vpow.pop %v1905
      %v1907 = vmul.f32 %v1735, 1.442695
      %v1908 = vpow.pop %v1907
      %v1909 = vmul.f32 %v1736, 1.442695
      %v1910 = vpow.pop %v1909
      %v1911 = vmul.f32 %v1737, 1.442695
      %v1912 = vpow.pop %v1911
      %v1913 = vmul.f32 %v1738, 1.442695
      %v1914 = vpow.pop %v1913
      %v1915 = vmul.f32 %v1739, 1.442695
      %v1916 = vpow.pop %v1915
      %v1917 = vmul.f32 %v1740, 1.442695
      %v1918 = vpow.pop %v1917
      %v1919 = vmul.f32 %v1741, 1.442695
      %v1920 = vpow.pop %v1919
      %v1921 = vmul.f32 %v1742, 1.442695
      %v1922 = vpow.pop %v1921
      %v1923 = vmul.f32 %v1743, 1.442695
      %v1924 = vpow.pop %v1923
      %v1925 = vmul.f32 %v1744, 1.442695
      %v1926 = vpow.pop %v1925
      %v1927 = vmul.f32 %v1745, 1.442695
      %v1928 = vpow.pop %v1927
      %v1929 = vmul.f32 %v1746, 1.442695
      %v1930 = vpow.pop %v1929
      %v1931 = vmul.f32 %v1747, 1.442695
      %v1932 = vpow.pop %v1931
      %v1933 = vmul.f32 %v1748, 1.442695
      %v1934 = vpow.pop %v1933
      %v1935 = vmul.f32 %v1749, 1.442695
      %v1936 = vpow.pop %v1935
      %v1937 = vmul.f32 %v1750, 1.442695
      %v1938 = vpow.pop %v1937
      %v1939 = vmul.f32 %v1751, 1.442695
      %v1940 = vpow.pop %v1939
      %v1941 = vmul.f32 %v1752, 1.442695
      %v1942 = vpow.pop %v1941
      %v1943 = vmul.f32 %v1753, 1.442695
      %v1944 = vpow.pop %v1943
      %v1945 = vmul.f32 %v1754, 1.442695
      %v1946 = vpow.pop %v1945
      %v1947 = vmul.f32 %v1755, 1.442695
      %v1948 = vpow.pop %v1947
      %v1949 = vmul.f32 %v1756, 1.442695
      %v1950 = vpow.pop %v1949
      %v1951 = vmul.f32 %v1757, 1.442695
      %v1952 = vpow.pop %v1951
      %v1953 = vmul.f32 %v1758, 1.442695
      %v1954 = vpow.pop %v1953
      %v1955 = vmul.f32 %v598, %v1760
      %v1956 = vmul.f32 %v600, %v1762
      %v1957 = vmul.f32 %v602, %v1764
      %v1958 = vmul.f32 %v604, %v1766
      %v1959 = vmul.f32 %v608, %v1768
      %v1960 = vmul.f32 %v610, %v1770
      %v1961 = vmul.f32 %v612, %v1772
      %v1962 = vmul.f32 %v614, %v1774
      %v1963 = vmul.f32 %v618, %v1776
      %v1964 = vmul.f32 %v620, %v1778
      %v1965 = vmul.f32 %v622, %v1780
      %v1966 = vmul.f32 %v624, %v1782
      %v1967 = vmul.f32 %v628, %v1784
      %v1968 = vmul.f32 %v630, %v1786
      %v1969 = vmul.f32 %v632, %v1788
      %v1970 = vmul.f32 %v634, %v1790
      %v1971 = vmul.f32 %v638, %v1792
      %v1972 = vmul.f32 %v640, %v1794
      %v1973 = vmul.f32 %v642, %v1796
      %v1974 = vmul.f32 %v644, %v1798
      %v1975 = vmul.f32 %v648, %v1800
      %v1976 = vmul.f32 %v650, %v1802
      %v1977 = vmul.f32 %v652, %v1804
      %v1978 = vmul.f32 %v654, %v1806
      %v1979 = vmul.f32 %v658, %v1808
      %v1980 = vmul.f32 %v660, %v1810
      %v1981 = vmul.f32 %v662, %v1812
      %v1982 = vmul.f32 %v664, %v1814
      %v1983 = vmul.f32 %v668, %v1816
      %v1984 = vmul.f32 %v670, %v1818
      %v1985 = vmul.f32 %v672, %v1820
      %v1986 = vmul.f32 %v674, %v1822
      %v1987 = vmul.f32 %v678, %v1824
      %v1988 = vmul.f32 %v680, %v1826
      %v1989 = vmul.f32 %v682, %v1828
      %v1990 = vmul.f32 %v684, %v1830
      %v1991 = vmul.f32 %v688, %v1832
      %v1992 = vmul.f32 %v690, %v1834
      %v1993 = vmul.f32 %v692, %v1836
      %v1994 = vmul.f32 %v694, %v1838
      %v1995 = vmul.f32 %v698, %v1840
      %v1996 = vmul.f32 %v700, %v1842
      %v1997 = vmul.f32 %v702, %v1844
      %v1998 = vmul.f32 %v704, %v1846
      %v1999 = vmul.f32 %v708, %v1848
      %v2000 = vmul.f32 %v710, %v1850
      %v2001 = vmul.f32 %v712, %v1852
      %v2002 = vmul.f32 %v714, %v1854
      %v2003 = vmul.f32 %v718, %v1856
      %v2004 = vmul.f32 %v720, %v1858
      %v2005 = vmul.f32 %v722, %v1860
      %v2006 = vmul.f32 %v724, %v1862
      %v2007 = vmul.f32 %v728, %v1864
      %v2008 = vmul.f32 %v730, %v1866
      %v2009 = vmul.f32 %v732, %v1868
      %v2010 = vmul.f32 %v734, %v1870
      %v2011 = vmul.f32 %v738, %v1872
      %v2012 = vmul.f32 %v740, %v1874
      %v2013 = vmul.f32 %v742, %v1876
      %v2014 = vmul.f32 %v744, %v1878
      %v2015 = vmul.f32 %v748, %v1880
      %v2016 = vmul.f32 %v750, %v1882
      %v2017 = vmul.f32 %v752, %v1884
      %v2018 = vmul.f32 %v754, %v1886
      %v2019 = vmul.f32 %v758, %v1888
      %v2020 = vmul.f32 %v760, %v1890
      %v2021 = vmul.f32 %v762, %v1892
      %v2022 = vmul.f32 %v764, %v1894
      %v2023 = vmul.f32 %v768, %v1896
      %v2024 = vmul.f32 %v770, %v1898
      %v2025 = vmul.f32 %v772, %v1900
      %v2026 = vmul.f32 %v774, %v1902
      %v2027 = vmul.f32 %v778, %v1904
      %v2028 = vmul.f32 %v780, %v1906
      %v2029 = vmul.f32 %v782, %v1908
      %v2030 = vmul.f32 %v784, %v1910
      %v2031 = vmul.f32 %v788, %v1912
      %v2032 = vmul.f32 %v790, %v1914
      %v2033 = vmul.f32 %v792, %v1916
      %v2034 = vmul.f32 %v794, %v1918
      %v2035 = vmul.f32 %v798, %v1920
      %v2036 = vmul.f32 %v800, %v1922
      %v2037 = vmul.f32 %v802, %v1924
      %v2038 = vmul.f32 %v804, %v1926
      %v2039 = vmul.f32 %v808, %v1928
      %v2040 = vmul.f32 %v810, %v1930
      %v2041 = vmul.f32 %v812, %v1932
      %v2042 = vmul.f32 %v814, %v1934
      %v2043 = vmul.f32 %v818, %v1936
      %v2044 = vmul.f32 %v820, %v1938
      %v2045 = vmul.f32 %v822, %v1940
      %v2046 = vmul.f32 %v824, %v1942
      %v2047 = vmul.f32 %v828, %v1944
      %v2048 = vmul.f32 %v830, %v1946
      %v2049 = vmul.f32 %v832, %v1948
      %v2050 = vmul.f32 %v834, %v1950
      %v2051 = vmul.f32 %v838, %v1952
      %v2052 = vmul.f32 %v840, %v1954
      %v2053 = vmax.f32 %v1955, 0.0
      %v2054 = vmax.f32 %v1956, 0.0
      %v2055 = vmax.f32 %v1957, 0.0
      %v2056 = vmax.f32 %v1958, 0.0
      %v2057 = vmax.f32 %v1959, 0.0
      %v2058 = vmax.f32 %v1960, 0.0
      %v2059 = vmax.f32 %v1961, 0.0
      %v2060 = vmax.f32 %v1962, 0.0
      %v2061 = vmax.f32 %v1963, 0.0
      %v2062 = vmax.f32 %v1964, 0.0
      %v2063 = vmax.f32 %v1965, 0.0
      %v2064 = vmax.f32 %v1966, 0.0
      %v2065 = vmax.f32 %v1967, 0.0
      %v2066 = vmax.f32 %v1968, 0.0
      %v2067 = vmax.f32 %v1969, 0.0
      %v2068 = vmax.f32 %v1970, 0.0
      %v2069 = vmax.f32 %v1971, 0.0
      %v2070 = vmax.f32 %v1972, 0.0
      %v2071 = vmax.f32 %v1973, 0.0
      %v2072 = vmax.f32 %v1974, 0.0
      %v2073 = vmax.f32 %v1975, 0.0
      %v2074 = vmax.f32 %v1976, 0.0
      %v2075 = vmax.f32 %v1977, 0.0
      %v2076 = vmax.f32 %v1978, 0.0
      %v2077 = vmax.f32 %v1979, 0.0
      %v2078 = vmax.f32 %v1980, 0.0
      %v2079 = vmax.f32 %v1981, 0.0
      %v2080 = vmax.f32 %v1982, 0.0
      %v2081 = vmax.f32 %v1983, 0.0
      %v2082 = vmax.f32 %v1984, 0.0
      %v2083 = vmax.f32 %v1985, 0.0
      %v2084 = vmax.f32 %v1986, 0.0
      %v2085 = vmax.f32 %v1987, 0.0
      %v2086 = vmax.f32 %v1988, 0.0
      %v2087 = vmax.f32 %v1989, 0.0
      %v2088 = vmax.f32 %v1990, 0.0
      %v2089 = vmax.f32 %v1991, 0.0
      %v2090 = vmax.f32 %v1992, 0.0
      %v2091 = vmax.f32 %v1993, 0.0
      %v2092 = vmax.f32 %v1994, 0.0
      %v2093 = vmax.f32 %v1995, 0.0
      %v2094 = vmax.f32 %v1996, 0.0
      %v2095 = vmax.f32 %v1997, 0.0
      %v2096 = vmax.f32 %v1998, 0.0
      %v2097 = vmax.f32 %v1999, 0.0
      %v2098 = vmax.f32 %v2000, 0.0
      %v2099 = vmax.f32 %v2001, 0.0
      %v2100 = vmax.f32 %v2002, 0.0
      %v2101 = vmax.f32 %v2003, 0.0
      %v2102 = vmax.f32 %v2004, 0.0
      %v2103 = vmax.f32 %v2005, 0.0
      %v2104 = vmax.f32 %v2006, 0.0
      %v2105 = vmax.f32 %v2007, 0.0
      %v2106 = vmax.f32 %v2008, 0.0
      %v2107 = vmax.f32 %v2009, 0.0
      %v2108 = vmax.f32 %v2010, 0.0
      %v2109 = vmax.f32 %v2011, 0.0
      %v2110 = vmax.f32 %v2012, 0.0
      %v2111 = vmax.f32 %v2013, 0.0
      %v2112 = vmax.f32 %v2014, 0.0
      %v2113 = vmax.f32 %v2015, 0.0
      %v2114 = vmax.f32 %v2016, 0.0
      %v2115 = vmax.f32 %v2017, 0.0
      %v2116 = vmax.f32 %v2018, 0.0
      %v2117 = vmax.f32 %v2019, 0.0
      %v2118 = vmax.f32 %v2020, 0.0
      %v2119 = vmax.f32 %v2021, 0.0
      %v2120 = vmax.f32 %v2022, 0.0
      %v2121 = vmax.f32 %v2023, 0.0
      %v2122 = vmax.f32 %v2024, 0.0
      %v2123 = vmax.f32 %v2025, 0.0
      %v2124 = vmax.f32 %v2026, 0.0
      %v2125 = vmax.f32 %v2027, 0.0
      %v2126 = vmax.f32 %v2028, 0.0
      %v2127 = vmax.f32 %v2029, 0.0
      %v2128 = vmax.f32 %v2030, 0.0
      %v2129 = vmax.f32 %v2031, 0.0
      %v2130 = vmax.f32 %v2032, 0.0
      %v2131 = vmax.f32 %v2033, 0.0
      %v2132 = vmax.f32 %v2034, 0.0
      %v2133 = vmax.f32 %v2035, 0.0
      %v2134 = vmax.f32 %v2036, 0.0
      %v2135 = vmax.f32 %v2037, 0.0
      %v2136 = vmax.f32 %v2038, 0.0
      %v2137 = vmax.f32 %v2039, 0.0
      %v2138 = vmax.f32 %v2040, 0.0
      %v2139 = vmax.f32 %v2041, 0.0
      %v2140 = vmax.f32 %v2042, 0.0
      %v2141 = vmax.f32 %v2043, 0.0
      %v2142 = vmax.f32 %v2044, 0.0
      %v2143 = vmax.f32 %v2045, 0.0
      %v2144 = vmax.f32 %v2046, 0.0
      %v2145 = vmax.f32 %v2047, 0.0
      %v2146 = vmax.f32 %v2048, 0.0
      %v2147 = vmax.f32 %v2049, 0.0
      %v2148 = vmax.f32 %v2050, 0.0
      %v2149 = vmax.f32 %v2051, 0.0
      %v2150 = vmax.f32 %v2052, 0.0
      %2200 = vrot.lane.b32.xlu0 %v2053, 64
      %v2201 = vpop.permute.xlu0 %2200
      %2202 = vrot.lane.b32.xlu0 %v2055, 64
      %v2203 = vpop.permute.xlu0 %2202
      %2204 = vrot.lane.b32.xlu0 %v2057, 64
      %v2205 = vpop.permute.xlu0 %2204
      %2206 = vrot.lane.b32.xlu0 %v2059, 64
      %v2207 = vpop.permute.xlu0 %2206
      %2208 = vrot.lane.b32.xlu0 %v2061, 64
      %v2209 = vpop.permute.xlu0 %2208
      %2210 = vrot.lane.b32.xlu0 %v2063, 64
      %v2211 = vpop.permute.xlu0 %2210
      %2212 = vrot.lane.b32.xlu0 %v2065, 64
      %v2213 = vpop.permute.xlu0 %2212
      %2214 = vrot.lane.b32.xlu0 %v2067, 64
      %v2215 = vpop.permute.xlu0 %2214
      %2216 = vrot.lane.b32.xlu0 %v2069, 64
      %v2217 = vpop.permute.xlu0 %2216
      %2218 = vrot.lane.b32.xlu0 %v2071, 64
      %v2219 = vpop.permute.xlu0 %2218
      %2220 = vrot.lane.b32.xlu0 %v2073, 64
      %v2221 = vpop.permute.xlu0 %2220
      %2222 = vrot.lane.b32.xlu0 %v2075, 64
      %v2223 = vpop.permute.xlu0 %2222
      %2224 = vrot.lane.b32.xlu0 %v2077, 64
      %v2225 = vpop.permute.xlu0 %2224
      %2226 = vrot.lane.b32.xlu0 %v2079, 64
      %v2227 = vpop.permute.xlu0 %2226
      %2228 = vrot.lane.b32.xlu0 %v2081, 64
      %v2229 = vpop.permute.xlu0 %2228
      %2230 = vrot.lane.b32.xlu0 %v2083, 64
      %v2231 = vpop.permute.xlu0 %2230
      %2232 = vrot.lane.b32.xlu0 %v2085, 64
      %v2233 = vpop.permute.xlu0 %2232
      %2234 = vrot.lane.b32.xlu0 %v2087, 64
      %v2235 = vpop.permute.xlu0 %2234
      %2236 = vrot.lane.b32.xlu0 %v2089, 64
      %v2237 = vpop.permute.xlu0 %2236
      %2238 = vrot.lane.b32.xlu0 %v2091, 64
      %v2239 = vpop.permute.xlu0 %2238
      %2240 = vrot.lane.b32.xlu0 %v2093, 64
      %v2241 = vpop.permute.xlu0 %2240
      %2242 = vrot.lane.b32.xlu0 %v2095, 64
      %v2243 = vpop.permute.xlu0 %2242
      %2244 = vrot.lane.b32.xlu0 %v2097, 64
      %v2245 = vpop.permute.xlu0 %2244
      %2246 = vrot.lane.b32.xlu0 %v2099, 64
      %v2247 = vpop.permute.xlu0 %2246
      %2248 = vrot.lane.b32.xlu0 %v2101, 64
      %v2249 = vpop.permute.xlu0 %2248
      %2250 = vrot.lane.b32.xlu0 %v2103, 64
      %v2251 = vpop.permute.xlu0 %2250
      %2252 = vrot.lane.b32.xlu0 %v2105, 64
      %v2253 = vpop.permute.xlu0 %2252
      %2254 = vrot.lane.b32.xlu0 %v2107, 64
      %v2255 = vpop.permute.xlu0 %2254
      %2256 = vrot.lane.b32.xlu0 %v2109, 64
      %v2257 = vpop.permute.xlu0 %2256
      %2258 = vrot.lane.b32.xlu0 %v2111, 64
      %v2259 = vpop.permute.xlu0 %2258
      %2260 = vrot.lane.b32.xlu0 %v2113, 64
      %v2261 = vpop.permute.xlu0 %2260
      %2262 = vrot.lane.b32.xlu0 %v2115, 64
      %v2263 = vpop.permute.xlu0 %2262
      %2264 = vrot.lane.b32.xlu0 %v2117, 64
      %v2265 = vpop.permute.xlu0 %2264
      %2266 = vrot.lane.b32.xlu0 %v2119, 64
      %v2267 = vpop.permute.xlu0 %2266
      %2268 = vrot.lane.b32.xlu0 %v2121, 64
      %v2269 = vpop.permute.xlu0 %2268
      %2270 = vrot.lane.b32.xlu0 %v2123, 64
      %v2271 = vpop.permute.xlu0 %2270
      %2272 = vrot.lane.b32.xlu0 %v2125, 64
      %v2273 = vpop.permute.xlu0 %2272
      %2274 = vrot.lane.b32.xlu0 %v2127, 64
      %v2275 = vpop.permute.xlu0 %2274
      %2276 = vrot.lane.b32.xlu0 %v2129, 64
      %v2277 = vpop.permute.xlu0 %2276
      %2278 = vrot.lane.b32.xlu0 %v2131, 64
      %v2279 = vpop.permute.xlu0 %2278
      %2280 = vrot.lane.b32.xlu0 %v2133, 64
      %v2281 = vpop.permute.xlu0 %2280
      %2282 = vrot.lane.b32.xlu0 %v2135, 64
      %v2283 = vpop.permute.xlu0 %2282
      %2284 = vrot.lane.b32.xlu0 %v2137, 64
      %v2285 = vpop.permute.xlu0 %2284
      %2286 = vrot.lane.b32.xlu0 %v2139, 64
      %v2287 = vpop.permute.xlu0 %2286
      %2288 = vrot.lane.b32.xlu0 %v2141, 64
      %v2289 = vpop.permute.xlu0 %2288
      %2290 = vrot.lane.b32.xlu0 %v2143, 64
      %v2291 = vpop.permute.xlu0 %2290
      %2292 = vrot.lane.b32.xlu0 %v2145, 64
      %v2293 = vpop.permute.xlu0 %2292
      %2294 = vrot.lane.b32.xlu0 %v2147, 64
      %v2295 = vpop.permute.xlu0 %2294
      %2296 = vrot.lane.b32.xlu0 %v2149, 64
      %v2297 = vpop.permute.xlu0 %2296
      %v2347 = vmax.f32 %v2053, %v2201
      %v2348 = vmax.f32 %v2055, %v2203
      %v2349 = vmax.f32 %v2057, %v2205
      %v2350 = vmax.f32 %v2059, %v2207
      %v2351 = vmax.f32 %v2061, %v2209
      %v2352 = vmax.f32 %v2063, %v2211
      %v2353 = vmax.f32 %v2065, %v2213
      %v2354 = vmax.f32 %v2067, %v2215
      %v2355 = vmax.f32 %v2069, %v2217
      %v2356 = vmax.f32 %v2071, %v2219
      %v2357 = vmax.f32 %v2073, %v2221
      %v2358 = vmax.f32 %v2075, %v2223
      %v2359 = vmax.f32 %v2077, %v2225
      %v2360 = vmax.f32 %v2079, %v2227
      %v2361 = vmax.f32 %v2081, %v2229
      %v2362 = vmax.f32 %v2083, %v2231
      %v2363 = vmax.f32 %v2085, %v2233
      %v2364 = vmax.f32 %v2087, %v2235
      %v2365 = vmax.f32 %v2089, %v2237
      %v2366 = vmax.f32 %v2091, %v2239
      %v2367 = vmax.f32 %v2093, %v2241
      %v2368 = vmax.f32 %v2095, %v2243
      %v2369 = vmax.f32 %v2097, %v2245
      %v2370 = vmax.f32 %v2099, %v2247
      %v2371 = vmax.f32 %v2101, %v2249
      %v2372 = vmax.f32 %v2103, %v2251
      %v2373 = vmax.f32 %v2105, %v2253
      %v2374 = vmax.f32 %v2107, %v2255
      %v2375 = vmax.f32 %v2109, %v2257
      %v2376 = vmax.f32 %v2111, %v2259
      %v2377 = vmax.f32 %v2113, %v2261
      %v2378 = vmax.f32 %v2115, %v2263
      %v2379 = vmax.f32 %v2117, %v2265
      %v2380 = vmax.f32 %v2119, %v2267
      %v2381 = vmax.f32 %v2121, %v2269
      %v2382 = vmax.f32 %v2123, %v2271
      %v2383 = vmax.f32 %v2125, %v2273
      %v2384 = vmax.f32 %v2127, %v2275
      %v2385 = vmax.f32 %v2129, %v2277
      %v2386 = vmax.f32 %v2131, %v2279
      %v2387 = vmax.f32 %v2133, %v2281
      %v2388 = vmax.f32 %v2135, %v2283
      %v2389 = vmax.f32 %v2137, %v2285
      %v2390 = vmax.f32 %v2139, %v2287
      %v2391 = vmax.f32 %v2141, %v2289
      %v2392 = vmax.f32 %v2143, %v2291
      %v2393 = vmax.f32 %v2145, %v2293
      %v2394 = vmax.f32 %v2147, %v2295
      %v2395 = vmax.f32 %v2149, %v2297
      %2445 = vrot.lane.b32.xlu0 %v2054, 64
      %v2446 = vpop.permute.xlu0 %2445
      %2447 = vrot.lane.b32.xlu0 %v2056, 64
      %v2448 = vpop.permute.xlu0 %2447
      %2449 = vrot.lane.b32.xlu0 %v2058, 64
      %v2450 = vpop.permute.xlu0 %2449
      %2451 = vrot.lane.b32.xlu0 %v2060, 64
      %v2452 = vpop.permute.xlu0 %2451
      %2453 = vrot.lane.b32.xlu0 %v2062, 64
      %v2454 = vpop.permute.xlu0 %2453
      %2455 = vrot.lane.b32.xlu0 %v2064, 64
      %v2456 = vpop.permute.xlu0 %2455
      %2457 = vrot.lane.b32.xlu0 %v2066, 64
      %v2458 = vpop.permute.xlu0 %2457
      %2459 = vrot.lane.b32.xlu0 %v2068, 64
      %v2460 = vpop.permute.xlu0 %2459
      %2461 = vrot.lane.b32.xlu0 %v2070, 64
      %v2462 = vpop.permute.xlu0 %2461
      %2463 = vrot.lane.b32.xlu0 %v2072, 64
      %v2464 = vpop.permute.xlu0 %2463
      %2465 = vrot.lane.b32.xlu0 %v2074, 64
      %v2466 = vpop.permute.xlu0 %2465
      %2467 = vrot.lane.b32.xlu0 %v2076, 64
      %v2468 = vpop.permute.xlu0 %2467
      %2469 = vrot.lane.b32.xlu0 %v2078, 64
      %v2470 = vpop.permute.xlu0 %2469
      %2471 = vrot.lane.b32.xlu0 %v2080, 64
      %v2472 = vpop.permute.xlu0 %2471
      %2473 = vrot.lane.b32.xlu0 %v2082, 64
      %v2474 = vpop.permute.xlu0 %2473
      %2475 = vrot.lane.b32.xlu0 %v2084, 64
      %v2476 = vpop.permute.xlu0 %2475
      %2477 = vrot.lane.b32.xlu0 %v2086, 64
      %v2478 = vpop.permute.xlu0 %2477
      %2479 = vrot.lane.b32.xlu0 %v2088, 64
      %v2480 = vpop.permute.xlu0 %2479
      %2481 = vrot.lane.b32.xlu0 %v2090, 64
      %v2482 = vpop.permute.xlu0 %2481
      %2483 = vrot.lane.b32.xlu0 %v2092, 64
      %v2484 = vpop.permute.xlu0 %2483
      %2485 = vrot.lane.b32.xlu0 %v2094, 64
      %v2486 = vpop.permute.xlu0 %2485
      %2487 = vrot.lane.b32.xlu0 %v2096, 64
      %v2488 = vpop.permute.xlu0 %2487
      %2489 = vrot.lane.b32.xlu0 %v2098, 64
      %v2490 = vpop.permute.xlu0 %2489
      %2491 = vrot.lane.b32.xlu0 %v2100, 64
      %v2492 = vpop.permute.xlu0 %2491
      %2493 = vrot.lane.b32.xlu0 %v2102, 64
      %v2494 = vpop.permute.xlu0 %2493
      %2495 = vrot.lane.b32.xlu0 %v2104, 64
      %v2496 = vpop.permute.xlu0 %2495
      %2497 = vrot.lane.b32.xlu0 %v2106, 64
      %v2498 = vpop.permute.xlu0 %2497
      %2499 = vrot.lane.b32.xlu0 %v2108, 64
      %v2500 = vpop.permute.xlu0 %2499
      %2501 = vrot.lane.b32.xlu0 %v2110, 64
      %v2502 = vpop.permute.xlu0 %2501
      %2503 = vrot.lane.b32.xlu0 %v2112, 64
      %v2504 = vpop.permute.xlu0 %2503
      %2505 = vrot.lane.b32.xlu0 %v2114, 64
      %v2506 = vpop.permute.xlu0 %2505
      %2507 = vrot.lane.b32.xlu0 %v2116, 64
      %v2508 = vpop.permute.xlu0 %2507
      %2509 = vrot.lane.b32.xlu0 %v2118, 64
      %v2510 = vpop.permute.xlu0 %2509
      %2511 = vrot.lane.b32.xlu0 %v2120, 64
      %v2512 = vpop.permute.xlu0 %2511
      %2513 = vrot.lane.b32.xlu0 %v2122, 64
      %v2514 = vpop.permute.xlu0 %2513
      %2515 = vrot.lane.b32.xlu0 %v2124, 64
      %v2516 = vpop.permute.xlu0 %2515
      %2517 = vrot.lane.b32.xlu0 %v2126, 64
      %v2518 = vpop.permute.xlu0 %2517
      %2519 = vrot.lane.b32.xlu0 %v2128, 64
      %v2520 = vpop.permute.xlu0 %2519
      %2521 = vrot.lane.b32.xlu0 %v2130, 64
      %v2522 = vpop.permute.xlu0 %2521
      %2523 = vrot.lane.b32.xlu0 %v2132, 64
      %v2524 = vpop.permute.xlu0 %2523
      %2525 = vrot.lane.b32.xlu0 %v2134, 64
      %v2526 = vpop.permute.xlu0 %2525
      %2527 = vrot.lane.b32.xlu0 %v2136, 64
      %v2528 = vpop.permute.xlu0 %2527
      %2529 = vrot.lane.b32.xlu0 %v2138, 64
      %v2530 = vpop.permute.xlu0 %2529
      %2531 = vrot.lane.b32.xlu0 %v2140, 64
      %v2532 = vpop.permute.xlu0 %2531
      %2533 = vrot.lane.b32.xlu0 %v2142, 64
      %v2534 = vpop.permute.xlu0 %2533
      %2535 = vrot.lane.b32.xlu0 %v2144, 64
      %v2536 = vpop.permute.xlu0 %2535
      %2537 = vrot.lane.b32.xlu0 %v2146, 64
      %v2538 = vpop.permute.xlu0 %2537
      %2539 = vrot.lane.b32.xlu0 %v2148, 64
      %v2540 = vpop.permute.xlu0 %2539
      %2541 = vrot.lane.b32.xlu0 %v2150, 64
      %v2542 = vpop.permute.xlu0 %2541
      %v2592 = vmax.f32 %v2054, %v2446
      %v2593 = vmax.f32 %v2056, %v2448
      %v2594 = vmax.f32 %v2058, %v2450
      %v2595 = vmax.f32 %v2060, %v2452
      %v2596 = vmax.f32 %v2062, %v2454
      %v2597 = vmax.f32 %v2064, %v2456
      %v2598 = vmax.f32 %v2066, %v2458
      %v2599 = vmax.f32 %v2068, %v2460
      %v2600 = vmax.f32 %v2070, %v2462
      %v2601 = vmax.f32 %v2072, %v2464
      %v2602 = vmax.f32 %v2074, %v2466
      %v2603 = vmax.f32 %v2076, %v2468
      %v2604 = vmax.f32 %v2078, %v2470
      %v2605 = vmax.f32 %v2080, %v2472
      %v2606 = vmax.f32 %v2082, %v2474
      %v2607 = vmax.f32 %v2084, %v2476
      %v2608 = vmax.f32 %v2086, %v2478
      %v2609 = vmax.f32 %v2088, %v2480
      %v2610 = vmax.f32 %v2090, %v2482
      %v2611 = vmax.f32 %v2092, %v2484
      %v2612 = vmax.f32 %v2094, %v2486
      %v2613 = vmax.f32 %v2096, %v2488
      %v2614 = vmax.f32 %v2098, %v2490
      %v2615 = vmax.f32 %v2100, %v2492
      %v2616 = vmax.f32 %v2102, %v2494
      %v2617 = vmax.f32 %v2104, %v2496
      %v2618 = vmax.f32 %v2106, %v2498
      %v2619 = vmax.f32 %v2108, %v2500
      %v2620 = vmax.f32 %v2110, %v2502
      %v2621 = vmax.f32 %v2112, %v2504
      %v2622 = vmax.f32 %v2114, %v2506
      %v2623 = vmax.f32 %v2116, %v2508
      %v2624 = vmax.f32 %v2118, %v2510
      %v2625 = vmax.f32 %v2120, %v2512
      %v2626 = vmax.f32 %v2122, %v2514
      %v2627 = vmax.f32 %v2124, %v2516
      %v2628 = vmax.f32 %v2126, %v2518
      %v2629 = vmax.f32 %v2128, %v2520
      %v2630 = vmax.f32 %v2130, %v2522
      %v2631 = vmax.f32 %v2132, %v2524
      %v2632 = vmax.f32 %v2134, %v2526
      %v2633 = vmax.f32 %v2136, %v2528
      %v2634 = vmax.f32 %v2138, %v2530
      %v2635 = vmax.f32 %v2140, %v2532
      %v2636 = vmax.f32 %v2142, %v2534
      %v2637 = vmax.f32 %v2144, %v2536
      %v2638 = vmax.f32 %v2146, %v2538
      %v2639 = vmax.f32 %v2148, %v2540
      %v2640 = vmax.f32 %v2150, %v2542
      %v2641 = vmax.f32 %v2347, %v2592
      %v2642 = vmax.f32 %v2348, %v2593
      %v2643 = vmax.f32 %v2349, %v2594
      %v2644 = vmax.f32 %v2350, %v2595
      %v2645 = vmax.f32 %v2351, %v2596
      %v2646 = vmax.f32 %v2352, %v2597
      %v2647 = vmax.f32 %v2353, %v2598
      %v2648 = vmax.f32 %v2354, %v2599
      %v2649 = vmax.f32 %v2355, %v2600
      %v2650 = vmax.f32 %v2356, %v2601
      %v2651 = vmax.f32 %v2357, %v2602
      %v2652 = vmax.f32 %v2358, %v2603
      %v2653 = vmax.f32 %v2359, %v2604
      %v2654 = vmax.f32 %v2360, %v2605
      %v2655 = vmax.f32 %v2361, %v2606
      %v2656 = vmax.f32 %v2362, %v2607
      %v2657 = vmax.f32 %v2363, %v2608
      %v2658 = vmax.f32 %v2364, %v2609
      %v2659 = vmax.f32 %v2365, %v2610
      %v2660 = vmax.f32 %v2366, %v2611
      %v2661 = vmax.f32 %v2367, %v2612
      %v2662 = vmax.f32 %v2368, %v2613
      %v2663 = vmax.f32 %v2369, %v2614
      %v2664 = vmax.f32 %v2370, %v2615
      %v2665 = vmax.f32 %v2371, %v2616
      %v2666 = vmax.f32 %v2372, %v2617
      %v2667 = vmax.f32 %v2373, %v2618
      %v2668 = vmax.f32 %v2374, %v2619
      %v2669 = vmax.f32 %v2375, %v2620
      %v2670 = vmax.f32 %v2376, %v2621
      %v2671 = vmax.f32 %v2377, %v2622
      %v2672 = vmax.f32 %v2378, %v2623
      %v2673 = vmax.f32 %v2379, %v2624
      %v2674 = vmax.f32 %v2380, %v2625
      %v2675 = vmax.f32 %v2381, %v2626
      %v2676 = vmax.f32 %v2382, %v2627
      %v2677 = vmax.f32 %v2383, %v2628
      %v2678 = vmax.f32 %v2384, %v2629
      %v2679 = vmax.f32 %v2385, %v2630
      %v2680 = vmax.f32 %v2386, %v2631
      %v2681 = vmax.f32 %v2387, %v2632
      %v2682 = vmax.f32 %v2388, %v2633
      %v2683 = vmax.f32 %v2389, %v2634
      %v2684 = vmax.f32 %v2390, %v2635
      %v2685 = vmax.f32 %v2391, %v2636
      %v2686 = vmax.f32 %v2392, %v2637
      %v2687 = vmax.f32 %v2393, %v2638
      %v2688 = vmax.f32 %v2394, %v2639
      %v2689 = vmax.f32 %v2395, %v2640
      %v2690 = vpack.c.bf16 %v2642, %v2641
      %v2691 = vpack.c.bf16 %v2644, %v2643
      %v2692 = vpack.c.bf16 %v2646, %v2645
      %v2693 = vpack.c.bf16 %v2648, %v2647
      %v2694 = vpack.c.bf16 %v2650, %v2649
      %v2695 = vpack.c.bf16 %v2652, %v2651
      %v2696 = vpack.c.bf16 %v2654, %v2653
      %v2697 = vpack.c.bf16 %v2656, %v2655
      %v2698 = vpack.c.bf16 %v2658, %v2657
      %v2699 = vpack.c.bf16 %v2660, %v2659
      %v2700 = vpack.c.bf16 %v2662, %v2661
      %v2701 = vpack.c.bf16 %v2664, %v2663
      %v2702 = vpack.c.bf16 %v2666, %v2665
      %v2703 = vpack.c.bf16 %v2668, %v2667
      %v2704 = vpack.c.bf16 %v2670, %v2669
      %v2705 = vpack.c.bf16 %v2672, %v2671
      %v2706 = vpack.c.bf16 %v2674, %v2673
      %v2707 = vpack.c.bf16 %v2676, %v2675
      %v2708 = vpack.c.bf16 %v2678, %v2677
      %v2709 = vpack.c.bf16 %v2680, %v2679
      %v2710 = vpack.c.bf16 %v2682, %v2681
      %v2711 = vpack.c.bf16 %v2684, %v2683
      %v2712 = vpack.c.bf16 %v2686, %v2685
      %v2713 = vpack.c.bf16 %v2688, %v2687
      %v2714 = vpack.c.bf16 %v2689, %v2689
      %v2715 = vld [vmem:[%s3] sm:$0xf]
      %v2716 = vld [vmem:[%s3 + $0x4] sm:$0xf]
      %v2717 = vld [vmem:[%s3 + $0x8] sm:$0xf]
      %v2718 = vld [vmem:[%s3 + $0xc] sm:$0xf]
      %v2719 = vld [vmem:[%s3 + $0x10] sm:$0xf]
      %v2720 = vld [vmem:[%s3 + $0x14] sm:$0xf]
      %v2721 = vld [vmem:[%s3 + $0x18] sm:$0xf]
      %v2722 = vld [vmem:[%s3 + $0x1c] sm:$0xf]
      %v2723 = vpack.c.bf16 0.0, %v2689
      %v2724 = vld [vmem:[%s3 + $0x20] sm:$0xf]
      %v2725 = vld [vmem:[%s3 + $0x24] sm:$0xf]
      %v2726 = vld [vmem:[%s3 + $0x28] sm:$0xf]
      %v2727 = vld [vmem:[%s3 + $0x2c] sm:$0xf]
      %v2728 = vld [vmem:[%s3 + $0x30] sm:$0xf]
      %v2729 = vld [vmem:[%s3 + $0x34] sm:$0xf]
      %v2730 = vld [vmem:[%s3 + $0x38] sm:$0xf]
      %v2731 = vld [vmem:[%s3 + $0x3c] sm:$0xf]
      %vm2732 = vsmask.f32 7424
      %v2734 = vshrl.u32 %v2690, 16
      %v2736 = vshll.u32 %v2690, 16
      %v2738 = vrot.slane %v2736, 1
      %v2739 = vor.u32 %v2734, %v2738
      %v2741 = vshll.u32 %v2691, 16
      %v2743 = vrot.slane %v2741, 1
      %v2744 = vsel %vm2732, %v2739, %v2743
      %v2745 = vshrl.u32 %v2691, 16
      %v2747 = vor.u32 %v2745, %v2743
      %v2749 = vshll.u32 %v2692, 16
      %v2751 = vrot.slane %v2749, 1
      %v2752 = vsel %vm2732, %v2747, %v2751
      %v2753 = vshrl.u32 %v2692, 16
      %v2755 = vor.u32 %v2753, %v2751
      %v2757 = vshll.u32 %v2693, 16
      %v2759 = vrot.slane %v2757, 1
      %v2760 = vsel %vm2732, %v2755, %v2759
      %v2761 = vshrl.u32 %v2693, 16
      %v2763 = vor.u32 %v2761, %v2759
      %v2765 = vshll.u32 %v2694, 16
      %v2767 = vrot.slane %v2765, 1
      %v2768 = vsel %vm2732, %v2763, %v2767
      %v2769 = vshrl.u32 %v2694, 16
      %v2771 = vor.u32 %v2769, %v2767
      %v2773 = vshll.u32 %v2695, 16
      %v2775 = vrot.slane %v2773, 1
      %v2776 = vsel %vm2732, %v2771, %v2775
      %v2777 = vshrl.u32 %v2695, 16
      %v2779 = vor.u32 %v2777, %v2775
      %v2781 = vshll.u32 %v2696, 16
      %v2783 = vrot.slane %v2781, 1
      %v2784 = vsel %vm2732, %v2779, %v2783
      %v2785 = vshrl.u32 %v2696, 16
      %v2787 = vor.u32 %v2785, %v2783
      %v2789 = vshll.u32 %v2697, 16
      %v2791 = vrot.slane %v2789, 1
      %v2792 = vsel %vm2732, %v2787, %v2791
      %v2793 = vshrl.u32 %v2697, 16
      %v2795 = vor.u32 %v2793, %v2791
      %v2797 = vshll.u32 %v2698, 16
      %v2799 = vrot.slane %v2797, 1
      %v2800 = vsel %vm2732, %v2795, %v2799
      %v2801 = vshrl.u32 %v2698, 16
      %v2803 = vor.u32 %v2801, %v2799
      %v2805 = vshll.u32 %v2699, 16
      %v2807 = vrot.slane %v2805, 1
      %v2808 = vsel %vm2732, %v2803, %v2807
      %v2809 = vshrl.u32 %v2699, 16
      %v2811 = vor.u32 %v2809, %v2807
      %v2813 = vshll.u32 %v2700, 16
      %v2815 = vrot.slane %v2813, 1
      %v2816 = vsel %vm2732, %v2811, %v2815
      %v2817 = vshrl.u32 %v2700, 16
      %v2819 = vor.u32 %v2817, %v2815
      %v2821 = vshll.u32 %v2701, 16
      %v2823 = vrot.slane %v2821, 1
      %v2824 = vsel %vm2732, %v2819, %v2823
      %v2825 = vshrl.u32 %v2701, 16
      %v2827 = vor.u32 %v2825, %v2823
      %v2829 = vshll.u32 %v2702, 16
      %v2831 = vrot.slane %v2829, 1
      %v2832 = vsel %vm2732, %v2827, %v2831
      %v2833 = vshrl.u32 %v2702, 16
      %v2835 = vor.u32 %v2833, %v2831
      %v2837 = vshll.u32 %v2703, 16
      %v2839 = vrot.slane %v2837, 1
      %v2840 = vsel %vm2732, %v2835, %v2839
      %v2841 = vshrl.u32 %v2703, 16
      %v2843 = vor.u32 %v2841, %v2839
      %v2845 = vshll.u32 %v2704, 16
      %v2847 = vrot.slane %v2845, 1
      %v2848 = vsel %vm2732, %v2843, %v2847
      %v2849 = vshrl.u32 %v2704, 16
      %v2851 = vor.u32 %v2849, %v2847
      %v2853 = vshll.u32 %v2705, 16
      %v2855 = vrot.slane %v2853, 1
      %v2856 = vsel %vm2732, %v2851, %v2855
      %v2857 = vshrl.u32 %v2705, 16
      %v2859 = vor.u32 %v2857, %v2855
      %v2861 = vshll.u32 %v2706, 16
      %v2863 = vrot.slane %v2861, 1
      %v2864 = vsel %vm2732, %v2859, %v2863
      %v2865 = vshrl.u32 %v2706, 16
      %v2867 = vor.u32 %v2865, %v2863
      %v2869 = vshll.u32 %v2707, 16
      %v2871 = vrot.slane %v2869, 1
      %v2872 = vsel %vm2732, %v2867, %v2871
      %v2873 = vshrl.u32 %v2707, 16
      %v2875 = vor.u32 %v2873, %v2871
      %v2877 = vshll.u32 %v2708, 16
      %v2879 = vrot.slane %v2877, 1
      %v2880 = vsel %vm2732, %v2875, %v2879
      %v2881 = vshrl.u32 %v2708, 16
      %v2883 = vor.u32 %v2881, %v2879
      %v2885 = vshll.u32 %v2709, 16
      %v2887 = vrot.slane %v2885, 1
      %v2888 = vsel %vm2732, %v2883, %v2887
      %v2889 = vshrl.u32 %v2709, 16
      %v2891 = vor.u32 %v2889, %v2887
      %v2893 = vshll.u32 %v2710, 16
      %v2895 = vrot.slane %v2893, 1
      %v2896 = vsel %vm2732, %v2891, %v2895
      %v2897 = vshrl.u32 %v2710, 16
      %v2899 = vor.u32 %v2897, %v2895
      %v2901 = vshll.u32 %v2711, 16
      %v2903 = vrot.slane %v2901, 1
      %v2904 = vsel %vm2732, %v2899, %v2903
      %v2905 = vshrl.u32 %v2711, 16
      %v2907 = vor.u32 %v2905, %v2903
      %v2909 = vshll.u32 %v2712, 16
      %v2911 = vrot.slane %v2909, 1
      %v2912 = vsel %vm2732, %v2907, %v2911
      %v2913 = vshrl.u32 %v2712, 16
      %v2915 = vor.u32 %v2913, %v2911
      %v2917 = vshll.u32 %v2713, 16
      %v2919 = vrot.slane %v2917, 1
      %v2920 = vsel %vm2732, %v2915, %v2919
      %v2921 = vshrl.u32 %v2713, 16
      %v2923 = vor.u32 %v2921, %v2919
      %v2925 = vshll.u32 %v2723, 16
      %v2927 = vrot.slane %v2925, 1
      %v2928 = vsel %vm2732, %v2923, %v2927
      %v2929 = vshrl.u32 %v2723, 16
      %v2931 = vor.u32 %v2929, %v2927
      %v2940 = vunpack.c.l.b16 %v2724
      %v2941 = vunpack.c.l.b16 %v2725
      %v2942 = vunpack.c.l.b16 %v2726
      %v2943 = vunpack.c.l.b16 %v2727
      %v2944 = vunpack.c.l.b16 %v2728
      %v2945 = vunpack.c.l.b16 %v2729
      %v2946 = vunpack.c.l.b16 %v2730
      %v2947 = vunpack.c.l.b16 %v2731
      %v2948 = vpack.c.b16 %v2941, %v2940
      %v2949 = vpack.c.b16 %v2943, %v2942
      %v2950 = vpack.c.b16 %v2945, %v2944
      %v2951 = vpack.c.b16 %v2947, %v2946
      %v2957 = vsel %vm487, %v2744, 0
      %v2960 = vsel %vm487, %v2752, 0
      %v2963 = vsel %vm487, %v2760, 0
      %v2966 = vsel %vm487, %v2768, 0
      %v2969 = vsel %vm487, %v2776, 0
      %v2972 = vsel %vm487, %v2784, 0
      %v2975 = vsel %vm487, %v2792, 0
      %v2978 = vsel %vm487, %v2800, 0
      %v2981 = vsel %vm487, %v2808, 0
      %v2984 = vsel %vm487, %v2816, 0
      %v2987 = vsel %vm487, %v2824, 0
      %v2990 = vsel %vm487, %v2832, 0
      %v2993 = vsel %vm487, %v2840, 0
      %v2996 = vsel %vm487, %v2848, 0
      %v2999 = vsel %vm487, %v2856, 0
      %v3002 = vsel %vm487, %v2864, 0
      %v3005 = vsel %vm487, %v2872, 0
      %v3008 = vsel %vm487, %v2880, 0
      %v3011 = vsel %vm487, %v2888, 0
      %v3014 = vsel %vm487, %v2896, 0
      %v3017 = vsel %vm487, %v2904, 0
      %v3020 = vsel %vm487, %v2912, 0
      %v3023 = vsel %vm487, %v2920, 0
      %v3026 = vsel %vm487, %v2928, 0
      %v3029 = vsel %vm487, %v2931, 0
      %3031 = vmatprep.subr.bf16.mxu0 0
      %3032 = vmatpush1.bf16.msra.mxu0 %v2948
      %3033 = vmatprep.subr.bf16.mxu0 0
      %3034 = vmatpush1.bf16.msra.mxu0 %v2949
      %3035 = vmatprep.subr.bf16.mxu0 0
      %3036 = vmatpush1.bf16.msra.mxu0 %v2950
      %3037 = vmatprep.subr.bf16.mxu0 0
      %3038 = vmatpush1.bf16.msra.mxu0 %v2951
      %3039 = vmatprep.subr.bf16.mxu0 0
      %3040 = vmatpush1.bf16.msra.mxu0 0
      %3041 = vmatprep.subr.bf16.mxu0 0
      %3042 = vmatpush1.bf16.msra.mxu0 0
      %3043 = vmatprep.subr.bf16.mxu0 0
      %3044 = vmatpush1.bf16.msra.mxu0 0
      %3045 = vmatprep.subr.bf16.mxu0 0
      %3046 = vmatpush1.bf16.msra.mxu0 0
      %3047 = vmatprep.subr.bf16.mxu0 0
      %3048 = vmatpush1.bf16.msra.mxu0 0
      %3049 = vmatprep.subr.bf16.mxu0 0
      %3050 = vmatpush1.bf16.msra.mxu0 0
      %3051 = vmatprep.subr.bf16.mxu0 0
      %3052 = vmatpush1.bf16.msra.mxu0 0
      %3053 = vmatprep.subr.bf16.mxu0 0
      %3054 = vmatpush1.bf16.msra.mxu0 0
      %3055 = vmatprep.subr.bf16.mxu0 0
      %3056 = vmatpush1.bf16.msra.mxu0 0
      %3057 = vmatprep.subr.bf16.mxu0 0
      %3058 = vmatpush1.bf16.msra.mxu0 0
      %3059 = vmatprep.subr.bf16.mxu0 0
      %3060 = vmatpush1.bf16.msra.mxu0 0
      %3061 = vmatprep.subr.bf16.mxu0 0
      %3062 = vmatpush1.bf16.msra.mxu0 0
      %3063 = vmatprep.mubr.bf16.mxu0 0
      %3064 = vmatmul.mubr.bf16.gmra.mrb[0].mxu0 %v2957
      %v3065 = vpop.f32.mrb[0].mxu0
      %v3066 = vadd.f32 0.0, %v3065
      %v3067 = vpop.f32.mrb[0].mxu0
      %v3068 = vpop.f32.mrb[0].mxu0
      %v3069 = vadd.f32 0.0, %v3068
      %v3070 = vpop.f32.mrb[0].mxu0
      %3071 = vmatprep.mubr.bf16.mxu0 0
      %3072 = vmatmul.mubr.bf16.gmra.mrb[0].mxu0 %v2960
      %v3073 = vpop.f32.mrb[0].mxu0
      %v3074 = vadd.f32 0.0, %v3073
      %v3075 = vpop.f32.mrb[0].mxu0
      %v3076 = vpop.f32.mrb[0].mxu0
      %v3077 = vadd.f32 0.0, %v3076
      %v3078 = vpop.f32.mrb[0].mxu0
      %3079 = vmatprep.mubr.bf16.mxu0 0
      %3080 = vmatmul.mubr.bf16.gmra.mrb[0].mxu0 %v2963
      %v3081 = vpop.f32.mrb[0].mxu0
      %v3082 = vadd.f32 0.0, %v3081
      %v3083 = vpop.f32.mrb[0].mxu0
      %v3084 = vpop.f32.mrb[0].mxu0
      %v3085 = vpop.f32.mrb[0].mxu0
      %3086 = vmatprep.mubr.bf16.mxu0 0
      %3087 = vmatmul.mubr.bf16.gmra.mrb[0].mxu0 %v2966
      %v3088 = vpop.f32.mrb[0].mxu0
      %v3089 = vadd.f32 0.0, %v3088
      %v3090 = vpop.f32.mrb[0].mxu0
      %v3091 = vpop.f32.mrb[0].mxu0
      %v3092 = vadd.f32 0.0, %v3091
      %v3093 = vpop.f32.mrb[0].mxu0
      %3094 = vmatprep.mubr.bf16.mxu0 0
      %3095 = vmatmul.mubr.bf16.gmra.mrb[0].mxu0 %v2969
      %v3096 = vpop.f32.mrb[0].mxu0
      %v3097 = vadd.f32 0.0, %v3096
      %v3098 = vpop.f32.mrb[0].mxu0
      %v3099 = vpop.f32.mrb[0].mxu0
      %v3100 = vadd.f32 0.0, %v3099
      %v3101 = vpop.f32.mrb[0].mxu0
      %3102 = vmatprep.mubr.bf16.mxu0 0
      %3103 = vmatmul.mubr.bf16.gmra.mrb[0].mxu0 %v2972
      %v3104 = vpop.f32.mrb[0].mxu0
      %v3105 = vadd.f32 0.0, %v3104
      %v3106 = vpop.f32.mrb[0].mxu0
      %v3107 = vpop.f32.mrb[0].mxu0
      %v3108 = vpop.f32.mrb[0].mxu0
      %3109 = vmatprep.mubr.bf16.mxu0 0
      %3110 = vmatmul.mubr.bf16.gmra.mrb[0].mxu0 %v2975
      %v3111 = vpop.f32.mrb[0].mxu0
      %v3112 = vadd.f32 0.0, %v3111
      %v3113 = vpop.f32.mrb[0].mxu0
      %v3114 = vpop.f32.mrb[0].mxu0
      %v3115 = vadd.f32 0.0, %v3114
      %v3116 = vpop.f32.mrb[0].mxu0
      %3117 = vmatprep.mubr.bf16.mxu0 0
      %3118 = vmatmul.mubr.bf16.gmra.mrb[0].mxu0 %v2978
      %v3119 = vpop.f32.mrb[0].mxu0
      %v3120 = vadd.f32 0.0, %v3119
      %v3121 = vpop.f32.mrb[0].mxu0
      %v3122 = vpop.f32.mrb[0].mxu0
      %v3123 = vadd.f32 0.0, %v3122
      %v3124 = vpop.f32.mrb[0].mxu0
      %3125 = vmatprep.mubr.bf16.mxu0 0
      %3126 = vmatmul.mubr.bf16.gmra.mrb[0].mxu0 %v2981
      %v3127 = vpop.f32.mrb[0].mxu0
      %v3128 = vadd.f32 0.0, %v3127
      %v3129 = vpop.f32.mrb[0].mxu0
      %v3130 = vpop.f32.mrb[0].mxu0
      %v3131 = vpop.f32.mrb[0].mxu0
      %3132 = vmatprep.mubr.bf16.mxu0 0
      %3133 = vmatmul.mubr.bf16.gmra.mrb[0].mxu0 %v2984
      %v3134 = vpop.f32.mrb[0].mxu0
      %v3135 = vadd.f32 0.0, %v3134
      %v3136 = vpop.f32.mrb[0].mxu0
      %v3137 = vpop.f32.mrb[0].mxu0
      %v3138 = vadd.f32 0.0, %v3137
      %v3139 = vpop.f32.mrb[0].mxu0
      %3140 = vmatprep.mubr.bf16.mxu0 0
      %3141 = vmatmul.mubr.bf16.gmra.mrb[0].mxu0 %v2987
      %v3142 = vpop.f32.mrb[0].mxu0
      %v3143 = vadd.f32 0.0, %v3142
      %v3144 = vpop.f32.mrb[0].mxu0
      %v3145 = vpop.f32.mrb[0].mxu0
      %v3146 = vadd.f32 0.0, %v3145
      %v3147 = vpop.f32.mrb[0].mxu0
      %3148 = vmatprep.mubr.bf16.mxu0 0
      %3149 = vmatmul.mubr.bf16.gmra.mrb[0].mxu0 %v2990
      %v3150 = vpop.f32.mrb[0].mxu0
      %v3151 = vadd.f32 0.0, %v3150
      %v3152 = vpop.f32.mrb[0].mxu0
      %v3153 = vpop.f32.mrb[0].mxu0
      %v3154 = vpop.f32.mrb[0].mxu0
      %3155 = vmatprep.mubr.bf16.mxu0 0
      %3156 = vmatmul.mubr.bf16.gmra.mrb[0].mxu0 %v2993
      %v3157 = vpop.f32.mrb[0].mxu0
      %v3158 = vadd.f32 0.0, %v3157
      %v3159 = vpop.f32.mrb[0].mxu0
      %v3160 = vpop.f32.mrb[0].mxu0
      %v3161 = vadd.f32 0.0, %v3160
      %v3162 = vpop.f32.mrb[0].mxu0
      %3163 = vmatprep.mubr.bf16.mxu0 0
      %3164 = vmatmul.mubr.bf16.gmra.mrb[0].mxu0 %v2996
      %v3165 = vpop.f32.mrb[0].mxu0
      %v3166 = vadd.f32 0.0, %v3165
      %v3167 = vpop.f32.mrb[0].mxu0
      %v3168 = vpop.f32.mrb[0].mxu0
      %v3169 = vadd.f32 0.0, %v3168
      %v3170 = vpop.f32.mrb[0].mxu0
      %3171 = vmatprep.mubr.bf16.mxu0 0
      %3172 = vmatmul.mubr.bf16.gmra.mrb[0].mxu0 %v2999
      %v3173 = vpop.f32.mrb[0].mxu0
      %v3174 = vadd.f32 0.0, %v3173
      %v3175 = vpop.f32.mrb[0].mxu0
      %v3176 = vpop.f32.mrb[0].mxu0
      %v3177 = vpop.f32.mrb[0].mxu0
      %3178 = vmatprep.mubr.bf16.mxu0 0
      %3179 = vmatmul.mubr.bf16.gmra.mrb[0].mxu0 %v3002
      %v3180 = vpop.f32.mrb[0].mxu0
      %v3181 = vadd.f32 0.0, %v3180
      %v3182 = vpop.f32.mrb[0].mxu0
      %v3183 = vpop.f32.mrb[0].mxu0
      %v3184 = vadd.f32 0.0, %v3183
      %v3185 = vpop.f32.mrb[0].mxu0
      %3186 = vmatprep.mubr.bf16.mxu0 0
      %3187 = vmatmul.mubr.bf16.gmra.mrb[0].mxu0 %v3005
      %v3188 = vpop.f32.mrb[0].mxu0
      %v3189 = vadd.f32 0.0, %v3188
      %v3190 = vpop.f32.mrb[0].mxu0
      %v3191 = vpop.f32.mrb[0].mxu0
      %v3192 = vadd.f32 0.0, %v3191
      %v3193 = vpop.f32.mrb[0].mxu0
      %3194 = vmatprep.mubr.bf16.mxu0 0
      %3195 = vmatmul.mubr.bf16.gmra.mrb[0].mxu0 %v3008
      %v3196 = vpop.f32.mrb[0].mxu0
      %v3197 = vadd.f32 0.0, %v3196
      %v3198 = vpop.f32.mrb[0].mxu0
      %v3199 = vpop.f32.mrb[0].mxu0
      %v3200 = vpop.f32.mrb[0].mxu0
      %3201 = vmatprep.mubr.bf16.mxu0 0
      %3202 = vmatmul.mubr.bf16.gmra.mrb[0].mxu0 %v3011
      %v3203 = vpop.f32.mrb[0].mxu0
      %v3204 = vadd.f32 0.0, %v3203
      %v3205 = vpop.f32.mrb[0].mxu0
      %v3206 = vpop.f32.mrb[0].mxu0
      %v3207 = vadd.f32 0.0, %v3206
      %v3208 = vpop.f32.mrb[0].mxu0
      %3209 = vmatprep.mubr.bf16.mxu0 0
      %3210 = vmatmul.mubr.bf16.gmra.mrb[0].mxu0 %v3014
      %v3211 = vpop.f32.mrb[0].mxu0
      %v3212 = vadd.f32 0.0, %v3211
      %v3213 = vpop.f32.mrb[0].mxu0
      %v3214 = vpop.f32.mrb[0].mxu0
      %v3215 = vadd.f32 0.0, %v3214
      %v3216 = vpop.f32.mrb[0].mxu0
      %3217 = vmatprep.mubr.bf16.mxu0 0
      %3218 = vmatmul.mubr.bf16.gmra.mrb[0].mxu0 %v3017
      %v3219 = vpop.f32.mrb[0].mxu0
      %v3220 = vadd.f32 0.0, %v3219
      %v3221 = vpop.f32.mrb[0].mxu0
      %v3222 = vpop.f32.mrb[0].mxu0
      %v3223 = vpop.f32.mrb[0].mxu0
      %3224 = vmatprep.mubr.bf16.mxu0 0
      %3225 = vmatmul.mubr.bf16.gmra.mrb[0].mxu0 %v3020
      %v3226 = vpop.f32.mrb[0].mxu0
      %v3227 = vadd.f32 0.0, %v3226
      %v3228 = vpop.f32.mrb[0].mxu0
      %v3229 = vpop.f32.mrb[0].mxu0
      %v3230 = vadd.f32 0.0, %v3229
      %v3231 = vpop.f32.mrb[0].mxu0
      %3232 = vmatprep.mubr.bf16.mxu0 0
      %3233 = vmatmul.mubr.bf16.gmra.mrb[0].mxu0 %v3023
      %v3234 = vpop.f32.mrb[0].mxu0
      %v3235 = vadd.f32 0.0, %v3234
      %v3236 = vpop.f32.mrb[0].mxu0
      %v3237 = vpop.f32.mrb[0].mxu0
      %v3238 = vadd.f32 0.0, %v3237
      %v3239 = vpop.f32.mrb[0].mxu0
      %3240 = vmatprep.mubr.bf16.mxu0 0
      %3241 = vmatmul.mubr.bf16.gmra.mrb[0].mxu0 %v3026
      %v3242 = vpop.f32.mrb[0].mxu0
      %v3243 = vadd.f32 0.0, %v3242
      %v3244 = vpop.f32.mrb[0].mxu0
      %v3245 = vpop.f32.mrb[0].mxu0
      %v3246 = vpop.f32.mrb[0].mxu0
      %3247 = vmatprep.mubr.bf16.mxu0 0
      %3248 = vmatmul.mubr.bf16.gmra.mrb[0].mxu0 %v3029
      %v3249 = vpop.f32.mrb[0].mxu0
      %v3250 = vpop.f32.mrb[0].mxu0
      %v3251 = vpop.f32.mrb[0].mxu0
      %v3252 = vpop.f32.mrb[0].mxu0
      %3253 = vdwg.mxu0
      %v3262 = vunpack.c.l.b16 %v2715
      %v3263 = vunpack.c.l.b16 %v2716
      %v3264 = vunpack.c.l.b16 %v2717
      %v3265 = vunpack.c.l.b16 %v2718
      %v3266 = vunpack.c.l.b16 %v2719
      %v3267 = vunpack.c.l.b16 %v2720
      %v3268 = vunpack.c.l.b16 %v2721
      %v3269 = vunpack.c.l.b16 %v2722
      %v3270 = vpack.c.b16 %v3263, %v3262
      %v3271 = vpack.c.b16 %v3265, %v3264
      %v3272 = vpack.c.b16 %v3267, %v3266
      %v3273 = vpack.c.b16 %v3269, %v3268
      %v3278 = vsel %vm487, %v2690, 0
      %v3280 = vsel %vm487, %v2691, 0
      %v3282 = vsel %vm487, %v2692, 0
      %v3284 = vsel %vm487, %v2693, 0
      %v3286 = vsel %vm487, %v2694, 0
      %v3288 = vsel %vm487, %v2695, 0
      %v3290 = vsel %vm487, %v2696, 0
      %v3292 = vsel %vm487, %v2697, 0
      %v3294 = vsel %vm487, %v2698, 0
      %v3296 = vsel %vm487, %v2699, 0
      %v3298 = vsel %vm487, %v2700, 0
      %v3300 = vsel %vm487, %v2701, 0
      %v3302 = vsel %vm487, %v2702, 0
      %v3304 = vsel %vm487, %v2703, 0
      %v3306 = vsel %vm487, %v2704, 0
      %v3308 = vsel %vm487, %v2705, 0
      %v3310 = vsel %vm487, %v2706, 0
      %v3312 = vsel %vm487, %v2707, 0
      %v3314 = vsel %vm487, %v2708, 0
      %v3316 = vsel %vm487, %v2709, 0
      %v3318 = vsel %vm487, %v2710, 0
      %v3320 = vsel %vm487, %v2711, 0
      %v3322 = vsel %vm487, %v2712, 0
      %v3324 = vsel %vm487, %v2713, 0
      %v3327 = vsel %vm487, %v2714, 0
      %3329 = vmatprep.subr.bf16.mxu0 0
      %3330 = vmatpush1.bf16.msra.mxu0 %v3270
      %3331 = vmatprep.subr.bf16.mxu0 0
      %3332 = vmatpush1.bf16.msra.mxu0 %v3271
      %3333 = vmatprep.subr.bf16.mxu0 0
      %3334 = vmatpush1.bf16.msra.mxu0 %v3272
      %3335 = vmatprep.subr.bf16.mxu0 0
      %3336 = vmatpush1.bf16.msra.mxu0 %v3273
      %3337 = vmatprep.subr.bf16.mxu0 0
      %3338 = vmatpush1.bf16.msra.mxu0 0
      %3339 = vmatprep.subr.bf16.mxu0 0
      %3340 = vmatpush1.bf16.msra.mxu0 0
      %3341 = vmatprep.subr.bf16.mxu0 0
      %3342 = vmatpush1.bf16.msra.mxu0 0
      %3343 = vmatprep.subr.bf16.mxu0 0
      %3344 = vmatpush1.bf16.msra.mxu0 0
      %3345 = vmatprep.subr.bf16.mxu0 0
      %3346 = vmatpush1.bf16.msra.mxu0 0
      %3347 = vmatprep.subr.bf16.mxu0 0
      %3348 = vmatpush1.bf16.msra.mxu0 0
      %3349 = vmatprep.subr.bf16.mxu0 0
      %3350 = vmatpush1.bf16.msra.mxu0 0
      %3351 = vmatprep.subr.bf16.mxu0 0
      %3352 = vmatpush1.bf16.msra.mxu0 0
      %3353 = vmatprep.subr.bf16.mxu0 0
      %3354 = vmatpush1.bf16.msra.mxu0 0
      %3355 = vmatprep.subr.bf16.mxu0 0
      %3356 = vmatpush1.bf16.msra.mxu0 0
      %3357 = vmatprep.subr.bf16.mxu0 0
      %3358 = vmatpush1.bf16.msra.mxu0 0
      %3359 = vmatprep.subr.bf16.mxu0 0
      %3360 = vmatpush1.bf16.msra.mxu0 0
      %3361 = vmatprep.mubr.bf16.mxu0 0
      %3362 = vmatmul.mubr.bf16.gmra.mrb[0].mxu0 %v3278
      %v3363 = vpop.f32.mrb[0].mxu0
      %v3364 = vadd.f32 %v3066, %v3363
      %v3365 = vpop.f32.mrb[0].mxu0
      %v3366 = vpop.f32.mrb[0].mxu0
      %v3367 = vadd.f32 %v3069, %v3366
      %v3368 = vpop.f32.mrb[0].mxu0
      %3369 = vmatprep.mubr.bf16.mxu0 0
      %3370 = vmatmul.mubr.bf16.gmra.mrb[0].mxu0 %v3280
      %v3371 = vpop.f32.mrb[0].mxu0
      %v3372 = vadd.f32 %v3074, %v3371
      %v3373 = vpop.f32.mrb[0].mxu0
      %v3374 = vpop.f32.mrb[0].mxu0
      %v3375 = vadd.f32 %v3077, %v3374
      %v3376 = vpop.f32.mrb[0].mxu0
      %3377 = vmatprep.mubr.bf16.mxu0 0
      %3378 = vmatmul.mubr.bf16.gmra.mrb[0].mxu0 %v3282
      %v3379 = vpop.f32.mrb[0].mxu0
      %v3380 = vadd.f32 %v3082, %v3379
      %v3381 = vpop.f32.mrb[0].mxu0
      %v3382 = vpop.f32.mrb[0].mxu0
      %v3383 = vpop.f32.mrb[0].mxu0
      %3384 = vmatprep.mubr.bf16.mxu0 0
      %3385 = vmatmul.mubr.bf16.gmra.mrb[0].mxu0 %v3284
      %v3386 = vpop.f32.mrb[0].mxu0
      %v3387 = vadd.f32 %v3089, %v3386
      %v3388 = vpop.f32.mrb[0].mxu0
      %v3389 = vpop.f32.mrb[0].mxu0
      %v3390 = vadd.f32 %v3092, %v3389
      %v3391 = vpop.f32.mrb[0].mxu0
      %3392 = vmatprep.mubr.bf16.mxu0 0
      %3393 = vmatmul.mubr.bf16.gmra.mrb[0].mxu0 %v3286
      %v3394 = vpop.f32.mrb[0].mxu0
      %v3395 = vadd.f32 %v3097, %v3394
      %v3396 = vpop.f32.mrb[0].mxu0
      %v3397 = vpop.f32.mrb[0].mxu0
      %v3398 = vadd.f32 %v3100, %v3397
      %v3399 = vpop.f32.mrb[0].mxu0
      %3400 = vmatprep.mubr.bf16.mxu0 0
      %3401 = vmatmul.mubr.bf16.gmra.mrb[0].mxu0 %v3288
      %v3402 = vpop.f32.mrb[0].mxu0
      %v3403 = vadd.f32 %v3105, %v3402
      %v3404 = vpop.f32.mrb[0].mxu0
      %v3405 = vpop.f32.mrb[0].mxu0
      %v3406 = vpop.f32.mrb[0].mxu0
      %3407 = vmatprep.mubr.bf16.mxu0 0
      %3408 = vmatmul.mubr.bf16.gmra.mrb[0].mxu0 %v3290
      %v3409 = vpop.f32.mrb[0].mxu0
      %v3410 = vadd.f32 %v3112, %v3409
      %v3411 = vpop.f32.mrb[0].mxu0
      %v3412 = vpop.f32.mrb[0].mxu0
      %v3413 = vadd.f32 %v3115, %v3412
      %v3414 = vpop.f32.mrb[0].mxu0
      %3415 = vmatprep.mubr.bf16.mxu0 0
      %3416 = vmatmul.mubr.bf16.gmra.mrb[0].mxu0 %v3292
      %v3417 = vpop.f32.mrb[0].mxu0
      %v3418 = vadd.f32 %v3120, %v3417
      %v3419 = vpop.f32.mrb[0].mxu0
      %v3420 = vpop.f32.mrb[0].mxu0
      %v3421 = vadd.f32 %v3123, %v3420
      %v3422 = vpop.f32.mrb[0].mxu0
      %3423 = vmatprep.mubr.bf16.mxu0 0
      %3424 = vmatmul.mubr.bf16.gmra.mrb[0].mxu0 %v3294
      %v3425 = vpop.f32.mrb[0].mxu0
      %v3426 = vadd.f32 %v3128, %v3425
      %v3427 = vpop.f32.mrb[0].mxu0
      %v3428 = vpop.f32.mrb[0].mxu0
      %v3429 = vpop.f32.mrb[0].mxu0
      %3430 = vmatprep.mubr.bf16.mxu0 0
      %3431 = vmatmul.mubr.bf16.gmra.mrb[0].mxu0 %v3296
      %v3432 = vpop.f32.mrb[0].mxu0
      %v3433 = vadd.f32 %v3135, %v3432
      %v3434 = vpop.f32.mrb[0].mxu0
      %v3435 = vpop.f32.mrb[0].mxu0
      %v3436 = vadd.f32 %v3138, %v3435
      %v3437 = vpop.f32.mrb[0].mxu0
      %3438 = vmatprep.mubr.bf16.mxu0 0
      %3439 = vmatmul.mubr.bf16.gmra.mrb[0].mxu0 %v3298
      %v3440 = vpop.f32.mrb[0].mxu0
      %v3441 = vadd.f32 %v3143, %v3440
      %v3442 = vpop.f32.mrb[0].mxu0
      %v3443 = vpop.f32.mrb[0].mxu0
      %v3444 = vadd.f32 %v3146, %v3443
      %v3445 = vpop.f32.mrb[0].mxu0
      %3446 = vmatprep.mubr.bf16.mxu0 0
      %3447 = vmatmul.mubr.bf16.gmra.mrb[0].mxu0 %v3300
      %v3448 = vpop.f32.mrb[0].mxu0
      %v3449 = vadd.f32 %v3151, %v3448
      %v3450 = vpop.f32.mrb[0].mxu0
      %v3451 = vpop.f32.mrb[0].mxu0
      %v3452 = vpop.f32.mrb[0].mxu0
      %3453 = vmatprep.mubr.bf16.mxu0 0
      %3454 = vmatmul.mubr.bf16.gmra.mrb[0].mxu0 %v3302
      %v3455 = vpop.f32.mrb[0].mxu0
      %v3456 = vadd.f32 %v3158, %v3455
      %v3457 = vpop.f32.mrb[0].mxu0
      %v3458 = vpop.f32.mrb[0].mxu0
      %v3459 = vadd.f32 %v3161, %v3458
      %v3460 = vpop.f32.mrb[0].mxu0
      %3461 = vmatprep.mubr.bf16.mxu0 0
      %3462 = vmatmul.mubr.bf16.gmra.mrb[0].mxu0 %v3304
      %v3463 = vpop.f32.mrb[0].mxu0
      %v3464 = vadd.f32 %v3166, %v3463
      %v3465 = vpop.f32.mrb[0].mxu0
      %v3466 = vpop.f32.mrb[0].mxu0
      %v3467 = vadd.f32 %v3169, %v3466
      %v3468 = vpop.f32.mrb[0].mxu0
      %3469 = vmatprep.mubr.bf16.mxu0 0
      %3470 = vmatmul.mubr.bf16.gmra.mrb[0].mxu0 %v3306
      %v3471 = vpop.f32.mrb[0].mxu0
      %v3472 = vadd.f32 %v3174, %v3471
      %v3473 = vpop.f32.mrb[0].mxu0
      %v3474 = vpop.f32.mrb[0].mxu0
      %v3475 = vpop.f32.mrb[0].mxu0
      %3476 = vmatprep.mubr.bf16.mxu0 0
      %3477 = vmatmul.mubr.bf16.gmra.mrb[0].mxu0 %v3308
      %v3478 = vpop.f32.mrb[0].mxu0
      %v3479 = vadd.f32 %v3181, %v3478
      %v3480 = vpop.f32.mrb[0].mxu0
      %v3481 = vpop.f32.mrb[0].mxu0
      %v3482 = vadd.f32 %v3184, %v3481
      %v3483 = vpop.f32.mrb[0].mxu0
      %3484 = vmatprep.mubr.bf16.mxu0 0
      %3485 = vmatmul.mubr.bf16.gmra.mrb[0].mxu0 %v3310
      %v3486 = vpop.f32.mrb[0].mxu0
      %v3487 = vadd.f32 %v3189, %v3486
      %v3488 = vpop.f32.mrb[0].mxu0
      %v3489 = vpop.f32.mrb[0].mxu0
      %v3490 = vadd.f32 %v3192, %v3489
      %v3491 = vpop.f32.mrb[0].mxu0
      %3492 = vmatprep.mubr.bf16.mxu0 0
      %3493 = vmatmul.mubr.bf16.gmra.mrb[0].mxu0 %v3312
      %v3494 = vpop.f32.mrb[0].mxu0
      %v3495 = vadd.f32 %v3197, %v3494
      %v3496 = vpop.f32.mrb[0].mxu0
      %v3497 = vpop.f32.mrb[0].mxu0
      %v3498 = vpop.f32.mrb[0].mxu0
      %3499 = vmatprep.mubr.bf16.mxu0 0
      %3500 = vmatmul.mubr.bf16.gmra.mrb[0].mxu0 %v3314
      %v3501 = vpop.f32.mrb[0].mxu0
      %v3502 = vadd.f32 %v3204, %v3501
      %v3503 = vpop.f32.mrb[0].mxu0
      %v3504 = vpop.f32.mrb[0].mxu0
      %v3505 = vadd.f32 %v3207, %v3504
      %v3506 = vpop.f32.mrb[0].mxu0
      %3507 = vmatprep.mubr.bf16.mxu0 0
      %3508 = vmatmul.mubr.bf16.gmra.mrb[0].mxu0 %v3316
      %v3509 = vpop.f32.mrb[0].mxu0
      %v3510 = vadd.f32 %v3212, %v3509
      %v3511 = vpop.f32.mrb[0].mxu0
      %v3512 = vpop.f32.mrb[0].mxu0
      %v3513 = vadd.f32 %v3215, %v3512
      %v3514 = vpop.f32.mrb[0].mxu0
      %3515 = vmatprep.mubr.bf16.mxu0 0
      %3516 = vmatmul.mubr.bf16.gmra.mrb[0].mxu0 %v3318
      %v3517 = vpop.f32.mrb[0].mxu0
      %v3518 = vadd.f32 %v3220, %v3517
      %v3519 = vpop.f32.mrb[0].mxu0
      %v3520 = vpop.f32.mrb[0].mxu0
      %v3521 = vpop.f32.mrb[0].mxu0
      %3522 = vmatprep.mubr.bf16.mxu0 0
      %3523 = vmatmul.mubr.bf16.gmra.mrb[0].mxu0 %v3320
      %v3524 = vpop.f32.mrb[0].mxu0
      %v3525 = vadd.f32 %v3227, %v3524
      %v3526 = vpop.f32.mrb[0].mxu0
      %v3527 = vpop.f32.mrb[0].mxu0
      %v3528 = vadd.f32 %v3230, %v3527
      %v3529 = vpop.f32.mrb[0].mxu0
      %3530 = vmatprep.mubr.bf16.mxu0 0
      %3531 = vmatmul.mubr.bf16.gmra.mrb[0].mxu0 %v3322
      %v3532 = vpop.f32.mrb[0].mxu0
      %v3533 = vadd.f32 %v3235, %v3532
      %v3534 = vpop.f32.mrb[0].mxu0
      %v3535 = vpop.f32.mrb[0].mxu0
      %v3536 = vadd.f32 %v3238, %v3535
      %v3537 = vpop.f32.mrb[0].mxu0
      %3538 = vmatprep.mubr.bf16.mxu0 0
      %3539 = vmatmul.mubr.bf16.gmra.mrb[0].mxu0 %v3324
      %v3540 = vpop.f32.mrb[0].mxu0
      %v3541 = vadd.f32 %v3243, %v3540
      %v3542 = vpop.f32.mrb[0].mxu0
      %v3543 = vpop.f32.mrb[0].mxu0
      %v3544 = vpop.f32.mrb[0].mxu0
      %3545 = vmatprep.mubr.bf16.mxu0 0
      %3546 = vmatmul.mubr.bf16.gmra.mrb[0].mxu0 %v3327
      %v3547 = vpop.f32.mrb[0].mxu0
      %v3548 = vpop.f32.mrb[0].mxu0
      %v3549 = vpop.f32.mrb[0].mxu0
      %v3550 = vpop.f32.mrb[0].mxu0
      %3551 = vdwg.mxu0
      %v3552 = vld [vmem:[%s3 + $0x40] sm:$0xf]
      %v3553 = vld [vmem:[%s3 + $0x44] sm:$0xf]
      %v3554 = vld [vmem:[%s3 + $0x48] sm:$0xf]
      %v3555 = vld [vmem:[%s3 + $0x4c] sm:$0xf]
      %v3556 = vld [vmem:[%s3 + $0x50] sm:$0xf]
      %v3557 = vld [vmem:[%s3 + $0x54] sm:$0xf]
      %v3558 = vld [vmem:[%s3 + $0x58] sm:$0xf]
      %v3559 = vld [vmem:[%s3 + $0x5c] sm:$0xf]
      %vm3585 = vcmask 1046528
      %v3586 = vrot.slane %v2690, 1
      %v3587 = vrot.slane %v2691, 1
      %v3588 = vsel %vm3585, %v3586, %v3587
      %v3589 = vrot.slane %v2692, 1
      %v3590 = vsel %vm3585, %v3587, %v3589
      %v3591 = vrot.slane %v2693, 1
      %v3592 = vsel %vm3585, %v3589, %v3591
      %v3593 = vrot.slane %v2694, 1
      %v3594 = vsel %vm3585, %v3591, %v3593
      %v3595 = vrot.slane %v2695, 1
      %v3596 = vsel %vm3585, %v3593, %v3595
      %v3597 = vrot.slane %v2696, 1
      %v3598 = vsel %vm3585, %v3595, %v3597
      %v3599 = vrot.slane %v2697, 1
      %v3600 = vsel %vm3585, %v3597, %v3599
      %v3601 = vrot.slane %v2698, 1
      %v3602 = vsel %vm3585, %v3599, %v3601
      %v3603 = vrot.slane %v2699, 1
      %v3604 = vsel %vm3585, %v3601, %v3603
      %v3605 = vrot.slane %v2700, 1
      %v3606 = vsel %vm3585, %v3603, %v3605
      %v3607 = vrot.slane %v2701, 1
      %v3608 = vsel %vm3585, %v3605, %v3607
      %v3609 = vrot.slane %v2702, 1
      %v3610 = vsel %vm3585, %v3607, %v3609
      %v3611 = vrot.slane %v2703, 1
      %v3612 = vsel %vm3585, %v3609, %v3611
      %v3613 = vrot.slane %v2704, 1
      %v3614 = vsel %vm3585, %v3611, %v3613
      %v3615 = vrot.slane %v2705, 1
      %v3616 = vsel %vm3585, %v3613, %v3615
      %v3617 = vrot.slane %v2706, 1
      %v3618 = vsel %vm3585, %v3615, %v3617
      %v3619 = vrot.slane %v2707, 1
      %v3620 = vsel %vm3585, %v3617, %v3619
      %v3621 = vrot.slane %v2708, 1
      %v3622 = vsel %vm3585, %v3619, %v3621
      %v3623 = vrot.slane %v2709, 1
      %v3624 = vsel %vm3585, %v3621, %v3623
      %v3625 = vrot.slane %v2710, 1
      %v3626 = vsel %vm3585, %v3623, %v3625
      %v3627 = vrot.slane %v2711, 1
      %v3628 = vsel %vm3585, %v3625, %v3627
      %v3629 = vrot.slane %v2712, 1
      %v3630 = vsel %vm3585, %v3627, %v3629
      %v3631 = vrot.slane %v2713, 1
      %v3632 = vsel %vm3585, %v3629, %v3631
      %v3633 = vrot.slane %v2723, 1
      %v3634 = vsel %vm3585, %v3631, %v3633
      %v3643 = vunpack.c.l.b16 %v3552
      %v3644 = vunpack.c.l.b16 %v3553
      %v3645 = vunpack.c.l.b16 %v3554
      %v3646 = vunpack.c.l.b16 %v3555
      %v3647 = vunpack.c.l.b16 %v3556
      %v3648 = vunpack.c.l.b16 %v3557
      %v3649 = vunpack.c.l.b16 %v3558
      %v3650 = vunpack.c.l.b16 %v3559
      %v3651 = vpack.c.b16 %v3644, %v3643
      %v3652 = vpack.c.b16 %v3646, %v3645
      %v3653 = vpack.c.b16 %v3648, %v3647
      %v3654 = vpack.c.b16 %v3650, %v3649
      %v3660 = vsel %vm487, %v3588, 0
      %v3663 = vsel %vm487, %v3590, 0
      %v3666 = vsel %vm487, %v3592, 0
      %v3669 = vsel %vm487, %v3594, 0
      %v3672 = vsel %vm487, %v3596, 0
      %v3675 = vsel %vm487, %v3598, 0
      %v3678 = vsel %vm487, %v3600, 0
      %v3681 = vsel %vm487, %v3602, 0
      %v3684 = vsel %vm487, %v3604, 0
      %v3687 = vsel %vm487, %v3606, 0
      %v3690 = vsel %vm487, %v3608, 0
      %v3693 = vsel %vm487, %v3610, 0
      %v3696 = vsel %vm487, %v3612, 0
      %v3699 = vsel %vm487, %v3614, 0
      %v3702 = vsel %vm487, %v3616, 0
      %v3705 = vsel %vm487, %v3618, 0
      %v3708 = vsel %vm487, %v3620, 0
      %v3711 = vsel %vm487, %v3622, 0
      %v3714 = vsel %vm487, %v3624, 0
      %v3717 = vsel %vm487, %v3626, 0
      %v3720 = vsel %vm487, %v3628, 0
      %v3723 = vsel %vm487, %v3630, 0
      %v3726 = vsel %vm487, %v3632, 0
      %v3729 = vsel %vm487, %v3634, 0
      %v3732 = vsel %vm487, %v3633, 0
      %3734 = vmatprep.subr.bf16.mxu0 0
      %3735 = vmatpush1.bf16.msra.mxu0 %v3651
      %3736 = vmatprep.subr.bf16.mxu0 0
      %3737 = vmatpush1.bf16.msra.mxu0 %v3652
      %3738 = vmatprep.subr.bf16.mxu0 0
      %3739 = vmatpush1.bf16.msra.mxu0 %v3653
      %3740 = vmatprep.subr.bf16.mxu0 0
      %3741 = vmatpush1.bf16.msra.mxu0 %v3654
      %3742 = vmatprep.subr.bf16.mxu0 0
      %3743 = vmatpush1.bf16.msra.mxu0 0
      %3744 = vmatprep.subr.bf16.mxu0 0
      %3745 = vmatpush1.bf16.msra.mxu0 0
      %3746 = vmatprep.subr.bf16.mxu0 0
      %3747 = vmatpush1.bf16.msra.mxu0 0
      %3748 = vmatprep.subr.bf16.mxu0 0
      %3749 = vmatpush1.bf16.msra.mxu0 0
      %3750 = vmatprep.subr.bf16.mxu0 0
      %3751 = vmatpush1.bf16.msra.mxu0 0
      %3752 = vmatprep.subr.bf16.mxu0 0
      %3753 = vmatpush1.bf16.msra.mxu0 0
      %3754 = vmatprep.subr.bf16.mxu0 0
      %3755 = vmatpush1.bf16.msra.mxu0 0
      %3756 = vmatprep.subr.bf16.mxu0 0
      %3757 = vmatpush1.bf16.msra.mxu0 0
      %3758 = vmatprep.subr.bf16.mxu0 0
      %3759 = vmatpush1.bf16.msra.mxu0 0
      %3760 = vmatprep.subr.bf16.mxu0 0
      %3761 = vmatpush1.bf16.msra.mxu0 0
      %3762 = vmatprep.subr.bf16.mxu0 0
      %3763 = vmatpush1.bf16.msra.mxu0 0
      %3764 = vmatprep.subr.bf16.mxu0 0
      %3765 = vmatpush1.bf16.msra.mxu0 0
      %3766 = vmatprep.mubr.bf16.mxu0 0
      %3767 = vmatmul.mubr.bf16.gmra.mrb[0].mxu0 %v3660
      %v3768 = vpop.f32.mrb[0].mxu0
      %v3769 = vadd.f32 0.0, %v3768
      %v3770 = vpop.f32.mrb[0].mxu0
      %v3771 = vpop.f32.mrb[0].mxu0
      %v3772 = vadd.f32 0.0, %v3771
      %v3773 = vpop.f32.mrb[0].mxu0
      %3774 = vmatprep.mubr.bf16.mxu0 0
      %3775 = vmatmul.mubr.bf16.gmra.mrb[0].mxu0 %v3663
      %v3776 = vpop.f32.mrb[0].mxu0
      %v3777 = vadd.f32 0.0, %v3776
      %v3778 = vpop.f32.mrb[0].mxu0
      %v3779 = vpop.f32.mrb[0].mxu0
      %v3780 = vadd.f32 0.0, %v3779
      %v3781 = vpop.f32.mrb[0].mxu0
      %3782 = vmatprep.mubr.bf16.mxu0 0
      %3783 = vmatmul.mubr.bf16.gmra.mrb[0].mxu0 %v3666
      %v3784 = vpop.f32.mrb[0].mxu0
      %v3785 = vadd.f32 0.0, %v3784
      %v3786 = vpop.f32.mrb[0].mxu0
      %v3787 = vpop.f32.mrb[0].mxu0
      %v3788 = vpop.f32.mrb[0].mxu0
      %3789 = vmatprep.mubr.bf16.mxu0 0
      %3790 = vmatmul.mubr.bf16.gmra.mrb[0].mxu0 %v3669
      %v3791 = vpop.f32.mrb[0].mxu0
      %v3792 = vadd.f32 0.0, %v3791
      %v3793 = vpop.f32.mrb[0].mxu0
      %v3794 = vpop.f32.mrb[0].mxu0
      %v3795 = vadd.f32 0.0, %v3794
      %v3796 = vpop.f32.mrb[0].mxu0
      %3797 = vmatprep.mubr.bf16.mxu0 0
      %3798 = vmatmul.mubr.bf16.gmra.mrb[0].mxu0 %v3672
      %v3799 = vpop.f32.mrb[0].mxu0
      %v3800 = vadd.f32 0.0, %v3799
      %v3801 = vpop.f32.mrb[0].mxu0
      %v3802 = vpop.f32.mrb[0].mxu0
      %v3803 = vadd.f32 0.0, %v3802
      %v3804 = vpop.f32.mrb[0].mxu0
      %3805 = vmatprep.mubr.bf16.mxu0 0
      %3806 = vmatmul.mubr.bf16.gmra.mrb[0].mxu0 %v3675
      %v3807 = vpop.f32.mrb[0].mxu0
      %v3808 = vadd.f32 0.0, %v3807
      %v3809 = vpop.f32.mrb[0].mxu0
      %v3810 = vpop.f32.mrb[0].mxu0
      %v3811 = vpop.f32.mrb[0].mxu0
      %3812 = vmatprep.mubr.bf16.mxu0 0
      %3813 = vmatmul.mubr.bf16.gmra.mrb[0].mxu0 %v3678
      %v3814 = vpop.f32.mrb[0].mxu0
      %v3815 = vadd.f32 0.0, %v3814
      %v3816 = vpop.f32.mrb[0].mxu0
      %v3817 = vpop.f32.mrb[0].mxu0
      %v3818 = vadd.f32 0.0, %v3817
      %v3819 = vpop.f32.mrb[0].mxu0
      %3820 = vmatprep.mubr.bf16.mxu0 0
      %3821 = vmatmul.mubr.bf16.gmra.mrb[0].mxu0 %v3681
      %v3822 = vpop.f32.mrb[0].mxu0
      %v3823 = vadd.f32 0.0, %v3822
      %v3824 = vpop.f32.mrb[0].mxu0
      %v3825 = vpop.f32.mrb[0].mxu0
      %v3826 = vadd.f32 0.0, %v3825
      %v3827 = vpop.f32.mrb[0].mxu0
      %3828 = vmatprep.mubr.bf16.mxu0 0
      %3829 = vmatmul.mubr.bf16.gmra.mrb[0].mxu0 %v3684
      %v3830 = vpop.f32.mrb[0].mxu0
      %v3831 = vadd.f32 0.0, %v3830
      %v3832 = vpop.f32.mrb[0].mxu0
      %v3833 = vpop.f32.mrb[0].mxu0
      %v3834 = vpop.f32.mrb[0].mxu0
      %3835 = vmatprep.mubr.bf16.mxu0 0
      %3836 = vmatmul.mubr.bf16.gmra.mrb[0].mxu0 %v3687
      %v3837 = vpop.f32.mrb[0].mxu0
      %v3838 = vadd.f32 0.0, %v3837
      %v3839 = vpop.f32.mrb[0].mxu0
      %v3840 = vpop.f32.mrb[0].mxu0
      %v3841 = vadd.f32 0.0, %v3840
      %v3842 = vpop.f32.mrb[0].mxu0
      %3843 = vmatprep.mubr.bf16.mxu0 0
      %3844 = vmatmul.mubr.bf16.gmra.mrb[0].mxu0 %v3690
      %v3845 = vpop.f32.mrb[0].mxu0
      %v3846 = vadd.f32 0.0, %v3845
      %v3847 = vpop.f32.mrb[0].mxu0
      %v3848 = vpop.f32.mrb[0].mxu0
      %v3849 = vadd.f32 0.0, %v3848
      %v3850 = vpop.f32.mrb[0].mxu0
      %3851 = vmatprep.mubr.bf16.mxu0 0
      %3852 = vmatmul.mubr.bf16.gmra.mrb[0].mxu0 %v3693
      %v3853 = vpop.f32.mrb[0].mxu0
      %v3854 = vadd.f32 0.0, %v3853
      %v3855 = vpop.f32.mrb[0].mxu0
      %v3856 = vpop.f32.mrb[0].mxu0
      %v3857 = vpop.f32.mrb[0].mxu0
      %3858 = vmatprep.mubr.bf16.mxu0 0
      %3859 = vmatmul.mubr.bf16.gmra.mrb[0].mxu0 %v3696
      %v3860 = vpop.f32.mrb[0].mxu0
      %v3861 = vadd.f32 0.0, %v3860
      %v3862 = vpop.f32.mrb[0].mxu0
      %v3863 = vpop.f32.mrb[0].mxu0
      %v3864 = vadd.f32 0.0, %v3863
      %v3865 = vpop.f32.mrb[0].mxu0
      %3866 = vmatprep.mubr.bf16.mxu0 0
      %3867 = vmatmul.mubr.bf16.gmra.mrb[0].mxu0 %v3699
      %v3868 = vpop.f32.mrb[0].mxu0
      %v3869 = vadd.f32 0.0, %v3868
      %v3870 = vpop.f32.mrb[0].mxu0
      %v3871 = vpop.f32.mrb[0].mxu0
      %v3872 = vadd.f32 0.0, %v3871
      %v3873 = vpop.f32.mrb[0].mxu0
      %3874 = vmatprep.mubr.bf16.mxu0 0
      %3875 = vmatmul.mubr.bf16.gmra.mrb[0].mxu0 %v3702
      %v3876 = vpop.f32.mrb[0].mxu0
      %v3877 = vadd.f32 0.0, %v3876
      %v3878 = vpop.f32.mrb[0].mxu0
      %v3879 = vpop.f32.mrb[0].mxu0
      %v3880 = vpop.f32.mrb[0].mxu0
      %3881 = vmatprep.mubr.bf16.mxu0 0
      %3882 = vmatmul.mubr.bf16.gmra.mrb[0].mxu0 %v3705
      %v3883 = vpop.f32.mrb[0].mxu0
      %v3884 = vadd.f32 0.0, %v3883
      %v3885 = vpop.f32.mrb[0].mxu0
      %v3886 = vpop.f32.mrb[0].mxu0
      %v3887 = vadd.f32 0.0, %v3886
      %v3888 = vpop.f32.mrb[0].mxu0
      %3889 = vmatprep.mubr.bf16.mxu0 0
      %3890 = vmatmul.mubr.bf16.gmra.mrb[0].mxu0 %v3708
      %v3891 = vpop.f32.mrb[0].mxu0
      %v3892 = vadd.f32 0.0, %v3891
      %v3893 = vpop.f32.mrb[0].mxu0
      %v3894 = vpop.f32.mrb[0].mxu0
      %v3895 = vadd.f32 0.0, %v3894
      %v3896 = vpop.f32.mrb[0].mxu0
      %3897 = vmatprep.mubr.bf16.mxu0 0
      %3898 = vmatmul.mubr.bf16.gmra.mrb[0].mxu0 %v3711
      %v3899 = vpop.f32.mrb[0].mxu0
      %v3900 = vadd.f32 0.0, %v3899
      %v3901 = vpop.f32.mrb[0].mxu0
      %v3902 = vpop.f32.mrb[0].mxu0
      %v3903 = vpop.f32.mrb[0].mxu0
      %3904 = vmatprep.mubr.bf16.mxu0 0
      %3905 = vmatmul.mubr.bf16.gmra.mrb[0].mxu0 %v3714
      %v3906 = vpop.f32.mrb[0].mxu0
      %v3907 = vadd.f32 0.0, %v3906
      %v3908 = vpop.f32.mrb[0].mxu0
      %v3909 = vpop.f32.mrb[0].mxu0
      %v3910 = vadd.f32 0.0, %v3909
      %v3911 = vpop.f32.mrb[0].mxu0
      %3912 = vmatprep.mubr.bf16.mxu0 0
      %3913 = vmatmul.mubr.bf16.gmra.mrb[0].mxu0 %v3717
      %v3914 = vpop.f32.mrb[0].mxu0
      %v3915 = vadd.f32 0.0, %v3914
      %v3916 = vpop.f32.mrb[0].mxu0
      %v3917 = vpop.f32.mrb[0].mxu0
      %v3918 = vadd.f32 0.0, %v3917
      %v3919 = vpop.f32.mrb[0].mxu0
      %3920 = vmatprep.mubr.bf16.mxu0 0
      %3921 = vmatmul.mubr.bf16.gmra.mrb[0].mxu0 %v3720
      %v3922 = vpop.f32.mrb[0].mxu0
      %v3923 = vadd.f32 0.0, %v3922
      %v3924 = vpop.f32.mrb[0].mxu0
      %v3925 = vpop.f32.mrb[0].mxu0
      %v3926 = vpop.f32.mrb[0].mxu0
      %3927 = vmatprep.mubr.bf16.mxu0 0
      %3928 = vmatmul.mubr.bf16.gmra.mrb[0].mxu0 %v3723
      %v3929 = vpop.f32.mrb[0].mxu0
      %v3930 = vadd.f32 0.0, %v3929
      %v3931 = vpop.f32.mrb[0].mxu0
      %v3932 = vpop.f32.mrb[0].mxu0
      %v3933 = vadd.f32 0.0, %v3932
      %v3934 = vpop.f32.mrb[0].mxu0
      %3935 = vmatprep.mubr.bf16.mxu0 0
      %3936 = vmatmul.mubr.bf16.gmra.mrb[0].mxu0 %v3726
      %v3937 = vpop.f32.mrb[0].mxu0
      %v3938 = vadd.f32 0.0, %v3937
      %v3939 = vpop.f32.mrb[0].mxu0
      %v3940 = vpop.f32.mrb[0].mxu0
      %v3941 = vadd.f32 0.0, %v3940
      %v3942 = vpop.f32.mrb[0].mxu0
      %3943 = vmatprep.mubr.bf16.mxu0 0
      %3944 = vmatmul.mubr.bf16.gmra.mrb[0].mxu0 %v3729
      %v3945 = vpop.f32.mrb[0].mxu0
      %v3946 = vadd.f32 0.0, %v3945
      %v3947 = vpop.f32.mrb[0].mxu0
      %v3948 = vpop.f32.mrb[0].mxu0
      %v3949 = vpop.f32.mrb[0].mxu0
      %3950 = vmatprep.mubr.bf16.mxu0 0
      %3951 = vmatmul.mubr.bf16.gmra.mrb[0].mxu0 %v3732
      %v3952 = vpop.f32.mrb[0].mxu0
      %v3953 = vpop.f32.mrb[0].mxu0
      %v3954 = vpop.f32.mrb[0].mxu0
      %v3955 = vpop.f32.mrb[0].mxu0
      %3956 = vdwg.mxu0
      %v3957 = vadd.f32 %v3364, %v3769
      %v3958 = vadd.f32 %v3367, %v3772
      %v3959 = vadd.f32 %v3372, %v3777
      %v3960 = vadd.f32 %v3375, %v3780
      %v3961 = vadd.f32 %v3380, %v3785
      %v3962 = vadd.f32 %v3387, %v3792
      %v3963 = vadd.f32 %v3390, %v3795
      %v3964 = vadd.f32 %v3395, %v3800
      %v3965 = vadd.f32 %v3398, %v3803
      %v3966 = vadd.f32 %v3403, %v3808
      %v3967 = vadd.f32 %v3410, %v3815
      %v3968 = vadd.f32 %v3413, %v3818
      %v3969 = vadd.f32 %v3418, %v3823
      %v3970 = vadd.f32 %v3421, %v3826
      %v3971 = vadd.f32 %v3426, %v3831
      %v3972 = vadd.f32 %v3433, %v3838
      %v3973 = vadd.f32 %v3436, %v3841
      %v3974 = vadd.f32 %v3441, %v3846
      %v3975 = vadd.f32 %v3444, %v3849
      %v3976 = vadd.f32 %v3449, %v3854
      %v3977 = vadd.f32 %v3456, %v3861
      %v3978 = vadd.f32 %v3459, %v3864
      %v3979 = vadd.f32 %v3464, %v3869
      %v3980 = vadd.f32 %v3467, %v3872
      %v3981 = vadd.f32 %v3472, %v3877
      %v3982 = vadd.f32 %v3479, %v3884
      %v3983 = vadd.f32 %v3482, %v3887
      %v3984 = vadd.f32 %v3487, %v3892
      %v3985 = vadd.f32 %v3490, %v3895
      %v3986 = vadd.f32 %v3495, %v3900
      %v3987 = vadd.f32 %v3502, %v3907
      %v3988 = vadd.f32 %v3505, %v3910
      %v3989 = vadd.f32 %v3510, %v3915
      %v3990 = vadd.f32 %v3513, %v3918
      %v3991 = vadd.f32 %v3518, %v3923
      %v3992 = vadd.f32 %v3525, %v3930
      %v3993 = vadd.f32 %v3528, %v3933
      %v3994 = vadd.f32 %v3533, %v3938
      %v3995 = vadd.f32 %v3536, %v3941
      %v3996 = vadd.f32 %v3541, %v3946
      %v3997 = vld [vmem:[%s3 + $0x60] sm:$0xf]
      %v3998 = vld [vmem:[%s3 + $0x64] sm:$0xf]
      %v3999 = vld [vmem:[%s3 + $0x68] sm:$0xf]
      %v4000 = vld [vmem:[%s3 + $0x6c] sm:$0xf]
      %v4001 = vld [vmem:[%s3 + $0x70] sm:$0xf]
      %v4002 = vld [vmem:[%s3 + $0x74] sm:$0xf]
      %v4003 = vld [vmem:[%s3 + $0x78] sm:$0xf]
      %v4004 = vld [vmem:[%s3 + $0x7c] sm:$0xf]
      %vm4005 = vsmask.f32 4352
      %v4006 = vrot.slane %v2734, 3
      %v4007 = vrot.slane %v2736, 4
      %v4008 = vor.u32 %v4006, %v4007
      %v4009 = vrot.slane %v2745, 3
      %v4010 = vrot.slane %v2741, 4
      %v4011 = vor.u32 %v4009, %v4010
      %v4012 = vsel %vm4005, %v4008, %v4011
      %v4013 = vrot.slane %v2753, 3
      %v4014 = vrot.slane %v2749, 4
      %v4015 = vor.u32 %v4013, %v4014
      %v4016 = vsel %vm4005, %v4011, %v4015
      %v4017 = vrot.slane %v2761, 3
      %v4018 = vrot.slane %v2757, 4
      %v4019 = vor.u32 %v4017, %v4018
      %v4020 = vsel %vm4005, %v4015, %v4019
      %v4021 = vrot.slane %v2769, 3
      %v4022 = vrot.slane %v2765, 4
      %v4023 = vor.u32 %v4021, %v4022
      %v4024 = vsel %vm4005, %v4019, %v4023
      %v4025 = vrot.slane %v2777, 3
      %v4026 = vrot.slane %v2773, 4
      %v4027 = vor.u32 %v4025, %v4026
      %v4028 = vsel %vm4005, %v4023, %v4027
      %v4029 = vrot.slane %v2785, 3
      %v4030 = vrot.slane %v2781, 4
      %v4031 = vor.u32 %v4029, %v4030
      %v4032 = vsel %vm4005, %v4027, %v4031
      %v4033 = vrot.slane %v2793, 3
      %v4034 = vrot.slane %v2789, 4
      %v4035 = vor.u32 %v4033, %v4034
      %v4036 = vsel %vm4005, %v4031, %v4035
      %v4037 = vrot.slane %v2801, 3
      %v4038 = vrot.slane %v2797, 4
      %v4039 = vor.u32 %v4037, %v4038
      %v4040 = vsel %vm4005, %v4035, %v4039
      %v4041 = vrot.slane %v2809, 3
      %v4042 = vrot.slane %v2805, 4
      %v4043 = vor.u32 %v4041, %v4042
      %v4044 = vsel %vm4005, %v4039, %v4043
      %v4045 = vrot.slane %v2817, 3
      %v4046 = vrot.slane %v2813, 4
      %v4047 = vor.u32 %v4045, %v4046
      %v4048 = vsel %vm4005, %v4043, %v4047
      %v4049 = vrot.slane %v2825, 3
      %v4050 = vrot.slane %v2821, 4
      %v4051 = vor.u32 %v4049, %v4050
      %v4052 = vsel %vm4005, %v4047, %v4051
      %v4053 = vrot.slane %v2833, 3
      %v4054 = vrot.slane %v2829, 4
      %v4055 = vor.u32 %v4053, %v4054
      %v4056 = vsel %vm4005, %v4051, %v4055
      %v4057 = vrot.slane %v2841, 3
      %v4058 = vrot.slane %v2837, 4
      %v4059 = vor.u32 %v4057, %v4058
      %v4060 = vsel %vm4005, %v4055, %v4059
      %v4061 = vrot.slane %v2849, 3
      %v4062 = vrot.slane %v2845, 4
      %v4063 = vor.u32 %v4061, %v4062
      %v4064 = vsel %vm4005, %v4059, %v4063
      %v4065 = vrot.slane %v2857, 3
      %v4066 = vrot.slane %v2853, 4
      %v4067 = vor.u32 %v4065, %v4066
      %v4068 = vsel %vm4005, %v4063, %v4067
      %v4069 = vrot.slane %v2865, 3
      %v4070 = vrot.slane %v2861, 4
      %v4071 = vor.u32 %v4069, %v4070
      %v4072 = vsel %vm4005, %v4067, %v4071
      %v4073 = vrot.slane %v2873, 3
      %v4074 = vrot.slane %v2869, 4
      %v4075 = vor.u32 %v4073, %v4074
      %v4076 = vsel %vm4005, %v4071, %v4075
      %v4077 = vrot.slane %v2881, 3
      %v4078 = vrot.slane %v2877, 4
      %v4079 = vor.u32 %v4077, %v4078
      %v4080 = vsel %vm4005, %v4075, %v4079
      %v4081 = vrot.slane %v2889, 3
      %v4082 = vrot.slane %v2885, 4
      %v4083 = vor.u32 %v4081, %v4082
      %v4084 = vsel %vm4005, %v4079, %v4083
      %v4085 = vrot.slane %v2897, 3
      %v4086 = vrot.slane %v2893, 4
      %v4087 = vor.u32 %v4085, %v4086
      %v4088 = vsel %vm4005, %v4083, %v4087
      %v4089 = vrot.slane %v2905, 3
      %v4090 = vrot.slane %v2901, 4
      %v4091 = vor.u32 %v4089, %v4090
      %v4092 = vsel %vm4005, %v4087, %v4091
      %v4093 = vrot.slane %v2913, 3
      %v4094 = vrot.slane %v2909, 4
      %v4095 = vor.u32 %v4093, %v4094
      %v4096 = vsel %vm4005, %v4091, %v4095
      %v4097 = vrot.slane %v2921, 3
      %v4098 = vrot.slane %v2917, 4
      %v4099 = vor.u32 %v4097, %v4098
      %v4100 = vsel %vm4005, %v4095, %v4099
      %v4101 = vrot.slane %v2929, 3
      %v4102 = vrot.slane %v2925, 4
      %v4103 = vor.u32 %v4101, %v4102
      %v4104 = vsel %vm4005, %v4099, %v4103
      %v4113 = vunpack.c.l.b16 %v3997
      %v4114 = vunpack.c.l.b16 %v3998
      %v4115 = vunpack.c.l.b16 %v3999
      %v4116 = vunpack.c.l.b16 %v4000
      %v4117 = vunpack.c.l.b16 %v4001
      %v4118 = vunpack.c.l.b16 %v4002
      %v4119 = vunpack.c.l.b16 %v4003
      %v4120 = vunpack.c.l.b16 %v4004
      %v4121 = vpack.c.b16 %v4114, %v4113
      %v4122 = vpack.c.b16 %v4116, %v4115
      %v4123 = vpack.c.b16 %v4118, %v4117
      %v4124 = vpack.c.b16 %v4120, %v4119
      %v4130 = vsel %vm487, %v4012, 0
      %v4133 = vsel %vm487, %v4016, 0
      %v4136 = vsel %vm487, %v4020, 0
      %v4139 = vsel %vm487, %v4024, 0
      %v4142 = vsel %vm487, %v4028, 0
      %v4145 = vsel %vm487, %v4032, 0
      %v4148 = vsel %vm487, %v4036, 0
      %v4151 = vsel %vm487, %v4040, 0
      %v4154 = vsel %vm487, %v4044, 0
      %v4157 = vsel %vm487, %v4048, 0
      %v4160 = vsel %vm487, %v4052, 0
      %v4163 = vsel %vm487, %v4056, 0
      %v4166 = vsel %vm487, %v4060, 0
      %v4169 = vsel %vm487, %v4064, 0
      %v4172 = vsel %vm487, %v4068, 0
      %v4175 = vsel %vm487, %v4072, 0
      %v4178 = vsel %vm487, %v4076, 0
      %v4181 = vsel %vm487, %v4080, 0
      %v4184 = vsel %vm487, %v4084, 0
      %v4187 = vsel %vm487, %v4088, 0
      %v4190 = vsel %vm487, %v4092, 0
      %v4193 = vsel %vm487, %v4096, 0
      %v4196 = vsel %vm487, %v4100, 0
      %v4199 = vsel %vm487, %v4104, 0
      %v4202 = vsel %vm487, %v4103, 0
      %4204 = vmatprep.subr.bf16.mxu0 0
      %4205 = vmatpush1.bf16.msra.mxu0 %v4121
      %4206 = vmatprep.subr.bf16.mxu0 0
      %4207 = vmatpush1.bf16.msra.mxu0 %v4122
      %4208 = vmatprep.subr.bf16.mxu0 0
      %4209 = vmatpush1.bf16.msra.mxu0 %v4123
      %4210 = vmatprep.subr.bf16.mxu0 0
      %4211 = vmatpush1.bf16.msra.mxu0 %v4124
      %4212 = vmatprep.subr.bf16.mxu0 0
      %4213 = vmatpush1.bf16.msra.mxu0 0
      %4214 = vmatprep.subr.bf16.mxu0 0
      %4215 = vmatpush1.bf16.msra.mxu0 0
      %4216 = vmatprep.subr.bf16.mxu0 0
      %4217 = vmatpush1.bf16.msra.mxu0 0
      %4218 = vmatprep.subr.bf16.mxu0 0
      %4219 = vmatpush1.bf16.msra.mxu0 0
      %4220 = vmatprep.subr.bf16.mxu0 0
      %4221 = vmatpush1.bf16.msra.mxu0 0
      %4222 = vmatprep.subr.bf16.mxu0 0
      %4223 = vmatpush1.bf16.msra.mxu0 0
      %4224 = vmatprep.subr.bf16.mxu0 0
      %4225 = vmatpush1.bf16.msra.mxu0 0
      %4226 = vmatprep.subr.bf16.mxu0 0
      %4227 = vmatpush1.bf16.msra.mxu0 0
      %4228 = vmatprep.subr.bf16.mxu0 0
      %4229 = vmatpush1.bf16.msra.mxu0 0
      %4230 = vmatprep.subr.bf16.mxu0 0
      %4231 = vmatpush1.bf16.msra.mxu0 0
      %4232 = vmatprep.subr.bf16.mxu0 0
      %4233 = vmatpush1.bf16.msra.mxu0 0
      %4234 = vmatprep.subr.bf16.mxu0 0
      %4235 = vmatpush1.bf16.msra.mxu0 0
      %4236 = vmatprep.mubr.bf16.mxu0 0
      %4237 = vmatmul.mubr.bf16.gmra.mrb[0].mxu0 %v4130
      %v4238 = vpop.f32.mrb[0].mxu0
      %v4239 = vadd.f32 0.0, %v4238
      %v4240 = vpop.f32.mrb[0].mxu0
      %v4241 = vpop.f32.mrb[0].mxu0
      %v4242 = vadd.f32 0.0, %v4241
      %v4243 = vpop.f32.mrb[0].mxu0
      %4244 = vmatprep.mubr.bf16.mxu0 0
      %4245 = vmatmul.mubr.bf16.gmra.mrb[0].mxu0 %v4133
      %v4246 = vpop.f32.mrb[0].mxu0
      %v4247 = vadd.f32 0.0, %v4246
      %v4248 = vpop.f32.mrb[0].mxu0
      %v4249 = vpop.f32.mrb[0].mxu0
      %v4250 = vadd.f32 0.0, %v4249
      %v4251 = vpop.f32.mrb[0].mxu0
      %4252 = vmatprep.mubr.bf16.mxu0 0
      %4253 = vmatmul.mubr.bf16.gmra.mrb[0].mxu0 %v4136
      %v4254 = vpop.f32.mrb[0].mxu0
      %v4255 = vadd.f32 0.0, %v4254
      %v4256 = vpop.f32.mrb[0].mxu0
      %v4257 = vpop.f32.mrb[0].mxu0
      %v4258 = vpop.f32.mrb[0].mxu0
      %4259 = vmatprep.mubr.bf16.mxu0 0
      %4260 = vmatmul.mubr.bf16.gmra.mrb[0].mxu0 %v4139
      %v4261 = vpop.f32.mrb[0].mxu0
      %v4262 = vadd.f32 0.0, %v4261
      %v4263 = vpop.f32.mrb[0].mxu0
      %v4264 = vpop.f32.mrb[0].mxu0
      %v4265 = vadd.f32 0.0, %v4264
      %v4266 = vpop.f32.mrb[0].mxu0
      %4267 = vmatprep.mubr.bf16.mxu0 0
      %4268 = vmatmul.mubr.bf16.gmra.mrb[0].mxu0 %v4142
      %v4269 = vpop.f32.mrb[0].mxu0
      %v4270 = vadd.f32 0.0, %v4269
      %v4271 = vpop.f32.mrb[0].mxu0
      %v4272 = vpop.f32.mrb[0].mxu0
      %v4273 = vadd.f32 0.0, %v4272
      %v4274 = vpop.f32.mrb[0].mxu0
      %4275 = vmatprep.mubr.bf16.mxu0 0
      %4276 = vmatmul.mubr.bf16.gmra.mrb[0].mxu0 %v4145
      %v4277 = vpop.f32.mrb[0].mxu0
      %v4278 = vadd.f32 0.0, %v4277
      %v4279 = vpop.f32.mrb[0].mxu0
      %v4280 = vpop.f32.mrb[0].mxu0
      %v4281 = vpop.f32.mrb[0].mxu0
      %4282 = vmatprep.mubr.bf16.mxu0 0
      %4283 = vmatmul.mubr.bf16.gmra.mrb[0].mxu0 %v4148
      %v4284 = vpop.f32.mrb[0].mxu0
      %v4285 = vadd.f32 0.0, %v4284
      %v4286 = vpop.f32.mrb[0].mxu0
      %v4287 = vpop.f32.mrb[0].mxu0
      %v4288 = vadd.f32 0.0, %v4287
      %v4289 = vpop.f32.mrb[0].mxu0
      %4290 = vmatprep.mubr.bf16.mxu0 0
      %4291 = vmatmul.mubr.bf16.gmra.mrb[0].mxu0 %v4151
      %v4292 = vpop.f32.mrb[0].mxu0
      %v4293 = vadd.f32 0.0, %v4292
      %v4294 = vpop.f32.mrb[0].mxu0
      %v4295 = vpop.f32.mrb[0].mxu0
      %v4296 = vadd.f32 0.0, %v4295
      %v4297 = vpop.f32.mrb[0].mxu0
      %4298 = vmatprep.mubr.bf16.mxu0 0
      %4299 = vmatmul.mubr.bf16.gmra.mrb[0].mxu0 %v4154
      %v4300 = vpop.f32.mrb[0].mxu0
      %v4301 = vadd.f32 0.0, %v4300
      %v4302 = vpop.f32.mrb[0].mxu0
      %v4303 = vpop.f32.mrb[0].mxu0
      %v4304 = vpop.f32.mrb[0].mxu0
      %4305 = vmatprep.mubr.bf16.mxu0 0
      %4306 = vmatmul.mubr.bf16.gmra.mrb[0].mxu0 %v4157
      %v4307 = vpop.f32.mrb[0].mxu0
      %v4308 = vadd.f32 0.0, %v4307
      %v4309 = vpop.f32.mrb[0].mxu0
      %v4310 = vpop.f32.mrb[0].mxu0
      %v4311 = vadd.f32 0.0, %v4310
      %v4312 = vpop.f32.mrb[0].mxu0
      %4313 = vmatprep.mubr.bf16.mxu0 0
      %4314 = vmatmul.mubr.bf16.gmra.mrb[0].mxu0 %v4160
      %v4315 = vpop.f32.mrb[0].mxu0
      %v4316 = vadd.f32 0.0, %v4315
      %v4317 = vpop.f32.mrb[0].mxu0
      %v4318 = vpop.f32.mrb[0].mxu0
      %v4319 = vadd.f32 0.0, %v4318
      %v4320 = vpop.f32.mrb[0].mxu0
      %4321 = vmatprep.mubr.bf16.mxu0 0
      %4322 = vmatmul.mubr.bf16.gmra.mrb[0].mxu0 %v4163
      %v4323 = vpop.f32.mrb[0].mxu0
      %v4324 = vadd.f32 0.0, %v4323
      %v4325 = vpop.f32.mrb[0].mxu0
      %v4326 = vpop.f32.mrb[0].mxu0
      %v4327 = vpop.f32.mrb[0].mxu0
      %4328 = vmatprep.mubr.bf16.mxu0 0
      %4329 = vmatmul.mubr.bf16.gmra.mrb[0].mxu0 %v4166
      %v4330 = vpop.f32.mrb[0].mxu0
      %v4331 = vadd.f32 0.0, %v4330
      %v4332 = vpop.f32.mrb[0].mxu0
      %v4333 = vpop.f32.mrb[0].mxu0
      %v4334 = vadd.f32 0.0, %v4333
      %v4335 = vpop.f32.mrb[0].mxu0
      %4336 = vmatprep.mubr.bf16.mxu0 0
      %4337 = vmatmul.mubr.bf16.gmra.mrb[0].mxu0 %v4169
      %v4338 = vpop.f32.mrb[0].mxu0
      %v4339 = vadd.f32 0.0, %v4338
      %v4340 = vpop.f32.mrb[0].mxu0
      %v4341 = vpop.f32.mrb[0].mxu0
      %v4342 = vadd.f32 0.0, %v4341
      %v4343 = vpop.f32.mrb[0].mxu0
      %4344 = vmatprep.mubr.bf16.mxu0 0
      %4345 = vmatmul.mubr.bf16.gmra.mrb[0].mxu0 %v4172
      %v4346 = vpop.f32.mrb[0].mxu0
      %v4347 = vadd.f32 0.0, %v4346
      %v4348 = vpop.f32.mrb[0].mxu0
      %v4349 = vpop.f32.mrb[0].mxu0
      %v4350 = vpop.f32.mrb[0].mxu0
      %4351 = vmatprep.mubr.bf16.mxu0 0
      %4352 = vmatmul.mubr.bf16.gmra.mrb[0].mxu0 %v4175
      %v4353 = vpop.f32.mrb[0].mxu0
      %v4354 = vadd.f32 0.0, %v4353
      %v4355 = vpop.f32.mrb[0].mxu0
      %v4356 = vpop.f32.mrb[0].mxu0
      %v4357 = vadd.f32 0.0, %v4356
      %v4358 = vpop.f32.mrb[0].mxu0
      %4359 = vmatprep.mubr.bf16.mxu0 0
      %4360 = vmatmul.mubr.bf16.gmra.mrb[0].mxu0 %v4178
      %v4361 = vpop.f32.mrb[0].mxu0
      %v4362 = vadd.f32 0.0, %v4361
      %v4363 = vpop.f32.mrb[0].mxu0
      %v4364 = vpop.f32.mrb[0].mxu0
      %v4365 = vadd.f32 0.0, %v4364
      %v4366 = vpop.f32.mrb[0].mxu0
      %4367 = vmatprep.mubr.bf16.mxu0 0
      %4368 = vmatmul.mubr.bf16.gmra.mrb[0].mxu0 %v4181
      %v4369 = vpop.f32.mrb[0].mxu0
      %v4370 = vadd.f32 0.0, %v4369
      %v4371 = vpop.f32.mrb[0].mxu0
      %v4372 = vpop.f32.mrb[0].mxu0
      %v4373 = vpop.f32.mrb[0].mxu0
      %4374 = vmatprep.mubr.bf16.mxu0 0
      %4375 = vmatmul.mubr.bf16.gmra.mrb[0].mxu0 %v4184
      %v4376 = vpop.f32.mrb[0].mxu0
      %v4377 = vadd.f32 0.0, %v4376
      %v4378 = vpop.f32.mrb[0].mxu0
      %v4379 = vpop.f32.mrb[0].mxu0
      %v4380 = vadd.f32 0.0, %v4379
      %v4381 = vpop.f32.mrb[0].mxu0
      %4382 = vmatprep.mubr.bf16.mxu0 0
      %4383 = vmatmul.mubr.bf16.gmra.mrb[0].mxu0 %v4187
      %v4384 = vpop.f32.mrb[0].mxu0
      %v4385 = vadd.f32 0.0, %v4384
      %v4386 = vpop.f32.mrb[0].mxu0
      %v4387 = vpop.f32.mrb[0].mxu0
      %v4388 = vadd.f32 0.0, %v4387
      %v4389 = vpop.f32.mrb[0].mxu0
      %4390 = vmatprep.mubr.bf16.mxu0 0
      %4391 = vmatmul.mubr.bf16.gmra.mrb[0].mxu0 %v4190
      %v4392 = vpop.f32.mrb[0].mxu0
      %v4393 = vadd.f32 0.0, %v4392
      %v4394 = vpop.f32.mrb[0].mxu0
      %v4395 = vpop.f32.mrb[0].mxu0
      %v4396 = vpop.f32.mrb[0].mxu0
      %4397 = vmatprep.mubr.bf16.mxu0 0
      %4398 = vmatmul.mubr.bf16.gmra.mrb[0].mxu0 %v4193
      %v4399 = vpop.f32.mrb[0].mxu0
      %v4400 = vadd.f32 0.0, %v4399
      %v4401 = vpop.f32.mrb[0].mxu0
      %v4402 = vpop.f32.mrb[0].mxu0
      %v4403 = vadd.f32 0.0, %v4402
      %v4404 = vpop.f32.mrb[0].mxu0
      %4405 = vmatprep.mubr.bf16.mxu0 0
      %4406 = vmatmul.mubr.bf16.gmra.mrb[0].mxu0 %v4196
      %v4407 = vpop.f32.mrb[0].mxu0
      %v4408 = vadd.f32 0.0, %v4407
      %v4409 = vpop.f32.mrb[0].mxu0
      %v4410 = vpop.f32.mrb[0].mxu0
      %v4411 = vadd.f32 0.0, %v4410
      %v4412 = vpop.f32.mrb[0].mxu0
      %4413 = vmatprep.mubr.bf16.mxu0 0
      %4414 = vmatmul.mubr.bf16.gmra.mrb[0].mxu0 %v4199
      %v4415 = vpop.f32.mrb[0].mxu0
      %v4416 = vadd.f32 0.0, %v4415
      %v4417 = vpop.f32.mrb[0].mxu0
      %v4418 = vpop.f32.mrb[0].mxu0
      %v4419 = vpop.f32.mrb[0].mxu0
      %4420 = vmatprep.mubr.bf16.mxu0 0
      %4421 = vmatmul.mubr.bf16.gmra.mrb[0].mxu0 %v4202
      %v4422 = vpop.f32.mrb[0].mxu0
      %v4423 = vpop.f32.mrb[0].mxu0
      %v4424 = vpop.f32.mrb[0].mxu0
      %v4425 = vpop.f32.mrb[0].mxu0
      %4426 = vdwg.mxu0
      %v4427 = vadd.f32 %v3957, %v4239
      %v4428 = vadd.f32 %v3958, %v4242
      %v4429 = vadd.f32 %v3959, %v4247
      %v4430 = vadd.f32 %v3960, %v4250
      %v4431 = vadd.f32 %v3961, %v4255
      %v4432 = vadd.f32 %v3962, %v4262
      %v4433 = vadd.f32 %v3963, %v4265
      %v4434 = vadd.f32 %v3964, %v4270
      %v4435 = vadd.f32 %v3965, %v4273
      %v4436 = vadd.f32 %v3966, %v4278
      %v4437 = vadd.f32 %v3967, %v4285
      %v4438 = vadd.f32 %v3968, %v4288
      %v4439 = vadd.f32 %v3969, %v4293
      %v4440 = vadd.f32 %v3970, %v4296
      %v4441 = vadd.f32 %v3971, %v4301
      %v4442 = vadd.f32 %v3972, %v4308
      %v4443 = vadd.f32 %v3973, %v4311
      %v4444 = vadd.f32 %v3974, %v4316
      %v4445 = vadd.f32 %v3975, %v4319
      %v4446 = vadd.f32 %v3976, %v4324
      %v4447 = vadd.f32 %v3977, %v4331
      %v4448 = vadd.f32 %v3978, %v4334
      %v4449 = vadd.f32 %v3979, %v4339
      %v4450 = vadd.f32 %v3980, %v4342
      %v4451 = vadd.f32 %v3981, %v4347
      %v4452 = vadd.f32 %v3982, %v4354
      %v4453 = vadd.f32 %v3983, %v4357
      %v4454 = vadd.f32 %v3984, %v4362
      %v4455 = vadd.f32 %v3985, %v4365
      %v4456 = vadd.f32 %v3986, %v4370
      %v4457 = vadd.f32 %v3987, %v4377
      %v4458 = vadd.f32 %v3988, %v4380
      %v4459 = vadd.f32 %v3989, %v4385
      %v4460 = vadd.f32 %v3990, %v4388
      %v4461 = vadd.f32 %v3991, %v4393
      %v4462 = vadd.f32 %v3992, %v4400
      %v4463 = vadd.f32 %v3993, %v4403
      %v4464 = vadd.f32 %v3994, %v4408
      %v4465 = vadd.f32 %v3995, %v4411
      %v4466 = vadd.f32 %v3996, %v4416
      %v4467 = vpack.c.bf16 %v2643, %v2642
      %v4468 = vpack.c.bf16 %v2645, %v2644
      %v4469 = vpack.c.bf16 %v2647, %v2646
      %v4470 = vpack.c.bf16 %v2649, %v2648
      %v4471 = vpack.c.bf16 %v2651, %v2650
      %v4472 = vpack.c.bf16 %v2653, %v2652
      %v4473 = vpack.c.bf16 %v2655, %v2654
      %v4474 = vpack.c.bf16 %v2657, %v2656
      %v4475 = vpack.c.bf16 %v2659, %v2658
      %v4476 = vpack.c.bf16 %v2661, %v2660
      %v4477 = vpack.c.bf16 %v2663, %v2662
      %v4478 = vpack.c.bf16 %v2665, %v2664
      %v4479 = vpack.c.bf16 %v2667, %v2666
      %v4480 = vpack.c.bf16 %v2669, %v2668
      %v4481 = vpack.c.bf16 %v2671, %v2670
      %v4482 = vpack.c.bf16 %v2673, %v2672
      %v4483 = vpack.c.bf16 %v2675, %v2674
      %v4484 = vpack.c.bf16 %v2677, %v2676
      %v4485 = vpack.c.bf16 %v2679, %v2678
      %v4486 = vpack.c.bf16 %v2681, %v2680
      %v4487 = vpack.c.bf16 %v2683, %v2682
      %v4488 = vpack.c.bf16 %v2685, %v2684
      %v4489 = vpack.c.bf16 %v2687, %v2686
      %v4490 = vpack.c.bf16 %v2689, %v2688
      %v4491 = vpack.c.bf16 0.0, 0.0
      %v4492 = vld [vmem:[%s3 + $0x80] sm:$0xf]
      %v4493 = vld [vmem:[%s3 + $0x84] sm:$0xf]
      %v4494 = vld [vmem:[%s3 + $0x88] sm:$0xf]
      %v4495 = vld [vmem:[%s3 + $0x8c] sm:$0xf]
      %v4496 = vld [vmem:[%s3 + $0x90] sm:$0xf]
      %v4497 = vld [vmem:[%s3 + $0x94] sm:$0xf]
      %v4498 = vld [vmem:[%s3 + $0x98] sm:$0xf]
      %v4499 = vld [vmem:[%s3 + $0x9c] sm:$0xf]
      %v4508 = vunpack.c.l.b16 %v4492
      %v4509 = vunpack.c.l.b16 %v4493
      %v4510 = vunpack.c.l.b16 %v4494
      %v4511 = vunpack.c.l.b16 %v4495
      %v4512 = vunpack.c.l.b16 %v4496
      %v4513 = vunpack.c.l.b16 %v4497
      %v4514 = vunpack.c.l.b16 %v4498
      %v4515 = vunpack.c.l.b16 %v4499
      %v4516 = vpack.c.b16 %v4509, %v4508
      %v4517 = vpack.c.b16 %v4511, %v4510
      %v4518 = vpack.c.b16 %v4513, %v4512
      %v4519 = vpack.c.b16 %v4515, %v4514
      %v4525 = vsel %vm487, %v4467, 0
      %v4528 = vsel %vm487, %v4468, 0
      %v4531 = vsel %vm487, %v4469, 0
      %v4534 = vsel %vm487, %v4470, 0
      %v4537 = vsel %vm487, %v4471, 0
      %v4540 = vsel %vm487, %v4472, 0
      %v4543 = vsel %vm487, %v4473, 0
      %v4546 = vsel %vm487, %v4474, 0
      %v4549 = vsel %vm487, %v4475, 0
      %v4552 = vsel %vm487, %v4476, 0
      %v4555 = vsel %vm487, %v4477, 0
      %v4558 = vsel %vm487, %v4478, 0
      %v4561 = vsel %vm487, %v4479, 0
      %v4564 = vsel %vm487, %v4480, 0
      %v4567 = vsel %vm487, %v4481, 0
      %v4570 = vsel %vm487, %v4482, 0
      %v4573 = vsel %vm487, %v4483, 0
      %v4576 = vsel %vm487, %v4484, 0
      %v4579 = vsel %vm487, %v4485, 0
      %v4582 = vsel %vm487, %v4486, 0
      %v4585 = vsel %vm487, %v4487, 0
      %v4588 = vsel %vm487, %v4488, 0
      %v4591 = vsel %vm487, %v4489, 0
      %v4594 = vsel %vm487, %v4490, 0
      %v4597 = vsel %vm487, %v4491, 0
      %4599 = vmatprep.subr.bf16.mxu0 0
      %4600 = vmatpush1.bf16.msra.mxu0 %v4516
      %4601 = vmatprep.subr.bf16.mxu0 0
      %4602 = vmatpush1.bf16.msra.mxu0 %v4517
      %4603 = vmatprep.subr.bf16.mxu0 0
      %4604 = vmatpush1.bf16.msra.mxu0 %v4518
      %4605 = vmatprep.subr.bf16.mxu0 0
      %4606 = vmatpush1.bf16.msra.mxu0 %v4519
      %4607 = vmatprep.subr.bf16.mxu0 0
      %4608 = vmatpush1.bf16.msra.mxu0 0
      %4609 = vmatprep.subr.bf16.mxu0 0
      %4610 = vmatpush1.bf16.msra.mxu0 0
      %4611 = vmatprep.subr.bf16.mxu0 0
      %4612 = vmatpush1.bf16.msra.mxu0 0
      %4613 = vmatprep.subr.bf16.mxu0 0
      %4614 = vmatpush1.bf16.msra.mxu0 0
      %4615 = vmatprep.subr.bf16.mxu0 0
      %4616 = vmatpush1.bf16.msra.mxu0 0
      %4617 = vmatprep.subr.bf16.mxu0 0
      %4618 = vmatpush1.bf16.msra.mxu0 0
      %4619 = vmatprep.subr.bf16.mxu0 0
      %4620 = vmatpush1.bf16.msra.mxu0 0
      %4621 = vmatprep.subr.bf16.mxu0 0
      %4622 = vmatpush1.bf16.msra.mxu0 0
      %4623 = vmatprep.subr.bf16.mxu0 0
      %4624 = vmatpush1.bf16.msra.mxu0 0
      %4625 = vmatprep.subr.bf16.mxu0 0
      %4626 = vmatpush1.bf16.msra.mxu0 0
      %4627 = vmatprep.subr.bf16.mxu0 0
      %4628 = vmatpush1.bf16.msra.mxu0 0
      %4629 = vmatprep.subr.bf16.mxu0 0
      %4630 = vmatpush1.bf16.msra.mxu0 0
      %4631 = vmatprep.mubr.bf16.mxu0 0
      %4632 = vmatmul.mubr.bf16.gmra.mrb[0].mxu0 %v4525
      %v4633 = vpop.f32.mrb[0].mxu0
      %v4634 = vadd.f32 0.0, %v4633
      %v4635 = vpop.f32.mrb[0].mxu0
      %v4636 = vpop.f32.mrb[0].mxu0
      %v4637 = vadd.f32 0.0, %v4636
      %v4638 = vpop.f32.mrb[0].mxu0
      %4639 = vmatprep.mubr.bf16.mxu0 0
      %4640 = vmatmul.mubr.bf16.gmra.mrb[0].mxu0 %v4528
      %v4641 = vpop.f32.mrb[0].mxu0
      %v4642 = vadd.f32 0.0, %v4641
      %v4643 = vpop.f32.mrb[0].mxu0
      %v4644 = vpop.f32.mrb[0].mxu0
      %v4645 = vadd.f32 0.0, %v4644
      %v4646 = vpop.f32.mrb[0].mxu0
      %4647 = vmatprep.mubr.bf16.mxu0 0
      %4648 = vmatmul.mubr.bf16.gmra.mrb[0].mxu0 %v4531
      %v4649 = vpop.f32.mrb[0].mxu0
      %v4650 = vadd.f32 0.0, %v4649
      %v4651 = vpop.f32.mrb[0].mxu0
      %v4652 = vpop.f32.mrb[0].mxu0
      %v4653 = vpop.f32.mrb[0].mxu0
      %4654 = vmatprep.mubr.bf16.mxu0 0
      %4655 = vmatmul.mubr.bf16.gmra.mrb[0].mxu0 %v4534
      %v4656 = vpop.f32.mrb[0].mxu0
      %v4657 = vadd.f32 0.0, %v4656
      %v4658 = vpop.f32.mrb[0].mxu0
      %v4659 = vpop.f32.mrb[0].mxu0
      %v4660 = vadd.f32 0.0, %v4659
      %v4661 = vpop.f32.mrb[0].mxu0
      %4662 = vmatprep.mubr.bf16.mxu0 0
      %4663 = vmatmul.mubr.bf16.gmra.mrb[0].mxu0 %v4537
      %v4664 = vpop.f32.mrb[0].mxu0
      %v4665 = vadd.f32 0.0, %v4664
      %v4666 = vpop.f32.mrb[0].mxu0
      %v4667 = vpop.f32.mrb[0].mxu0
      %v4668 = vadd.f32 0.0, %v4667
      %v4669 = vpop.f32.mrb[0].mxu0
      %4670 = vmatprep.mubr.bf16.mxu0 0
      %4671 = vmatmul.mubr.bf16.gmra.mrb[0].mxu0 %v4540
      %v4672 = vpop.f32.mrb[0].mxu0
      %v4673 = vadd.f32 0.0, %v4672
      %v4674 = vpop.f32.mrb[0].mxu0
      %v4675 = vpop.f32.mrb[0].mxu0
      %v4676 = vpop.f32.mrb[0].mxu0
      %4677 = vmatprep.mubr.bf16.mxu0 0
      %4678 = vmatmul.mubr.bf16.gmra.mrb[0].mxu0 %v4543
      %v4679 = vpop.f32.mrb[0].mxu0
      %v4680 = vadd.f32 0.0, %v4679
      %v4681 = vpop.f32.mrb[0].mxu0
      %v4682 = vpop.f32.mrb[0].mxu0
      %v4683 = vadd.f32 0.0, %v4682
      %v4684 = vpop.f32.mrb[0].mxu0
      %4685 = vmatprep.mubr.bf16.mxu0 0
      %4686 = vmatmul.mubr.bf16.gmra.mrb[0].mxu0 %v4546
      %v4687 = vpop.f32.mrb[0].mxu0
      %v4688 = vadd.f32 0.0, %v4687
      %v4689 = vpop.f32.mrb[0].mxu0
      %v4690 = vpop.f32.mrb[0].mxu0
      %v4691 = vadd.f32 0.0, %v4690
      %v4692 = vpop.f32.mrb[0].mxu0
      %4693 = vmatprep.mubr.bf16.mxu0 0
      %4694 = vmatmul.mubr.bf16.gmra.mrb[0].mxu0 %v4549
      %v4695 = vpop.f32.mrb[0].mxu0
      %v4696 = vadd.f32 0.0, %v4695
      %v4697 = vpop.f32.mrb[0].mxu0
      %v4698 = vpop.f32.mrb[0].mxu0
      %v4699 = vpop.f32.mrb[0].mxu0
      %4700 = vmatprep.mubr.bf16.mxu0 0
      %4701 = vmatmul.mubr.bf16.gmra.mrb[0].mxu0 %v4552
      %v4702 = vpop.f32.mrb[0].mxu0
      %v4703 = vadd.f32 0.0, %v4702
      %v4704 = vpop.f32.mrb[0].mxu0
      %v4705 = vpop.f32.mrb[0].mxu0
      %v4706 = vadd.f32 0.0, %v4705
      %v4707 = vpop.f32.mrb[0].mxu0
      %4708 = vmatprep.mubr.bf16.mxu0 0
      %4709 = vmatmul.mubr.bf16.gmra.mrb[0].mxu0 %v4555
      %v4710 = vpop.f32.mrb[0].mxu0
      %v4711 = vadd.f32 0.0, %v4710
      %v4712 = vpop.f32.mrb[0].mxu0
      %v4713 = vpop.f32.mrb[0].mxu0
      %v4714 = vadd.f32 0.0, %v4713
      %v4715 = vpop.f32.mrb[0].mxu0
      %4716 = vmatprep.mubr.bf16.mxu0 0
      %4717 = vmatmul.mubr.bf16.gmra.mrb[0].mxu0 %v4558
      %v4718 = vpop.f32.mrb[0].mxu0
      %v4719 = vadd.f32 0.0, %v4718
      %v4720 = vpop.f32.mrb[0].mxu0
      %v4721 = vpop.f32.mrb[0].mxu0
      %v4722 = vpop.f32.mrb[0].mxu0
      %4723 = vmatprep.mubr.bf16.mxu0 0
      %4724 = vmatmul.mubr.bf16.gmra.mrb[0].mxu0 %v4561
      %v4725 = vpop.f32.mrb[0].mxu0
      %v4726 = vadd.f32 0.0, %v4725
      %v4727 = vpop.f32.mrb[0].mxu0
      %v4728 = vpop.f32.mrb[0].mxu0
      %v4729 = vadd.f32 0.0, %v4728
      %v4730 = vpop.f32.mrb[0].mxu0
      %4731 = vmatprep.mubr.bf16.mxu0 0
      %4732 = vmatmul.mubr.bf16.gmra.mrb[0].mxu0 %v4564
      %v4733 = vpop.f32.mrb[0].mxu0
      %v4734 = vadd.f32 0.0, %v4733
      %v4735 = vpop.f32.mrb[0].mxu0
      %v4736 = vpop.f32.mrb[0].mxu0
      %v4737 = vadd.f32 0.0, %v4736
      %v4738 = vpop.f32.mrb[0].mxu0
      %4739 = vmatprep.mubr.bf16.mxu0 0
      %4740 = vmatmul.mubr.bf16.gmra.mrb[0].mxu0 %v4567
      %v4741 = vpop.f32.mrb[0].mxu0
      %v4742 = vadd.f32 0.0, %v4741
      %v4743 = vpop.f32.mrb[0].mxu0
      %v4744 = vpop.f32.mrb[0].mxu0
      %v4745 = vpop.f32.mrb[0].mxu0
      %4746 = vmatprep.mubr.bf16.mxu0 0
      %4747 = vmatmul.mubr.bf16.gmra.mrb[0].mxu0 %v4570
      %v4748 = vpop.f32.mrb[0].mxu0
      %v4749 = vadd.f32 0.0, %v4748
      %v4750 = vpop.f32.mrb[0].mxu0
      %v4751 = vpop.f32.mrb[0].mxu0
      %v4752 = vadd.f32 0.0, %v4751
      %v4753 = vpop.f32.mrb[0].mxu0
      %4754 = vmatprep.mubr.bf16.mxu0 0
      %4755 = vmatmul.mubr.bf16.gmra.mrb[0].mxu0 %v4573
      %v4756 = vpop.f32.mrb[0].mxu0
      %v4757 = vadd.f32 0.0, %v4756
      %v4758 = vpop.f32.mrb[0].mxu0
      %v4759 = vpop.f32.mrb[0].mxu0
      %v4760 = vadd.f32 0.0, %v4759
      %v4761 = vpop.f32.mrb[0].mxu0
      %4762 = vmatprep.mubr.bf16.mxu0 0
      %4763 = vmatmul.mubr.bf16.gmra.mrb[0].mxu0 %v4576
      %v4764 = vpop.f32.mrb[0].mxu0
      %v4765 = vadd.f32 0.0, %v4764
      %v4766 = vpop.f32.mrb[0].mxu0
      %v4767 = vpop.f32.mrb[0].mxu0
      %v4768 = vpop.f32.mrb[0].mxu0
      %4769 = vmatprep.mubr.bf16.mxu0 0
      %4770 = vmatmul.mubr.bf16.gmra.mrb[0].mxu0 %v4579
      %v4771 = vpop.f32.mrb[0].mxu0
      %v4772 = vadd.f32 0.0, %v4771
      %v4773 = vpop.f32.mrb[0].mxu0
      %v4774 = vpop.f32.mrb[0].mxu0
      %v4775 = vadd.f32 0.0, %v4774
      %v4776 = vpop.f32.mrb[0].mxu0
      %4777 = vmatprep.mubr.bf16.mxu0 0
      %4778 = vmatmul.mubr.bf16.gmra.mrb[0].mxu0 %v4582
      %v4779 = vpop.f32.mrb[0].mxu0
      %v4780 = vadd.f32 0.0, %v4779
      %v4781 = vpop.f32.mrb[0].mxu0
      %v4782 = vpop.f32.mrb[0].mxu0
      %v4783 = vadd.f32 0.0, %v4782
      %v4784 = vpop.f32.mrb[0].mxu0
      %4785 = vmatprep.mubr.bf16.mxu0 0
      %4786 = vmatmul.mubr.bf16.gmra.mrb[0].mxu0 %v4585
      %v4787 = vpop.f32.mrb[0].mxu0
      %v4788 = vadd.f32 0.0, %v4787
      %v4789 = vpop.f32.mrb[0].mxu0
      %v4790 = vpop.f32.mrb[0].mxu0
      %v4791 = vpop.f32.mrb[0].mxu0
      %4792 = vmatprep.mubr.bf16.mxu0 0
      %4793 = vmatmul.mubr.bf16.gmra.mrb[0].mxu0 %v4588
      %v4794 = vpop.f32.mrb[0].mxu0
      %v4795 = vadd.f32 0.0, %v4794
      %v4796 = vpop.f32.mrb[0].mxu0
      %v4797 = vpop.f32.mrb[0].mxu0
      %v4798 = vadd.f32 0.0, %v4797
      %v4799 = vpop.f32.mrb[0].mxu0
      %4800 = vmatprep.mubr.bf16.mxu0 0
      %4801 = vmatmul.mubr.bf16.gmra.mrb[0].mxu0 %v4591
      %v4802 = vpop.f32.mrb[0].mxu0
      %v4803 = vadd.f32 0.0, %v4802
      %v4804 = vpop.f32.mrb[0].mxu0
      %v4805 = vpop.f32.mrb[0].mxu0
      %v4806 = vadd.f32 0.0, %v4805
      %v4807 = vpop.f32.mrb[0].mxu0
      %4808 = vmatprep.mubr.bf16.mxu0 0
      %4809 = vmatmul.mubr.bf16.gmra.mrb[0].mxu0 %v4594
      %v4810 = vpop.f32.mrb[0].mxu0
      %v4811 = vadd.f32 0.0, %v4810
      %v4812 = vpop.f32.mrb[0].mxu0
      %v4813 = vpop.f32.mrb[0].mxu0
      %v4814 = vpop.f32.mrb[0].mxu0
      %4815 = vmatprep.mubr.bf16.mxu0 0
      %4816 = vmatmul.mubr.bf16.gmra.mrb[0].mxu0 %v4597
      %v4817 = vpop.f32.mrb[0].mxu0
      %v4818 = vpop.f32.mrb[0].mxu0
      %v4819 = vpop.f32.mrb[0].mxu0
      %v4820 = vpop.f32.mrb[0].mxu0
      %4821 = vdwg.mxu0
      %v4822 = vadd.f32 %v4427, %v4634
      %v4823 = vadd.f32 %v4428, %v4637
      %v4824 = vadd.f32 %v4429, %v4642
      %v4825 = vadd.f32 %v4430, %v4645
      %v4826 = vadd.f32 %v4431, %v4650
      %v4827 = vadd.f32 %v4432, %v4657
      %v4828 = vadd.f32 %v4433, %v4660
      %v4829 = vadd.f32 %v4434, %v4665
      %v4830 = vadd.f32 %v4435, %v4668
      %v4831 = vadd.f32 %v4436, %v4673
      %v4832 = vadd.f32 %v4437, %v4680
      %v4833 = vadd.f32 %v4438, %v4683
      %v4834 = vadd.f32 %v4439, %v4688
      %v4835 = vadd.f32 %v4440, %v4691
      %v4836 = vadd.f32 %v4441, %v4696
      %v4837 = vadd.f32 %v4442, %v4703
      %v4838 = vadd.f32 %v4443, %v4706
      %v4839 = vadd.f32 %v4444, %v4711
      %v4840 = vadd.f32 %v4445, %v4714
      %v4841 = vadd.f32 %v4446, %v4719
      %v4842 = vadd.f32 %v4447, %v4726
      %v4843 = vadd.f32 %v4448, %v4729
      %v4844 = vadd.f32 %v4449, %v4734
      %v4845 = vadd.f32 %v4450, %v4737
      %v4846 = vadd.f32 %v4451, %v4742
      %v4847 = vadd.f32 %v4452, %v4749
      %v4848 = vadd.f32 %v4453, %v4752
      %v4849 = vadd.f32 %v4454, %v4757
      %v4850 = vadd.f32 %v4455, %v4760
      %v4851 = vadd.f32 %v4456, %v4765
      %v4852 = vadd.f32 %v4457, %v4772
      %v4853 = vadd.f32 %v4458, %v4775
      %v4854 = vadd.f32 %v4459, %v4780
      %v4855 = vadd.f32 %v4460, %v4783
      %v4856 = vadd.f32 %v4461, %v4788
      %v4857 = vadd.f32 %v4462, %v4795
      %v4858 = vadd.f32 %v4463, %v4798
      %v4859 = vadd.f32 %v4464, %v4803
      %v4860 = vadd.f32 %v4465, %v4806
      %v4861 = vadd.f32 %v4466, %v4811
      %v4862 = vld [vmem:[%s3 + $0xa0] sm:$0xf]
      %v4863 = vld [vmem:[%s3 + $0xa4] sm:$0xf]
      %v4864 = vld [vmem:[%s3 + $0xa8] sm:$0xf]
      %v4865 = vld [vmem:[%s3 + $0xac] sm:$0xf]
      %v4866 = vld [vmem:[%s3 + $0xb0] sm:$0xf]
      %v4867 = vld [vmem:[%s3 + $0xb4] sm:$0xf]
      %v4868 = vld [vmem:[%s3 + $0xb8] sm:$0xf]
      %v4869 = vld [vmem:[%s3 + $0xbc] sm:$0xf]
      %v4870 = vshrl.u32 %v4467, 16
      %v4872 = vshll.u32 %v4467, 16
      %v4874 = vrot.slane %v4872, 1
      %v4875 = vor.u32 %v4870, %v4874
      %v4876 = vshll.u32 %v4468, 16
      %v4878 = vrot.slane %v4876, 1
      %v4879 = vsel %vm2732, %v4875, %v4878
      %v4880 = vshrl.u32 %v4468, 16
      %v4882 = vor.u32 %v4880, %v4878
      %v4883 = vshll.u32 %v4469, 16
      %v4885 = vrot.slane %v4883, 1
      %v4886 = vsel %vm2732, %v4882, %v4885
      %v4887 = vshrl.u32 %v4469, 16
      %v4889 = vor.u32 %v4887, %v4885
      %v4890 = vshll.u32 %v4470, 16
      %v4892 = vrot.slane %v4890, 1
      %v4893 = vsel %vm2732, %v4889, %v4892
      %v4894 = vshrl.u32 %v4470, 16
      %v4896 = vor.u32 %v4894, %v4892
      %v4897 = vshll.u32 %v4471, 16
      %v4899 = vrot.slane %v4897, 1
      %v4900 = vsel %vm2732, %v4896, %v4899
      %v4901 = vshrl.u32 %v4471, 16
      %v4903 = vor.u32 %v4901, %v4899
      %v4904 = vshll.u32 %v4472, 16
      %v4906 = vrot.slane %v4904, 1
      %v4907 = vsel %vm2732, %v4903, %v4906
      %v4908 = vshrl.u32 %v4472, 16
      %v4910 = vor.u32 %v4908, %v4906
      %v4911 = vshll.u32 %v4473, 16
      %v4913 = vrot.slane %v4911, 1
      %v4914 = vsel %vm2732, %v4910, %v4913
      %v4915 = vshrl.u32 %v4473, 16
      %v4917 = vor.u32 %v4915, %v4913
      %v4918 = vshll.u32 %v4474, 16
      %v4920 = vrot.slane %v4918, 1
      %v4921 = vsel %vm2732, %v4917, %v4920
      %v4922 = vshrl.u32 %v4474, 16
      %v4924 = vor.u32 %v4922, %v4920
      %v4925 = vshll.u32 %v4475, 16
      %v4927 = vrot.slane %v4925, 1
      %v4928 = vsel %vm2732, %v4924, %v4927
      %v4929 = vshrl.u32 %v4475, 16
      %v4931 = vor.u32 %v4929, %v4927
      %v4932 = vshll.u32 %v4476, 16
      %v4934 = vrot.slane %v4932, 1
      %v4935 = vsel %vm2732, %v4931, %v4934
      %v4936 = vshrl.u32 %v4476, 16
      %v4938 = vor.u32 %v4936, %v4934
      %v4939 = vshll.u32 %v4477, 16
      %v4941 = vrot.slane %v4939, 1
      %v4942 = vsel %vm2732, %v4938, %v4941
      %v4943 = vshrl.u32 %v4477, 16
      %v4945 = vor.u32 %v4943, %v4941
      %v4946 = vshll.u32 %v4478, 16
      %v4948 = vrot.slane %v4946, 1
      %v4949 = vsel %vm2732, %v4945, %v4948
      %v4950 = vshrl.u32 %v4478, 16
      %v4952 = vor.u32 %v4950, %v4948
      %v4953 = vshll.u32 %v4479, 16
      %v4955 = vrot.slane %v4953, 1
      %v4956 = vsel %vm2732, %v4952, %v4955
      %v4957 = vshrl.u32 %v4479, 16
      %v4959 = vor.u32 %v4957, %v4955
      %v4960 = vshll.u32 %v4480, 16
      %v4962 = vrot.slane %v4960, 1
      %v4963 = vsel %vm2732, %v4959, %v4962
      %v4964 = vshrl.u32 %v4480, 16
      %v4966 = vor.u32 %v4964, %v4962
      %v4967 = vshll.u32 %v4481, 16
      %v4969 = vrot.slane %v4967, 1
      %v4970 = vsel %vm2732, %v4966, %v4969
      %v4971 = vshrl.u32 %v4481, 16
      %v4973 = vor.u32 %v4971, %v4969
      %v4974 = vshll.u32 %v4482, 16
      %v4976 = vrot.slane %v4974, 1
      %v4977 = vsel %vm2732, %v4973, %v4976
      %v4978 = vshrl.u32 %v4482, 16
      %v4980 = vor.u32 %v4978, %v4976
      %v4981 = vshll.u32 %v4483, 16
      %v4983 = vrot.slane %v4981, 1
      %v4984 = vsel %vm2732, %v4980, %v4983
      %v4985 = vshrl.u32 %v4483, 16
      %v4987 = vor.u32 %v4985, %v4983
      %v4988 = vshll.u32 %v4484, 16
      %v4990 = vrot.slane %v4988, 1
      %v4991 = vsel %vm2732, %v4987, %v4990
      %v4992 = vshrl.u32 %v4484, 16
      %v4994 = vor.u32 %v4992, %v4990
      %v4995 = vshll.u32 %v4485, 16
      %v4997 = vrot.slane %v4995, 1
      %v4998 = vsel %vm2732, %v4994, %v4997
      %v4999 = vshrl.u32 %v4485, 16
      %v5001 = vor.u32 %v4999, %v4997
      %v5002 = vshll.u32 %v4486, 16
      %v5004 = vrot.slane %v5002, 1
      %v5005 = vsel %vm2732, %v5001, %v5004
      %v5006 = vshrl.u32 %v4486, 16
      %v5008 = vor.u32 %v5006, %v5004
      %v5009 = vshll.u32 %v4487, 16
      %v5011 = vrot.slane %v5009, 1
      %v5012 = vsel %vm2732, %v5008, %v5011
      %v5013 = vshrl.u32 %v4487, 16
      %v5015 = vor.u32 %v5013, %v5011
      %v5016 = vshll.u32 %v4488, 16
      %v5018 = vrot.slane %v5016, 1
      %v5019 = vsel %vm2732, %v5015, %v5018
      %v5020 = vshrl.u32 %v4488, 16
      %v5022 = vor.u32 %v5020, %v5018
      %v5023 = vshll.u32 %v4489, 16
      %v5025 = vrot.slane %v5023, 1
      %v5026 = vsel %vm2732, %v5022, %v5025
      %v5027 = vshrl.u32 %v4489, 16
      %v5029 = vor.u32 %v5027, %v5025
      %v5030 = vshll.u32 %v4490, 16
      %v5032 = vrot.slane %v5030, 1
      %v5033 = vsel %vm2732, %v5029, %v5032
      %v5034 = vshrl.u32 %v4490, 16
      %v5036 = vor.u32 %v5034, %v5032
      %v5037 = vshll.u32 %v4491, 16
      %v5039 = vrot.slane %v5037, 1
      %v5040 = vsel %vm2732, %v5036, %v5039
      %v5041 = vshrl.u32 %v4491, 16
      %v5043 = vor.u32 %v5041, %v5039
      %v5052 = vunpack.c.l.b16 %v4862
      %v5053 = vunpack.c.l.b16 %v4863
      %v5054 = vunpack.c.l.b16 %v4864
      %v5055 = vunpack.c.l.b16 %v4865
      %v5056 = vunpack.c.l.b16 %v4866
      %v5057 = vunpack.c.l.b16 %v4867
      %v5058 = vunpack.c.l.b16 %v4868
      %v5059 = vunpack.c.l.b16 %v4869
      %v5060 = vpack.c.b16 %v5053, %v5052
      %v5061 = vpack.c.b16 %v5055, %v5054
      %v5062 = vpack.c.b16 %v5057, %v5056
      %v5063 = vpack.c.b16 %v5059, %v5058
      %v5069 = vsel %vm487, %v4879, 0
      %v5072 = vsel %vm487, %v4886, 0
      %v5075 = vsel %vm487, %v4893, 0
      %v5078 = vsel %vm487, %v4900, 0
      %v5081 = vsel %vm487, %v4907, 0
      %v5084 = vsel %vm487, %v4914, 0
      %v5087 = vsel %vm487, %v4921, 0
      %v5090 = vsel %vm487, %v4928, 0
      %v5093 = vsel %vm487, %v4935, 0
      %v5096 = vsel %vm487, %v4942, 0
      %v5099 = vsel %vm487, %v4949, 0
      %v5102 = vsel %vm487, %v4956, 0
      %v5105 = vsel %vm487, %v4963, 0
      %v5108 = vsel %vm487, %v4970, 0
      %v5111 = vsel %vm487, %v4977, 0
      %v5114 = vsel %vm487, %v4984, 0
      %v5117 = vsel %vm487, %v4991, 0
      %v5120 = vsel %vm487, %v4998, 0
      %v5123 = vsel %vm487, %v5005, 0
      %v5126 = vsel %vm487, %v5012, 0
      %v5129 = vsel %vm487, %v5019, 0
      %v5132 = vsel %vm487, %v5026, 0
      %v5135 = vsel %vm487, %v5033, 0
      %v5138 = vsel %vm487, %v5040, 0
      %v5141 = vsel %vm487, %v5043, 0
      %5143 = vmatprep.subr.bf16.mxu0 0
      %5144 = vmatpush1.bf16.msra.mxu0 %v5060
      %5145 = vmatprep.subr.bf16.mxu0 0
      %5146 = vmatpush1.bf16.msra.mxu0 %v5061
      %5147 = vmatprep.subr.bf16.mxu0 0
      %5148 = vmatpush1.bf16.msra.mxu0 %v5062
      %5149 = vmatprep.subr.bf16.mxu0 0
      %5150 = vmatpush1.bf16.msra.mxu0 %v5063
      %5151 = vmatprep.subr.bf16.mxu0 0
      %5152 = vmatpush1.bf16.msra.mxu0 0
      %5153 = vmatprep.subr.bf16.mxu0 0
      %5154 = vmatpush1.bf16.msra.mxu0 0
      %5155 = vmatprep.subr.bf16.mxu0 0
      %5156 = vmatpush1.bf16.msra.mxu0 0
      %5157 = vmatprep.subr.bf16.mxu0 0
      %5158 = vmatpush1.bf16.msra.mxu0 0
      %5159 = vmatprep.subr.bf16.mxu0 0
      %5160 = vmatpush1.bf16.msra.mxu0 0
      %5161 = vmatprep.subr.bf16.mxu0 0
      %5162 = vmatpush1.bf16.msra.mxu0 0
      %5163 = vmatprep.subr.bf16.mxu0 0
      %5164 = vmatpush1.bf16.msra.mxu0 0
      %5165 = vmatprep.subr.bf16.mxu0 0
      %5166 = vmatpush1.bf16.msra.mxu0 0
      %5167 = vmatprep.subr.bf16.mxu0 0
      %5168 = vmatpush1.bf16.msra.mxu0 0
      %5169 = vmatprep.subr.bf16.mxu0 0
      %5170 = vmatpush1.bf16.msra.mxu0 0
      %5171 = vmatprep.subr.bf16.mxu0 0
      %5172 = vmatpush1.bf16.msra.mxu0 0
      %5173 = vmatprep.subr.bf16.mxu0 0
      %5174 = vmatpush1.bf16.msra.mxu0 0
      %5175 = vmatprep.mubr.bf16.mxu0 0
      %5176 = vmatmul.mubr.bf16.gmra.mrb[0].mxu0 %v5069
      %v5177 = vpop.f32.mrb[0].mxu0
      %v5178 = vadd.f32 0.0, %v5177
      %v5179 = vpop.f32.mrb[0].mxu0
      %v5180 = vpop.f32.mrb[0].mxu0
      %v5181 = vadd.f32 0.0, %v5180
      %v5182 = vpop.f32.mrb[0].mxu0
      %5183 = vmatprep.mubr.bf16.mxu0 0
      %5184 = vmatmul.mubr.bf16.gmra.mrb[0].mxu0 %v5072
      %v5185 = vpop.f32.mrb[0].mxu0
      %v5186 = vadd.f32 0.0, %v5185
      %v5187 = vpop.f32.mrb[0].mxu0
      %v5188 = vpop.f32.mrb[0].mxu0
      %v5189 = vadd.f32 0.0, %v5188
      %v5190 = vpop.f32.mrb[0].mxu0
      %5191 = vmatprep.mubr.bf16.mxu0 0
      %5192 = vmatmul.mubr.bf16.gmra.mrb[0].mxu0 %v5075
      %v5193 = vpop.f32.mrb[0].mxu0
      %v5194 = vadd.f32 0.0, %v5193
      %v5195 = vpop.f32.mrb[0].mxu0
      %v5196 = vpop.f32.mrb[0].mxu0
      %v5197 = vpop.f32.mrb[0].mxu0
      %5198 = vmatprep.mubr.bf16.mxu0 0
      %5199 = vmatmul.mubr.bf16.gmra.mrb[0].mxu0 %v5078
      %v5200 = vpop.f32.mrb[0].mxu0
      %v5201 = vadd.f32 0.0, %v5200
      %v5202 = vpop.f32.mrb[0].mxu0
      %v5203 = vpop.f32.mrb[0].mxu0
      %v5204 = vadd.f32 0.0, %v5203
      %v5205 = vpop.f32.mrb[0].mxu0
      %5206 = vmatprep.mubr.bf16.mxu0 0
      %5207 = vmatmul.mubr.bf16.gmra.mrb[0].mxu0 %v5081
      %v5208 = vpop.f32.mrb[0].mxu0
      %v5209 = vadd.f32 0.0, %v5208
      %v5210 = vpop.f32.mrb[0].mxu0
      %v5211 = vpop.f32.mrb[0].mxu0
      %v5212 = vadd.f32 0.0, %v5211
      %v5213 = vpop.f32.mrb[0].mxu0
      %5214 = vmatprep.mubr.bf16.mxu0 0
      %5215 = vmatmul.mubr.bf16.gmra.mrb[0].mxu0 %v5084
      %v5216 = vpop.f32.mrb[0].mxu0
      %v5217 = vadd.f32 0.0, %v5216
      %v5218 = vpop.f32.mrb[0].mxu0
      %v5219 = vpop.f32.mrb[0].mxu0
      %v5220 = vpop.f32.mrb[0].mxu0
      %5221 = vmatprep.mubr.bf16.mxu0 0
      %5222 = vmatmul.mubr.bf16.gmra.mrb[0].mxu0 %v5087
      %v5223 = vpop.f32.mrb[0].mxu0
      %v5224 = vadd.f32 0.0, %v5223
      %v5225 = vpop.f32.mrb[0].mxu0
      %v5226 = vpop.f32.mrb[0].mxu0
      %v5227 = vadd.f32 0.0, %v5226
      %v5228 = vpop.f32.mrb[0].mxu0
      %5229 = vmatprep.mubr.bf16.mxu0 0
      %5230 = vmatmul.mubr.bf16.gmra.mrb[0].mxu0 %v5090
      %v5231 = vpop.f32.mrb[0].mxu0
      %v5232 = vadd.f32 0.0, %v5231
      %v5233 = vpop.f32.mrb[0].mxu0
      %v5234 = vpop.f32.mrb[0].mxu0
      %v5235 = vadd.f32 0.0, %v5234
      %v5236 = vpop.f32.mrb[0].mxu0
      %5237 = vmatprep.mubr.bf16.mxu0 0
      %5238 = vmatmul.mubr.bf16.gmra.mrb[0].mxu0 %v5093
      %v5239 = vpop.f32.mrb[0].mxu0
      %v5240 = vadd.f32 0.0, %v5239
      %v5241 = vpop.f32.mrb[0].mxu0
      %v5242 = vpop.f32.mrb[0].mxu0
      %v5243 = vpop.f32.mrb[0].mxu0
      %5244 = vmatprep.mubr.bf16.mxu0 0
      %5245 = vmatmul.mubr.bf16.gmra.mrb[0].mxu0 %v5096
      %v5246 = vpop.f32.mrb[0].mxu0
      %v5247 = vadd.f32 0.0, %v5246
      %v5248 = vpop.f32.mrb[0].mxu0
      %v5249 = vpop.f32.mrb[0].mxu0
      %v5250 = vadd.f32 0.0, %v5249
      %v5251 = vpop.f32.mrb[0].mxu0
      %5252 = vmatprep.mubr.bf16.mxu0 0
      %5253 = vmatmul.mubr.bf16.gmra.mrb[0].mxu0 %v5099
      %v5254 = vpop.f32.mrb[0].mxu0
      %v5255 = vadd.f32 0.0, %v5254
      %v5256 = vpop.f32.mrb[0].mxu0
      %v5257 = vpop.f32.mrb[0].mxu0
      %v5258 = vadd.f32 0.0, %v5257
      %v5259 = vpop.f32.mrb[0].mxu0
      %5260 = vmatprep.mubr.bf16.mxu0 0
      %5261 = vmatmul.mubr.bf16.gmra.mrb[0].mxu0 %v5102
      %v5262 = vpop.f32.mrb[0].mxu0
      %v5263 = vadd.f32 0.0, %v5262
      %v5264 = vpop.f32.mrb[0].mxu0
      %v5265 = vpop.f32.mrb[0].mxu0
      %v5266 = vpop.f32.mrb[0].mxu0
      %5267 = vmatprep.mubr.bf16.mxu0 0
      %5268 = vmatmul.mubr.bf16.gmra.mrb[0].mxu0 %v5105
      %v5269 = vpop.f32.mrb[0].mxu0
      %v5270 = vadd.f32 0.0, %v5269
      %v5271 = vpop.f32.mrb[0].mxu0
      %v5272 = vpop.f32.mrb[0].mxu0
      %v5273 = vadd.f32 0.0, %v5272
      %v5274 = vpop.f32.mrb[0].mxu0
      %5275 = vmatprep.mubr.bf16.mxu0 0
      %5276 = vmatmul.mubr.bf16.gmra.mrb[0].mxu0 %v5108
      %v5277 = vpop.f32.mrb[0].mxu0
      %v5278 = vadd.f32 0.0, %v5277
      %v5279 = vpop.f32.mrb[0].mxu0
      %v5280 = vpop.f32.mrb[0].mxu0
      %v5281 = vadd.f32 0.0, %v5280
      %v5282 = vpop.f32.mrb[0].mxu0
      %5283 = vmatprep.mubr.bf16.mxu0 0
      %5284 = vmatmul.mubr.bf16.gmra.mrb[0].mxu0 %v5111
      %v5285 = vpop.f32.mrb[0].mxu0
      %v5286 = vadd.f32 0.0, %v5285
      %v5287 = vpop.f32.mrb[0].mxu0
      %v5288 = vpop.f32.mrb[0].mxu0
      %v5289 = vpop.f32.mrb[0].mxu0
      %5290 = vmatprep.mubr.bf16.mxu0 0
      %5291 = vmatmul.mubr.bf16.gmra.mrb[0].mxu0 %v5114
      %v5292 = vpop.f32.mrb[0].mxu0
      %v5293 = vadd.f32 0.0, %v5292
      %v5294 = vpop.f32.mrb[0].mxu0
      %v5295 = vpop.f32.mrb[0].mxu0
      %v5296 = vadd.f32 0.0, %v5295
      %v5297 = vpop.f32.mrb[0].mxu0
      %5298 = vmatprep.mubr.bf16.mxu0 0
      %5299 = vmatmul.mubr.bf16.gmra.mrb[0].mxu0 %v5117
      %v5300 = vpop.f32.mrb[0].mxu0
      %v5301 = vadd.f32 0.0, %v5300
      %v5302 = vpop.f32.mrb[0].mxu0
      %v5303 = vpop.f32.mrb[0].mxu0
      %v5304 = vadd.f32 0.0, %v5303
      %v5305 = vpop.f32.mrb[0].mxu0
      %5306 = vmatprep.mubr.bf16.mxu0 0
      %5307 = vmatmul.mubr.bf16.gmra.mrb[0].mxu0 %v5120
      %v5308 = vpop.f32.mrb[0].mxu0
      %v5309 = vadd.f32 0.0, %v5308
      %v5310 = vpop.f32.mrb[0].mxu0
      %v5311 = vpop.f32.mrb[0].mxu0
      %v5312 = vpop.f32.mrb[0].mxu0
      %5313 = vmatprep.mubr.bf16.mxu0 0
      %5314 = vmatmul.mubr.bf16.gmra.mrb[0].mxu0 %v5123
      %v5315 = vpop.f32.mrb[0].mxu0
      %v5316 = vadd.f32 0.0, %v5315
      %v5317 = vpop.f32.mrb[0].mxu0
      %v5318 = vpop.f32.mrb[0].mxu0
      %v5319 = vadd.f32 0.0, %v5318
      %v5320 = vpop.f32.mrb[0].mxu0
      %5321 = vmatprep.mubr.bf16.mxu0 0
      %5322 = vmatmul.mubr.bf16.gmra.mrb[0].mxu0 %v5126
      %v5323 = vpop.f32.mrb[0].mxu0
      %v5324 = vadd.f32 0.0, %v5323
      %v5325 = vpop.f32.mrb[0].mxu0
      %v5326 = vpop.f32.mrb[0].mxu0
      %v5327 = vadd.f32 0.0, %v5326
      %v5328 = vpop.f32.mrb[0].mxu0
      %5329 = vmatprep.mubr.bf16.mxu0 0
      %5330 = vmatmul.mubr.bf16.gmra.mrb[0].mxu0 %v5129
      %v5331 = vpop.f32.mrb[0].mxu0
      %v5332 = vadd.f32 0.0, %v5331
      %v5333 = vpop.f32.mrb[0].mxu0
      %v5334 = vpop.f32.mrb[0].mxu0
      %v5335 = vpop.f32.mrb[0].mxu0
      %5336 = vmatprep.mubr.bf16.mxu0 0
      %5337 = vmatmul.mubr.bf16.gmra.mrb[0].mxu0 %v5132
      %v5338 = vpop.f32.mrb[0].mxu0
      %v5339 = vadd.f32 0.0, %v5338
      %v5340 = vpop.f32.mrb[0].mxu0
      %v5341 = vpop.f32.mrb[0].mxu0
      %v5342 = vadd.f32 0.0, %v5341
      %v5343 = vpop.f32.mrb[0].mxu0
      %5344 = vmatprep.mubr.bf16.mxu0 0
      %5345 = vmatmul.mubr.bf16.gmra.mrb[0].mxu0 %v5135
      %v5346 = vpop.f32.mrb[0].mxu0
      %v5347 = vadd.f32 0.0, %v5346
      %v5348 = vpop.f32.mrb[0].mxu0
      %v5349 = vpop.f32.mrb[0].mxu0
      %v5350 = vadd.f32 0.0, %v5349
      %v5351 = vpop.f32.mrb[0].mxu0
      %5352 = vmatprep.mubr.bf16.mxu0 0
      %5353 = vmatmul.mubr.bf16.gmra.mrb[0].mxu0 %v5138
      %v5354 = vpop.f32.mrb[0].mxu0
      %v5355 = vadd.f32 0.0, %v5354
      %v5356 = vpop.f32.mrb[0].mxu0
      %v5357 = vpop.f32.mrb[0].mxu0
      %v5358 = vpop.f32.mrb[0].mxu0
      %5359 = vmatprep.mubr.bf16.mxu0 0
      %5360 = vmatmul.mubr.bf16.gmra.mrb[0].mxu0 %v5141
      %v5361 = vpop.f32.mrb[0].mxu0
      %v5362 = vpop.f32.mrb[0].mxu0
      %v5363 = vpop.f32.mrb[0].mxu0
      %v5364 = vpop.f32.mrb[0].mxu0
      %5365 = vdwg.mxu0
      %v5366 = vadd.f32 %v4822, %v5178
      %v5367 = vadd.f32 %v4823, %v5181
      %v5368 = vadd.f32 %v4824, %v5186
      %v5369 = vadd.f32 %v4825, %v5189
      %v5370 = vadd.f32 %v4826, %v5194
      %v5371 = vadd.f32 %v4827, %v5201
      %v5372 = vadd.f32 %v4828, %v5204
      %v5373 = vadd.f32 %v4829, %v5209
      %v5374 = vadd.f32 %v4830, %v5212
      %v5375 = vadd.f32 %v4831, %v5217
      %v5376 = vadd.f32 %v4832, %v5224
      %v5377 = vadd.f32 %v4833, %v5227
      %v5378 = vadd.f32 %v4834, %v5232
      %v5379 = vadd.f32 %v4835, %v5235
      %v5380 = vadd.f32 %v4836, %v5240
      %v5381 = vadd.f32 %v4837, %v5247
      %v5382 = vadd.f32 %v4838, %v5250
      %v5383 = vadd.f32 %v4839, %v5255
      %v5384 = vadd.f32 %v4840, %v5258
      %v5385 = vadd.f32 %v4841, %v5263
      %v5386 = vadd.f32 %v4842, %v5270
      %v5387 = vadd.f32 %v4843, %v5273
      %v5388 = vadd.f32 %v4844, %v5278
      %v5389 = vadd.f32 %v4845, %v5281
      %v5390 = vadd.f32 %v4846, %v5286
      %v5391 = vadd.f32 %v4847, %v5293
      %v5392 = vadd.f32 %v4848, %v5296
      %v5393 = vadd.f32 %v4849, %v5301
      %v5394 = vadd.f32 %v4850, %v5304
      %v5395 = vadd.f32 %v4851, %v5309
      %v5396 = vadd.f32 %v4852, %v5316
      %v5397 = vadd.f32 %v4853, %v5319
      %v5398 = vadd.f32 %v4854, %v5324
      %v5399 = vadd.f32 %v4855, %v5327
      %v5400 = vadd.f32 %v4856, %v5332
      %v5401 = vadd.f32 %v4857, %v5339
      %v5402 = vadd.f32 %v4858, %v5342
      %v5403 = vadd.f32 %v4859, %v5347
      %v5404 = vadd.f32 %v4860, %v5350
      %v5405 = vadd.f32 %v4861, %v5355
      %v5406 = vld [vmem:[%s3 + $0xc0] sm:$0xf]
      %v5407 = vld [vmem:[%s3 + $0xc4] sm:$0xf]
      %v5408 = vld [vmem:[%s3 + $0xc8] sm:$0xf]
      %v5409 = vld [vmem:[%s3 + $0xcc] sm:$0xf]
      %v5410 = vld [vmem:[%s3 + $0xd0] sm:$0xf]
      %v5411 = vld [vmem:[%s3 + $0xd4] sm:$0xf]
      %v5412 = vld [vmem:[%s3 + $0xd8] sm:$0xf]
      %v5413 = vld [vmem:[%s3 + $0xdc] sm:$0xf]
      %vm5439 = vcmask 1044480
      %v5440 = vrot.slane %v4467, 3
      %v5441 = vrot.slane %v4468, 3
      %v5442 = vsel %vm5439, %v5440, %v5441
      %v5443 = vrot.slane %v4469, 3
      %v5444 = vsel %vm5439, %v5441, %v5443
      %v5445 = vrot.slane %v4470, 3
      %v5446 = vsel %vm5439, %v5443, %v5445
      %v5447 = vrot.slane %v4471, 3
      %v5448 = vsel %vm5439, %v5445, %v5447
      %v5449 = vrot.slane %v4472, 3
      %v5450 = vsel %vm5439, %v5447, %v5449
      %v5451 = vrot.slane %v4473, 3
      %v5452 = vsel %vm5439, %v5449, %v5451
      %v5453 = vrot.slane %v4474, 3
      %v5454 = vsel %vm5439, %v5451, %v5453
      %v5455 = vrot.slane %v4475, 3
      %v5456 = vsel %vm5439, %v5453, %v5455
      %v5457 = vrot.slane %v4476, 3
      %v5458 = vsel %vm5439, %v5455, %v5457
      %v5459 = vrot.slane %v4477, 3
      %v5460 = vsel %vm5439, %v5457, %v5459
      %v5461 = vrot.slane %v4478, 3
      %v5462 = vsel %vm5439, %v5459, %v5461
      %v5463 = vrot.slane %v4479, 3
      %v5464 = vsel %vm5439, %v5461, %v5463
      %v5465 = vrot.slane %v4480, 3
      %v5466 = vsel %vm5439, %v5463, %v5465
      %v5467 = vrot.slane %v4481, 3
      %v5468 = vsel %vm5439, %v5465, %v5467
      %v5469 = vrot.slane %v4482, 3
      %v5470 = vsel %vm5439, %v5467, %v5469
      %v5471 = vrot.slane %v4483, 3
      %v5472 = vsel %vm5439, %v5469, %v5471
      %v5473 = vrot.slane %v4484, 3
      %v5474 = vsel %vm5439, %v5471, %v5473
      %v5475 = vrot.slane %v4485, 3
      %v5476 = vsel %vm5439, %v5473, %v5475
      %v5477 = vrot.slane %v4486, 3
      %v5478 = vsel %vm5439, %v5475, %v5477
      %v5479 = vrot.slane %v4487, 3
      %v5480 = vsel %vm5439, %v5477, %v5479
      %v5481 = vrot.slane %v4488, 3
      %v5482 = vsel %vm5439, %v5479, %v5481
      %v5483 = vrot.slane %v4489, 3
      %v5484 = vsel %vm5439, %v5481, %v5483
      %v5485 = vrot.slane %v4490, 3
      %v5486 = vsel %vm5439, %v5483, %v5485
      %v5487 = vrot.slane %v4491, 3
      %v5488 = vsel %vm5439, %v5485, %v5487
      %v5497 = vunpack.c.l.b16 %v5406
      %v5498 = vunpack.c.l.b16 %v5407
      %v5499 = vunpack.c.l.b16 %v5408
      %v5500 = vunpack.c.l.b16 %v5409
      %v5501 = vunpack.c.l.b16 %v5410
      %v5502 = vunpack.c.l.b16 %v5411
      %v5503 = vunpack.c.l.b16 %v5412
      %v5504 = vunpack.c.l.b16 %v5413
      %v5505 = vpack.c.b16 %v5498, %v5497
      %v5506 = vpack.c.b16 %v5500, %v5499
      %v5507 = vpack.c.b16 %v5502, %v5501
      %v5508 = vpack.c.b16 %v5504, %v5503
      %v5514 = vsel %vm487, %v5442, 0
      %v5517 = vsel %vm487, %v5444, 0
      %v5520 = vsel %vm487, %v5446, 0
      %v5523 = vsel %vm487, %v5448, 0
      %v5526 = vsel %vm487, %v5450, 0
      %v5529 = vsel %vm487, %v5452, 0
      %v5532 = vsel %vm487, %v5454, 0
      %v5535 = vsel %vm487, %v5456, 0
      %v5538 = vsel %vm487, %v5458, 0
      %v5541 = vsel %vm487, %v5460, 0
      %v5544 = vsel %vm487, %v5462, 0
      %v5547 = vsel %vm487, %v5464, 0
      %v5550 = vsel %vm487, %v5466, 0
      %v5553 = vsel %vm487, %v5468, 0
      %v5556 = vsel %vm487, %v5470, 0
      %v5559 = vsel %vm487, %v5472, 0
      %v5562 = vsel %vm487, %v5474, 0
      %v5565 = vsel %vm487, %v5476, 0
      %v5568 = vsel %vm487, %v5478, 0
      %v5571 = vsel %vm487, %v5480, 0
      %v5574 = vsel %vm487, %v5482, 0
      %v5577 = vsel %vm487, %v5484, 0
      %v5580 = vsel %vm487, %v5486, 0
      %v5583 = vsel %vm487, %v5488, 0
      %v5586 = vsel %vm487, %v5487, 0
      %5588 = vmatprep.subr.bf16.mxu0 0
      %5589 = vmatpush1.bf16.msra.mxu0 %v5505
      %5590 = vmatprep.subr.bf16.mxu0 0
      %5591 = vmatpush1.bf16.msra.mxu0 %v5506
      %5592 = vmatprep.subr.bf16.mxu0 0
      %5593 = vmatpush1.bf16.msra.mxu0 %v5507
      %5594 = vmatprep.subr.bf16.mxu0 0
      %5595 = vmatpush1.bf16.msra.mxu0 %v5508
      %5596 = vmatprep.subr.bf16.mxu0 0
      %5597 = vmatpush1.bf16.msra.mxu0 0
      %5598 = vmatprep.subr.bf16.mxu0 0
      %5599 = vmatpush1.bf16.msra.mxu0 0
      %5600 = vmatprep.subr.bf16.mxu0 0
      %5601 = vmatpush1.bf16.msra.mxu0 0
      %5602 = vmatprep.subr.bf16.mxu0 0
      %5603 = vmatpush1.bf16.msra.mxu0 0
      %5604 = vmatprep.subr.bf16.mxu0 0
      %5605 = vmatpush1.bf16.msra.mxu0 0
      %5606 = vmatprep.subr.bf16.mxu0 0
      %5607 = vmatpush1.bf16.msra.mxu0 0
      %5608 = vmatprep.subr.bf16.mxu0 0
      %5609 = vmatpush1.bf16.msra.mxu0 0
      %5610 = vmatprep.subr.bf16.mxu0 0
      %5611 = vmatpush1.bf16.msra.mxu0 0
      %5612 = vmatprep.subr.bf16.mxu0 0
      %5613 = vmatpush1.bf16.msra.mxu0 0
      %5614 = vmatprep.subr.bf16.mxu0 0
      %5615 = vmatpush1.bf16.msra.mxu0 0
      %5616 = vmatprep.subr.bf16.mxu0 0
      %5617 = vmatpush1.bf16.msra.mxu0 0
      %5618 = vmatprep.subr.bf16.mxu0 0
      %5619 = vmatpush1.bf16.msra.mxu0 0
      %5620 = vmatprep.mubr.bf16.mxu0 0
      %5621 = vmatmul.mubr.bf16.gmra.mrb[0].mxu0 %v5514
      %v5622 = vpop.f32.mrb[0].mxu0
      %v5623 = vadd.f32 0.0, %v5622
      %v5624 = vpop.f32.mrb[0].mxu0
      %v5625 = vpop.f32.mrb[0].mxu0
      %v5626 = vadd.f32 0.0, %v5625
      %v5627 = vpop.f32.mrb[0].mxu0
      %5628 = vmatprep.mubr.bf16.mxu0 0
      %5629 = vmatmul.mubr.bf16.gmra.mrb[0].mxu0 %v5517
      %v5630 = vpop.f32.mrb[0].mxu0
      %v5631 = vadd.f32 0.0, %v5630
      %v5632 = vpop.f32.mrb[0].mxu0
      %v5633 = vpop.f32.mrb[0].mxu0
      %v5634 = vadd.f32 0.0, %v5633
      %v5635 = vpop.f32.mrb[0].mxu0
      %5636 = vmatprep.mubr.bf16.mxu0 0
      %5637 = vmatmul.mubr.bf16.gmra.mrb[0].mxu0 %v5520
      %v5638 = vpop.f32.mrb[0].mxu0
      %v5639 = vadd.f32 0.0, %v5638
      %v5640 = vpop.f32.mrb[0].mxu0
      %v5641 = vpop.f32.mrb[0].mxu0
      %v5642 = vpop.f32.mrb[0].mxu0
      %5643 = vmatprep.mubr.bf16.mxu0 0
      %5644 = vmatmul.mubr.bf16.gmra.mrb[0].mxu0 %v5523
      %v5645 = vpop.f32.mrb[0].mxu0
      %v5646 = vadd.f32 0.0, %v5645
      %v5647 = vpop.f32.mrb[0].mxu0
      %v5648 = vpop.f32.mrb[0].mxu0
      %v5649 = vadd.f32 0.0, %v5648
      %v5650 = vpop.f32.mrb[0].mxu0
      %5651 = vmatprep.mubr.bf16.mxu0 0
      %5652 = vmatmul.mubr.bf16.gmra.mrb[0].mxu0 %v5526
      %v5653 = vpop.f32.mrb[0].mxu0
      %v5654 = vadd.f32 0.0, %v5653
      %v5655 = vpop.f32.mrb[0].mxu0
      %v5656 = vpop.f32.mrb[0].mxu0
      %v5657 = vadd.f32 0.0, %v5656
      %v5658 = vpop.f32.mrb[0].mxu0
      %5659 = vmatprep.mubr.bf16.mxu0 0
      %5660 = vmatmul.mubr.bf16.gmra.mrb[0].mxu0 %v5529
      %v5661 = vpop.f32.mrb[0].mxu0
      %v5662 = vadd.f32 0.0, %v5661
      %v5663 = vpop.f32.mrb[0].mxu0
      %v5664 = vpop.f32.mrb[0].mxu0
      %v5665 = vpop.f32.mrb[0].mxu0
      %5666 = vmatprep.mubr.bf16.mxu0 0
      %5667 = vmatmul.mubr.bf16.gmra.mrb[0].mxu0 %v5532
      %v5668 = vpop.f32.mrb[0].mxu0
      %v5669 = vadd.f32 0.0, %v5668
      %v5670 = vpop.f32.mrb[0].mxu0
      %v5671 = vpop.f32.mrb[0].mxu0
      %v5672 = vadd.f32 0.0, %v5671
      %v5673 = vpop.f32.mrb[0].mxu0
      %5674 = vmatprep.mubr.bf16.mxu0 0
      %5675 = vmatmul.mubr.bf16.gmra.mrb[0].mxu0 %v5535
      %v5676 = vpop.f32.mrb[0].mxu0
      %v5677 = vadd.f32 0.0, %v5676
      %v5678 = vpop.f32.mrb[0].mxu0
      %v5679 = vpop.f32.mrb[0].mxu0
      %v5680 = vadd.f32 0.0, %v5679
      %v5681 = vpop.f32.mrb[0].mxu0
      %5682 = vmatprep.mubr.bf16.mxu0 0
      %5683 = vmatmul.mubr.bf16.gmra.mrb[0].mxu0 %v5538
      %v5684 = vpop.f32.mrb[0].mxu0
      %v5685 = vadd.f32 0.0, %v5684
      %v5686 = vpop.f32.mrb[0].mxu0
      %v5687 = vpop.f32.mrb[0].mxu0
      %v5688 = vpop.f32.mrb[0].mxu0
      %5689 = vmatprep.mubr.bf16.mxu0 0
      %5690 = vmatmul.mubr.bf16.gmra.mrb[0].mxu0 %v5541
      %v5691 = vpop.f32.mrb[0].mxu0
      %v5692 = vadd.f32 0.0, %v5691
      %v5693 = vpop.f32.mrb[0].mxu0
      %v5694 = vpop.f32.mrb[0].mxu0
      %v5695 = vadd.f32 0.0, %v5694
      %v5696 = vpop.f32.mrb[0].mxu0
      %5697 = vmatprep.mubr.bf16.mxu0 0
      %5698 = vmatmul.mubr.bf16.gmra.mrb[0].mxu0 %v5544
      %v5699 = vpop.f32.mrb[0].mxu0
      %v5700 = vadd.f32 0.0, %v5699
      %v5701 = vpop.f32.mrb[0].mxu0
      %v5702 = vpop.f32.mrb[0].mxu0
      %v5703 = vadd.f32 0.0, %v5702
      %v5704 = vpop.f32.mrb[0].mxu0
      %5705 = vmatprep.mubr.bf16.mxu0 0
      %5706 = vmatmul.mubr.bf16.gmra.mrb[0].mxu0 %v5547
      %v5707 = vpop.f32.mrb[0].mxu0
      %v5708 = vadd.f32 0.0, %v5707
      %v5709 = vpop.f32.mrb[0].mxu0
      %v5710 = vpop.f32.mrb[0].mxu0
      %v5711 = vpop.f32.mrb[0].mxu0
      %5712 = vmatprep.mubr.bf16.mxu0 0
      %5713 = vmatmul.mubr.bf16.gmra.mrb[0].mxu0 %v5550
      %v5714 = vpop.f32.mrb[0].mxu0
      %v5715 = vadd.f32 0.0, %v5714
      %v5716 = vpop.f32.mrb[0].mxu0
      %v5717 = vpop.f32.mrb[0].mxu0
      %v5718 = vadd.f32 0.0, %v5717
      %v5719 = vpop.f32.mrb[0].mxu0
      %5720 = vmatprep.mubr.bf16.mxu0 0
      %5721 = vmatmul.mubr.bf16.gmra.mrb[0].mxu0 %v5553
      %v5722 = vpop.f32.mrb[0].mxu0
      %v5723 = vadd.f32 0.0, %v5722
      %v5724 = vpop.f32.mrb[0].mxu0
      %v5725 = vpop.f32.mrb[0].mxu0
      %v5726 = vadd.f32 0.0, %v5725
      %v5727 = vpop.f32.mrb[0].mxu0
      %5728 = vmatprep.mubr.bf16.mxu0 0
      %5729 = vmatmul.mubr.bf16.gmra.mrb[0].mxu0 %v5556
      %v5730 = vpop.f32.mrb[0].mxu0
      %v5731 = vadd.f32 0.0, %v5730
      %v5732 = vpop.f32.mrb[0].mxu0
      %v5733 = vpop.f32.mrb[0].mxu0
      %v5734 = vpop.f32.mrb[0].mxu0
      %5735 = vmatprep.mubr.bf16.mxu0 0
      %5736 = vmatmul.mubr.bf16.gmra.mrb[0].mxu0 %v5559
      %v5737 = vpop.f32.mrb[0].mxu0
      %v5738 = vadd.f32 0.0, %v5737
      %v5739 = vpop.f32.mrb[0].mxu0
      %v5740 = vpop.f32.mrb[0].mxu0
      %v5741 = vadd.f32 0.0, %v5740
      %v5742 = vpop.f32.mrb[0].mxu0
      %5743 = vmatprep.mubr.bf16.mxu0 0
      %5744 = vmatmul.mubr.bf16.gmra.mrb[0].mxu0 %v5562
      %v5745 = vpop.f32.mrb[0].mxu0
      %v5746 = vadd.f32 0.0, %v5745
      %v5747 = vpop.f32.mrb[0].mxu0
      %v5748 = vpop.f32.mrb[0].mxu0
      %v5749 = vadd.f32 0.0, %v5748
      %v5750 = vpop.f32.mrb[0].mxu0
      %5751 = vmatprep.mubr.bf16.mxu0 0
      %5752 = vmatmul.mubr.bf16.gmra.mrb[0].mxu0 %v5565
      %v5753 = vpop.f32.mrb[0].mxu0
      %v5754 = vadd.f32 0.0, %v5753
      %v5755 = vpop.f32.mrb[0].mxu0
      %v5756 = vpop.f32.mrb[0].mxu0
      %v5757 = vpop.f32.mrb[0].mxu0
      %5758 = vmatprep.mubr.bf16.mxu0 0
      %5759 = vmatmul.mubr.bf16.gmra.mrb[0].mxu0 %v5568
      %v5760 = vpop.f32.mrb[0].mxu0
      %v5761 = vadd.f32 0.0, %v5760
      %v5762 = vpop.f32.mrb[0].mxu0
      %v5763 = vpop.f32.mrb[0].mxu0
      %v5764 = vadd.f32 0.0, %v5763
      %v5765 = vpop.f32.mrb[0].mxu0
      %5766 = vmatprep.mubr.bf16.mxu0 0
      %5767 = vmatmul.mubr.bf16.gmra.mrb[0].mxu0 %v5571
      %v5768 = vpop.f32.mrb[0].mxu0
      %v5769 = vadd.f32 0.0, %v5768
      %v5770 = vpop.f32.mrb[0].mxu0
      %v5771 = vpop.f32.mrb[0].mxu0
      %v5772 = vadd.f32 0.0, %v5771
      %v5773 = vpop.f32.mrb[0].mxu0
      %5774 = vmatprep.mubr.bf16.mxu0 0
      %5775 = vmatmul.mubr.bf16.gmra.mrb[0].mxu0 %v5574
      %v5776 = vpop.f32.mrb[0].mxu0
      %v5777 = vadd.f32 0.0, %v5776
      %v5778 = vpop.f32.mrb[0].mxu0
      %v5779 = vpop.f32.mrb[0].mxu0
      %v5780 = vpop.f32.mrb[0].mxu0
      %5781 = vmatprep.mubr.bf16.mxu0 0
      %5782 = vmatmul.mubr.bf16.gmra.mrb[0].mxu0 %v5577
      %v5783 = vpop.f32.mrb[0].mxu0
      %v5784 = vadd.f32 0.0, %v5783
      %v5785 = vpop.f32.mrb[0].mxu0
      %v5786 = vpop.f32.mrb[0].mxu0
      %v5787 = vadd.f32 0.0, %v5786
      %v5788 = vpop.f32.mrb[0].mxu0
      %5789 = vmatprep.mubr.bf16.mxu0 0
      %5790 = vmatmul.mubr.bf16.gmra.mrb[0].mxu0 %v5580
      %v5791 = vpop.f32.mrb[0].mxu0
      %v5792 = vadd.f32 0.0, %v5791
      %v5793 = vpop.f32.mrb[0].mxu0
      %v5794 = vpop.f32.mrb[0].mxu0
      %v5795 = vadd.f32 0.0, %v5794
      %v5796 = vpop.f32.mrb[0].mxu0
      %5797 = vmatprep.mubr.bf16.mxu0 0
      %5798 = vmatmul.mubr.bf16.gmra.mrb[0].mxu0 %v5583
      %v5799 = vpop.f32.mrb[0].mxu0
      %v5800 = vadd.f32 0.0, %v5799
      %v5801 = vpop.f32.mrb[0].mxu0
      %v5802 = vpop.f32.mrb[0].mxu0
      %v5803 = vpop.f32.mrb[0].mxu0
      %5804 = vmatprep.mubr.bf16.mxu0 0
      %5805 = vmatmul.mubr.bf16.gmra.mrb[0].mxu0 %v5586
      %v5806 = vpop.f32.mrb[0].mxu0
      %v5807 = vpop.f32.mrb[0].mxu0
      %v5808 = vpop.f32.mrb[0].mxu0
      %v5809 = vpop.f32.mrb[0].mxu0
      %5810 = vdwg.mxu0
      %v5811 = vadd.f32 %v5366, %v5623
      %v5812 = vadd.f32 %v5367, %v5626
      %v5813 = vadd.f32 %v5368, %v5631
      %v5814 = vadd.f32 %v5369, %v5634
      %v5815 = vadd.f32 %v5370, %v5639
      %v5816 = vadd.f32 %v5371, %v5646
      %v5817 = vadd.f32 %v5372, %v5649
      %v5818 = vadd.f32 %v5373, %v5654
      %v5819 = vadd.f32 %v5374, %v5657
      %v5820 = vadd.f32 %v5375, %v5662
      %v5821 = vadd.f32 %v5376, %v5669
      %v5822 = vadd.f32 %v5377, %v5672
      %v5823 = vadd.f32 %v5378, %v5677
      %v5824 = vadd.f32 %v5379, %v5680
      %v5825 = vadd.f32 %v5380, %v5685
      %v5826 = vadd.f32 %v5381, %v5692
      %v5827 = vadd.f32 %v5382, %v5695
      %v5828 = vadd.f32 %v5383, %v5700
      %v5829 = vadd.f32 %v5384, %v5703
      %v5830 = vadd.f32 %v5385, %v5708
      %v5831 = vadd.f32 %v5386, %v5715
      %v5832 = vadd.f32 %v5387, %v5718
      %v5833 = vadd.f32 %v5388, %v5723
      %v5834 = vadd.f32 %v5389, %v5726
      %v5835 = vadd.f32 %v5390, %v5731
      %v5836 = vadd.f32 %v5391, %v5738
      %v5837 = vadd.f32 %v5392, %v5741
      %v5838 = vadd.f32 %v5393, %v5746
      %v5839 = vadd.f32 %v5394, %v5749
      %v5840 = vadd.f32 %v5395, %v5754
      %v5841 = vadd.f32 %v5396, %v5761
      %v5842 = vadd.f32 %v5397, %v5764
      %v5843 = vadd.f32 %v5398, %v5769
      %v5844 = vadd.f32 %v5399, %v5772
      %v5845 = vadd.f32 %v5400, %v5777
      %v5846 = vadd.f32 %v5401, %v5784
      %v5847 = vadd.f32 %v5402, %v5787
      %v5848 = vadd.f32 %v5403, %v5792
      %v5849 = vadd.f32 %v5404, %v5795
      %v5850 = vadd.f32 %v5405, %v5800
      %v5851 = vld [vmem:[%s3 + $0xe0] sm:$0xf]
      %v5852 = vld [vmem:[%s3 + $0xe4] sm:$0xf]
      %v5853 = vld [vmem:[%s3 + $0xe8] sm:$0xf]
      %v5854 = vld [vmem:[%s3 + $0xec] sm:$0xf]
      %v5855 = vld [vmem:[%s3 + $0xf0] sm:$0xf]
      %v5856 = vld [vmem:[%s3 + $0xf4] sm:$0xf]
      %v5857 = vld [vmem:[%s3 + $0xf8] sm:$0xf]
      %v5858 = vld [vmem:[%s3 + $0xfc] sm:$0xf]
      %v5859 = vrot.slane %v4870, 3
      %v5860 = vrot.slane %v4872, 4
      %v5861 = vor.u32 %v5859, %v5860
      %v5862 = vrot.slane %v4880, 3
      %v5863 = vrot.slane %v4876, 4
      %v5864 = vor.u32 %v5862, %v5863
      %v5865 = vsel %vm4005, %v5861, %v5864
      %v5866 = vrot.slane %v4887, 3
      %v5867 = vrot.slane %v4883, 4
      %v5868 = vor.u32 %v5866, %v5867
      %v5869 = vsel %vm4005, %v5864, %v5868
      %v5870 = vrot.slane %v4894, 3
      %v5871 = vrot.slane %v4890, 4
      %v5872 = vor.u32 %v5870, %v5871
      %v5873 = vsel %vm4005, %v5868, %v5872
      %v5874 = vrot.slane %v4901, 3
      %v5875 = vrot.slane %v4897, 4
      %v5876 = vor.u32 %v5874, %v5875
      %v5877 = vsel %vm4005, %v5872, %v5876
      %v5878 = vrot.slane %v4908, 3
      %v5879 = vrot.slane %v4904, 4
      %v5880 = vor.u32 %v5878, %v5879
      %v5881 = vsel %vm4005, %v5876, %v5880
      %v5882 = vrot.slane %v4915, 3
      %v5883 = vrot.slane %v4911, 4
      %v5884 = vor.u32 %v5882, %v5883
      %v5885 = vsel %vm4005, %v5880, %v5884
      %v5886 = vrot.slane %v4922, 3
      %v5887 = vrot.slane %v4918, 4
      %v5888 = vor.u32 %v5886, %v5887
      %v5889 = vsel %vm4005, %v5884, %v5888
      %v5890 = vrot.slane %v4929, 3
      %v5891 = vrot.slane %v4925, 4
      %v5892 = vor.u32 %v5890, %v5891
      %v5893 = vsel %vm4005, %v5888, %v5892
      %v5894 = vrot.slane %v4936, 3
      %v5895 = vrot.slane %v4932, 4
      %v5896 = vor.u32 %v5894, %v5895
      %v5897 = vsel %vm4005, %v5892, %v5896
      %v5898 = vrot.slane %v4943, 3
      %v5899 = vrot.slane %v4939, 4
      %v5900 = vor.u32 %v5898, %v5899
      %v5901 = vsel %vm4005, %v5896, %v5900
      %v5902 = vrot.slane %v4950, 3
      %v5903 = vrot.slane %v4946, 4
      %v5904 = vor.u32 %v5902, %v5903
      %v5905 = vsel %vm4005, %v5900, %v5904
      %v5906 = vrot.slane %v4957, 3
      %v5907 = vrot.slane %v4953, 4
      %v5908 = vor.u32 %v5906, %v5907
      %v5909 = vsel %vm4005, %v5904, %v5908
      %v5910 = vrot.slane %v4964, 3
      %v5911 = vrot.slane %v4960, 4
      %v5912 = vor.u32 %v5910, %v5911
      %v5913 = vsel %vm4005, %v5908, %v5912
      %v5914 = vrot.slane %v4971, 3
      %v5915 = vrot.slane %v4967, 4
      %v5916 = vor.u32 %v5914, %v5915
      %v5917 = vsel %vm4005, %v5912, %v5916
      %v5918 = vrot.slane %v4978, 3
      %v5919 = vrot.slane %v4974, 4
      %v5920 = vor.u32 %v5918, %v5919
      %v5921 = vsel %vm4005, %v5916, %v5920
      %v5922 = vrot.slane %v4985, 3
      %v5923 = vrot.slane %v4981, 4
      %v5924 = vor.u32 %v5922, %v5923
      %v5925 = vsel %vm4005, %v5920, %v5924
      %v5926 = vrot.slane %v4992, 3
      %v5927 = vrot.slane %v4988, 4
      %v5928 = vor.u32 %v5926, %v5927
      %v5929 = vsel %vm4005, %v5924, %v5928
      %v5930 = vrot.slane %v4999, 3
      %v5931 = vrot.slane %v4995, 4
      %v5932 = vor.u32 %v5930, %v5931
      %v5933 = vsel %vm4005, %v5928, %v5932
      %v5934 = vrot.slane %v5006, 3
      %v5935 = vrot.slane %v5002, 4
      %v5936 = vor.u32 %v5934, %v5935
      %v5937 = vsel %vm4005, %v5932, %v5936
      %v5938 = vrot.slane %v5013, 3
      %v5939 = vrot.slane %v5009, 4
      %v5940 = vor.u32 %v5938, %v5939
      %v5941 = vsel %vm4005, %v5936, %v5940
      %v5942 = vrot.slane %v5020, 3
      %v5943 = vrot.slane %v5016, 4
      %v5944 = vor.u32 %v5942, %v5943
      %v5945 = vsel %vm4005, %v5940, %v5944
      %v5946 = vrot.slane %v5027, 3
      %v5947 = vrot.slane %v5023, 4
      %v5948 = vor.u32 %v5946, %v5947
      %v5949 = vsel %vm4005, %v5944, %v5948
      %v5950 = vrot.slane %v5034, 3
      %v5951 = vrot.slane %v5030, 4
      %v5952 = vor.u32 %v5950, %v5951
      %v5953 = vsel %vm4005, %v5948, %v5952
      %v5954 = vrot.slane %v5041, 3
      %v5955 = vrot.slane %v5037, 4
      %v5956 = vor.u32 %v5954, %v5955
      %v5957 = vsel %vm4005, %v5952, %v5956
      %v5966 = vunpack.c.l.b16 %v5851
      %v5967 = vunpack.c.l.b16 %v5852
      %v5968 = vunpack.c.l.b16 %v5853
      %v5969 = vunpack.c.l.b16 %v5854
      %v5970 = vunpack.c.l.b16 %v5855
      %v5971 = vunpack.c.l.b16 %v5856
      %v5972 = vunpack.c.l.b16 %v5857
      %v5973 = vunpack.c.l.b16 %v5858
      %v5974 = vpack.c.b16 %v5967, %v5966
      %v5975 = vpack.c.b16 %v5969, %v5968
      %v5976 = vpack.c.b16 %v5971, %v5970
      %v5977 = vpack.c.b16 %v5973, %v5972
      %v5983 = vsel %vm487, %v5865, 0
      %v5986 = vsel %vm487, %v5869, 0
      %v5989 = vsel %vm487, %v5873, 0
      %v5992 = vsel %vm487, %v5877, 0
      %v5995 = vsel %vm487, %v5881, 0
      %v5998 = vsel %vm487, %v5885, 0
      %v6001 = vsel %vm487, %v5889, 0
      %v6004 = vsel %vm487, %v5893, 0
      %v6007 = vsel %vm487, %v5897, 0
      %v6010 = vsel %vm487, %v5901, 0
      %v6013 = vsel %vm487, %v5905, 0
      %v6016 = vsel %vm487, %v5909, 0
      %v6019 = vsel %vm487, %v5913, 0
      %v6022 = vsel %vm487, %v5917, 0
      %v6025 = vsel %vm487, %v5921, 0
      %v6028 = vsel %vm487, %v5925, 0
      %v6031 = vsel %vm487, %v5929, 0
      %v6034 = vsel %vm487, %v5933, 0
      %v6037 = vsel %vm487, %v5937, 0
      %v6040 = vsel %vm487, %v5941, 0
      %v6043 = vsel %vm487, %v5945, 0
      %v6046 = vsel %vm487, %v5949, 0
      %v6049 = vsel %vm487, %v5953, 0
      %v6052 = vsel %vm487, %v5957, 0
      %v6055 = vsel %vm487, %v5956, 0
      %6057 = vmatprep.subr.bf16.mxu0 0
      %6058 = vmatpush1.bf16.msra.mxu0 %v5974
      %6059 = vmatprep.subr.bf16.mxu0 0
      %6060 = vmatpush1.bf16.msra.mxu0 %v5975
      %6061 = vmatprep.subr.bf16.mxu0 0
      %6062 = vmatpush1.bf16.msra.mxu0 %v5976
      %6063 = vmatprep.subr.bf16.mxu0 0
      %6064 = vmatpush1.bf16.msra.mxu0 %v5977
      %6065 = vmatprep.subr.bf16.mxu0 0
      %6066 = vmatpush1.bf16.msra.mxu0 0
      %6067 = vmatprep.subr.bf16.mxu0 0
      %6068 = vmatpush1.bf16.msra.mxu0 0
      %6069 = vmatprep.subr.bf16.mxu0 0
      %6070 = vmatpush1.bf16.msra.mxu0 0
      %6071 = vmatprep.subr.bf16.mxu0 0
      %6072 = vmatpush1.bf16.msra.mxu0 0
      %6073 = vmatprep.subr.bf16.mxu0 0
      %6074 = vmatpush1.bf16.msra.mxu0 0
      %6075 = vmatprep.subr.bf16.mxu0 0
      %6076 = vmatpush1.bf16.msra.mxu0 0
      %6077 = vmatprep.subr.bf16.mxu0 0
      %6078 = vmatpush1.bf16.msra.mxu0 0
      %6079 = vmatprep.subr.bf16.mxu0 0
      %6080 = vmatpush1.bf16.msra.mxu0 0
      %6081 = vmatprep.subr.bf16.mxu0 0
      %6082 = vmatpush1.bf16.msra.mxu0 0
      %6083 = vmatprep.subr.bf16.mxu0 0
      %6084 = vmatpush1.bf16.msra.mxu0 0
      %6085 = vmatprep.subr.bf16.mxu0 0
      %6086 = vmatpush1.bf16.msra.mxu0 0
      %6087 = vmatprep.subr.bf16.mxu0 0
      %6088 = vmatpush1.bf16.msra.mxu0 0
      %6089 = vmatprep.mubr.bf16.mxu0 0
      %6090 = vmatmul.mubr.bf16.gmra.mrb[0].mxu0 %v5983
      %v6091 = vpop.f32.mrb[0].mxu0
      %v6092 = vadd.f32 0.0, %v6091
      %v6093 = vpop.f32.mrb[0].mxu0
      %v6094 = vpop.f32.mrb[0].mxu0
      %v6095 = vadd.f32 0.0, %v6094
      %v6096 = vpop.f32.mrb[0].mxu0
      %6097 = vmatprep.mubr.bf16.mxu0 0
      %6098 = vmatmul.mubr.bf16.gmra.mrb[0].mxu0 %v5986
      %v6099 = vpop.f32.mrb[0].mxu0
      %v6100 = vadd.f32 0.0, %v6099
      %v6101 = vpop.f32.mrb[0].mxu0
      %v6102 = vpop.f32.mrb[0].mxu0
      %v6103 = vadd.f32 0.0, %v6102
      %v6104 = vpop.f32.mrb[0].mxu0
      %6105 = vmatprep.mubr.bf16.mxu0 0
      %6106 = vmatmul.mubr.bf16.gmra.mrb[0].mxu0 %v5989
      %v6107 = vpop.f32.mrb[0].mxu0
      %v6108 = vadd.f32 0.0, %v6107
      %v6109 = vpop.f32.mrb[0].mxu0
      %v6110 = vpop.f32.mrb[0].mxu0
      %v6111 = vpop.f32.mrb[0].mxu0
      %6112 = vmatprep.mubr.bf16.mxu0 0
      %6113 = vmatmul.mubr.bf16.gmra.mrb[0].mxu0 %v5992
      %v6114 = vpop.f32.mrb[0].mxu0
      %v6115 = vadd.f32 0.0, %v6114
      %v6116 = vpop.f32.mrb[0].mxu0
      %v6117 = vpop.f32.mrb[0].mxu0
      %v6118 = vadd.f32 0.0, %v6117
      %v6119 = vpop.f32.mrb[0].mxu0
      %6120 = vmatprep.mubr.bf16.mxu0 0
      %6121 = vmatmul.mubr.bf16.gmra.mrb[0].mxu0 %v5995
      %v6122 = vpop.f32.mrb[0].mxu0
      %v6123 = vadd.f32 0.0, %v6122
      %v6124 = vpop.f32.mrb[0].mxu0
      %v6125 = vpop.f32.mrb[0].mxu0
      %v6126 = vadd.f32 0.0, %v6125
      %v6127 = vpop.f32.mrb[0].mxu0
      %6128 = vmatprep.mubr.bf16.mxu0 0
      %6129 = vmatmul.mubr.bf16.gmra.mrb[0].mxu0 %v5998
      %v6130 = vpop.f32.mrb[0].mxu0
      %v6131 = vadd.f32 0.0, %v6130
      %v6132 = vpop.f32.mrb[0].mxu0
      %v6133 = vpop.f32.mrb[0].mxu0
      %v6134 = vpop.f32.mrb[0].mxu0
      %6135 = vmatprep.mubr.bf16.mxu0 0
      %6136 = vmatmul.mubr.bf16.gmra.mrb[0].mxu0 %v6001
      %v6137 = vpop.f32.mrb[0].mxu0
      %v6138 = vadd.f32 0.0, %v6137
      %v6139 = vpop.f32.mrb[0].mxu0
      %v6140 = vpop.f32.mrb[0].mxu0
      %v6141 = vadd.f32 0.0, %v6140
      %v6142 = vpop.f32.mrb[0].mxu0
      %6143 = vmatprep.mubr.bf16.mxu0 0
      %6144 = vmatmul.mubr.bf16.gmra.mrb[0].mxu0 %v6004
      %v6145 = vpop.f32.mrb[0].mxu0
      %v6146 = vadd.f32 0.0, %v6145
      %v6147 = vpop.f32.mrb[0].mxu0
      %v6148 = vpop.f32.mrb[0].mxu0
      %v6149 = vadd.f32 0.0, %v6148
      %v6150 = vpop.f32.mrb[0].mxu0
      %6151 = vmatprep.mubr.bf16.mxu0 0
      %6152 = vmatmul.mubr.bf16.gmra.mrb[0].mxu0 %v6007
      %v6153 = vpop.f32.mrb[0].mxu0
      %v6154 = vadd.f32 0.0, %v6153
      %v6155 = vpop.f32.mrb[0].mxu0
      %v6156 = vpop.f32.mrb[0].mxu0
      %v6157 = vpop.f32.mrb[0].mxu0
      %6158 = vmatprep.mubr.bf16.mxu0 0
      %6159 = vmatmul.mubr.bf16.gmra.mrb[0].mxu0 %v6010
      %v6160 = vpop.f32.mrb[0].mxu0
      %v6161 = vadd.f32 0.0, %v6160
      %v6162 = vpop.f32.mrb[0].mxu0
      %v6163 = vpop.f32.mrb[0].mxu0
      %v6164 = vadd.f32 0.0, %v6163
      %v6165 = vpop.f32.mrb[0].mxu0
      %6166 = vmatprep.mubr.bf16.mxu0 0
      %6167 = vmatmul.mubr.bf16.gmra.mrb[0].mxu0 %v6013
      %v6168 = vpop.f32.mrb[0].mxu0
      %v6169 = vadd.f32 0.0, %v6168
      %v6170 = vpop.f32.mrb[0].mxu0
      %v6171 = vpop.f32.mrb[0].mxu0
      %v6172 = vadd.f32 0.0, %v6171
      %v6173 = vpop.f32.mrb[0].mxu0
      %6174 = vmatprep.mubr.bf16.mxu0 0
      %6175 = vmatmul.mubr.bf16.gmra.mrb[0].mxu0 %v6016
      %v6176 = vpop.f32.mrb[0].mxu0
      %v6177 = vadd.f32 0.0, %v6176
      %v6178 = vpop.f32.mrb[0].mxu0
      %v6179 = vpop.f32.mrb[0].mxu0
      %v6180 = vpop.f32.mrb[0].mxu0
      %6181 = vmatprep.mubr.bf16.mxu0 0
      %6182 = vmatmul.mubr.bf16.gmra.mrb[0].mxu0 %v6019
      %v6183 = vpop.f32.mrb[0].mxu0
      %v6184 = vadd.f32 0.0, %v6183
      %v6185 = vpop.f32.mrb[0].mxu0
      %v6186 = vpop.f32.mrb[0].mxu0
      %v6187 = vadd.f32 0.0, %v6186
      %v6188 = vpop.f32.mrb[0].mxu0
      %6189 = vmatprep.mubr.bf16.mxu0 0
      %6190 = vmatmul.mubr.bf16.gmra.mrb[0].mxu0 %v6022
      %v6191 = vpop.f32.mrb[0].mxu0
      %v6192 = vadd.f32 0.0, %v6191
      %v6193 = vpop.f32.mrb[0].mxu0
      %v6194 = vpop.f32.mrb[0].mxu0
      %v6195 = vadd.f32 0.0, %v6194
      %v6196 = vpop.f32.mrb[0].mxu0
      %6197 = vmatprep.mubr.bf16.mxu0 0
      %6198 = vmatmul.mubr.bf16.gmra.mrb[0].mxu0 %v6025
      %v6199 = vpop.f32.mrb[0].mxu0
      %v6200 = vadd.f32 0.0, %v6199
      %v6201 = vpop.f32.mrb[0].mxu0
      %v6202 = vpop.f32.mrb[0].mxu0
      %v6203 = vpop.f32.mrb[0].mxu0
      %6204 = vmatprep.mubr.bf16.mxu0 0
      %6205 = vmatmul.mubr.bf16.gmra.mrb[0].mxu0 %v6028
      %v6206 = vpop.f32.mrb[0].mxu0
      %v6207 = vadd.f32 0.0, %v6206
      %v6208 = vpop.f32.mrb[0].mxu0
      %v6209 = vpop.f32.mrb[0].mxu0
      %v6210 = vadd.f32 0.0, %v6209
      %v6211 = vpop.f32.mrb[0].mxu0
      %6212 = vmatprep.mubr.bf16.mxu0 0
      %6213 = vmatmul.mubr.bf16.gmra.mrb[0].mxu0 %v6031
      %v6214 = vpop.f32.mrb[0].mxu0
      %v6215 = vadd.f32 0.0, %v6214
      %v6216 = vpop.f32.mrb[0].mxu0
      %v6217 = vpop.f32.mrb[0].mxu0
      %v6218 = vadd.f32 0.0, %v6217
      %v6219 = vpop.f32.mrb[0].mxu0
      %6220 = vmatprep.mubr.bf16.mxu0 0
      %6221 = vmatmul.mubr.bf16.gmra.mrb[0].mxu0 %v6034
      %v6222 = vpop.f32.mrb[0].mxu0
      %v6223 = vadd.f32 0.0, %v6222
      %v6224 = vpop.f32.mrb[0].mxu0
      %v6225 = vpop.f32.mrb[0].mxu0
      %v6226 = vpop.f32.mrb[0].mxu0
      %6227 = vmatprep.mubr.bf16.mxu0 0
      %6228 = vmatmul.mubr.bf16.gmra.mrb[0].mxu0 %v6037
      %v6229 = vpop.f32.mrb[0].mxu0
      %v6230 = vadd.f32 0.0, %v6229
      %v6231 = vpop.f32.mrb[0].mxu0
      %v6232 = vpop.f32.mrb[0].mxu0
      %v6233 = vadd.f32 0.0, %v6232
      %v6234 = vpop.f32.mrb[0].mxu0
      %6235 = vmatprep.mubr.bf16.mxu0 0
      %6236 = vmatmul.mubr.bf16.gmra.mrb[0].mxu0 %v6040
      %v6237 = vpop.f32.mrb[0].mxu0
      %v6238 = vadd.f32 0.0, %v6237
      %v6239 = vpop.f32.mrb[0].mxu0
      %v6240 = vpop.f32.mrb[0].mxu0
      %v6241 = vadd.f32 0.0, %v6240
      %v6242 = vpop.f32.mrb[0].mxu0
      %6243 = vmatprep.mubr.bf16.mxu0 0
      %6244 = vmatmul.mubr.bf16.gmra.mrb[0].mxu0 %v6043
      %v6245 = vpop.f32.mrb[0].mxu0
      %v6246 = vadd.f32 0.0, %v6245
      %v6247 = vpop.f32.mrb[0].mxu0
      %v6248 = vpop.f32.mrb[0].mxu0
      %v6249 = vpop.f32.mrb[0].mxu0
      %6250 = vmatprep.mubr.bf16.mxu0 0
      %6251 = vmatmul.mubr.bf16.gmra.mrb[0].mxu0 %v6046
      %v6252 = vpop.f32.mrb[0].mxu0
      %v6253 = vadd.f32 0.0, %v6252
      %v6254 = vpop.f32.mrb[0].mxu0
      %v6255 = vpop.f32.mrb[0].mxu0
      %v6256 = vadd.f32 0.0, %v6255
      %v6257 = vpop.f32.mrb[0].mxu0
      %6258 = vmatprep.mubr.bf16.mxu0 0
      %6259 = vmatmul.mubr.bf16.gmra.mrb[0].mxu0 %v6049
      %v6260 = vpop.f32.mrb[0].mxu0
      %v6261 = vadd.f32 0.0, %v6260
      %v6262 = vpop.f32.mrb[0].mxu0
      %v6263 = vpop.f32.mrb[0].mxu0
      %v6264 = vadd.f32 0.0, %v6263
      %v6265 = vpop.f32.mrb[0].mxu0
      %6266 = vmatprep.mubr.bf16.mxu0 0
      %6267 = vmatmul.mubr.bf16.gmra.mrb[0].mxu0 %v6052
      %v6268 = vpop.f32.mrb[0].mxu0
      %v6269 = vadd.f32 0.0, %v6268
      %v6270 = vpop.f32.mrb[0].mxu0
      %v6271 = vpop.f32.mrb[0].mxu0
      %v6272 = vpop.f32.mrb[0].mxu0
      %6273 = vmatprep.mubr.bf16.mxu0 0
      %6274 = vmatmul.mubr.bf16.gmra.mrb[0].mxu0 %v6055
      %v6275 = vpop.f32.mrb[0].mxu0
      %v6276 = vpop.f32.mrb[0].mxu0
      %v6277 = vpop.f32.mrb[0].mxu0
      %v6278 = vpop.f32.mrb[0].mxu0
      %6279 = vdwg.mxu0
      %v6280 = vadd.f32 %v5811, %v6092
      %v6281 = vadd.f32 %v5812, %v6095
      %v6282 = vadd.f32 %v5813, %v6100
      %v6283 = vadd.f32 %v5814, %v6103
      %v6284 = vadd.f32 %v5815, %v6108
      %v6285 = vadd.f32 %v5816, %v6115
      %v6286 = vadd.f32 %v5817, %v6118
      %v6287 = vadd.f32 %v5818, %v6123
      %v6288 = vadd.f32 %v5819, %v6126
      %v6289 = vadd.f32 %v5820, %v6131
      %v6290 = vadd.f32 %v5821, %v6138
      %v6291 = vadd.f32 %v5822, %v6141
      %v6292 = vadd.f32 %v5823, %v6146
      %v6293 = vadd.f32 %v5824, %v6149
      %v6294 = vadd.f32 %v5825, %v6154
      %v6295 = vadd.f32 %v5826, %v6161
      %v6296 = vadd.f32 %v5827, %v6164
      %v6297 = vadd.f32 %v5828, %v6169
      %v6298 = vadd.f32 %v5829, %v6172
      %v6299 = vadd.f32 %v5830, %v6177
      %v6300 = vadd.f32 %v5831, %v6184
      %v6301 = vadd.f32 %v5832, %v6187
      %v6302 = vadd.f32 %v5833, %v6192
      %v6303 = vadd.f32 %v5834, %v6195
      %v6304 = vadd.f32 %v5835, %v6200
      %v6305 = vadd.f32 %v5836, %v6207
      %v6306 = vadd.f32 %v5837, %v6210
      %v6307 = vadd.f32 %v5838, %v6215
      %v6308 = vadd.f32 %v5839, %v6218
      %v6309 = vadd.f32 %v5840, %v6223
      %v6310 = vadd.f32 %v5841, %v6230
      %v6311 = vadd.f32 %v5842, %v6233
      %v6312 = vadd.f32 %v5843, %v6238
      %v6313 = vadd.f32 %v5844, %v6241
      %v6314 = vadd.f32 %v5845, %v6246
      %v6315 = vadd.f32 %v5846, %v6253
      %v6316 = vadd.f32 %v5847, %v6256
      %v6317 = vadd.f32 %v5848, %v6261
      %v6318 = vadd.f32 %v5849, %v6264
      %v6319 = vadd.f32 %v5850, %v6269
      %v6320 = vld [vmem:[%s3 + $0x100] sm:$0xf]
      %v6321 = vld [vmem:[%s3 + $0x104] sm:$0xf]
      %v6322 = vld [vmem:[%s3 + $0x108] sm:$0xf]
      %v6323 = vld [vmem:[%s3 + $0x10c] sm:$0xf]
      %v6324 = vld [vmem:[%s3 + $0x110] sm:$0xf]
      %v6325 = vld [vmem:[%s3 + $0x114] sm:$0xf]
      %v6326 = vld [vmem:[%s3 + $0x118] sm:$0xf]
      %v6327 = vld [vmem:[%s3 + $0x11c] sm:$0xf]
      %v6336 = vunpack.c.l.b16 %v6320
      %v6337 = vunpack.c.l.b16 %v6321
      %v6338 = vunpack.c.l.b16 %v6322
      %v6339 = vunpack.c.l.b16 %v6323
      %v6340 = vunpack.c.l.b16 %v6324
      %v6341 = vunpack.c.l.b16 %v6325
      %v6342 = vunpack.c.l.b16 %v6326
      %v6343 = vunpack.c.l.b16 %v6327
      %v6344 = vpack.c.b16 %v6337, %v6336
      %v6345 = vpack.c.b16 %v6339, %v6338
      %v6346 = vpack.c.b16 %v6341, %v6340
      %v6347 = vpack.c.b16 %v6343, %v6342
      %v6352 = vsel %vm487, %v2723, 0
      %6354 = vmatprep.subr.bf16.mxu0 0
      %6355 = vmatpush1.bf16.msra.mxu0 %v6344
      %6356 = vmatprep.subr.bf16.mxu0 0
      %6357 = vmatpush1.bf16.msra.mxu0 %v6345
      %6358 = vmatprep.subr.bf16.mxu0 0
      %6359 = vmatpush1.bf16.msra.mxu0 %v6346
      %6360 = vmatprep.subr.bf16.mxu0 0
      %6361 = vmatpush1.bf16.msra.mxu0 %v6347
      %6362 = vmatprep.subr.bf16.mxu0 0
      %6363 = vmatpush1.bf16.msra.mxu0 0
      %6364 = vmatprep.subr.bf16.mxu0 0
      %6365 = vmatpush1.bf16.msra.mxu0 0
      %6366 = vmatprep.subr.bf16.mxu0 0
      %6367 = vmatpush1.bf16.msra.mxu0 0
      %6368 = vmatprep.subr.bf16.mxu0 0
      %6369 = vmatpush1.bf16.msra.mxu0 0
      %6370 = vmatprep.subr.bf16.mxu0 0
      %6371 = vmatpush1.bf16.msra.mxu0 0
      %6372 = vmatprep.subr.bf16.mxu0 0
      %6373 = vmatpush1.bf16.msra.mxu0 0
      %6374 = vmatprep.subr.bf16.mxu0 0
      %6375 = vmatpush1.bf16.msra.mxu0 0
      %6376 = vmatprep.subr.bf16.mxu0 0
      %6377 = vmatpush1.bf16.msra.mxu0 0
      %6378 = vmatprep.subr.bf16.mxu0 0
      %6379 = vmatpush1.bf16.msra.mxu0 0
      %6380 = vmatprep.subr.bf16.mxu0 0
      %6381 = vmatpush1.bf16.msra.mxu0 0
      %6382 = vmatprep.subr.bf16.mxu0 0
      %6383 = vmatpush1.bf16.msra.mxu0 0
      %6384 = vmatprep.subr.bf16.mxu0 0
      %6385 = vmatpush1.bf16.msra.mxu0 0
      %6386 = vmatprep.mubr.bf16.mxu0 0
      %6387 = vmatmul.mubr.bf16.gmra.mrb[0].mxu0 %v3280
      %v6388 = vpop.f32.mrb[0].mxu0
      %v6389 = vadd.f32 0.0, %v6388
      %v6390 = vpop.f32.mrb[0].mxu0
      %v6391 = vpop.f32.mrb[0].mxu0
      %v6392 = vadd.f32 0.0, %v6391
      %v6393 = vpop.f32.mrb[0].mxu0
      %6394 = vmatprep.mubr.bf16.mxu0 0
      %6395 = vmatmul.mubr.bf16.gmra.mrb[0].mxu0 %v3282
      %v6396 = vpop.f32.mrb[0].mxu0
      %v6397 = vadd.f32 0.0, %v6396
      %v6398 = vpop.f32.mrb[0].mxu0
      %v6399 = vpop.f32.mrb[0].mxu0
      %v6400 = vadd.f32 0.0, %v6399
      %v6401 = vpop.f32.mrb[0].mxu0
      %6402 = vmatprep.mubr.bf16.mxu0 0
      %6403 = vmatmul.mubr.bf16.gmra.mrb[0].mxu0 %v3284
      %v6404 = vpop.f32.mrb[0].mxu0
      %v6405 = vadd.f32 0.0, %v6404
      %v6406 = vpop.f32.mrb[0].mxu0
      %v6407 = vpop.f32.mrb[0].mxu0
      %v6408 = vpop.f32.mrb[0].mxu0
      %6409 = vmatprep.mubr.bf16.mxu0 0
      %6410 = vmatmul.mubr.bf16.gmra.mrb[0].mxu0 %v3286
      %v6411 = vpop.f32.mrb[0].mxu0
      %v6412 = vadd.f32 0.0, %v6411
      %v6413 = vpop.f32.mrb[0].mxu0
      %v6414 = vpop.f32.mrb[0].mxu0
      %v6415 = vadd.f32 0.0, %v6414
      %v6416 = vpop.f32.mrb[0].mxu0
      %6417 = vmatprep.mubr.bf16.mxu0 0
      %6418 = vmatmul.mubr.bf16.gmra.mrb[0].mxu0 %v3288
      %v6419 = vpop.f32.mrb[0].mxu0
      %v6420 = vadd.f32 0.0, %v6419
      %v6421 = vpop.f32.mrb[0].mxu0
      %v6422 = vpop.f32.mrb[0].mxu0
      %v6423 = vadd.f32 0.0, %v6422
      %v6424 = vpop.f32.mrb[0].mxu0
      %6425 = vmatprep.mubr.bf16.mxu0 0
      %6426 = vmatmul.mubr.bf16.gmra.mrb[0].mxu0 %v3290
      %v6427 = vpop.f32.mrb[0].mxu0
      %v6428 = vadd.f32 0.0, %v6427
      %v6429 = vpop.f32.mrb[0].mxu0
      %v6430 = vpop.f32.mrb[0].mxu0
      %v6431 = vpop.f32.mrb[0].mxu0
      %6432 = vmatprep.mubr.bf16.mxu0 0
      %6433 = vmatmul.mubr.bf16.gmra.mrb[0].mxu0 %v3292
      %v6434 = vpop.f32.mrb[0].mxu0
      %v6435 = vadd.f32 0.0, %v6434
      %v6436 = vpop.f32.mrb[0].mxu0
      %v6437 = vpop.f32.mrb[0].mxu0
      %v6438 = vadd.f32 0.0, %v6437
      %v6439 = vpop.f32.mrb[0].mxu0
      %6440 = vmatprep.mubr.bf16.mxu0 0
      %6441 = vmatmul.mubr.bf16.gmra.mrb[0].mxu0 %v3294
      %v6442 = vpop.f32.mrb[0].mxu0
      %v6443 = vadd.f32 0.0, %v6442
      %v6444 = vpop.f32.mrb[0].mxu0
      %v6445 = vpop.f32.mrb[0].mxu0
      %v6446 = vadd.f32 0.0, %v6445
      %v6447 = vpop.f32.mrb[0].mxu0
      %6448 = vmatprep.mubr.bf16.mxu0 0
      %6449 = vmatmul.mubr.bf16.gmra.mrb[0].mxu0 %v3296
      %v6450 = vpop.f32.mrb[0].mxu0
      %v6451 = vadd.f32 0.0, %v6450
      %v6452 = vpop.f32.mrb[0].mxu0
      %v6453 = vpop.f32.mrb[0].mxu0
      %v6454 = vpop.f32.mrb[0].mxu0
      %6455 = vmatprep.mubr.bf16.mxu0 0
      %6456 = vmatmul.mubr.bf16.gmra.mrb[0].mxu0 %v3298
      %v6457 = vpop.f32.mrb[0].mxu0
      %v6458 = vadd.f32 0.0, %v6457
      %v6459 = vpop.f32.mrb[0].mxu0
      %v6460 = vpop.f32.mrb[0].mxu0
      %v6461 = vadd.f32 0.0, %v6460
      %v6462 = vpop.f32.mrb[0].mxu0
      %6463 = vmatprep.mubr.bf16.mxu0 0
      %6464 = vmatmul.mubr.bf16.gmra.mrb[0].mxu0 %v3300
      %v6465 = vpop.f32.mrb[0].mxu0
      %v6466 = vadd.f32 0.0, %v6465
      %v6467 = vpop.f32.mrb[0].mxu0
      %v6468 = vpop.f32.mrb[0].mxu0
      %v6469 = vadd.f32 0.0, %v6468
      %v6470 = vpop.f32.mrb[0].mxu0
      %6471 = vmatprep.mubr.bf16.mxu0 0
      %6472 = vmatmul.mubr.bf16.gmra.mrb[0].mxu0 %v3302
      %v6473 = vpop.f32.mrb[0].mxu0
      %v6474 = vadd.f32 0.0, %v6473
      %v6475 = vpop.f32.mrb[0].mxu0
      %v6476 = vpop.f32.mrb[0].mxu0
      %v6477 = vpop.f32.mrb[0].mxu0
      %6478 = vmatprep.mubr.bf16.mxu0 0
      %6479 = vmatmul.mubr.bf16.gmra.mrb[0].mxu0 %v3304
      %v6480 = vpop.f32.mrb[0].mxu0
      %v6481 = vadd.f32 0.0, %v6480
      %v6482 = vpop.f32.mrb[0].mxu0
      %v6483 = vpop.f32.mrb[0].mxu0
      %v6484 = vadd.f32 0.0, %v6483
      %v6485 = vpop.f32.mrb[0].mxu0
      %6486 = vmatprep.mubr.bf16.mxu0 0
      %6487 = vmatmul.mubr.bf16.gmra.mrb[0].mxu0 %v3306
      %v6488 = vpop.f32.mrb[0].mxu0
      %v6489 = vadd.f32 0.0, %v6488
      %v6490 = vpop.f32.mrb[0].mxu0
      %v6491 = vpop.f32.mrb[0].mxu0
      %v6492 = vadd.f32 0.0, %v6491
      %v6493 = vpop.f32.mrb[0].mxu0
      %6494 = vmatprep.mubr.bf16.mxu0 0
      %6495 = vmatmul.mubr.bf16.gmra.mrb[0].mxu0 %v3308
      %v6496 = vpop.f32.mrb[0].mxu0
      %v6497 = vadd.f32 0.0, %v6496
      %v6498 = vpop.f32.mrb[0].mxu0
      %v6499 = vpop.f32.mrb[0].mxu0
      %v6500 = vpop.f32.mrb[0].mxu0
      %6501 = vmatprep.mubr.bf16.mxu0 0
      %6502 = vmatmul.mubr.bf16.gmra.mrb[0].mxu0 %v3310
      %v6503 = vpop.f32.mrb[0].mxu0
      %v6504 = vadd.f32 0.0, %v6503
      %v6505 = vpop.f32.mrb[0].mxu0
      %v6506 = vpop.f32.mrb[0].mxu0
      %v6507 = vadd.f32 0.0, %v6506
      %v6508 = vpop.f32.mrb[0].mxu0
      %6509 = vmatprep.mubr.bf16.mxu0 0
      %6510 = vmatmul.mubr.bf16.gmra.mrb[0].mxu0 %v3312
      %v6511 = vpop.f32.mrb[0].mxu0
      %v6512 = vadd.f32 0.0, %v6511
      %v6513 = vpop.f32.mrb[0].mxu0
      %v6514 = vpop.f32.mrb[0].mxu0
      %v6515 = vadd.f32 0.0, %v6514
      %v6516 = vpop.f32.mrb[0].mxu0
      %6517 = vmatprep.mubr.bf16.mxu0 0
      %6518 = vmatmul.mubr.bf16.gmra.mrb[0].mxu0 %v3314
      %v6519 = vpop.f32.mrb[0].mxu0
      %v6520 = vadd.f32 0.0, %v6519
      %v6521 = vpop.f32.mrb[0].mxu0
      %v6522 = vpop.f32.mrb[0].mxu0
      %v6523 = vpop.f32.mrb[0].mxu0
      %6524 = vmatprep.mubr.bf16.mxu0 0
      %6525 = vmatmul.mubr.bf16.gmra.mrb[0].mxu0 %v3316
      %v6526 = vpop.f32.mrb[0].mxu0
      %v6527 = vadd.f32 0.0, %v6526
      %v6528 = vpop.f32.mrb[0].mxu0
      %v6529 = vpop.f32.mrb[0].mxu0
      %v6530 = vadd.f32 0.0, %v6529
      %v6531 = vpop.f32.mrb[0].mxu0
      %6532 = vmatprep.mubr.bf16.mxu0 0
      %6533 = vmatmul.mubr.bf16.gmra.mrb[0].mxu0 %v3318
      %v6534 = vpop.f32.mrb[0].mxu0
      %v6535 = vadd.f32 0.0, %v6534
      %v6536 = vpop.f32.mrb[0].mxu0
      %v6537 = vpop.f32.mrb[0].mxu0
      %v6538 = vadd.f32 0.0, %v6537
      %v6539 = vpop.f32.mrb[0].mxu0
      %6540 = vmatprep.mubr.bf16.mxu0 0
      %6541 = vmatmul.mubr.bf16.gmra.mrb[0].mxu0 %v3320
      %v6542 = vpop.f32.mrb[0].mxu0
      %v6543 = vadd.f32 0.0, %v6542
      %v6544 = vpop.f32.mrb[0].mxu0
      %v6545 = vpop.f32.mrb[0].mxu0
      %v6546 = vpop.f32.mrb[0].mxu0
      %6547 = vmatprep.mubr.bf16.mxu0 0
      %6548 = vmatmul.mubr.bf16.gmra.mrb[0].mxu0 %v3322
      %v6549 = vpop.f32.mrb[0].mxu0
      %v6550 = vadd.f32 0.0, %v6549
      %v6551 = vpop.f32.mrb[0].mxu0
      %v6552 = vpop.f32.mrb[0].mxu0
      %v6553 = vadd.f32 0.0, %v6552
      %v6554 = vpop.f32.mrb[0].mxu0
      %6555 = vmatprep.mubr.bf16.mxu0 0
      %6556 = vmatmul.mubr.bf16.gmra.mrb[0].mxu0 %v3324
      %v6557 = vpop.f32.mrb[0].mxu0
      %v6558 = vadd.f32 0.0, %v6557
      %v6559 = vpop.f32.mrb[0].mxu0
      %v6560 = vpop.f32.mrb[0].mxu0
      %v6561 = vadd.f32 0.0, %v6560
      %v6562 = vpop.f32.mrb[0].mxu0
      %6563 = vmatprep.mubr.bf16.mxu0 0
      %6564 = vmatmul.mubr.bf16.gmra.mrb[0].mxu0 %v6352
      %v6565 = vpop.f32.mrb[0].mxu0
      %v6566 = vadd.f32 0.0, %v6565
      %v6567 = vpop.f32.mrb[0].mxu0
      %v6568 = vpop.f32.mrb[0].mxu0
      %v6569 = vpop.f32.mrb[0].mxu0
      %6570 = vmatprep.mubr.bf16.mxu0 0
      %6571 = vmatmul.mubr.bf16.gmra.mrb[0].mxu0 %v4597
      %v6572 = vpop.f32.mrb[0].mxu0
      %v6573 = vpop.f32.mrb[0].mxu0
      %v6574 = vpop.f32.mrb[0].mxu0
      %v6575 = vpop.f32.mrb[0].mxu0
      %6576 = vdwg.mxu0
      %v6577 = vadd.f32 %v6280, %v6389
      %v6578 = vadd.f32 %v6281, %v6392
      %v6579 = vadd.f32 %v6282, %v6397
      %v6580 = vadd.f32 %v6283, %v6400
      %v6581 = vadd.f32 %v6284, %v6405
      %v6582 = vadd.f32 %v6285, %v6412
      %v6583 = vadd.f32 %v6286, %v6415
      %v6584 = vadd.f32 %v6287, %v6420
      %v6585 = vadd.f32 %v6288, %v6423
      %v6586 = vadd.f32 %v6289, %v6428
      %v6587 = vadd.f32 %v6290, %v6435
      %v6588 = vadd.f32 %v6291, %v6438
      %v6589 = vadd.f32 %v6292, %v6443
      %v6590 = vadd.f32 %v6293, %v6446
      %v6591 = vadd.f32 %v6294, %v6451
      %v6592 = vadd.f32 %v6295, %v6458
      %v6593 = vadd.f32 %v6296, %v6461
      %v6594 = vadd.f32 %v6297, %v6466
      %v6595 = vadd.f32 %v6298, %v6469
      %v6596 = vadd.f32 %v6299, %v6474
      %v6597 = vadd.f32 %v6300, %v6481
      %v6598 = vadd.f32 %v6301, %v6484
      %v6599 = vadd.f32 %v6302, %v6489
      %v6600 = vadd.f32 %v6303, %v6492
      %v6601 = vadd.f32 %v6304, %v6497
      %v6602 = vadd.f32 %v6305, %v6504
      %v6603 = vadd.f32 %v6306, %v6507
      %v6604 = vadd.f32 %v6307, %v6512
      %v6605 = vadd.f32 %v6308, %v6515
      %v6606 = vadd.f32 %v6309, %v6520
      %v6607 = vadd.f32 %v6310, %v6527
      %v6608 = vadd.f32 %v6311, %v6530
      %v6609 = vadd.f32 %v6312, %v6535
      %v6610 = vadd.f32 %v6313, %v6538
      %v6611 = vadd.f32 %v6314, %v6543
      %v6612 = vadd.f32 %v6315, %v6550
      %v6613 = vadd.f32 %v6316, %v6553
      %v6614 = vadd.f32 %v6317, %v6558
      %v6615 = vadd.f32 %v6318, %v6561
      %v6616 = vadd.f32 %v6319, %v6566
      %v6617 = vld [vmem:[%s4] sm:$0x1]
      %v6619 = vlaneseq
      %v6620 = vshrl.u32 %v6619, 7
      %v6621 = vsub.s32 0, %v6620
      %v6622 = vrot.slane %v6617, %v6621
      %v6624 = vadd.f32 %v6577, %v6622
      %v6625 = vadd.f32 %v6578, %v6622
      %v6626 = vadd.f32 %v6579, %v6622
      %v6627 = vadd.f32 %v6580, %v6622
      %v6628 = vadd.f32 %v6581, %v6622
      %v6629 = vadd.f32 %v6582, %v6622
      %v6630 = vadd.f32 %v6583, %v6622
      %v6631 = vadd.f32 %v6584, %v6622
      %v6632 = vadd.f32 %v6585, %v6622
      %v6633 = vadd.f32 %v6586, %v6622
      %v6634 = vadd.f32 %v6587, %v6622
      %v6635 = vadd.f32 %v6588, %v6622
      %v6636 = vadd.f32 %v6589, %v6622
      %v6637 = vadd.f32 %v6590, %v6622
      %v6638 = vadd.f32 %v6591, %v6622
      %v6639 = vadd.f32 %v6592, %v6622
      %v6640 = vadd.f32 %v6593, %v6622
      %v6641 = vadd.f32 %v6594, %v6622
      %v6642 = vadd.f32 %v6595, %v6622
      %v6643 = vadd.f32 %v6596, %v6622
      %v6644 = vadd.f32 %v6597, %v6622
      %v6645 = vadd.f32 %v6598, %v6622
      %v6646 = vadd.f32 %v6599, %v6622
      %v6647 = vadd.f32 %v6600, %v6622
      %v6648 = vadd.f32 %v6601, %v6622
      %v6649 = vadd.f32 %v6602, %v6622
      %v6650 = vadd.f32 %v6603, %v6622
      %v6651 = vadd.f32 %v6604, %v6622
      %v6652 = vadd.f32 %v6605, %v6622
      %v6653 = vadd.f32 %v6606, %v6622
      %v6654 = vadd.f32 %v6607, %v6622
      %v6655 = vadd.f32 %v6608, %v6622
      %v6656 = vadd.f32 %v6609, %v6622
      %v6657 = vadd.f32 %v6610, %v6622
      %v6658 = vadd.f32 %v6611, %v6622
      %v6659 = vadd.f32 %v6612, %v6622
      %v6660 = vadd.f32 %v6613, %v6622
      %v6661 = vadd.f32 %v6614, %v6622
      %v6662 = vadd.f32 %v6615, %v6622
      %v6663 = vadd.f32 %v6616, %v6622
      %vm6704 = vcmask 1046528
      %v6705 = vrot.slane %v6624, 1
      %v6706 = vrot.slane %v6625, 1
      %v6707 = vsel %vm6704, %v6705, %v6706
      %v6708 = vrot.slane %v6626, 1
      %v6709 = vsel %vm6704, %v6706, %v6708
      %v6710 = vrot.slane %v6627, 1
      %v6711 = vsel %vm6704, %v6708, %v6710
      %v6712 = vrot.slane %v6628, 1
      %v6713 = vsel %vm6704, %v6710, %v6712
      %v6714 = vrot.slane %v6629, 1
      %v6715 = vrot.slane %v6630, 1
      %v6716 = vsel %vm6704, %v6714, %v6715
      %v6717 = vrot.slane %v6631, 1
      %v6718 = vsel %vm6704, %v6715, %v6717
      %v6719 = vrot.slane %v6632, 1
      %v6720 = vsel %vm6704, %v6717, %v6719
      %v6721 = vrot.slane %v6633, 1
      %v6722 = vsel %vm6704, %v6719, %v6721
      %v6723 = vrot.slane %v6634, 1
      %v6724 = vrot.slane %v6635, 1
      %v6725 = vsel %vm6704, %v6723, %v6724
      %v6726 = vrot.slane %v6636, 1
      %v6727 = vsel %vm6704, %v6724, %v6726
      %v6728 = vrot.slane %v6637, 1
      %v6729 = vsel %vm6704, %v6726, %v6728
      %v6730 = vrot.slane %v6638, 1
      %v6731 = vsel %vm6704, %v6728, %v6730
      %v6732 = vrot.slane %v6639, 1
      %v6733 = vrot.slane %v6640, 1
      %v6734 = vsel %vm6704, %v6732, %v6733
      %v6735 = vrot.slane %v6641, 1
      %v6736 = vsel %vm6704, %v6733, %v6735
      %v6737 = vrot.slane %v6642, 1
      %v6738 = vsel %vm6704, %v6735, %v6737
      %v6739 = vrot.slane %v6643, 1
      %v6740 = vsel %vm6704, %v6737, %v6739
      %v6741 = vrot.slane %v6644, 1
      %v6742 = vrot.slane %v6645, 1
      %v6743 = vsel %vm6704, %v6741, %v6742
      %v6744 = vrot.slane %v6646, 1
      %v6745 = vsel %vm6704, %v6742, %v6744
      %v6746 = vrot.slane %v6647, 1
      %v6747 = vsel %vm6704, %v6744, %v6746
      %v6748 = vrot.slane %v6648, 1
      %v6749 = vsel %vm6704, %v6746, %v6748
      %v6750 = vrot.slane %v6649, 1
      %v6751 = vrot.slane %v6650, 1
      %v6752 = vsel %vm6704, %v6750, %v6751
      %v6753 = vrot.slane %v6651, 1
      %v6754 = vsel %vm6704, %v6751, %v6753
      %v6755 = vrot.slane %v6652, 1
      %v6756 = vsel %vm6704, %v6753, %v6755
      %v6757 = vrot.slane %v6653, 1
      %v6758 = vsel %vm6704, %v6755, %v6757
      %v6759 = vrot.slane %v6654, 1
      %v6760 = vrot.slane %v6655, 1
      %v6761 = vsel %vm6704, %v6759, %v6760
      %v6762 = vrot.slane %v6656, 1
      %v6763 = vsel %vm6704, %v6760, %v6762
      %v6764 = vrot.slane %v6657, 1
      %v6765 = vsel %vm6704, %v6762, %v6764
      %v6766 = vrot.slane %v6658, 1
      %v6767 = vsel %vm6704, %v6764, %v6766
      %v6768 = vrot.slane %v6659, 1
      %v6769 = vrot.slane %v6660, 1
      %v6770 = vsel %vm6704, %v6768, %v6769
      %v6771 = vrot.slane %v6661, 1
      %v6772 = vsel %vm6704, %v6769, %v6771
      %v6773 = vrot.slane %v6662, 1
      %v6774 = vsel %vm6704, %v6771, %v6773
      %v6775 = vrot.slane %v6663, 1
      %v6776 = vsel %vm6704, %v6773, %v6775
      %v6809 = vmax.f32 %v6624, %v6707
      %v6810 = vmax.f32 %v6625, %v6709
      %v6811 = vmax.f32 %v6626, %v6711
      %v6812 = vmax.f32 %v6627, %v6713
      %v6813 = vmax.f32 %v6629, %v6716
      %v6814 = vmax.f32 %v6630, %v6718
      %v6815 = vmax.f32 %v6631, %v6720
      %v6816 = vmax.f32 %v6632, %v6722
      %v6817 = vmax.f32 %v6634, %v6725
      %v6818 = vmax.f32 %v6635, %v6727
      %v6819 = vmax.f32 %v6636, %v6729
      %v6820 = vmax.f32 %v6637, %v6731
      %v6821 = vmax.f32 %v6639, %v6734
      %v6822 = vmax.f32 %v6640, %v6736
      %v6823 = vmax.f32 %v6641, %v6738
      %v6824 = vmax.f32 %v6642, %v6740
      %v6825 = vmax.f32 %v6644, %v6743
      %v6826 = vmax.f32 %v6645, %v6745
      %v6827 = vmax.f32 %v6646, %v6747
      %v6828 = vmax.f32 %v6647, %v6749
      %v6829 = vmax.f32 %v6649, %v6752
      %v6830 = vmax.f32 %v6650, %v6754
      %v6831 = vmax.f32 %v6651, %v6756
      %v6832 = vmax.f32 %v6652, %v6758
      %v6833 = vmax.f32 %v6654, %v6761
      %v6834 = vmax.f32 %v6655, %v6763
      %v6835 = vmax.f32 %v6656, %v6765
      %v6836 = vmax.f32 %v6657, %v6767
      %v6837 = vmax.f32 %v6659, %v6770
      %v6838 = vmax.f32 %v6660, %v6772
      %v6839 = vmax.f32 %v6661, %v6774
      %v6840 = vmax.f32 %v6662, %v6776
      %vm6873 = vcmask 1040384
      %v6874 = vrot.slane %v6809, 7
      %v6875 = vrot.slane %v6810, 7
      %v6876 = vsel %vm6873, %v6874, %v6875
      %v6877 = vrot.slane %v6811, 7
      %v6878 = vsel %vm6873, %v6875, %v6877
      %v6879 = vrot.slane %v6812, 7
      %v6880 = vsel %vm6873, %v6877, %v6879
      %v6881 = vrot.slane %v6813, 7
      %v6882 = vrot.slane %v6814, 7
      %v6883 = vsel %vm6873, %v6881, %v6882
      %v6884 = vrot.slane %v6815, 7
      %v6885 = vsel %vm6873, %v6882, %v6884
      %v6886 = vrot.slane %v6816, 7
      %v6887 = vsel %vm6873, %v6884, %v6886
      %v6888 = vrot.slane %v6817, 7
      %v6889 = vrot.slane %v6818, 7
      %v6890 = vsel %vm6873, %v6888, %v6889
      %v6891 = vrot.slane %v6819, 7
      %v6892 = vrot.slane %v6820, 7
      %v6893 = vsel %vm6873, %v6891, %v6892
      %v6894 = vrot.slane %v6821, 7
      %v6895 = vrot.slane %v6822, 7
      %v6896 = vsel %vm6873, %v6894, %v6895
      %v6897 = vrot.slane %v6823, 7
      %v6898 = vrot.slane %v6824, 7
      %v6899 = vsel %vm6873, %v6897, %v6898
      %v6900 = vrot.slane %v6825, 7
      %v6901 = vrot.slane %v6826, 7
      %v6902 = vsel %vm6873, %v6900, %v6901
      %v6903 = vrot.slane %v6827, 7
      %v6904 = vrot.slane %v6828, 7
      %v6905 = vsel %vm6873, %v6903, %v6904
      %v6906 = vrot.slane %v6829, 7
      %v6907 = vrot.slane %v6830, 7
      %v6908 = vsel %vm6873, %v6906, %v6907
      %v6909 = vrot.slane %v6831, 7
      %v6910 = vrot.slane %v6832, 7
      %v6911 = vsel %vm6873, %v6909, %v6910
      %v6912 = vrot.slane %v6833, 7
      %v6913 = vrot.slane %v6834, 7
      %v6914 = vsel %vm6873, %v6912, %v6913
      %v6915 = vrot.slane %v6835, 7
      %v6916 = vsel %vm6873, %v6913, %v6915
      %v6917 = vrot.slane %v6836, 7
      %v6918 = vsel %vm6873, %v6915, %v6917
      %v6919 = vrot.slane %v6837, 7
      %v6920 = vrot.slane %v6838, 7
      %v6921 = vsel %vm6873, %v6919, %v6920
      %v6922 = vrot.slane %v6839, 7
      %v6923 = vsel %vm6873, %v6920, %v6922
      %v6924 = vrot.slane %v6840, 7
      %v6925 = vsel %vm6873, %v6922, %v6924
      %v6946 = vmax.f32 %v6809, %v6876
      %v6947 = vmax.f32 %v6810, %v6878
      %v6948 = vmax.f32 %v6811, %v6880
      %v6949 = vmax.f32 %v6813, %v6883
      %v6950 = vmax.f32 %v6814, %v6885
      %v6951 = vmax.f32 %v6815, %v6887
      %v6952 = vmax.f32 %v6817, %v6890
      %v6953 = vmax.f32 %v6819, %v6893
      %v6954 = vmax.f32 %v6821, %v6896
      %v6955 = vmax.f32 %v6823, %v6899
      %v6956 = vmax.f32 %v6825, %v6902
      %v6957 = vmax.f32 %v6827, %v6905
      %v6958 = vmax.f32 %v6829, %v6908
      %v6959 = vmax.f32 %v6831, %v6911
      %v6960 = vmax.f32 %v6833, %v6914
      %v6961 = vmax.f32 %v6834, %v6916
      %v6962 = vmax.f32 %v6835, %v6918
      %v6963 = vmax.f32 %v6837, %v6921
      %v6964 = vmax.f32 %v6838, %v6923
      %v6965 = vmax.f32 %v6839, %v6925
      %v6987 = vunpack.c.l.s4 1966171168
      %v6988 = vunpack.c.0.s8 %v6987
      %v6989 = vlaneseq
      %v6990 = vshrl.u32 %v6989, 7
      %v6991 = vsub.s32 %v6988, %v6990
      %v6992 = vrot.slane %v6946, %v6991
      %v6994 = vunpack.c.l.s4 1966171168
      %v6995 = vunpack.c.0.s8 %v6994
      %v6996 = vlaneseq
      %v6997 = vshrl.u32 %v6996, 7
      %v6998 = vsub.s32 %v6995, %v6997
      %v6999 = vrot.slane %v6992, %v6998
      %v7000 = vcombine.high %v6999, %v6999
      %v7001 = vcombine.high %v6947, %v6947
      %v7003 = vunpack.c.l.s4 1966171168
      %v7004 = vunpack.c.0.s8 %v7003
      %v7005 = vlaneseq
      %v7006 = vshrl.u32 %v7005, 7
      %v7007 = vsub.s32 %v7004, %v7006
      %v7008 = vrot.slane %v7001, %v7007
      %v7010 = vunpack.c.l.s4 1966171168
      %v7011 = vunpack.c.0.s8 %v7010
      %v7012 = vlaneseq
      %v7013 = vshrl.u32 %v7012, 7
      %v7014 = vsub.s32 %v7011, %v7013
      %v7015 = vrot.slane %v7008, %v7014
      %v7016 = vcombine.high %v7015, %v7015
      %v7018 = vunpack.c.l.s4 1966171168
      %v7019 = vunpack.c.0.s8 %v7018
      %v7020 = vlaneseq
      %v7021 = vshrl.u32 %v7020, 7
      %v7022 = vsub.s32 %v7019, %v7021
      %v7023 = vrot.slane %v6948, %v7022
      %v7025 = vunpack.c.l.s4 1966171168
      %v7026 = vunpack.c.0.s8 %v7025
      %v7027 = vlaneseq
      %v7028 = vshrl.u32 %v7027, 7
      %v7029 = vsub.s32 %v7026, %v7028
      %v7030 = vrot.slane %v7023, %v7029
      %v7032 = vunpack.c.l.s4 1966171168
      %v7033 = vunpack.c.0.s8 %v7032
      %v7034 = vlaneseq
      %v7035 = vshrl.u32 %v7034, 7
      %v7036 = vsub.s32 %v7033, %v7035
      %v7037 = vrot.slane %v6949, %v7036
      %v7038 = vcombine.high %v7037, %v7037
      %v7040 = vunpack.c.l.s4 1966171168
      %v7041 = vunpack.c.0.s8 %v7040
      %v7042 = vlaneseq
      %v7043 = vshrl.u32 %v7042, 7
      %v7044 = vsub.s32 %v7041, %v7043
      %v7045 = vrot.slane %v7038, %v7044
      %v7046 = vcombine.high %v7045, %v7045
      %v7047 = vcombine.high %v6950, %v6950
      %v7049 = vunpack.c.l.s4 1966171168
      %v7050 = vunpack.c.0.s8 %v7049
      %v7051 = vlaneseq
      %v7052 = vshrl.u32 %v7051, 7
      %v7053 = vsub.s32 %v7050, %v7052
      %v7054 = vrot.slane %v7047, %v7053
      %v7055 = vcombine.high %v7054, %v7054
      %v7057 = vunpack.c.l.s4 1966171168
      %v7058 = vunpack.c.0.s8 %v7057
      %v7059 = vlaneseq
      %v7060 = vshrl.u32 %v7059, 7
      %v7061 = vsub.s32 %v7058, %v7060
      %v7062 = vrot.slane %v7055, %v7061
      %v7063 = vcombine.high %v7062, %v7062
      %v7065 = vunpack.c.l.s4 1966171168
      %v7066 = vunpack.c.0.s8 %v7065
      %v7067 = vlaneseq
      %v7068 = vshrl.u32 %v7067, 7
      %v7069 = vsub.s32 %v7066, %v7068
      %v7070 = vrot.slane %v6951, %v7069
      %v7071 = vcombine.high %v7070, %v7070
      %v7073 = vunpack.c.l.s4 1966171168
      %v7074 = vunpack.c.0.s8 %v7073
      %v7075 = vlaneseq
      %v7076 = vshrl.u32 %v7075, 7
      %v7077 = vsub.s32 %v7074, %v7076
      %v7078 = vrot.slane %v7071, %v7077
      %v7079 = vcombine.high %v6952, %v6952
      %v7081 = vunpack.c.l.s4 1966171168
      %v7082 = vunpack.c.0.s8 %v7081
      %v7083 = vlaneseq
      %v7084 = vshrl.u32 %v7083, 7
      %v7085 = vsub.s32 %v7082, %v7084
      %v7086 = vrot.slane %v6952, %v7085
      %v7088 = vunpack.c.l.s4 1966171168
      %v7089 = vunpack.c.0.s8 %v7088
      %v7090 = vlaneseq
      %v7091 = vshrl.u32 %v7090, 7
      %v7092 = vsub.s32 %v7089, %v7091
      %v7093 = vrot.slane %v7079, %v7092
      %v7095 = vunpack.c.l.s4 1966171168
      %v7096 = vunpack.c.0.s8 %v7095
      %v7097 = vlaneseq
      %v7098 = vshrl.u32 %v7097, 7
      %v7099 = vsub.s32 %v7096, %v7098
      %v7100 = vrot.slane %v7086, %v7099
      %v7102 = vunpack.c.l.s4 1966171168
      %v7103 = vunpack.c.0.s8 %v7102
      %v7104 = vlaneseq
      %v7105 = vshrl.u32 %v7104, 7
      %v7106 = vsub.s32 %v7103, %v7105
      %v7107 = vrot.slane %v7093, %v7106
      %v7108 = vcombine.high %v7100, %v7100
      %v7110 = vunpack.c.l.s4 1966171168
      %v7111 = vunpack.c.0.s8 %v7110
      %v7112 = vlaneseq
      %v7113 = vshrl.u32 %v7112, 7
      %v7114 = vsub.s32 %v7111, %v7113
      %v7115 = vrot.slane %v6953, %v7114
      %v7117 = vunpack.c.l.s4 1966171168
      %v7118 = vunpack.c.0.s8 %v7117
      %v7119 = vlaneseq
      %v7120 = vshrl.u32 %v7119, 7
      %v7121 = vsub.s32 %v7118, %v7120
      %v7122 = vrot.slane %v7115, %v7121
      %v7123 = vcombine.high %v7122, %v7122
      %v7124 = vcombine.high %v6954, %v6954
      %v7126 = vunpack.c.l.s4 1966171168
      %v7127 = vunpack.c.0.s8 %v7126
      %v7128 = vlaneseq
      %v7129 = vshrl.u32 %v7128, 7
      %v7130 = vsub.s32 %v7127, %v7129
      %v7131 = vrot.slane %v6954, %v7130
      %v7133 = vunpack.c.l.s4 1966171168
      %v7134 = vunpack.c.0.s8 %v7133
      %v7135 = vlaneseq
      %v7136 = vshrl.u32 %v7135, 7
      %v7137 = vsub.s32 %v7134, %v7136
      %v7138 = vrot.slane %v7124, %v7137
      %v7139 = vcombine.high %v7131, %v7131
      %v7140 = vcombine.high %v7138, %v7138
      %v7142 = vunpack.c.l.s4 1966171168
      %v7143 = vunpack.c.0.s8 %v7142
      %v7144 = vlaneseq
      %v7145 = vshrl.u32 %v7144, 7
      %v7146 = vsub.s32 %v7143, %v7145
      %v7147 = vrot.slane %v7139, %v7146
      %v7149 = vunpack.c.l.s4 1966171168
      %v7150 = vunpack.c.0.s8 %v7149
      %v7151 = vlaneseq
      %v7152 = vshrl.u32 %v7151, 7
      %v7153 = vsub.s32 %v7150, %v7152
      %v7154 = vrot.slane %v7140, %v7153
      %v7155 = vcombine.high %v7147, %v7147
      %v7157 = vunpack.c.l.s4 1966171168
      %v7158 = vunpack.c.0.s8 %v7157
      %v7159 = vlaneseq
      %v7160 = vshrl.u32 %v7159, 7
      %v7161 = vsub.s32 %v7158, %v7160
      %v7162 = vrot.slane %v6955, %v7161
      %v7163 = vcombine.high %v7162, %v7162
      %v7165 = vunpack.c.l.s4 1966171168
      %v7166 = vunpack.c.0.s8 %v7165
      %v7167 = vlaneseq
      %v7168 = vshrl.u32 %v7167, 7
      %v7169 = vsub.s32 %v7166, %v7168
      %v7170 = vrot.slane %v7163, %v7169
      %v7171 = vcombine.high %v7170, %v7170
      %v7172 = vcombine.high %v6956, %v6956
      %v7174 = vunpack.c.l.s4 1966171168
      %v7175 = vunpack.c.0.s8 %v7174
      %v7176 = vlaneseq
      %v7177 = vshrl.u32 %v7176, 7
      %v7178 = vsub.s32 %v7175, %v7177
      %v7179 = vrot.slane %v7172, %v7178
      %v7181 = vunpack.c.l.s4 1966171168
      %v7182 = vunpack.c.0.s8 %v7181
      %v7183 = vlaneseq
      %v7184 = vshrl.u32 %v7183, 7
      %v7185 = vsub.s32 %v7182, %v7184
      %v7186 = vrot.slane %v7179, %v7185
      %v7187 = vcombine.high %v7186, %v7186
      %v7188 = vcombine.high %v6957, %v6957
      %v7190 = vunpack.c.l.s4 1966171168
      %v7191 = vunpack.c.0.s8 %v7190
      %v7192 = vlaneseq
      %v7193 = vshrl.u32 %v7192, 7
      %v7194 = vsub.s32 %v7191, %v7193
      %v7195 = vrot.slane %v6957, %v7194
      %v7197 = vunpack.c.l.s4 1966171168
      %v7198 = vunpack.c.0.s8 %v7197
      %v7199 = vlaneseq
      %v7200 = vshrl.u32 %v7199, 7
      %v7201 = vsub.s32 %v7198, %v7200
      %v7202 = vrot.slane %v7188, %v7201
      %v7204 = vunpack.c.l.s4 1966171168
      %v7205 = vunpack.c.0.s8 %v7204
      %v7206 = vlaneseq
      %v7207 = vshrl.u32 %v7206, 7
      %v7208 = vsub.s32 %v7205, %v7207
      %v7209 = vrot.slane %v7195, %v7208
      %v7211 = vunpack.c.l.s4 1966171168
      %v7212 = vunpack.c.0.s8 %v7211
      %v7213 = vlaneseq
      %v7214 = vshrl.u32 %v7213, 7
      %v7215 = vsub.s32 %v7212, %v7214
      %v7216 = vrot.slane %v7202, %v7215
      %v7217 = vcombine.high %v7209, %v7209
      %v7218 = vcombine.high %v6958, %v6958
      %v7220 = vunpack.c.l.s4 1966171168
      %v7221 = vunpack.c.0.s8 %v7220
      %v7222 = vlaneseq
      %v7223 = vshrl.u32 %v7222, 7
      %v7224 = vsub.s32 %v7221, %v7223
      %v7225 = vrot.slane %v7218, %v7224
      %v7226 = vcombine.high %v7225, %v7225
      %v7228 = vunpack.c.l.s4 1966171168
      %v7229 = vunpack.c.0.s8 %v7228
      %v7230 = vlaneseq
      %v7231 = vshrl.u32 %v7230, 7
      %v7232 = vsub.s32 %v7229, %v7231
      %v7233 = vrot.slane %v7226, %v7232
      %v7234 = vcombine.high %v7233, %v7233
      %v7235 = vcombine.high %v6959, %v6959
      %v7237 = vunpack.c.l.s4 1966171168
      %v7238 = vunpack.c.0.s8 %v7237
      %v7239 = vlaneseq
      %v7240 = vshrl.u32 %v7239, 7
      %v7241 = vsub.s32 %v7238, %v7240
      %v7242 = vrot.slane %v6959, %v7241
      %v7244 = vunpack.c.l.s4 1966171168
      %v7245 = vunpack.c.0.s8 %v7244
      %v7246 = vlaneseq
      %v7247 = vshrl.u32 %v7246, 7
      %v7248 = vsub.s32 %v7245, %v7247
      %v7249 = vrot.slane %v7235, %v7248
      %v7250 = vcombine.high %v7242, %v7242
      %v7251 = vcombine.high %v7249, %v7249
      %v7253 = vunpack.c.l.s4 1966171168
      %v7254 = vunpack.c.0.s8 %v7253
      %v7255 = vlaneseq
      %v7256 = vshrl.u32 %v7255, 7
      %v7257 = vsub.s32 %v7254, %v7256
      %v7258 = vrot.slane %v7250, %v7257
      %v7260 = vunpack.c.l.s4 1966171168
      %v7261 = vunpack.c.0.s8 %v7260
      %v7262 = vlaneseq
      %v7263 = vshrl.u32 %v7262, 7
      %v7264 = vsub.s32 %v7261, %v7263
      %v7265 = vrot.slane %v7251, %v7264
      %v7266 = vcombine.high %v7258, %v7258
      %v7267 = vcombine.high %v6960, %v6960
      %v7269 = vunpack.c.l.s4 1966171168
      %v7270 = vunpack.c.0.s8 %v7269
      %v7271 = vlaneseq
      %v7272 = vshrl.u32 %v7271, 7
      %v7273 = vsub.s32 %v7270, %v7272
      %v7274 = vrot.slane %v7267, %v7273
      %v7276 = vunpack.c.l.s4 1966171168
      %v7277 = vunpack.c.0.s8 %v7276
      %v7278 = vlaneseq
      %v7279 = vshrl.u32 %v7278, 7
      %v7280 = vsub.s32 %v7277, %v7279
      %v7281 = vrot.slane %v7274, %v7280
      %v7282 = vcombine.high %v7281, %v7281
      %v7284 = vunpack.c.l.s4 1966171168
      %v7285 = vunpack.c.0.s8 %v7284
      %v7286 = vlaneseq
      %v7287 = vshrl.u32 %v7286, 7
      %v7288 = vsub.s32 %v7285, %v7287
      %v7289 = vrot.slane %v6961, %v7288
      %v7291 = vunpack.c.l.s4 1966171168
      %v7292 = vunpack.c.0.s8 %v7291
      %v7293 = vlaneseq
      %v7294 = vshrl.u32 %v7293, 7
      %v7295 = vsub.s32 %v7292, %v7294
      %v7296 = vrot.slane %v7289, %v7295
      %v7297 = vcombine.high %v6962, %v6962
      %v7299 = vunpack.c.l.s4 1966171168
      %v7300 = vunpack.c.0.s8 %v7299
      %v7301 = vlaneseq
      %v7302 = vshrl.u32 %v7301, 7
      %v7303 = vsub.s32 %v7300, %v7302
      %v7304 = vrot.slane %v7297, %v7303
      %v7306 = vunpack.c.l.s4 1966171168
      %v7307 = vunpack.c.0.s8 %v7306
      %v7308 = vlaneseq
      %v7309 = vshrl.u32 %v7308, 7
      %v7310 = vsub.s32 %v7307, %v7309
      %v7311 = vrot.slane %v7304, %v7310
      %v7312 = vcombine.high %v7311, %v7311
      %v7313 = vcombine.high %v6963, %v6963
      %v7315 = vunpack.c.l.s4 1966171168
      %v7316 = vunpack.c.0.s8 %v7315
      %v7317 = vlaneseq
      %v7318 = vshrl.u32 %v7317, 7
      %v7319 = vsub.s32 %v7316, %v7318
      %v7320 = vrot.slane %v7313, %v7319
      %v7321 = vcombine.high %v7320, %v7320
      %v7323 = vunpack.c.l.s4 1966171168
      %v7324 = vunpack.c.0.s8 %v7323
      %v7325 = vlaneseq
      %v7326 = vshrl.u32 %v7325, 7
      %v7327 = vsub.s32 %v7324, %v7326
      %v7328 = vrot.slane %v7321, %v7327
      %v7329 = vcombine.high %v7328, %v7328
      %v7331 = vunpack.c.l.s4 1966171168
      %v7332 = vunpack.c.0.s8 %v7331
      %v7333 = vlaneseq
      %v7334 = vshrl.u32 %v7333, 7
      %v7335 = vsub.s32 %v7332, %v7334
      %v7336 = vrot.slane %v6964, %v7335
      %v7337 = vcombine.high %v7336, %v7336
      %v7339 = vunpack.c.l.s4 1966171168
      %v7340 = vunpack.c.0.s8 %v7339
      %v7341 = vlaneseq
      %v7342 = vshrl.u32 %v7341, 7
      %v7343 = vsub.s32 %v7340, %v7342
      %v7344 = vrot.slane %v7337, %v7343
      %v7345 = vcombine.high %v6965, %v6965
      %v7347 = vunpack.c.l.s4 1966171168
      %v7348 = vunpack.c.0.s8 %v7347
      %v7349 = vlaneseq
      %v7350 = vshrl.u32 %v7349, 7
      %v7351 = vsub.s32 %v7348, %v7350
      %v7352 = vrot.slane %v7345, %v7351
      %v7353 = vcombine.high %v7352, %v7352
      %v7355 = vunpack.c.l.s4 1966171168
      %v7356 = vunpack.c.0.s8 %v7355
      %v7357 = vlaneseq
      %v7358 = vshrl.u32 %v7357, 7
      %v7359 = vsub.s32 %v7356, %v7358
      %v7360 = vrot.slane %v7353, %v7359
      %v7361 = vcombine.high %v7360, %v7360
      %v7362 = vcombine.low %v6999, %v7045
      %v7363 = vcombine.low %v7108, %v7155
      %v7364 = vcombine.low %v7186, %v7233
      %v7365 = vcombine.low %v7282, %v7329
      %v7367 = vunpack.c.l.s4 1966171168
      %v7368 = vunpack.c.0.s8 %v7367
      %v7369 = vlaneseq
      %v7370 = vshrl.u32 %v7369, 7
      %v7371 = vsub.s32 %v7368, %v7370
      %v7372 = vrot.slane %v7362, %v7371
      %v7374 = vunpack.c.l.s4 1966171168
      %v7375 = vunpack.c.0.s8 %v7374
      %v7376 = vlaneseq
      %v7377 = vshrl.u32 %v7376, 7
      %v7378 = vsub.s32 %v7375, %v7377
      %v7379 = vrot.slane %v7363, %v7378
      %v7381 = vunpack.c.l.s4 1966171168
      %v7382 = vunpack.c.0.s8 %v7381
      %v7383 = vlaneseq
      %v7384 = vshrl.u32 %v7383, 7
      %v7385 = vsub.s32 %v7382, %v7384
      %v7386 = vrot.slane %v7364, %v7385
      %v7388 = vunpack.c.l.s4 1966171168
      %v7389 = vunpack.c.0.s8 %v7388
      %v7390 = vlaneseq
      %v7391 = vshrl.u32 %v7390, 7
      %v7392 = vsub.s32 %v7389, %v7391
      %v7393 = vrot.slane %v7365, %v7392
      %v7394 = vcombine.low %v7372, %v7379
      %v7395 = vcombine.low %v7386, %v7393
      %v7397 = vunpack.c.l.s4 1966171168
      %v7398 = vunpack.c.0.s8 %v7397
      %v7399 = vlaneseq
      %v7400 = vshrl.u32 %v7399, 7
      %v7401 = vsub.s32 %v7398, %v7400
      %v7402 = vrot.slane %v7394, %v7401
      %v7404 = vunpack.c.l.s4 1966171168
      %v7405 = vunpack.c.0.s8 %v7404
      %v7406 = vlaneseq
      %v7407 = vshrl.u32 %v7406, 7
      %v7408 = vsub.s32 %v7405, %v7407
      %v7409 = vrot.slane %v7395, %v7408
      %v7410 = vcombine.low %v7402, %v7409
      %v7412 = vcombine.low %v7000, %v7046
      %v7413 = vcombine.low %v7107, %v7154
      %v7414 = vcombine.low %v7187, %v7234
      %v7415 = vcombine.low %v7296, %v7344
      %v7417 = vunpack.c.l.s4 1966171168
      %v7418 = vunpack.c.0.s8 %v7417
      %v7419 = vlaneseq
      %v7420 = vshrl.u32 %v7419, 7
      %v7421 = vsub.s32 %v7418, %v7420
      %v7422 = vrot.slane %v7412, %v7421
      %v7424 = vunpack.c.l.s4 1966171168
      %v7425 = vunpack.c.0.s8 %v7424
      %v7426 = vlaneseq
      %v7427 = vshrl.u32 %v7426, 7
      %v7428 = vsub.s32 %v7425, %v7427
      %v7429 = vrot.slane %v7413, %v7428
      %v7431 = vunpack.c.l.s4 1966171168
      %v7432 = vunpack.c.0.s8 %v7431
      %v7433 = vlaneseq
      %v7434 = vshrl.u32 %v7433, 7
      %v7435 = vsub.s32 %v7432, %v7434
      %v7436 = vrot.slane %v7414, %v7435
      %v7438 = vunpack.c.l.s4 1966171168
      %v7439 = vunpack.c.0.s8 %v7438
      %v7440 = vlaneseq
      %v7441 = vshrl.u32 %v7440, 7
      %v7442 = vsub.s32 %v7439, %v7441
      %v7443 = vrot.slane %v7415, %v7442
      %v7444 = vcombine.low %v7422, %v7429
      %v7445 = vcombine.low %v7436, %v7443
      %v7447 = vunpack.c.l.s4 1966171168
      %v7448 = vunpack.c.0.s8 %v7447
      %v7449 = vlaneseq
      %v7450 = vshrl.u32 %v7449, 7
      %v7451 = vsub.s32 %v7448, %v7450
      %v7452 = vrot.slane %v7444, %v7451
      %v7454 = vunpack.c.l.s4 1966171168
      %v7455 = vunpack.c.0.s8 %v7454
      %v7456 = vlaneseq
      %v7457 = vshrl.u32 %v7456, 7
      %v7458 = vsub.s32 %v7455, %v7457
      %v7459 = vrot.slane %v7445, %v7458
      %v7460 = vcombine.low %v7452, %v7459
      %7461 = vrot.lane.b32.xlu0 %v7460, 64
      %v7462 = vpop.permute.xlu0 %7461
      %v7464 = vcombine.low %v7016, %v7063
      %v7465 = vcombine.low %v7122, %v7170
      %v7466 = vcombine.low %v7217, %v7266
      %v7467 = vcombine.low %v7311, %v7360
      %v7469 = vunpack.c.l.s4 1966171168
      %v7470 = vunpack.c.0.s8 %v7469
      %v7471 = vlaneseq
      %v7472 = vshrl.u32 %v7471, 7
      %v7473 = vsub.s32 %v7470, %v7472
      %v7474 = vrot.slane %v7464, %v7473
      %v7476 = vunpack.c.l.s4 1966171168
      %v7477 = vunpack.c.0.s8 %v7476
      %v7478 = vlaneseq
      %v7479 = vshrl.u32 %v7478, 7
      %v7480 = vsub.s32 %v7477, %v7479
      %v7481 = vrot.slane %v7465, %v7480
      %v7483 = vunpack.c.l.s4 1966171168
      %v7484 = vunpack.c.0.s8 %v7483
      %v7485 = vlaneseq
      %v7486 = vshrl.u32 %v7485, 7
      %v7487 = vsub.s32 %v7484, %v7486
      %v7488 = vrot.slane %v7466, %v7487
      %v7490 = vunpack.c.l.s4 1966171168
      %v7491 = vunpack.c.0.s8 %v7490
      %v7492 = vlaneseq
      %v7493 = vshrl.u32 %v7492, 7
      %v7494 = vsub.s32 %v7491, %v7493
      %v7495 = vrot.slane %v7467, %v7494
      %v7496 = vcombine.low %v7474, %v7481
      %v7497 = vcombine.low %v7488, %v7495
      %v7499 = vunpack.c.l.s4 1966171168
      %v7500 = vunpack.c.0.s8 %v7499
      %v7501 = vlaneseq
      %v7502 = vshrl.u32 %v7501, 7
      %v7503 = vsub.s32 %v7500, %v7502
      %v7504 = vrot.slane %v7496, %v7503
      %v7506 = vunpack.c.l.s4 1966171168
      %v7507 = vunpack.c.0.s8 %v7506
      %v7508 = vlaneseq
      %v7509 = vshrl.u32 %v7508, 7
      %v7510 = vsub.s32 %v7507, %v7509
      %v7511 = vrot.slane %v7497, %v7510
      %v7512 = vcombine.low %v7504, %v7511
      %v7514 = vcombine.low %v7030, %v7078
      %v7515 = vcombine.low %v7123, %v7171
      %v7516 = vcombine.low %v7216, %v7265
      %v7517 = vcombine.low %v7312, %v7361
      %v7519 = vunpack.c.l.s4 1966171168
      %v7520 = vunpack.c.0.s8 %v7519
      %v7521 = vlaneseq
      %v7522 = vshrl.u32 %v7521, 7
      %v7523 = vsub.s32 %v7520, %v7522
      %v7524 = vrot.slane %v7514, %v7523
      %v7526 = vunpack.c.l.s4 1966171168
      %v7527 = vunpack.c.0.s8 %v7526
      %v7528 = vlaneseq
      %v7529 = vshrl.u32 %v7528, 7
      %v7530 = vsub.s32 %v7527, %v7529
      %v7531 = vrot.slane %v7515, %v7530
      %v7533 = vunpack.c.l.s4 1966171168
      %v7534 = vunpack.c.0.s8 %v7533
      %v7535 = vlaneseq
      %v7536 = vshrl.u32 %v7535, 7
      %v7537 = vsub.s32 %v7534, %v7536
      %v7538 = vrot.slane %v7516, %v7537
      %v7540 = vunpack.c.l.s4 1966171168
      %v7541 = vunpack.c.0.s8 %v7540
      %v7542 = vlaneseq
      %v7543 = vshrl.u32 %v7542, 7
      %v7544 = vsub.s32 %v7541, %v7543
      %v7545 = vrot.slane %v7517, %v7544
      %v7546 = vcombine.low %v7524, %v7531
      %v7547 = vcombine.low %v7538, %v7545
      %v7549 = vunpack.c.l.s4 1966171168
      %v7550 = vunpack.c.0.s8 %v7549
      %v7551 = vlaneseq
      %v7552 = vshrl.u32 %v7551, 7
      %v7553 = vsub.s32 %v7550, %v7552
      %v7554 = vrot.slane %v7546, %v7553
      %v7556 = vunpack.c.l.s4 1966171168
      %v7557 = vunpack.c.0.s8 %v7556
      %v7558 = vlaneseq
      %v7559 = vshrl.u32 %v7558, 7
      %v7560 = vsub.s32 %v7557, %v7559
      %v7561 = vrot.slane %v7547, %v7560
      %v7562 = vcombine.low %v7554, %v7561
      %7563 = vrot.lane.b32.xlu0 %v7562, 64
      %v7564 = vpop.permute.xlu0 %7563
      %v7566 = vsel %vm487, %v7410, %v7462
      %v7567 = vsel %vm487, %v7512, %v7564
      %7568 = vst [vmem:[%s253] sm:$0xff] %v7566
      %7569 = vst [vmem:[%s253 + $0x8] sm:$0xff] %v7567
      %p7570 = scmp.lt.s32.totalorder %s17, 1
      %s7571 = scalar_select %p7570, %s17, 1
      %s7572 = smul.addr %s7571, 2
      %s7573 = smul.addr %s7572, 8
      %s7574 = scalar_lea.vmem %s6, %s7573
      // Predicated region
      $region45: #{_lambda_.1} parent=43 // pred_check
        %p7575 = pneg %p166
      $region46: #{_lambda_.1} parent=43 // pred_check_branch
        %7577 = sbr.rel (%p7575) target = $region48
      $region47: #{_lambda_.1} parent=43 // pred_region
        _
      $region48: #{_lambda_.1} parent=43 // pred_fallthru
        _
    $region44: #{_lambda_.1} parent=5 // pred_fallthru
      _
    %p7578 = scmp.le.s32.totalorder 2, %s12
    // Predicated region
    $region49: #{_lambda_.1} parent=5 // pred_check
      %p7579 = pneg %p7578
    $region50: #{_lambda_.1} parent=5 // pred_check_branch
      %7581 = sbr.rel (%p7579) target = $region52
    $region51: #{_lambda_.1} parent=5 // pred_region
      %s7582 = ssub.s32 %s12, 2
      // Predicated region
      $region53: #{_lambda_.1} parent=51 // pred_check
        %p7583 = pneg %p172
      $region54: #{_lambda_.1} parent=51 // pred_check_branch
        %7585 = sbr.rel (%p7583) target = $region56
      $region55: #{_lambda_.1} parent=51 // pred_region
        %p7586 = scmp.lt.s32.totalorder %s18, 1
        %s7587 = scalar_select %p7586, %s18, 1
        %s7588 = smul.addr %s7587, 2
        %s7589 = smul.addr %s7588, 8
        %s7590 = scalar_lea.vmem %s6, %s7589
      $region56: #{_lambda_.1} parent=51 // pred_fallthru
        _
    $region52: #{_lambda_.1} parent=5 // pred_fallthru
      _
  $region6: #{_lambda_.1} parent=0 // loop_footer
    %s16 = sadd.s32 1, %s12
  $region7: #{_lambda_.1} parent=0 // loop_footer_branch
    %11 = sbr.rel target = $region3
  $region8: #{_lambda_.1} parent=0 // loop_exit
    _

</llo_original>
